<compile_context>
chip_gen: v6e
topology: v6e:2x2x1
jax: 0.10.0
libtpu: 0.0.40
codegen_flags: <defaults>
</compile_context>

<pallas_src>
import functools

import numpy as np
import jax
import jax.numpy as jnp
from jax.experimental import pallas as pl
from jax.experimental.pallas import tpu as pltpu  # noqa: F401  (kept for TPU backend)


# ---------------------------------------------------------------------------
# Pallas kernels
# ---------------------------------------------------------------------------
def _gemm_bias_act_kernel(a_ref, w_ref, b_ref, o_ref, *, act):
    """o = act(a @ w + b); bf16 MXU operands, f32 accumulate + f32 epilogue."""
    acc = jnp.dot(a_ref[...].astype(jnp.bfloat16), w_ref[...],
                  preferred_element_type=jnp.float32)
    out = acc + b_ref[...]
    if act == "relu":
        out = jnp.maximum(out, 0.0)
    elif act == "tanh":
        out = jnp.tanh(out)
    o_ref[...] = out.astype(o_ref.dtype)


def gemm_bias_act(a, w, b_row, act, out_dtype):
    """Single-block GEMM: whole operands resident in VMEM, one grid step per layer."""
    m, k = a.shape
    kw_, n = w.shape
    assert k == kw_, (k, kw_)
    return pl.pallas_call(
        functools.partial(_gemm_bias_act_kernel, act=act),
        out_shape=jax.ShapeDtypeStruct((m, n), out_dtype),
    )(a, w, b_row)


def _latent_fused_kernel(p_ref, wmu_ref, bmu_ref, wlv_ref, blv_ref, eps_ref,
                         wd_ref, bd_ref, mu_ref, logvar_ref, h_ref):
    """Fused: encoder head (mu/logvar) + reparameterization + first deconv (1x1 latent).

    Everything stays in VMEM / f32; only plain 2-D matmuls + elementwise ops.
    """
    p = p_ref[...].astype(jnp.bfloat16)
    mu = jnp.dot(p, wmu_ref[...], preferred_element_type=jnp.float32) + bmu_ref[...]
    logvar = jnp.dot(p, wlv_ref[...], preferred_element_type=jnp.float32) + blv_ref[...]
    mu_ref[...] = mu
    logvar_ref[...] = logvar
    z = mu + eps_ref[...] * jnp.exp(0.5 * logvar)
    d = jnp.dot(z.astype(jnp.bfloat16), wd_ref[...],
                preferred_element_type=jnp.float32) + bd_ref[...]
    h_ref[...] = jnp.maximum(d, 0.0).astype(h_ref.dtype)


def latent_fused(feats, w_mu, b_mu, w_lv, b_lv, eps2d, w_dec, b_dec):
    m = feats.shape[0]
    lat = w_mu.shape[1]
    n_dec = w_dec.shape[1]
    return pl.pallas_call(
        _latent_fused_kernel,
        out_shape=(jax.ShapeDtypeStruct((m, lat), jnp.float32),
                   jax.ShapeDtypeStruct((m, lat), jnp.float32),
                   jax.ShapeDtypeStruct((m, n_dec), jnp.bfloat16)),
    )(feats, w_mu, b_mu, w_lv, b_lv, eps2d, w_dec, b_dec)


# ---------------------------------------------------------------------------
# One-time weight preparation (GEMM layout, bf16, no padding)
# ---------------------------------------------------------------------------
def prep_conv(w, b):
    # PyTorch Conv2d weight [O, C, kh, kw] -> GEMM weight [kh*kw*C, O] (NHWC patches).
    o, c, kh, kw = w.shape
    w_mat = jnp.transpose(w, (2, 3, 1, 0)).reshape(kh * kw * c, o).astype(jnp.bfloat16)
    b_row = b.astype(jnp.float32).reshape(1, o)
    return w_mat, b_row


# (output parity, 3x3 tap offset) -> original 4x4 kernel index; missing -> zero tap
_KMAP = {(0, 0): 3, (0, 1): 1, (1, 1): 2, (1, 2): 0}


def prep_deconv(w_t, b):
    # ConvTranspose2d(k=4, s=2, p=1) weight [C_in, C_out, 4, 4] rewritten as an exact
    # stride-1 3x3 conv producing 4*C_out channels, channel order (py, px, o).
    c, o, kh, kw = w_t.shape
    assert kh == 4 and kw == 4
    w_eq = jnp.zeros((3, 3, c, 4 * o), jnp.float32)
    for py in range(2):
        for px in range(2):
            oc = (py * 2 + px) * o
            for dh in range(3):
                ki = _KMAP.get((py, dh))
                if ki is None:
                    continue
                for dw in range(3):
                    kj = _KMAP.get((px, dw))
                    if kj is None:
                        continue
                    w_eq = w_eq.at[dh, dw, :, oc:oc + o].set(w_t[:, :, ki, kj])
    w_full = w_eq.reshape(9 * c, 4 * o).astype(jnp.bfloat16)
    w_center = w_eq[1, 1].astype(jnp.bfloat16)   # exact for a 1x1 spatial input
    b_row = jnp.tile(b, 4).astype(jnp.float32).reshape(1, 4 * o)
    return {"w": w_full, "w_center": w_center, "b": b_row}


def init_raw_params(key, in_channels=1, latent_dim=8):
    enc_dims = [(in_channels, 64), (64, 128), (128, 256), (256, 2 * latent_dim)]
    dec_dims = [(latent_dim, 256), (256, 128), (128, 64), (64, in_channels)]
    keys = jax.random.split(key, 2 * (len(enc_dims) + len(dec_dims)))
    ki = 0
    enc, dec = [], []
    for cin, cout in enc_dims:
        w = jax.random.normal(keys[ki], (cout, cin, 4, 4), jnp.float32) * 0.05
        bb = jax.random.normal(keys[ki + 1], (cout,), jnp.float32) * 0.01
        ki += 2
        enc.append((w, bb))
    for cin, cout in dec_dims:
        # ConvTranspose2d weight layout: [C_in, C_out, kh, kw]
        w = jax.random.normal(keys[ki], (cin, cout, 4, 4), jnp.float32) * 0.05
        bb = jax.random.normal(keys[ki + 1], (cout,), jnp.float32) * 0.01
        ki += 2
        dec.append((w, bb))
    return {"enc": enc, "dec": dec}


def prep_params(raw, latent_dim):
    enc_body = [prep_conv(w, b) for (w, b) in raw["enc"][:-1]]
    w4, b4 = raw["enc"][-1]
    head = {
        # mu / logvar heads split once, so the fused kernel needs no channel slicing.
        "mu": prep_conv(w4[:latent_dim], b4[:latent_dim]),
        "logvar": prep_conv(w4[latent_dim:], b4[latent_dim:]),
        # 2x2-input specialization: only taps kh,kw in {1,2} touch real data, so the
        # head collapses to a dense matmul over the flattened 2x2xC feature map.
        "mu_c": prep_conv(w4[:latent_dim, :, 1:3, 1:3], b4[:latent_dim]),
        "logvar_c": prep_conv(w4[latent_dim:, :, 1:3, 1:3], b4[latent_dim:]),
    }
    dec = [prep_deconv(w_t, b) for (w_t, b) in raw["dec"]]
    return {"enc": enc_body, "head": head, "dec": dec}


# ---------------------------------------------------------------------------
# Conv / ConvTranspose layers (NHWC; im2col glue in XLA, GEMM in Pallas)
# ---------------------------------------------------------------------------
def _im2col(x, kh, kw, stride, pad):
    # TODO(synk): still XLA-side; an in-kernel window gather (fully fused encoder /
    #             decoder) would remove this patch replication entirely.
    n, h, w, c = x.shape
    ho = (h + 2 * pad - kh) // stride + 1
    wo = (w + 2 * pad - kw) // stride + 1
    x_p = jnp.pad(x, ((0, 0), (pad, pad), (pad, pad), (0, 0)))
    cols = []
    for i in range(kh):
        for j in range(kw):
            cols.append(x_p[:, i:i + (ho - 1) * stride + 1:stride,
                            j:j + (wo - 1) * stride + 1:stride, :])
    patches = jnp.concatenate(cols, axis=-1)          # [N, Ho, Wo, kh*kw*C]
    return patches.reshape(n * ho * wo, kh * kw * c), ho, wo


def conv_layer(x, w_mat, b_row, act, out_dtype):
    # nn.Conv2d(kernel=4, stride=2, padding=1), NHWC
    n = x.shape[0]
    cout = w_mat.shape[1]
    patches, ho, wo = _im2col(x, 4, 4, 2, 1)
    out = gemm_bias_act(patches, w_mat, b_row, act, out_dtype)
    return out.reshape(n, ho, wo, cout)


def _pixel_shuffle(out, n, h, w, cout):
    # packed rows (n, y, x) with channels (py, px, o) -> (n, 2h, 2w, cout)
    # TODO(synk): per perf review this interleave could stay packed in the channel dim
    #             and fold into the next layer's gather; kept as tiny XLA glue here.
    out = out.reshape(n, h, w, 2, 2, cout)
    return out.transpose(0, 1, 3, 2, 4, 5).reshape(n, 2 * h, 2 * w, cout)


def deconv_layer(x, p, act, out_dtype):
    # nn.ConvTranspose2d(kernel=4, stride=2, padding=1), NHWC, sub-pixel formulation
    n, h, w, _ = x.shape
    cout = p["b"].shape[1] // 4
    if h == 1 and w == 1:
        # 1x1 spatial input: only the center tap touches data -> plain matmul.
        out = gemm_bias_act(x.reshape(n, -1), p["w_center"], p["b"], act, out_dtype)
    else:
        patches, _, _ = _im2col(x, 3, 3, 1, 1)
        out = gemm_bias_act(patches, p["w"], p["b"], act, out_dtype)
    return _pixel_shuffle(out, n, h, w, cout)


# ---------------------------------------------------------------------------
# VAE forward
# ---------------------------------------------------------------------------
def vae_forward(x, params, eps, *, latent_dim=8):
    """x: NCHW f32; eps: NHWC latent-grid noise (N, Hl, Wl, latent). Returns NCHW."""
    h = jnp.transpose(x, (0, 2, 3, 1))                 # NCHW -> NHWC (boundary only)
    for (w_mat, b_row) in params["enc"]:
        h = conv_layer(h, w_mat, b_row, "relu", jnp.bfloat16)

    head = params["head"]
    dec = params["dec"]
    n = h.shape[0]

    if h.shape[1] == 2 and h.shape[2] == 2:
        # Fused pallas_call: encoder head + reparameterization + first deconv.
        feats = h.reshape(n, -1)                       # (N, 4*C), column order (ih,iw,c)
        mu2d, logvar2d, hdec = latent_fused(
            feats,
            head["mu_c"][0], head["mu_c"][1],
            head["logvar_c"][0], head["logvar_c"][1],
            eps.reshape(n, latent_dim),
            dec[0]["w_center"], dec[0]["b"])
        cout0 = dec[0]["b"].shape[1] // 4
        z = _pixel_shuffle(hdec, n, 1, 1, cout0)
        mu = mu2d.reshape(n, latent_dim, 1, 1)         # spatial 1x1 => NCHW via reshape
        logvar = logvar2d.reshape(n, latent_dim, 1, 1)
    else:
        # Generic fallback for inputs whose latent grid is larger than 1x1.
        mu_nhwc = conv_layer(h, head["mu"][0], head["mu"][1], "none", jnp.float32)
        lv_nhwc = conv_layer(h, head["logvar"][0], head["logvar"][1], "none", jnp.float32)
        z_lat = mu_nhwc + eps * jnp.exp(0.5 * lv_nhwc)
        z = deconv_layer(z_lat, dec[0], "relu", jnp.bfloat16)
        mu = jnp.transpose(mu_nhwc, (0, 3, 1, 2))
        logvar = jnp.transpose(lv_nhwc, (0, 3, 1, 2))

    z = deconv_layer(z, dec[1], "relu", jnp.bfloat16)
    z = deconv_layer(z, dec[2], "relu", jnp.bfloat16)
    z = deconv_layer(z, dec[3], "tanh", jnp.float32)

    recon = jnp.transpose(z, (0, 3, 1, 2))             # NHWC -> NCHW
    return recon, mu, logvar


# ---------------------------------------------------------------------------
# Pure-XLA reference of the PyTorch module (for the correctness check)
# ---------------------------------------------------------------------------
def _conv_ref(x, w, b, stride, pad):
    y = jax.lax.conv_general_dilated(
        x, w, window_strides=(stride, stride), padding=[(pad, pad), (pad, pad)],
        dimension_numbers=("NCHW", "OIHW", "NCHW"),
        precision=jax.lax.Precision.HIGHEST)
    return y + b.reshape(1, -1, 1, 1)


def _deconv_ref(x, w_t, b, stride, pad):
    k = w_t.shape[-1]
    w_flip = jnp.transpose(w_t, (1, 0, 2, 3))[:, :, ::-1, ::-1]
    y = jax.lax.conv_general_dilated(
        x, w_flip, window_strides=(1, 1),
        padding=[(k - 1 - pad, k - 1 - pad)] * 2, lhs_dilation=(stride, stride),
        dimension_numbers=("NCHW", "OIHW", "NCHW"),
        precision=jax.lax.Precision.HIGHEST)
    return y + b.reshape(1, -1, 1, 1)


def reference_forward(x, raw, eps_nchw, latent_dim):
    def q(t):  # match the kernels' bf16 weight storage
        return t.astype(jnp.bfloat16).astype(jnp.float32)
    h = x
    for i, (w, b) in enumerate(raw["enc"]):
        h = _conv_ref(h, q(w), b, 2, 1)
        if i < len(raw["enc"]) - 1:
            h = jax.nn.relu(h)
    mu, logvar = h[:, :latent_dim], h[:, latent_dim:]
    z = mu + eps_nchw * jnp.exp(0.5 * logvar)
    for i, (w_t, b) in enumerate(raw["dec"]):
        z = _deconv_ref(z, q(w_t), b, 2, 1)
        z = jax.nn.relu(z) if i < len(raw["dec"]) - 1 else jnp.tanh(z)
    return z, mu, logvar


if __name__ == "__main__":
    key = jax.random.PRNGKey(0)
    pkey, xkey, ekey = jax.random.split(key, 3)
    in_channels, latent_dim = 1, 8

    raw = init_raw_params(pkey, in_channels=in_channels, latent_dim=latent_dim)
    params = prep_params(raw, latent_dim)

    x = jax.random.normal(xkey, (2, in_channels, 16, 16), jnp.float32)
    # TODO(synk): torch.randn_like samples eps inside the module; here eps comes from an
    #             explicit JAX key in the wrapper and is passed into the fused kernel.
    eps = jax.random.normal(ekey, (2, 1, 1, latent_dim), jnp.float32)

    fwd = jax.jit(functools.partial(vae_forward, latent_dim=latent_dim))
    recon, mu, logvar = fwd(x, params, eps)
    jax.block_until_ready((recon, mu, logvar))

    assert recon.shape == x.shape, recon.shape
    assert mu.shape == (2, latent_dim, 1, 1), mu.shape
    assert logvar.shape == (2, latent_dim, 1, 1), logvar.shape
    assert bool(jnp.all(jnp.isfinite(recon)))

    # Numerical check against a pure-XLA reference of the PyTorch module
    # (bf16 weight storage + bf16 intermediate activations => small deviation).
    recon_r, mu_r, logvar_r = reference_forward(
        x, raw, jnp.transpose(eps, (0, 3, 1, 2)), latent_dim)
    for got, ref in ((mu, mu_r), (logvar, logvar_r), (recon, recon_r)):
        g = np.asarray(got, dtype=np.float32)
        r = np.asarray(ref, dtype=np.float32)
        assert np.allclose(g, r, atol=3e-2, rtol=3e-2), float(np.max(np.abs(g - r)))

    print("KERNEL_OK")
</pallas_src>

<mosaic_0001>
module attributes {stable_mosaic.version = 11 : i64} {
  func.func @_gemm_bias_act_kernel(%arg0: memref<128x16xf32, #tpu.memory_space<vmem>>, %arg1: memref<16x64xbf16, #tpu.memory_space<vmem>>, %arg2: memref<1x64xf32, #tpu.memory_space<vmem>>, %arg3: memref<128x64xbf16, #tpu.memory_space<vmem>>) attributes {dimension_semantics = [], scalar_prefetch = 0 : i64, scratch_operands = 0 : i64, tpu.core_type = #tpu.core_type<tc>} {
    %c0 = arith.constant 0 : index
    %c0_0 = arith.constant 0 : index
    %0 = vector.load %arg0[%c0, %c0_0] : memref<128x16xf32, #tpu.memory_space<vmem>>, vector<128x16xf32>
    %1 = arith.truncf %0 : vector<128x16xf32> to vector<128x16xbf16>
    %c0_1 = arith.constant 0 : index
    %c0_2 = arith.constant 0 : index
    %2 = vector.load %arg1[%c0_1, %c0_2] : memref<16x64xbf16, #tpu.memory_space<vmem>>, vector<16x64xbf16>
    %cst = arith.constant dense<0.000000e+00> : vector<128x64xf32>
    %3 = tpu.matmul %1, %2, %cst {dimension_numbers = #tpu.dot_dimension_numbers<[1], [0], [0], [1], [0, 0, 1, 1], [], []>} : vector<128x16xbf16>, vector<16x64xbf16>, vector<128x64xf32> -> vector<128x64xf32>
    %c0_3 = arith.constant 0 : index
    %c0_4 = arith.constant 0 : index
    %4 = vector.load %arg2[%c0_3, %c0_4] : memref<1x64xf32, #tpu.memory_space<vmem>>, vector<1x64xf32>
    %5 = vector.broadcast %4 : vector<1x64xf32> to vector<128x64xf32>
    %6 = arith.addf %3, %5 : vector<128x64xf32>
    %cst_5 = arith.constant 0.000000e+00 : f32
    %7 = vector.broadcast %cst_5 : f32 to vector<128x64xf32>
    %8 = arith.maximumf %6, %7 : vector<128x64xf32>
    %9 = arith.truncf %8 : vector<128x64xf32> to vector<128x64xbf16>
    %c0_6 = arith.constant 0 : index
    %c0_7 = arith.constant 0 : index
    %10 = vector.load %arg3[%c0_6, %c0_7] : memref<128x64xbf16, #tpu.memory_space<vmem>>, vector<128x64xbf16>
    tpu.vector_store %arg3[%c0_6, %c0_7], %9 {strides = array<i32>} : memref<128x64xbf16, #tpu.memory_space<vmem>>, vector<128x64xbf16>,
    return
  }
}

module attributes {stable_mosaic.version = 11 : i64} {
  func.func @_gemm_bias_act_kernel(%arg0: memref<32x1024xbf16, #tpu.memory_space<vmem>>, %arg1: memref<1024x128xbf16, #tpu.memory_space<vmem>>, %arg2: memref<1x128xf32, #tpu.memory_space<vmem>>, %arg3: memref<32x128xbf16, #tpu.memory_space<vmem>>) attributes {dimension_semantics = [], scalar_prefetch = 0 : i64, scratch_operands = 0 : i64, tpu.core_type = #tpu.core_type<tc>} {
    %c0 = arith.constant 0 : index
    %c0_0 = arith.constant 0 : index
    %0 = vector.load %arg0[%c0, %c0_0] : memref<32x1024xbf16, #tpu.memory_space<vmem>>, vector<32x1024xbf16>
    %c0_1 = arith.constant 0 : index
    %c0_2 = arith.constant 0 : index
    %1 = vector.load %arg1[%c0_1, %c0_2] : memref<1024x128xbf16, #tpu.memory_space<vmem>>, vector<1024x128xbf16>
    %cst = arith.constant dense<0.000000e+00> : vector<32x128xf32>
    %2 = tpu.matmul %0, %1, %cst {dimension_numbers = #tpu.dot_dimension_numbers<[1], [0], [0], [1], [0, 0, 1, 1], [], []>} : vector<32x1024xbf16>, vector<1024x128xbf16>, vector<32x128xf32> -> vector<32x128xf32>
    %c0_3 = arith.constant 0 : index
    %c0_4 = arith.constant 0 : index
    %3 = vector.load %arg2[%c0_3, %c0_4] : memref<1x128xf32, #tpu.memory_space<vmem>>, vector<1x128xf32>
    %4 = vector.broadcast %3 : vector<1x128xf32> to vector<32x128xf32>
    %5 = arith.addf %2, %4 : vector<32x128xf32>
    %cst_5 = arith.constant 0.000000e+00 : f32
    %6 = vector.broadcast %cst_5 : f32 to vector<32x128xf32>
    %7 = arith.maximumf %5, %6 : vector<32x128xf32>
    %8 = arith.truncf %7 : vector<32x128xf32> to vector<32x128xbf16>
    %c0_6 = arith.constant 0 : index
    %c0_7 = arith.constant 0 : index
    %9 = vector.load %arg3[%c0_6, %c0_7] : memref<32x128xbf16, #tpu.memory_space<vmem>>, vector<32x128xbf16>
    tpu.vector_store %arg3[%c0_6, %c0_7], %8 {strides = array<i32>} : memref<32x128xbf16, #tpu.memory_space<vmem>>, vector<32x128xbf16>,
    return
  }
}

module attributes {stable_mosaic.version = 11 : i64} {
  func.func @_gemm_bias_act_kernel(%arg0: memref<8x2048xbf16, #tpu.memory_space<vmem>>, %arg1: memref<2048x256xbf16, #tpu.memory_space<vmem>>, %arg2: memref<1x256xf32, #tpu.memory_space<vmem>>, %arg3: memref<8x256xbf16, #tpu.memory_space<vmem>>) attributes {dimension_semantics = [], scalar_prefetch = 0 : i64, scratch_operands = 0 : i64, tpu.core_type = #tpu.core_type<tc>} {
    %c0 = arith.constant 0 : index
    %c0_0 = arith.constant 0 : index
    %0 = vector.load %arg0[%c0, %c0_0] : memref<8x2048xbf16, #tpu.memory_space<vmem>>, vector<8x2048xbf16>
    %c0_1 = arith.constant 0 : index
    %c0_2 = arith.constant 0 : index
    %1 = vector.load %arg1[%c0_1, %c0_2] : memref<2048x256xbf16, #tpu.memory_space<vmem>>, vector<2048x256xbf16>
    %cst = arith.constant dense<0.000000e+00> : vector<8x256xf32>
    %2 = tpu.matmul %0, %1, %cst {dimension_numbers = #tpu.dot_dimension_numbers<[1], [0], [0], [1], [0, 0, 1, 1], [], []>} : vector<8x2048xbf16>, vector<2048x256xbf16>, vector<8x256xf32> -> vector<8x256xf32>
    %c0_3 = arith.constant 0 : index
    %c0_4 = arith.constant 0 : index
    %3 = vector.load %arg2[%c0_3, %c0_4] : memref<1x256xf32, #tpu.memory_space<vmem>>, vector<1x256xf32>
    %4 = vector.broadcast %3 : vector<1x256xf32> to vector<8x256xf32>
    %5 = arith.addf %2, %4 : vector<8x256xf32>
    %cst_5 = arith.constant 0.000000e+00 : f32
    %6 = vector.broadcast %cst_5 : f32 to vector<8x256xf32>
    %7 = arith.maximumf %5, %6 : vector<8x256xf32>
    %8 = arith.truncf %7 : vector<8x256xf32> to vector<8x256xbf16>
    %c0_6 = arith.constant 0 : index
    %c0_7 = arith.constant 0 : index
    %9 = vector.load %arg3[%c0_6, %c0_7] : memref<8x256xbf16, #tpu.memory_space<vmem>>, vector<8x256xbf16>
    tpu.vector_store %arg3[%c0_6, %c0_7], %8 {strides = array<i32>} : memref<8x256xbf16, #tpu.memory_space<vmem>>, vector<8x256xbf16>,
    return
  }
}

module attributes {stable_mosaic.version = 11 : i64} {
  func.func @_latent_fused_kernel(%arg0: memref<2x1024xbf16, #tpu.memory_space<vmem>>, %arg1: memref<1024x8xbf16, #tpu.memory_space<vmem>>, %arg2: memref<1x8xf32, #tpu.memory_space<vmem>>, %arg3: memref<1024x8xbf16, #tpu.memory_space<vmem>>, %arg4: memref<1x8xf32, #tpu.memory_space<vmem>>, %arg5: memref<2x8xf32, #tpu.memory_space<vmem>>, %arg6: memref<8x1024xbf16, #tpu.memory_space<vmem>>, %arg7: memref<1x1024xf32, #tpu.memory_space<vmem>>, %arg8: memref<2x8xf32, #tpu.memory_space<vmem>>, %arg9: memref<2x8xf32, #tpu.memory_space<vmem>>, %arg10: memref<2x1024xbf16, #tpu.memory_space<vmem>>) attributes {dimension_semantics = [], scalar_prefetch = 0 : i64, scratch_operands = 0 : i64, tpu.core_type = #tpu.core_type<tc>} {
    %c0 = arith.constant 0 : index
    %c0_0 = arith.constant 0 : index
    %0 = vector.load %arg0[%c0, %c0_0] : memref<2x1024xbf16, #tpu.memory_space<vmem>>, vector<2x1024xbf16>
    %c0_1 = arith.constant 0 : index
    %c0_2 = arith.constant 0 : index
    %1 = vector.load %arg1[%c0_1, %c0_2] : memref<1024x8xbf16, #tpu.memory_space<vmem>>, vector<1024x8xbf16>
    %cst = arith.constant dense<0.000000e+00> : vector<2x8xf32>
    %2 = tpu.matmul %0, %1, %cst {dimension_numbers = #tpu.dot_dimension_numbers<[1], [0], [0], [1], [0, 0, 1, 1], [], []>} : vector<2x1024xbf16>, vector<1024x8xbf16>, vector<2x8xf32> -> vector<2x8xf32>
    %c0_3 = arith.constant 0 : index
    %c0_4 = arith.constant 0 : index
    %3 = vector.load %arg2[%c0_3, %c0_4] : memref<1x8xf32, #tpu.memory_space<vmem>>, vector<1x8xf32>
    %4 = vector.broadcast %3 : vector<1x8xf32> to vector<2x8xf32>
    %5 = arith.addf %2, %4 : vector<2x8xf32>
    %c0_5 = arith.constant 0 : index
    %c0_6 = arith.constant 0 : index
    %6 = vector.load %arg3[%c0_5, %c0_6] : memref<1024x8xbf16, #tpu.memory_space<vmem>>, vector<1024x8xbf16>
    %cst_7 = arith.constant dense<0.000000e+00> : vector<2x8xf32>
    %7 = tpu.matmul %0, %6, %cst_7 {dimension_numbers = #tpu.dot_dimension_numbers<[1], [0], [0], [1], [0, 0, 1, 1], [], []>} : vector<2x1024xbf16>, vector<1024x8xbf16>, vector<2x8xf32> -> vector<2x8xf32>
    %c0_8 = arith.constant 0 : index
    %c0_9 = arith.constant 0 : index
    %8 = vector.load %arg4[%c0_8, %c0_9] : memref<1x8xf32, #tpu.memory_space<vmem>>, vector<1x8xf32>
    %9 = vector.broadcast %8 : vector<1x8xf32> to vector<2x8xf32>
    %10 = arith.addf %7, %9 : vector<2x8xf32>
    %c0_10 = arith.constant 0 : index
    %c0_11 = arith.constant 0 : index
    %11 = vector.load %arg8[%c0_10, %c0_11] : memref<2x8xf32, #tpu.memory_space<vmem>>, vector<2x8xf32>
    tpu.vector_store %arg8[%c0_10, %c0_11], %5 {strides = array<i32>} : memref<2x8xf32, #tpu.memory_space<vmem>>, vector<2x8xf32>,
    %c0_12 = arith.constant 0 : index
    %c0_13 = arith.constant 0 : index
    %12 = vector.load %arg9[%c0_12, %c0_13] : memref<2x8xf32, #tpu.memory_space<vmem>>, vector<2x8xf32>
    tpu.vector_store %arg9[%c0_12, %c0_13], %10 {strides = array<i32>} : memref<2x8xf32, #tpu.memory_space<vmem>>, vector<2x8xf32>,
    %c0_14 = arith.constant 0 : index
    %c0_15 = arith.constant 0 : index
    %13 = vector.load %arg5[%c0_14, %c0_15] : memref<2x8xf32, #tpu.memory_space<vmem>>, vector<2x8xf32>
    %cst_16 = arith.constant 5.000000e-01 : f32
    %14 = vector.broadcast %cst_16 : f32 to vector<2x8xf32>
    %15 = arith.mulf %14, %10 : vector<2x8xf32>
    %16 = math.exp %15 : vector<2x8xf32>
    %17 = arith.mulf %13, %16 : vector<2x8xf32>
    %18 = arith.addf %5, %17 : vector<2x8xf32>
    %19 = arith.truncf %18 : vector<2x8xf32> to vector<2x8xbf16>
    %c0_17 = arith.constant 0 : index
    %c0_18 = arith.constant 0 : index
    %20 = vector.load %arg6[%c0_17, %c0_18] : memref<8x1024xbf16, #tpu.memory_space<vmem>>, vector<8x1024xbf16>
    %cst_19 = arith.constant dense<0.000000e+00> : vector<2x1024xf32>
    %21 = tpu.matmul %19, %20, %cst_19 {dimension_numbers = #tpu.dot_dimension_numbers<[1], [0], [0], [1], [0, 0, 1, 1], [], []>} : vector<2x8xbf16>, vector<8x1024xbf16>, vector<2x1024xf32> -> vector<2x1024xf32>
    %c0_20 = arith.constant 0 : index
    %c0_21 = arith.constant 0 : index
    %22 = vector.load %arg7[%c0_20, %c0_21] : memref<1x1024xf32, #tpu.memory_space<vmem>>, vector<1x1024xf32>
    %23 = vector.broadcast %22 : vector<1x1024xf32> to vector<2x1024xf32>
    %24 = arith.addf %21, %23 : vector<2x1024xf32>
    %cst_22 = arith.constant 0.000000e+00 : f32
    %25 = vector.broadcast %cst_22 : f32 to vector<2x1024xf32>
    %26 = arith.maximumf %24, %25 : vector<2x1024xf32>
    %27 = arith.truncf %26 : vector<2x1024xf32> to vector<2x1024xbf16>
    %c0_23 = arith.constant 0 : index
    %c0_24 = arith.constant 0 : index
    %28 = vector.load %arg10[%c0_23, %c0_24] : memref<2x1024xbf16, #tpu.memory_space<vmem>>, vector<2x1024xbf16>
    tpu.vector_store %arg10[%c0_23, %c0_24], %27 {strides = array<i32>} : memref<2x1024xbf16, #tpu.memory_space<vmem>>, vector<2x1024xbf16>,
    return
  }
}

module attributes {stable_mosaic.version = 11 : i64} {
  func.func @_gemm_bias_act_kernel(%arg0: memref<8x2304xbf16, #tpu.memory_space<vmem>>, %arg1: memref<2304x512xbf16, #tpu.memory_space<vmem>>, %arg2: memref<1x512xf32, #tpu.memory_space<vmem>>, %arg3: memref<8x512xbf16, #tpu.memory_space<vmem>>) attributes {dimension_semantics = [], scalar_prefetch = 0 : i64, scratch_operands = 0 : i64, tpu.core_type = #tpu.core_type<tc>} {
    %c0 = arith.constant 0 : index
    %c0_0 = arith.constant 0 : index
    %0 = vector.load %arg0[%c0, %c0_0] : memref<8x2304xbf16, #tpu.memory_space<vmem>>, vector<8x2304xbf16>
    %c0_1 = arith.constant 0 : index
    %c0_2 = arith.constant 0 : index
    %1 = vector.load %arg1[%c0_1, %c0_2] : memref<2304x512xbf16, #tpu.memory_space<vmem>>, vector<2304x512xbf16>
    %cst = arith.constant dense<0.000000e+00> : vector<8x512xf32>
    %2 = tpu.matmul %0, %1, %cst {dimension_numbers = #tpu.dot_dimension_numbers<[1], [0], [0], [1], [0, 0, 1, 1], [], []>} : vector<8x2304xbf16>, vector<2304x512xbf16>, vector<8x512xf32> -> vector<8x512xf32>
    %c0_3 = arith.constant 0 : index
    %c0_4 = arith.constant 0 : index
    %3 = vector.load %arg2[%c0_3, %c0_4] : memref<1x512xf32, #tpu.memory_space<vmem>>, vector<1x512xf32>
    %4 = vector.broadcast %3 : vector<1x512xf32> to vector<8x512xf32>
    %5 = arith.addf %2, %4 : vector<8x512xf32>
    %cst_5 = arith.constant 0.000000e+00 : f32
    %6 = vector.broadcast %cst_5 : f32 to vector<8x512xf32>
    %7 = arith.maximumf %5, %6 : vector<8x512xf32>
    %8 = arith.truncf %7 : vector<8x512xf32> to vector<8x512xbf16>
    %c0_6 = arith.constant 0 : index
    %c0_7 = arith.constant 0 : index
    %9 = vector.load %arg3[%c0_6, %c0_7] : memref<8x512xbf16, #tpu.memory_space<vmem>>, vector<8x512xbf16>
    tpu.vector_store %arg3[%c0_6, %c0_7], %8 {strides = array<i32>} : memref<8x512xbf16, #tpu.memory_space<vmem>>, vector<8x512xbf16>,
    return
  }
}

module attributes {stable_mosaic.version = 11 : i64} {
  func.func @_gemm_bias_act_kernel(%arg0: memref<32x1152xbf16, #tpu.memory_space<vmem>>, %arg1: memref<1152x256xbf16, #tpu.memory_space<vmem>>, %arg2: memref<1x256xf32, #tpu.memory_space<vmem>>, %arg3: memref<32x256xbf16, #tpu.memory_space<vmem>>) attributes {dimension_semantics = [], scalar_prefetch = 0 : i64, scratch_operands = 0 : i64, tpu.core_type = #tpu.core_type<tc>} {
    %c0 = arith.constant 0 : index
    %c0_0 = arith.constant 0 : index
    %0 = vector.load %arg0[%c0, %c0_0] : memref<32x1152xbf16, #tpu.memory_space<vmem>>, vector<32x1152xbf16>
    %c0_1 = arith.constant 0 : index
    %c0_2 = arith.constant 0 : index
    %1 = vector.load %arg1[%c0_1, %c0_2] : memref<1152x256xbf16, #tpu.memory_space<vmem>>, vector<1152x256xbf16>
    %cst = arith.constant dense<0.000000e+00> : vector<32x256xf32>
    %2 = tpu.matmul %0, %1, %cst {dimension_numbers = #tpu.dot_dimension_numbers<[1], [0], [0], [1], [0, 0, 1, 1], [], []>} : vector<32x1152xbf16>, vector<1152x256xbf16>, vector<32x256xf32> -> vector<32x256xf32>
    %c0_3 = arith.constant 0 : index
    %c0_4 = arith.constant 0 : index
    %3 = vector.load %arg2[%c0_3, %c0_4] : memref<1x256xf32, #tpu.memory_space<vmem>>, vector<1x256xf32>
    %4 = vector.broadcast %3 : vector<1x256xf32> to vector<32x256xf32>
    %5 = arith.addf %2, %4 : vector<32x256xf32>
    %cst_5 = arith.constant 0.000000e+00 : f32
    %6 = vector.broadcast %cst_5 : f32 to vector<32x256xf32>
    %7 = arith.maximumf %5, %6 : vector<32x256xf32>
    %8 = arith.truncf %7 : vector<32x256xf32> to vector<32x256xbf16>
    %c0_6 = arith.constant 0 : index
    %c0_7 = arith.constant 0 : index
    %9 = vector.load %arg3[%c0_6, %c0_7] : memref<32x256xbf16, #tpu.memory_space<vmem>>, vector<32x256xbf16>
    tpu.vector_store %arg3[%c0_6, %c0_7], %8 {strides = array<i32>} : memref<32x256xbf16, #tpu.memory_space<vmem>>, vector<32x256xbf16>,
    return
  }
}

module attributes {stable_mosaic.version = 11 : i64} {
  func.func @_gemm_bias_act_kernel(%arg0: memref<128x576xbf16, #tpu.memory_space<vmem>>, %arg1: memref<576x4xbf16, #tpu.memory_space<vmem>>, %arg2: memref<1x4xf32, #tpu.memory_space<vmem>>, %arg3: memref<128x4xf32, #tpu.memory_space<vmem>>) attributes {dimension_semantics = [], scalar_prefetch = 0 : i64, scratch_operands = 0 : i64, tpu.core_type = #tpu.core_type<tc>} {
    %c0 = arith.constant 0 : index
    %c0_0 = arith.constant 0 : index
    %0 = vector.load %arg0[%c0, %c0_0] : memref<128x576xbf16, #tpu.memory_space<vmem>>, vector<128x576xbf16>
    %c0_1 = arith.constant 0 : index
    %c0_2 = arith.constant 0 : index
    %1 = vector.load %arg1[%c0_1, %c0_2] : memref<576x4xbf16, #tpu.memory_space<vmem>>, vector<576x4xbf16>
    %cst = arith.constant dense<0.000000e+00> : vector<128x4xf32>
    %2 = tpu.matmul %0, %1, %cst {dimension_numbers = #tpu.dot_dimension_numbers<[1], [0], [0], [1], [0, 0, 1, 1], [], []>} : vector<128x576xbf16>, vector<576x4xbf16>, vector<128x4xf32> -> vector<128x4xf32>
    %c0_3 = arith.constant 0 : index
    %c0_4 = arith.constant 0 : index
    %3 = vector.load %arg2[%c0_3, %c0_4] : memref<1x4xf32, #tpu.memory_space<vmem>>, vector<1x4xf32>
    %4 = vector.broadcast %3 : vector<1x4xf32> to vector<128x4xf32>
    %5 = arith.addf %2, %4 : vector<128x4xf32>
    %6 = math.tanh %5 : vector<128x4xf32>
    %c0_5 = arith.constant 0 : index
    %c0_6 = arith.constant 0 : index
    %7 = vector.load %arg3[%c0_5, %c0_6] : memref<128x4xf32, #tpu.memory_space<vmem>>, vector<128x4xf32>
    tpu.vector_store %arg3[%c0_5, %c0_6], %6 {strides = array<i32>} : memref<128x4xf32, #tpu.memory_space<vmem>>, vector<128x4xf32>,
    return
  }
}

</mosaic_0001>

<llo_original>
// kernel: vae_forward.7
$region0: #{vae_forward.7}
  #allocation0 [shape = 'u32[]', space=smem, size = 0x4, offset = 0x4, fixed_abs, tag = 'smem constant byte address 0x4 - core index']
  #allocation1 [shape = 'u32[144,128]{1,0:T(1,128)}', space=vmem, size = 0x12000, scoped, tag = 'internal scratch']
  %s0 = inlined_call_operand.vmem [shape: f32[128,16], index: 0, kind: input, shape index: {}]
  %s1 = inlined_call_operand.hbm [shape: bf16[16,64], index: 1, kind: input, shape index: {}]
  %s2 = inlined_call_operand.hbm [shape: f32[1,64], index: 2, kind: input, shape index: {}]
  %s3 = inlined_call_operand.vmem [shape: bf16[128,64], index: 3, kind: output, shape index: {}]
  %s4 = sld [smem:[#allocation0]]
  $region30: #{vae_forward.7} parent=0
    _
  %s6 = ssub.s32 1, %s4
  %s7 = scalar_select 0, %s6, %s4
  $region1: #{vae_forward.7} parent=0
    #allocation2 [shape = 'u8[4096]{0}', space=vmem, size = 0x1000, scoped, tag = 'input window, operand 1, single buffered']
    #allocation3 [shape = 's32[1]{0}', space=sflag, size = 0x4, scoped, tag = 'scoped memory for vae_forward.7']
    #allocation4 [shape = 'u8[512]{0}', space=vmem, size = 0x400, scoped, tag = 'input window, operand 2, single buffered']
    #allocation5 [shape = 's32[1]{0}', space=sflag, size = 0x4, scoped, tag = 'scoped memory for vae_forward.7']
    %8 = vsyncpa [#allocation3], 0
    %9 = vsyncpa [#allocation5], 0
    // Predicated region
    $region2: #{vae_forward.7} parent=1 // pred_check
      _
    $region3: #{vae_forward.7} parent=1 // pred_check_branch
      %11 = sbr.rel (0) target = $region5
    $region4: #{vae_forward.7} parent=1 // pred_region
      _
    $region5: #{vae_forward.7} parent=1 // pred_fallthru
      _
    // Predicated region
    $region6: #{vae_forward.7} parent=1 // pred_check
      _
    $region7: #{vae_forward.7} parent=1 // pred_check_branch
      %13 = sbr.rel (0) target = $region9
    $region8: #{vae_forward.7} parent=1 // pred_region
      %s15 = ssub.s32 128, 128
      %16 = vsyncadd [#allocation3], %s15
      %s17 = sshll.u32 [#allocation2], 4
      %s18 = int_to_ptr.vmem [resolvable:$true] %s17
      %23 = dma.hbm_to_vmem [thread:$0]  %s1, 128, %s18, [#allocation3], 64, 64, 4
    $region9: #{vae_forward.7} parent=1 // pred_fallthru
      _
    // Predicated region
    $region10: #{vae_forward.7} parent=1 // pred_check
      _
    $region11: #{vae_forward.7} parent=1 // pred_check_branch
      %25 = sbr.rel (0) target = $region13
    $region12: #{vae_forward.7} parent=1 // pred_region
      %s27 = ssub.s32 16, 16
      %28 = vsyncadd [#allocation5], %s27
      %s30 = sshll.u32 [#allocation4], 4
      %s31 = int_to_ptr.vmem [resolvable:$true] %s30
      %33 = dma.hbm_to_vmem [thread:$0]  %s2, 16, %s31, [#allocation5]
    $region13: #{vae_forward.7} parent=1 // pred_fallthru
      _
    // Predicated region
    $region14: #{vae_forward.7} parent=1 // pred_check
      _
    $region15: #{vae_forward.7} parent=1 // pred_check_branch
      %35 = sbr.rel (0) target = $region17
    $region16: #{vae_forward.7} parent=1 // pred_region
      %36 = dma.done [#allocation3], 128
    $region17: #{vae_forward.7} parent=1 // pred_fallthru
      _
    // Predicated region
    $region18: #{vae_forward.7} parent=1 // pred_check
      _
    $region19: #{vae_forward.7} parent=1 // pred_check_branch
      %38 = sbr.rel (0) target = $region21
    $region20: #{vae_forward.7} parent=1 // pred_region
      %39 = dma.done [#allocation5], 16
    $region21: #{vae_forward.7} parent=1 // pred_fallthru
      _
    %v41 = vld [vmem:[%s0] sm:$0xff]
    %v42 = vld [vmem:[%s0 + $0x8] sm:$0xff]
    %v43 = vld [vmem:[%s0 + $0x10] sm:$0xff]
    %v44 = vld [vmem:[%s0 + $0x18] sm:$0xff]
    %v45 = vld [vmem:[%s0 + $0x20] sm:$0xff]
    %v46 = vld [vmem:[%s0 + $0x28] sm:$0xff]
    %v47 = vld [vmem:[%s0 + $0x30] sm:$0xff]
    %v48 = vld [vmem:[%s0 + $0x38] sm:$0xff]
    %v49 = vld [vmem:[%s0 + $0x40] sm:$0xff]
    %v50 = vld [vmem:[%s0 + $0x48] sm:$0xff]
    %v51 = vld [vmem:[%s0 + $0x50] sm:$0xff]
    %v52 = vld [vmem:[%s0 + $0x58] sm:$0xff]
    %v53 = vld [vmem:[%s0 + $0x60] sm:$0xff]
    %v54 = vld [vmem:[%s0 + $0x68] sm:$0xff]
    %v55 = vld [vmem:[%s0 + $0x70] sm:$0xff]
    %v56 = vld [vmem:[%s0 + $0x78] sm:$0xff]
    %v57 = vpack.c.bf16 %v42, %v41
    %v58 = vpack.c.bf16 %v44, %v43
    %v59 = vpack.c.bf16 %v46, %v45
    %v60 = vpack.c.bf16 %v48, %v47
    %v61 = vpack.c.bf16 %v50, %v49
    %v62 = vpack.c.bf16 %v52, %v51
    %v63 = vpack.c.bf16 %v54, %v53
    %v64 = vpack.c.bf16 %v56, %v55
    %v65 = vld [vmem:[#allocation2] sm:$0xf]
    %v66 = vld [vmem:[#allocation2 + $0x4] sm:$0xf]
    %v67 = vld [vmem:[#allocation4] sm:$0x1]
    %v69 = vlaneseq
    %v70 = vshrl.u32 %v69, 7
    %v71 = vsub.s32 0, %v70
    %v72 = vrot.slane %v67, %v71
    %v76 = vunpack.c.l.b16 %v65
    %v77 = vunpack.c.l.b16 %v66
    %v78 = vpack.c.b16 %v77, %v76
    %vm80 = vcmask 130048
    %v82 = vsel %vm80, %v57, 0
    %v85 = vsel %vm80, %v58, 0
    %v88 = vsel %vm80, %v59, 0
    %v91 = vsel %vm80, %v60, 0
    %v94 = vsel %vm80, %v61, 0
    %v97 = vsel %vm80, %v62, 0
    %v100 = vsel %vm80, %v63, 0
    %v103 = vsel %vm80, %v64, 0
    %105 = vmatprep.subr.bf16.mxu0 0
    %106 = vmatpush1.bf16.msra.mxu0 0
    %107 = vmatprep.subr.bf16.mxu0 0
    %108 = vmatpush1.bf16.msra.mxu0 0
    %109 = vmatprep.subr.bf16.mxu0 0
    %110 = vmatpush1.bf16.msra.mxu0 0
    %111 = vmatprep.subr.bf16.mxu0 0
    %112 = vmatpush1.bf16.msra.mxu0 0
    %113 = vmatprep.subr.bf16.mxu0 0
    %114 = vmatpush1.bf16.msra.mxu0 0
    %115 = vmatprep.subr.bf16.mxu0 0
    %116 = vmatpush1.bf16.msra.mxu0 0
    %117 = vmatprep.subr.bf16.mxu0 0
    %118 = vmatpush1.bf16.msra.mxu0 0
    %119 = vmatprep.subr.bf16.mxu0 0
    %120 = vmatpush1.bf16.msra.mxu0 %v78
    %121 = vmatprep.subr.bf16.mxu0 0
    %122 = vmatpush2.bf16.msra.mxu0 0
    %123 = vmatprep.subr.bf16.mxu0 0
    %124 = vmatpush2.bf16.msra.mxu0 0
    %125 = vmatprep.subr.bf16.mxu0 0
    %126 = vmatpush2.bf16.msra.mxu0 0
    %127 = vmatprep.subr.bf16.mxu0 0
    %128 = vmatpush2.bf16.msra.mxu0 0
    %129 = vmatprep.subr.bf16.mxu0 0
    %130 = vmatpush2.bf16.msra.mxu0 0
    %131 = vmatprep.subr.bf16.mxu0 0
    %132 = vmatpush2.bf16.msra.mxu0 0
    %133 = vmatprep.subr.bf16.mxu0 0
    %134 = vmatpush2.bf16.msra.mxu0 0
    %135 = vmatprep.subr.bf16.mxu0 0
    %136 = vmatpush2.bf16.msra.mxu0 0
    %137 = vmatprep.mubr.bf16.mxu0 0
    %138 = vmatmul.mubr.bf16.gmra.mxu0 %v82
    %v139 = vpop.f32.mrf.mxu0
    %v140 = vadd.f32 %v72, %v139
    %v141 = vpop.f32.mrf.mxu0
    %v142 = vpop.f32.mrf.mxu0
    %v143 = vadd.f32 %v72, %v142
    %v144 = vpop.f32.mrf.mxu0
    %145 = vmatprep.mubr.bf16.mxu0 0
    %146 = vmatmul.mubr.bf16.gmra.mxu0 %v85
    %v147 = vpop.f32.mrf.mxu0
    %v148 = vadd.f32 %v72, %v147
    %v149 = vpop.f32.mrf.mxu0
    %v150 = vpop.f32.mrf.mxu0
    %v151 = vadd.f32 %v72, %v150
    %v152 = vpop.f32.mrf.mxu0
    %153 = vmatprep.mubr.bf16.mxu0 0
    %154 = vmatmul.mubr.bf16.gmra.mxu0 %v88
    %v155 = vpop.f32.mrf.mxu0
    %v156 = vadd.f32 %v72, %v155
    %v157 = vpop.f32.mrf.mxu0
    %v158 = vpop.f32.mrf.mxu0
    %v159 = vadd.f32 %v72, %v158
    %v160 = vpop.f32.mrf.mxu0
    %161 = vmatprep.mubr.bf16.mxu0 0
    %162 = vmatmul.mubr.bf16.gmra.mxu0 %v91
    %v163 = vpop.f32.mrf.mxu0
    %v164 = vadd.f32 %v72, %v163
    %v165 = vpop.f32.mrf.mxu0
    %v166 = vpop.f32.mrf.mxu0
    %v167 = vadd.f32 %v72, %v166
    %v168 = vpop.f32.mrf.mxu0
    %169 = vmatprep.mubr.bf16.mxu0 0
    %170 = vmatmul.mubr.bf16.gmra.mxu0 %v94
    %v171 = vpop.f32.mrf.mxu0
    %v172 = vadd.f32 %v72, %v171
    %v173 = vpop.f32.mrf.mxu0
    %v174 = vpop.f32.mrf.mxu0
    %v175 = vadd.f32 %v72, %v174
    %v176 = vpop.f32.mrf.mxu0
    %177 = vmatprep.mubr.bf16.mxu0 0
    %178 = vmatmul.mubr.bf16.gmra.mxu0 %v97
    %v179 = vpop.f32.mrf.mxu0
    %v180 = vadd.f32 %v72, %v179
    %v181 = vpop.f32.mrf.mxu0
    %v182 = vpop.f32.mrf.mxu0
    %v183 = vadd.f32 %v72, %v182
    %v184 = vpop.f32.mrf.mxu0
    %185 = vmatprep.mubr.bf16.mxu0 0
    %186 = vmatmul.mubr.bf16.gmra.mxu0 %v100
    %v187 = vpop.f32.mrf.mxu0
    %v188 = vadd.f32 %v72, %v187
    %v189 = vpop.f32.mrf.mxu0
    %v190 = vpop.f32.mrf.mxu0
    %v191 = vadd.f32 %v72, %v190
    %v192 = vpop.f32.mrf.mxu0
    %193 = vmatprep.mubr.bf16.mxu0 0
    %194 = vmatmul.mubr.bf16.gmra.mxu0 %v103
    %v195 = vpop.f32.mrf.mxu0
    %v196 = vadd.f32 %v72, %v195
    %v197 = vpop.f32.mrf.mxu0
    %v198 = vpop.f32.mrf.mxu0
    %v199 = vadd.f32 %v72, %v198
    %v200 = vpop.f32.mrf.mxu0
    %201 = vdwg.mxu0
    %v202 = vmax.f32 %v140, 0.0
    %v203 = vmax.f32 %v143, 0.0
    %v204 = vmax.f32 %v148, 0.0
    %v205 = vmax.f32 %v151, 0.0
    %v206 = vmax.f32 %v156, 0.0
    %v207 = vmax.f32 %v159, 0.0
    %v208 = vmax.f32 %v164, 0.0
    %v209 = vmax.f32 %v167, 0.0
    %v210 = vmax.f32 %v172, 0.0
    %v211 = vmax.f32 %v175, 0.0
    %v212 = vmax.f32 %v180, 0.0
    %v213 = vmax.f32 %v183, 0.0
    %v214 = vmax.f32 %v188, 0.0
    %v215 = vmax.f32 %v191, 0.0
    %v216 = vmax.f32 %v196, 0.0
    %v217 = vmax.f32 %v199, 0.0
    %v218 = vpack.c.bf16 %v203, %v202
    %v219 = vpack.c.bf16 %v205, %v204
    %v220 = vpack.c.bf16 %v207, %v206
    %v221 = vpack.c.bf16 %v209, %v208
    %v222 = vpack.c.bf16 %v211, %v210
    %v223 = vpack.c.bf16 %v213, %v212
    %v224 = vpack.c.bf16 %v215, %v214
    %v225 = vpack.c.bf16 %v217, %v216
    %v234 = vunpack.c.l.b16 %v218
    %v235 = vunpack.c.h.b16 %v218
    %v236 = vunpack.c.l.b16 %v219
    %v237 = vunpack.c.h.b16 %v219
    %v238 = vunpack.c.l.b16 %v220
    %v239 = vunpack.c.h.b16 %v220
    %v240 = vunpack.c.l.b16 %v221
    %v241 = vunpack.c.h.b16 %v221
    %v242 = vunpack.c.l.b16 %v222
    %v243 = vunpack.c.h.b16 %v222
    %v244 = vunpack.c.l.b16 %v223
    %v245 = vunpack.c.h.b16 %v223
    %v246 = vunpack.c.l.b16 %v224
    %v247 = vunpack.c.h.b16 %v224
    %v248 = vunpack.c.l.b16 %v225
    %v249 = vunpack.c.h.b16 %v225
    %v250 = vpack.c.b16 %v234, %v234
    %v251 = vpack.c.b16 %v235, %v235
    %v252 = vpack.c.b16 %v236, %v236
    %v253 = vpack.c.b16 %v237, %v237
    %v254 = vpack.c.b16 %v238, %v238
    %v255 = vpack.c.b16 %v239, %v239
    %v256 = vpack.c.b16 %v240, %v240
    %v257 = vpack.c.b16 %v241, %v241
    %v258 = vpack.c.b16 %v242, %v242
    %v259 = vpack.c.b16 %v243, %v243
    %v260 = vpack.c.b16 %v244, %v244
    %v261 = vpack.c.b16 %v245, %v245
    %v262 = vpack.c.b16 %v246, %v246
    %v263 = vpack.c.b16 %v247, %v247
    %v264 = vpack.c.b16 %v248, %v248
    %v265 = vpack.c.b16 %v249, %v249
    %vm282 = vcmask 519168
    %283 = vst.msk [vmem:[%s3] sm:$0xf] %vm282, %v250
    %284 = vst.msk [vmem:[%s3 + $0x4] sm:$0xf] %vm282, %v251
    %285 = vst.msk [vmem:[%s3 + $0x8] sm:$0xf] %vm282, %v252
    %286 = vst.msk [vmem:[%s3 + $0xc] sm:$0xf] %vm282, %v253
    %287 = vst.msk [vmem:[%s3 + $0x10] sm:$0xf] %vm282, %v254
    %288 = vst.msk [vmem:[%s3 + $0x14] sm:$0xf] %vm282, %v255
    %289 = vst.msk [vmem:[%s3 + $0x18] sm:$0xf] %vm282, %v256
    %290 = vst.msk [vmem:[%s3 + $0x1c] sm:$0xf] %vm282, %v257
    %291 = vst.msk [vmem:[%s3 + $0x20] sm:$0xf] %vm282, %v258
    %292 = vst.msk [vmem:[%s3 + $0x24] sm:$0xf] %vm282, %v259
    %293 = vst.msk [vmem:[%s3 + $0x28] sm:$0xf] %vm282, %v260
    %294 = vst.msk [vmem:[%s3 + $0x2c] sm:$0xf] %vm282, %v261
    %295 = vst.msk [vmem:[%s3 + $0x30] sm:$0xf] %vm282, %v262
    %296 = vst.msk [vmem:[%s3 + $0x34] sm:$0xf] %vm282, %v263
    %297 = vst.msk [vmem:[%s3 + $0x38] sm:$0xf] %vm282, %v264
    %298 = vst.msk [vmem:[%s3 + $0x3c] sm:$0xf] %vm282, %v265
    // Predicated region
    $region22: #{vae_forward.7} parent=1 // pred_check
      _
    $region23: #{vae_forward.7} parent=1 // pred_check_branch
      %300 = sbr.rel (0) target = $region25
    $region24: #{vae_forward.7} parent=1 // pred_region
      _
    $region25: #{vae_forward.7} parent=1 // pred_fallthru
      _
    // Predicated region
    $region26: #{vae_forward.7} parent=1 // pred_check
      _
    $region27: #{vae_forward.7} parent=1 // pred_check_branch
      %302 = sbr.rel (0) target = $region29
    $region28: #{vae_forward.7} parent=1 // pred_region
      _
    $region29: #{vae_forward.7} parent=1 // pred_fallthru
      _
    %303 = vsyncpa [#allocation3], 1
    %304 = vsyncpa [#allocation5], 1

// kernel: vae_forward.8
$region0: #{vae_forward.8}
  #allocation0 [shape = 'u32[]', space=smem, size = 0x4, offset = 0x4, fixed_abs, tag = 'smem constant byte address 0x4 - core index']
  #allocation1 [shape = 'u32[144,128]{1,0:T(1,128)}', space=vmem, size = 0x12000, scoped, tag = 'internal scratch']
  %s0 = inlined_call_operand.vmem [shape: bf16[32,1024], index: 0, kind: input, shape index: {}]
  %s1 = inlined_call_operand.hbm [shape: bf16[1024,128], index: 1, kind: input, shape index: {}]
  %s2 = inlined_call_operand.hbm [shape: f32[1,128], index: 2, kind: input, shape index: {}]
  %s3 = inlined_call_operand.vmem [shape: bf16[32,128], index: 3, kind: output, shape index: {}]
  %s4 = sld [smem:[#allocation0]]
  $region30: #{vae_forward.8} parent=0
    _
  %s6 = ssub.s32 1, %s4
  %s7 = scalar_select 0, %s6, %s4
  $region1: #{vae_forward.8} parent=0
    #allocation2 [shape = 'u8[262144]{0}', space=vmem, size = 0x40000, scoped, tag = 'input window, operand 1, single buffered']
    #allocation3 [shape = 's32[1]{0}', space=sflag, size = 0x4, scoped, tag = 'scoped memory for vae_forward.8']
    #allocation4 [shape = 'u8[512]{0}', space=vmem, size = 0x400, scoped, tag = 'input window, operand 2, single buffered']
    #allocation5 [shape = 's32[1]{0}', space=sflag, size = 0x4, scoped, tag = 'scoped memory for vae_forward.8']
    %8 = vsyncpa [#allocation3], 0
    %9 = vsyncpa [#allocation5], 0
    // Predicated region
    $region2: #{vae_forward.8} parent=1 // pred_check
      _
    $region3: #{vae_forward.8} parent=1 // pred_check_branch
      %11 = sbr.rel (0) target = $region5
    $region4: #{vae_forward.8} parent=1 // pred_region
      _
    $region5: #{vae_forward.8} parent=1 // pred_fallthru
      _
    // Predicated region
    $region6: #{vae_forward.8} parent=1 // pred_check
      _
    $region7: #{vae_forward.8} parent=1 // pred_check_branch
      %13 = sbr.rel (0) target = $region9
    $region8: #{vae_forward.8} parent=1 // pred_region
      %s15 = ssub.s32 8192, 8192
      %16 = vsyncadd [#allocation3], %s15
      %s17 = sshll.u32 [#allocation2], 4
      %s18 = int_to_ptr.vmem [resolvable:$true] %s17
      %23 = dma.hbm_to_vmem [thread:$0]  %s1, 8192, %s18, [#allocation3], 64, 64, 4
    $region9: #{vae_forward.8} parent=1 // pred_fallthru
      _
    // Predicated region
    $region10: #{vae_forward.8} parent=1 // pred_check
      _
    $region11: #{vae_forward.8} parent=1 // pred_check_branch
      %25 = sbr.rel (0) target = $region13
    $region12: #{vae_forward.8} parent=1 // pred_region
      %s27 = ssub.s32 16, 16
      %28 = vsyncadd [#allocation5], %s27
      %s30 = sshll.u32 [#allocation4], 4
      %s31 = int_to_ptr.vmem [resolvable:$true] %s30
      %33 = dma.hbm_to_vmem [thread:$0]  %s2, 16, %s31, [#allocation5]
    $region13: #{vae_forward.8} parent=1 // pred_fallthru
      _
    // Predicated region
    $region14: #{vae_forward.8} parent=1 // pred_check
      _
    $region15: #{vae_forward.8} parent=1 // pred_check_branch
      %35 = sbr.rel (0) target = $region17
    $region16: #{vae_forward.8} parent=1 // pred_region
      %36 = dma.done [#allocation3], 8192
    $region17: #{vae_forward.8} parent=1 // pred_fallthru
      _
    // Predicated region
    $region18: #{vae_forward.8} parent=1 // pred_check
      _
    $region19: #{vae_forward.8} parent=1 // pred_check_branch
      %38 = sbr.rel (0) target = $region21
    $region20: #{vae_forward.8} parent=1 // pred_region
      %39 = dma.done [#allocation5], 16
    $region21: #{vae_forward.8} parent=1 // pred_fallthru
      _
    %v41 = vld [vmem:[%s0] sm:$0xff]
    %v42 = vld [vmem:[%s0 + $0x8] sm:$0xff]
    %v43 = vld [vmem:[%s0 + $0x10] sm:$0xff]
    %v44 = vld [vmem:[%s0 + $0x18] sm:$0xff]
    %v45 = vld [vmem:[%s0 + $0x20] sm:$0xff]
    %v46 = vld [vmem:[%s0 + $0x28] sm:$0xff]
    %v47 = vld [vmem:[%s0 + $0x30] sm:$0xff]
    %v48 = vld [vmem:[%s0 + $0x38] sm:$0xff]
    %v49 = vld [vmem:[%s0 + $0x40] sm:$0xff]
    %v50 = vld [vmem:[%s0 + $0x48] sm:$0xff]
    %v51 = vld [vmem:[%s0 + $0x50] sm:$0xff]
    %v52 = vld [vmem:[%s0 + $0x58] sm:$0xff]
    %v53 = vld [vmem:[%s0 + $0x60] sm:$0xff]
    %v54 = vld [vmem:[%s0 + $0x68] sm:$0xff]
    %v55 = vld [vmem:[%s0 + $0x70] sm:$0xff]
    %v56 = vld [vmem:[%s0 + $0x78] sm:$0xff]
    %v57 = vld [vmem:[#allocation2] sm:$0xf]
    %v58 = vld [vmem:[#allocation2 + $0x4] sm:$0xf]
    %v59 = vld [vmem:[#allocation2 + $0x8] sm:$0xf]
    %v60 = vld [vmem:[#allocation2 + $0xc] sm:$0xf]
    %v61 = vld [vmem:[#allocation2 + $0x10] sm:$0xf]
    %v62 = vld [vmem:[#allocation2 + $0x14] sm:$0xf]
    %v63 = vld [vmem:[#allocation2 + $0x18] sm:$0xf]
    %v64 = vld [vmem:[#allocation2 + $0x1c] sm:$0xf]
    %v65 = vld [vmem:[#allocation2 + $0x20] sm:$0xf]
    %v66 = vld [vmem:[#allocation2 + $0x24] sm:$0xf]
    %v67 = vld [vmem:[#allocation2 + $0x28] sm:$0xf]
    %v68 = vld [vmem:[#allocation2 + $0x2c] sm:$0xf]
    %v69 = vld [vmem:[#allocation2 + $0x30] sm:$0xf]
    %v70 = vld [vmem:[#allocation2 + $0x34] sm:$0xf]
    %v71 = vld [vmem:[#allocation2 + $0x38] sm:$0xf]
    %v72 = vld [vmem:[#allocation2 + $0x3c] sm:$0xf]
    %v73 = vld [vmem:[#allocation2 + $0x40] sm:$0xf]
    %v74 = vld [vmem:[#allocation2 + $0x44] sm:$0xf]
    %v75 = vld [vmem:[#allocation2 + $0x48] sm:$0xf]
    %v76 = vld [vmem:[#allocation2 + $0x4c] sm:$0xf]
    %v77 = vld [vmem:[#allocation2 + $0x50] sm:$0xf]
    %v78 = vld [vmem:[#allocation2 + $0x54] sm:$0xf]
    %v79 = vld [vmem:[#allocation2 + $0x58] sm:$0xf]
    %v80 = vld [vmem:[#allocation2 + $0x5c] sm:$0xf]
    %v81 = vld [vmem:[#allocation2 + $0x60] sm:$0xf]
    %v82 = vld [vmem:[#allocation2 + $0x64] sm:$0xf]
    %v83 = vld [vmem:[#allocation2 + $0x68] sm:$0xf]
    %v84 = vld [vmem:[#allocation2 + $0x6c] sm:$0xf]
    %v85 = vld [vmem:[#allocation2 + $0x70] sm:$0xf]
    %v86 = vld [vmem:[#allocation2 + $0x74] sm:$0xf]
    %v87 = vld [vmem:[#allocation2 + $0x78] sm:$0xf]
    %v88 = vld [vmem:[#allocation2 + $0x7c] sm:$0xf]
    %v89 = vld [vmem:[#allocation2 + $0x80] sm:$0xf]
    %v90 = vld [vmem:[#allocation2 + $0x84] sm:$0xf]
    %v91 = vld [vmem:[#allocation2 + $0x88] sm:$0xf]
    %v92 = vld [vmem:[#allocation2 + $0x8c] sm:$0xf]
    %v93 = vld [vmem:[#allocation2 + $0x90] sm:$0xf]
    %v94 = vld [vmem:[#allocation2 + $0x94] sm:$0xf]
    %v95 = vld [vmem:[#allocation2 + $0x98] sm:$0xf]
    %v96 = vld [vmem:[#allocation2 + $0x9c] sm:$0xf]
    %v97 = vld [vmem:[#allocation2 + $0xa0] sm:$0xf]
    %v98 = vld [vmem:[#allocation2 + $0xa4] sm:$0xf]
    %v99 = vld [vmem:[#allocation2 + $0xa8] sm:$0xf]
    %v100 = vld [vmem:[#allocation2 + $0xac] sm:$0xf]
    %v101 = vld [vmem:[#allocation2 + $0xb0] sm:$0xf]
    %v102 = vld [vmem:[#allocation2 + $0xb4] sm:$0xf]
    %v103 = vld [vmem:[#allocation2 + $0xb8] sm:$0xf]
    %v104 = vld [vmem:[#allocation2 + $0xbc] sm:$0xf]
    %v105 = vld [vmem:[#allocation2 + $0xc0] sm:$0xf]
    %v106 = vld [vmem:[#allocation2 + $0xc4] sm:$0xf]
    %v107 = vld [vmem:[#allocation2 + $0xc8] sm:$0xf]
    %v108 = vld [vmem:[#allocation2 + $0xcc] sm:$0xf]
    %v109 = vld [vmem:[#allocation2 + $0xd0] sm:$0xf]
    %v110 = vld [vmem:[#allocation2 + $0xd4] sm:$0xf]
    %v111 = vld [vmem:[#allocation2 + $0xd8] sm:$0xf]
    %v112 = vld [vmem:[#allocation2 + $0xdc] sm:$0xf]
    %v113 = vld [vmem:[#allocation2 + $0xe0] sm:$0xf]
    %v114 = vld [vmem:[#allocation2 + $0xe4] sm:$0xf]
    %v115 = vld [vmem:[#allocation2 + $0xe8] sm:$0xf]
    %v116 = vld [vmem:[#allocation2 + $0xec] sm:$0xf]
    %v117 = vld [vmem:[#allocation2 + $0xf0] sm:$0xf]
    %v118 = vld [vmem:[#allocation2 + $0xf4] sm:$0xf]
    %v119 = vld [vmem:[#allocation2 + $0xf8] sm:$0xf]
    %v120 = vld [vmem:[#allocation2 + $0xfc] sm:$0xf]
    %v121 = vld [vmem:[#allocation2 + $0x100] sm:$0xf]
    %v122 = vld [vmem:[#allocation2 + $0x104] sm:$0xf]
    %v123 = vld [vmem:[#allocation2 + $0x108] sm:$0xf]
    %v124 = vld [vmem:[#allocation2 + $0x10c] sm:$0xf]
    %v125 = vld [vmem:[#allocation2 + $0x110] sm:$0xf]
    %v126 = vld [vmem:[#allocation2 + $0x114] sm:$0xf]
    %v127 = vld [vmem:[#allocation2 + $0x118] sm:$0xf]
    %v128 = vld [vmem:[#allocation2 + $0x11c] sm:$0xf]
    %v129 = vld [vmem:[#allocation2 + $0x120] sm:$0xf]
    %v130 = vld [vmem:[#allocation2 + $0x124] sm:$0xf]
    %v131 = vld [vmem:[#allocation2 + $0x128] sm:$0xf]
    %v132 = vld [vmem:[#allocation2 + $0x12c] sm:$0xf]
    %v133 = vld [vmem:[#allocation2 + $0x130] sm:$0xf]
    %v134 = vld [vmem:[#allocation2 + $0x134] sm:$0xf]
    %v135 = vld [vmem:[#allocation2 + $0x138] sm:$0xf]
    %v136 = vld [vmem:[#allocation2 + $0x13c] sm:$0xf]
    %v137 = vld [vmem:[#allocation2 + $0x140] sm:$0xf]
    %v138 = vld [vmem:[#allocation2 + $0x144] sm:$0xf]
    %v139 = vld [vmem:[#allocation2 + $0x148] sm:$0xf]
    %v140 = vld [vmem:[#allocation2 + $0x14c] sm:$0xf]
    %v141 = vld [vmem:[#allocation2 + $0x150] sm:$0xf]
    %v142 = vld [vmem:[#allocation2 + $0x154] sm:$0xf]
    %v143 = vld [vmem:[#allocation2 + $0x158] sm:$0xf]
    %v144 = vld [vmem:[#allocation2 + $0x15c] sm:$0xf]
    %v145 = vld [vmem:[#allocation2 + $0x160] sm:$0xf]
    %v146 = vld [vmem:[#allocation2 + $0x164] sm:$0xf]
    %v147 = vld [vmem:[#allocation2 + $0x168] sm:$0xf]
    %v148 = vld [vmem:[#allocation2 + $0x16c] sm:$0xf]
    %v149 = vld [vmem:[#allocation2 + $0x170] sm:$0xf]
    %v150 = vld [vmem:[#allocation2 + $0x174] sm:$0xf]
    %v151 = vld [vmem:[#allocation2 + $0x178] sm:$0xf]
    %v152 = vld [vmem:[#allocation2 + $0x17c] sm:$0xf]
    %v153 = vld [vmem:[#allocation2 + $0x180] sm:$0xf]
    %v154 = vld [vmem:[#allocation2 + $0x184] sm:$0xf]
    %v155 = vld [vmem:[#allocation2 + $0x188] sm:$0xf]
    %v156 = vld [vmem:[#allocation2 + $0x18c] sm:$0xf]
    %v157 = vld [vmem:[#allocation2 + $0x190] sm:$0xf]
    %v158 = vld [vmem:[#allocation2 + $0x194] sm:$0xf]
    %v159 = vld [vmem:[#allocation2 + $0x198] sm:$0xf]
    %v160 = vld [vmem:[#allocation2 + $0x19c] sm:$0xf]
    %v161 = vld [vmem:[#allocation2 + $0x1a0] sm:$0xf]
    %v162 = vld [vmem:[#allocation2 + $0x1a4] sm:$0xf]
    %v163 = vld [vmem:[#allocation2 + $0x1a8] sm:$0xf]
    %v164 = vld [vmem:[#allocation2 + $0x1ac] sm:$0xf]
    %v165 = vld [vmem:[#allocation2 + $0x1b0] sm:$0xf]
    %v166 = vld [vmem:[#allocation2 + $0x1b4] sm:$0xf]
    %v167 = vld [vmem:[#allocation2 + $0x1b8] sm:$0xf]
    %v168 = vld [vmem:[#allocation2 + $0x1bc] sm:$0xf]
    %v169 = vld [vmem:[#allocation2 + $0x1c0] sm:$0xf]
    %v170 = vld [vmem:[#allocation2 + $0x1c4] sm:$0xf]
    %v171 = vld [vmem:[#allocation2 + $0x1c8] sm:$0xf]
    %v172 = vld [vmem:[#allocation2 + $0x1cc] sm:$0xf]
    %v173 = vld [vmem:[#allocation2 + $0x1d0] sm:$0xf]
    %v174 = vld [vmem:[#allocation2 + $0x1d4] sm:$0xf]
    %v175 = vld [vmem:[#allocation2 + $0x1d8] sm:$0xf]
    %v176 = vld [vmem:[#allocation2 + $0x1dc] sm:$0xf]
    %v177 = vld [vmem:[#allocation2 + $0x1e0] sm:$0xf]
    %v178 = vld [vmem:[#allocation2 + $0x1e4] sm:$0xf]
    %v179 = vld [vmem:[#allocation2 + $0x1e8] sm:$0xf]
    %v180 = vld [vmem:[#allocation2 + $0x1ec] sm:$0xf]
    %v181 = vld [vmem:[#allocation2 + $0x1f0] sm:$0xf]
    %v182 = vld [vmem:[#allocation2 + $0x1f4] sm:$0xf]
    %v183 = vld [vmem:[#allocation2 + $0x1f8] sm:$0xf]
    %v184 = vld [vmem:[#allocation2 + $0x1fc] sm:$0xf]
    %v185 = vld [vmem:[#allocation4] sm:$0x1]
    %v187 = vlaneseq
    %v188 = vshrl.u32 %v187, 7
    %v189 = vsub.s32 0, %v188
    %v190 = vrot.slane %v185, %v189
    %v208 = vunpack.c.l.b16 %v41
    %v209 = vunpack.c.h.b16 %v41
    %v210 = vunpack.c.l.b16 %v42
    %v211 = vunpack.c.h.b16 %v42
    %v212 = vunpack.c.l.b16 %v43
    %v213 = vunpack.c.h.b16 %v43
    %v214 = vunpack.c.l.b16 %v44
    %v215 = vunpack.c.h.b16 %v44
    %v216 = vunpack.c.l.b16 %v45
    %v217 = vunpack.c.h.b16 %v45
    %v218 = vunpack.c.l.b16 %v46
    %v219 = vunpack.c.h.b16 %v46
    %v220 = vunpack.c.l.b16 %v47
    %v221 = vunpack.c.h.b16 %v47
    %v222 = vunpack.c.l.b16 %v48
    %v223 = vunpack.c.h.b16 %v48
    %v224 = vunpack.c.l.b16 %v49
    %v225 = vunpack.c.h.b16 %v49
    %v226 = vunpack.c.l.b16 %v50
    %v227 = vunpack.c.h.b16 %v50
    %v228 = vunpack.c.l.b16 %v51
    %v229 = vunpack.c.h.b16 %v51
    %v230 = vunpack.c.l.b16 %v52
    %v231 = vunpack.c.h.b16 %v52
    %v232 = vunpack.c.l.b16 %v53
    %v233 = vunpack.c.h.b16 %v53
    %v234 = vunpack.c.l.b16 %v54
    %v235 = vunpack.c.h.b16 %v54
    %v236 = vunpack.c.l.b16 %v55
    %v237 = vunpack.c.h.b16 %v55
    %v238 = vunpack.c.l.b16 %v56
    %v239 = vunpack.c.h.b16 %v56
    %v240 = vpack.c.b16 %v216, %v208
    %v241 = vpack.c.b16 %v217, %v209
    %v242 = vpack.c.b16 %v218, %v210
    %v243 = vpack.c.b16 %v219, %v211
    %v244 = vpack.c.b16 %v220, %v212
    %v245 = vpack.c.b16 %v221, %v213
    %v246 = vpack.c.b16 %v222, %v214
    %v247 = vpack.c.b16 %v223, %v215
    %v248 = vpack.c.b16 %v232, %v224
    %v249 = vpack.c.b16 %v233, %v225
    %v250 = vpack.c.b16 %v234, %v226
    %v251 = vpack.c.b16 %v235, %v227
    %v252 = vpack.c.b16 %v236, %v228
    %v253 = vpack.c.b16 %v237, %v229
    %v254 = vpack.c.b16 %v238, %v230
    %v255 = vpack.c.b16 %v239, %v231
    %v400 = vunpack.c.l.b16 %v57
    %v401 = vunpack.c.l.b16 %v58
    %v402 = vunpack.c.l.b16 %v59
    %v403 = vunpack.c.l.b16 %v60
    %v404 = vunpack.c.l.b16 %v61
    %v405 = vunpack.c.l.b16 %v62
    %v406 = vunpack.c.l.b16 %v63
    %v407 = vunpack.c.l.b16 %v64
    %v408 = vunpack.c.l.b16 %v65
    %v409 = vunpack.c.l.b16 %v66
    %v410 = vunpack.c.l.b16 %v67
    %v411 = vunpack.c.l.b16 %v68
    %v412 = vunpack.c.l.b16 %v69
    %v413 = vunpack.c.l.b16 %v70
    %v414 = vunpack.c.l.b16 %v71
    %v415 = vunpack.c.l.b16 %v72
    %v416 = vunpack.c.l.b16 %v73
    %v417 = vunpack.c.l.b16 %v74
    %v418 = vunpack.c.l.b16 %v75
    %v419 = vunpack.c.l.b16 %v76
    %v420 = vunpack.c.l.b16 %v77
    %v421 = vunpack.c.l.b16 %v78
    %v422 = vunpack.c.l.b16 %v79
    %v423 = vunpack.c.l.b16 %v80
    %v424 = vunpack.c.l.b16 %v81
    %v425 = vunpack.c.l.b16 %v82
    %v426 = vunpack.c.l.b16 %v83
    %v427 = vunpack.c.l.b16 %v84
    %v428 = vunpack.c.l.b16 %v85
    %v429 = vunpack.c.l.b16 %v86
    %v430 = vunpack.c.l.b16 %v87
    %v431 = vunpack.c.l.b16 %v88
    %v432 = vunpack.c.l.b16 %v89
    %v433 = vunpack.c.l.b16 %v90
    %v434 = vunpack.c.l.b16 %v91
    %v435 = vunpack.c.l.b16 %v92
    %v436 = vunpack.c.l.b16 %v93
    %v437 = vunpack.c.l.b16 %v94
    %v438 = vunpack.c.l.b16 %v95
    %v439 = vunpack.c.l.b16 %v96
    %v440 = vunpack.c.l.b16 %v97
    %v441 = vunpack.c.l.b16 %v98
    %v442 = vunpack.c.l.b16 %v99
    %v443 = vunpack.c.l.b16 %v100
    %v444 = vunpack.c.l.b16 %v101
    %v445 = vunpack.c.l.b16 %v102
    %v446 = vunpack.c.l.b16 %v103
    %v447 = vunpack.c.l.b16 %v104
    %v448 = vunpack.c.l.b16 %v105
    %v449 = vunpack.c.l.b16 %v106
    %v450 = vunpack.c.l.b16 %v107
    %v451 = vunpack.c.l.b16 %v108
    %v452 = vunpack.c.l.b16 %v109
    %v453 = vunpack.c.l.b16 %v110
    %v454 = vunpack.c.l.b16 %v111
    %v455 = vunpack.c.l.b16 %v112
    %v456 = vunpack.c.l.b16 %v113
    %v457 = vunpack.c.l.b16 %v114
    %v458 = vunpack.c.l.b16 %v115
    %v459 = vunpack.c.l.b16 %v116
    %v460 = vunpack.c.l.b16 %v117
    %v461 = vunpack.c.l.b16 %v118
    %v462 = vunpack.c.l.b16 %v119
    %v463 = vunpack.c.l.b16 %v120
    %v464 = vunpack.c.l.b16 %v121
    %v465 = vunpack.c.l.b16 %v122
    %v466 = vunpack.c.l.b16 %v123
    %v467 = vunpack.c.l.b16 %v124
    %v468 = vunpack.c.l.b16 %v125
    %v469 = vunpack.c.l.b16 %v126
    %v470 = vunpack.c.l.b16 %v127
    %v471 = vunpack.c.l.b16 %v128
    %v472 = vunpack.c.l.b16 %v129
    %v473 = vunpack.c.l.b16 %v130
    %v474 = vunpack.c.l.b16 %v131
    %v475 = vunpack.c.l.b16 %v132
    %v476 = vunpack.c.l.b16 %v133
    %v477 = vunpack.c.l.b16 %v134
    %v478 = vunpack.c.l.b16 %v135
    %v479 = vunpack.c.l.b16 %v136
    %v480 = vunpack.c.l.b16 %v137
    %v481 = vunpack.c.l.b16 %v138
    %v482 = vunpack.c.l.b16 %v139
    %v483 = vunpack.c.l.b16 %v140
    %v484 = vunpack.c.l.b16 %v141
    %v485 = vunpack.c.l.b16 %v142
    %v486 = vunpack.c.l.b16 %v143
    %v487 = vunpack.c.l.b16 %v144
    %v488 = vunpack.c.l.b16 %v145
    %v489 = vunpack.c.l.b16 %v146
    %v490 = vunpack.c.l.b16 %v147
    %v491 = vunpack.c.l.b16 %v148
    %v492 = vunpack.c.l.b16 %v149
    %v493 = vunpack.c.l.b16 %v150
    %v494 = vunpack.c.l.b16 %v151
    %v495 = vunpack.c.l.b16 %v152
    %v496 = vunpack.c.l.b16 %v153
    %v497 = vunpack.c.l.b16 %v154
    %v498 = vunpack.c.l.b16 %v155
    %v499 = vunpack.c.l.b16 %v156
    %v500 = vunpack.c.l.b16 %v157
    %v501 = vunpack.c.l.b16 %v158
    %v502 = vunpack.c.l.b16 %v159
    %v503 = vunpack.c.l.b16 %v160
    %v504 = vunpack.c.l.b16 %v161
    %v505 = vunpack.c.l.b16 %v162
    %v506 = vunpack.c.l.b16 %v163
    %v507 = vunpack.c.l.b16 %v164
    %v508 = vunpack.c.l.b16 %v165
    %v509 = vunpack.c.l.b16 %v166
    %v510 = vunpack.c.l.b16 %v167
    %v511 = vunpack.c.l.b16 %v168
    %v512 = vunpack.c.l.b16 %v169
    %v513 = vunpack.c.l.b16 %v170
    %v514 = vunpack.c.l.b16 %v171
    %v515 = vunpack.c.l.b16 %v172
    %v516 = vunpack.c.l.b16 %v173
    %v517 = vunpack.c.l.b16 %v174
    %v518 = vunpack.c.l.b16 %v175
    %v519 = vunpack.c.l.b16 %v176
    %v520 = vunpack.c.l.b16 %v177
    %v521 = vunpack.c.l.b16 %v178
    %v522 = vunpack.c.l.b16 %v179
    %v523 = vunpack.c.l.b16 %v180
    %v524 = vunpack.c.l.b16 %v181
    %v525 = vunpack.c.l.b16 %v182
    %v526 = vunpack.c.l.b16 %v183
    %v527 = vunpack.c.l.b16 %v184
    %v528 = vpack.c.b16 %v401, %v400
    %v529 = vpack.c.b16 %v403, %v402
    %v530 = vpack.c.b16 %v405, %v404
    %v531 = vpack.c.b16 %v407, %v406
    %v532 = vpack.c.b16 %v409, %v408
    %v533 = vpack.c.b16 %v411, %v410
    %v534 = vpack.c.b16 %v413, %v412
    %v535 = vpack.c.b16 %v415, %v414
    %v536 = vpack.c.b16 %v417, %v416
    %v537 = vpack.c.b16 %v419, %v418
    %v538 = vpack.c.b16 %v421, %v420
    %v539 = vpack.c.b16 %v423, %v422
    %v540 = vpack.c.b16 %v425, %v424
    %v541 = vpack.c.b16 %v427, %v426
    %v542 = vpack.c.b16 %v429, %v428
    %v543 = vpack.c.b16 %v431, %v430
    %v544 = vpack.c.b16 %v433, %v432
    %v545 = vpack.c.b16 %v435, %v434
    %v546 = vpack.c.b16 %v437, %v436
    %v547 = vpack.c.b16 %v439, %v438
    %v548 = vpack.c.b16 %v441, %v440
    %v549 = vpack.c.b16 %v443, %v442
    %v550 = vpack.c.b16 %v445, %v444
    %v551 = vpack.c.b16 %v447, %v446
    %v552 = vpack.c.b16 %v449, %v448
    %v553 = vpack.c.b16 %v451, %v450
    %v554 = vpack.c.b16 %v453, %v452
    %v555 = vpack.c.b16 %v455, %v454
    %v556 = vpack.c.b16 %v457, %v456
    %v557 = vpack.c.b16 %v459, %v458
    %v558 = vpack.c.b16 %v461, %v460
    %v559 = vpack.c.b16 %v463, %v462
    %v560 = vpack.c.b16 %v465, %v464
    %v561 = vpack.c.b16 %v467, %v466
    %v562 = vpack.c.b16 %v469, %v468
    %v563 = vpack.c.b16 %v471, %v470
    %v564 = vpack.c.b16 %v473, %v472
    %v565 = vpack.c.b16 %v475, %v474
    %v566 = vpack.c.b16 %v477, %v476
    %v567 = vpack.c.b16 %v479, %v478
    %v568 = vpack.c.b16 %v481, %v480
    %v569 = vpack.c.b16 %v483, %v482
    %v570 = vpack.c.b16 %v485, %v484
    %v571 = vpack.c.b16 %v487, %v486
    %v572 = vpack.c.b16 %v489, %v488
    %v573 = vpack.c.b16 %v491, %v490
    %v574 = vpack.c.b16 %v493, %v492
    %v575 = vpack.c.b16 %v495, %v494
    %v576 = vpack.c.b16 %v497, %v496
    %v577 = vpack.c.b16 %v499, %v498
    %v578 = vpack.c.b16 %v501, %v500
    %v579 = vpack.c.b16 %v503, %v502
    %v580 = vpack.c.b16 %v505, %v504
    %v581 = vpack.c.b16 %v507, %v506
    %v582 = vpack.c.b16 %v509, %v508
    %v583 = vpack.c.b16 %v511, %v510
    %v584 = vpack.c.b16 %v513, %v512
    %v585 = vpack.c.b16 %v515, %v514
    %v586 = vpack.c.b16 %v517, %v516
    %v587 = vpack.c.b16 %v519, %v518
    %v588 = vpack.c.b16 %v521, %v520
    %v589 = vpack.c.b16 %v523, %v522
    %v590 = vpack.c.b16 %v525, %v524
    %v591 = vpack.c.b16 %v527, %v526
    %656 = vmatprep.subr.bf16.mxu0 0
    %657 = vmatpush1.bf16.msra.mxu0 %v535
    %658 = vmatprep.subr.bf16.mxu0 0
    %659 = vmatpush1.bf16.msra.mxu0 %v534
    %660 = vmatprep.subr.bf16.mxu0 0
    %661 = vmatpush1.bf16.msra.mxu0 %v533
    %662 = vmatprep.subr.bf16.mxu0 0
    %663 = vmatpush1.bf16.msra.mxu0 %v532
    %664 = vmatprep.subr.bf16.mxu0 0
    %665 = vmatpush1.bf16.msra.mxu0 %v531
    %666 = vmatprep.subr.bf16.mxu0 0
    %667 = vmatpush1.bf16.msra.mxu0 %v530
    %668 = vmatprep.subr.bf16.mxu0 0
    %669 = vmatpush1.bf16.msra.mxu0 %v529
    %670 = vmatprep.subr.bf16.mxu0 0
    %671 = vmatpush1.bf16.msra.mxu0 %v528
    %672 = vmatprep.subr.bf16.mxu0 0
    %673 = vmatpush2.bf16.msra.mxu0 %v543
    %674 = vmatprep.subr.bf16.mxu0 0
    %675 = vmatpush2.bf16.msra.mxu0 %v542
    %676 = vmatprep.subr.bf16.mxu0 0
    %677 = vmatpush2.bf16.msra.mxu0 %v541
    %678 = vmatprep.subr.bf16.mxu0 0
    %679 = vmatpush2.bf16.msra.mxu0 %v540
    %680 = vmatprep.subr.bf16.mxu0 0
    %681 = vmatpush2.bf16.msra.mxu0 %v539
    %682 = vmatprep.subr.bf16.mxu0 0
    %683 = vmatpush2.bf16.msra.mxu0 %v538
    %684 = vmatprep.subr.bf16.mxu0 0
    %685 = vmatpush2.bf16.msra.mxu0 %v537
    %686 = vmatprep.subr.bf16.mxu0 0
    %687 = vmatpush2.bf16.msra.mxu0 %v536
    %688 = vmatprep.mubr.bf16.mxu0 %v241
    %689 = vmatmul.mubr.bf16.gmra.mxu0 %v240
    %v690 = vpop.f32.mrf.mxu0
    %v691 = vadd.f32 %v190, %v690
    %v692 = vpop.f32.mrf.mxu0
    %v693 = vpop.f32.mrf.mxu0
    %v694 = vadd.f32 %v190, %v693
    %v695 = vpop.f32.mrf.mxu0
    %696 = vmatprep.mubr.bf16.mxu0 %v249
    %697 = vmatmul.mubr.bf16.gmra.mxu0 %v248
    %v698 = vpop.f32.mrf.mxu0
    %v699 = vadd.f32 %v190, %v698
    %v700 = vpop.f32.mrf.mxu0
    %v701 = vpop.f32.mrf.mxu0
    %v702 = vadd.f32 %v190, %v701
    %v703 = vpop.f32.mrf.mxu0
    %704 = vdwg.mxu0
    %705 = vmatprep.subr.bf16.mxu0 0
    %706 = vmatpush1.bf16.msra.mxu0 %v551
    %707 = vmatprep.subr.bf16.mxu0 0
    %708 = vmatpush1.bf16.msra.mxu0 %v550
    %709 = vmatprep.subr.bf16.mxu0 0
    %710 = vmatpush1.bf16.msra.mxu0 %v549
    %711 = vmatprep.subr.bf16.mxu0 0
    %712 = vmatpush1.bf16.msra.mxu0 %v548
    %713 = vmatprep.subr.bf16.mxu0 0
    %714 = vmatpush1.bf16.msra.mxu0 %v547
    %715 = vmatprep.subr.bf16.mxu0 0
    %716 = vmatpush1.bf16.msra.mxu0 %v546
    %717 = vmatprep.subr.bf16.mxu0 0
    %718 = vmatpush1.bf16.msra.mxu0 %v545
    %719 = vmatprep.subr.bf16.mxu0 0
    %720 = vmatpush1.bf16.msra.mxu0 %v544
    %721 = vmatprep.subr.bf16.mxu0 0
    %722 = vmatpush2.bf16.msra.mxu0 %v559
    %723 = vmatprep.subr.bf16.mxu0 0
    %724 = vmatpush2.bf16.msra.mxu0 %v558
    %725 = vmatprep.subr.bf16.mxu0 0
    %726 = vmatpush2.bf16.msra.mxu0 %v557
    %727 = vmatprep.subr.bf16.mxu0 0
    %728 = vmatpush2.bf16.msra.mxu0 %v556
    %729 = vmatprep.subr.bf16.mxu0 0
    %730 = vmatpush2.bf16.msra.mxu0 %v555
    %731 = vmatprep.subr.bf16.mxu0 0
    %732 = vmatpush2.bf16.msra.mxu0 %v554
    %733 = vmatprep.subr.bf16.mxu0 0
    %734 = vmatpush2.bf16.msra.mxu0 %v553
    %735 = vmatprep.subr.bf16.mxu0 0
    %736 = vmatpush2.bf16.msra.mxu0 %v552
    %737 = vmatprep.mubr.bf16.mxu0 %v243
    %738 = vmatmul.mubr.bf16.gmra.mxu0 %v242
    %v739 = vpop.f32.mrf.mxu0
    %v740 = vadd.f32 %v691, %v739
    %v741 = vpop.f32.mrf.mxu0
    %v742 = vpop.f32.mrf.mxu0
    %v743 = vadd.f32 %v694, %v742
    %v744 = vpop.f32.mrf.mxu0
    %745 = vmatprep.mubr.bf16.mxu0 %v251
    %746 = vmatmul.mubr.bf16.gmra.mxu0 %v250
    %v747 = vpop.f32.mrf.mxu0
    %v748 = vadd.f32 %v699, %v747
    %v749 = vpop.f32.mrf.mxu0
    %v750 = vpop.f32.mrf.mxu0
    %v751 = vadd.f32 %v702, %v750
    %v752 = vpop.f32.mrf.mxu0
    %753 = vdwg.mxu0
    %754 = vmatprep.subr.bf16.mxu0 0
    %755 = vmatpush1.bf16.msra.mxu0 %v567
    %756 = vmatprep.subr.bf16.mxu0 0
    %757 = vmatpush1.bf16.msra.mxu0 %v566
    %758 = vmatprep.subr.bf16.mxu0 0
    %759 = vmatpush1.bf16.msra.mxu0 %v565
    %760 = vmatprep.subr.bf16.mxu0 0
    %761 = vmatpush1.bf16.msra.mxu0 %v564
    %762 = vmatprep.subr.bf16.mxu0 0
    %763 = vmatpush1.bf16.msra.mxu0 %v563
    %764 = vmatprep.subr.bf16.mxu0 0
    %765 = vmatpush1.bf16.msra.mxu0 %v562
    %766 = vmatprep.subr.bf16.mxu0 0
    %767 = vmatpush1.bf16.msra.mxu0 %v561
    %768 = vmatprep.subr.bf16.mxu0 0
    %769 = vmatpush1.bf16.msra.mxu0 %v560
    %770 = vmatprep.subr.bf16.mxu0 0
    %771 = vmatpush2.bf16.msra.mxu0 %v575
    %772 = vmatprep.subr.bf16.mxu0 0
    %773 = vmatpush2.bf16.msra.mxu0 %v574
    %774 = vmatprep.subr.bf16.mxu0 0
    %775 = vmatpush2.bf16.msra.mxu0 %v573
    %776 = vmatprep.subr.bf16.mxu0 0
    %777 = vmatpush2.bf16.msra.mxu0 %v572
    %778 = vmatprep.subr.bf16.mxu0 0
    %779 = vmatpush2.bf16.msra.mxu0 %v571
    %780 = vmatprep.subr.bf16.mxu0 0
    %781 = vmatpush2.bf16.msra.mxu0 %v570
    %782 = vmatprep.subr.bf16.mxu0 0
    %783 = vmatpush2.bf16.msra.mxu0 %v569
    %784 = vmatprep.subr.bf16.mxu0 0
    %785 = vmatpush2.bf16.msra.mxu0 %v568
    %786 = vmatprep.mubr.bf16.mxu0 %v245
    %787 = vmatmul.mubr.bf16.gmra.mxu0 %v244
    %v788 = vpop.f32.mrf.mxu0
    %v789 = vadd.f32 %v740, %v788
    %v790 = vpop.f32.mrf.mxu0
    %v791 = vpop.f32.mrf.mxu0
    %v792 = vadd.f32 %v743, %v791
    %v793 = vpop.f32.mrf.mxu0
    %794 = vmatprep.mubr.bf16.mxu0 %v253
    %795 = vmatmul.mubr.bf16.gmra.mxu0 %v252
    %v796 = vpop.f32.mrf.mxu0
    %v797 = vadd.f32 %v748, %v796
    %v798 = vpop.f32.mrf.mxu0
    %v799 = vpop.f32.mrf.mxu0
    %v800 = vadd.f32 %v751, %v799
    %v801 = vpop.f32.mrf.mxu0
    %802 = vdwg.mxu0
    %803 = vmatprep.subr.bf16.mxu0 0
    %804 = vmatpush1.bf16.msra.mxu0 %v583
    %805 = vmatprep.subr.bf16.mxu0 0
    %806 = vmatpush1.bf16.msra.mxu0 %v582
    %807 = vmatprep.subr.bf16.mxu0 0
    %808 = vmatpush1.bf16.msra.mxu0 %v581
    %809 = vmatprep.subr.bf16.mxu0 0
    %810 = vmatpush1.bf16.msra.mxu0 %v580
    %811 = vmatprep.subr.bf16.mxu0 0
    %812 = vmatpush1.bf16.msra.mxu0 %v579
    %813 = vmatprep.subr.bf16.mxu0 0
    %814 = vmatpush1.bf16.msra.mxu0 %v578
    %815 = vmatprep.subr.bf16.mxu0 0
    %816 = vmatpush1.bf16.msra.mxu0 %v577
    %817 = vmatprep.subr.bf16.mxu0 0
    %818 = vmatpush1.bf16.msra.mxu0 %v576
    %819 = vmatprep.subr.bf16.mxu0 0
    %820 = vmatpush2.bf16.msra.mxu0 %v591
    %821 = vmatprep.subr.bf16.mxu0 0
    %822 = vmatpush2.bf16.msra.mxu0 %v590
    %823 = vmatprep.subr.bf16.mxu0 0
    %824 = vmatpush2.bf16.msra.mxu0 %v589
    %825 = vmatprep.subr.bf16.mxu0 0
    %826 = vmatpush2.bf16.msra.mxu0 %v588
    %827 = vmatprep.subr.bf16.mxu0 0
    %828 = vmatpush2.bf16.msra.mxu0 %v587
    %829 = vmatprep.subr.bf16.mxu0 0
    %830 = vmatpush2.bf16.msra.mxu0 %v586
    %831 = vmatprep.subr.bf16.mxu0 0
    %832 = vmatpush2.bf16.msra.mxu0 %v585
    %833 = vmatprep.subr.bf16.mxu0 0
    %834 = vmatpush2.bf16.msra.mxu0 %v584
    %835 = vmatprep.mubr.bf16.mxu0 %v247
    %836 = vmatmul.mubr.bf16.gmra.mxu0 %v246
    %v837 = vpop.f32.mrf.mxu0
    %v838 = vadd.f32 %v789, %v837
    %v839 = vpop.f32.mrf.mxu0
    %v840 = vpop.f32.mrf.mxu0
    %v841 = vadd.f32 %v792, %v840
    %v842 = vpop.f32.mrf.mxu0
    %843 = vmatprep.mubr.bf16.mxu0 %v255
    %844 = vmatmul.mubr.bf16.gmra.mxu0 %v254
    %v845 = vpop.f32.mrf.mxu0
    %v846 = vadd.f32 %v797, %v845
    %v847 = vpop.f32.mrf.mxu0
    %v848 = vpop.f32.mrf.mxu0
    %v849 = vadd.f32 %v800, %v848
    %v850 = vpop.f32.mrf.mxu0
    %851 = vdwg.mxu0
    %v852 = vmax.f32 %v838, 0.0
    %v853 = vmax.f32 %v841, 0.0
    %v854 = vmax.f32 %v846, 0.0
    %v855 = vmax.f32 %v849, 0.0
    %v856 = vpack.c.bf16 %v853, %v852
    %v857 = vpack.c.bf16 %v855, %v854
    %v860 = vunpack.c.l.b16 %v856
    %v861 = vunpack.c.h.b16 %v856
    %v862 = vunpack.c.l.b16 %v857
    %v863 = vunpack.c.h.b16 %v857
    %v864 = vpack.c.b16 %v860, %v860
    %v865 = vpack.c.b16 %v861, %v861
    %v866 = vpack.c.b16 %v862, %v862
    %v867 = vpack.c.b16 %v863, %v863
    %872 = vst [vmem:[%s3] sm:$0xf] %v864
    %873 = vst [vmem:[%s3 + $0x4] sm:$0xf] %v865
    %874 = vst [vmem:[%s3 + $0x8] sm:$0xf] %v866
    %875 = vst [vmem:[%s3 + $0xc] sm:$0xf] %v867
    // Predicated region
    $region22: #{vae_forward.8} parent=1 // pred_check
      _
    $region23: #{vae_forward.8} parent=1 // pred_check_branch
      %877 = sbr.rel (0) target = $region25
    $region24: #{vae_forward.8} parent=1 // pred_region
      _
    $region25: #{vae_forward.8} parent=1 // pred_fallthru
      _
    // Predicated region
    $region26: #{vae_forward.8} parent=1 // pred_check
      _
    $region27: #{vae_forward.8} parent=1 // pred_check_branch
      %879 = sbr.rel (0) target = $region29
    $region28: #{vae_forward.8} parent=1 // pred_region
      _
    $region29: #{vae_forward.8} parent=1 // pred_fallthru
      _
    %880 = vsyncpa [#allocation3], 1
    %881 = vsyncpa [#allocation5], 1

// kernel: vae_forward.9
$region0: #{vae_forward.9}
  #allocation0 [shape = 'u32[]', space=smem, size = 0x4, offset = 0x4, fixed_abs, tag = 'smem constant byte address 0x4 - core index']
  #allocation1 [shape = 'u32[144,128]{1,0:T(1,128)}', space=vmem, size = 0x12000, scoped, tag = 'internal scratch']
  %s0 = inlined_call_operand.vmem [shape: bf16[8,2048], index: 0, kind: input, shape index: {}]
  %s1 = inlined_call_operand.vmem [shape: bf16[2048,256], index: 1, kind: input, shape index: {}]
  %s2 = inlined_call_operand.hbm [shape: f32[1,256], index: 2, kind: input, shape index: {}]
  %s3 = inlined_call_operand.vmem [shape: bf16[8,256], index: 3, kind: output, shape index: {}]
  %s4 = sld [smem:[#allocation0]]
  $region26: #{vae_forward.9} parent=0
    _
  %s6 = ssub.s32 1, %s4
  %s7 = scalar_select 0, %s6, %s4
  $region1: #{vae_forward.9} parent=0
    #allocation2 [shape = 'u8[1024]{0}', space=vmem, size = 0x400, scoped, tag = 'input window, operand 2, single buffered']
    #allocation3 [shape = 's32[1]{0}', space=sflag, size = 0x4, scoped, tag = 'scoped memory for vae_forward.9']
    %8 = vsyncpa [#allocation3], 0
    // Predicated region
    $region2: #{vae_forward.9} parent=1 // pred_check
      _
    $region3: #{vae_forward.9} parent=1 // pred_check_branch
      %10 = sbr.rel (0) target = $region5
    $region4: #{vae_forward.9} parent=1 // pred_region
      _
    $region5: #{vae_forward.9} parent=1 // pred_fallthru
      _
    // Predicated region
    $region6: #{vae_forward.9} parent=1 // pred_check
      _
    $region7: #{vae_forward.9} parent=1 // pred_check_branch
      %12 = sbr.rel (0) target = $region9
    $region8: #{vae_forward.9} parent=1 // pred_region
      _
    $region9: #{vae_forward.9} parent=1 // pred_fallthru
      _
    // Predicated region
    $region10: #{vae_forward.9} parent=1 // pred_check
      _
    $region11: #{vae_forward.9} parent=1 // pred_check_branch
      %14 = sbr.rel (0) target = $region13
    $region12: #{vae_forward.9} parent=1 // pred_region
      %s16 = ssub.s32 32, 32
      %17 = vsyncadd [#allocation3], %s16
      %s19 = sshll.u32 [#allocation2], 4
      %s20 = int_to_ptr.vmem [resolvable:$true] %s19
      %22 = dma.hbm_to_vmem [thread:$0]  %s2, 32, %s20, [#allocation3]
    $region13: #{vae_forward.9} parent=1 // pred_fallthru
      _
    // Predicated region
    $region14: #{vae_forward.9} parent=1 // pred_check
      _
    $region15: #{vae_forward.9} parent=1 // pred_check_branch
      %24 = sbr.rel (0) target = $region17
    $region16: #{vae_forward.9} parent=1 // pred_region
      %25 = dma.done [#allocation3], 32
    $region17: #{vae_forward.9} parent=1 // pred_fallthru
      _
    %v26 = vld [vmem:[%s0] sm:$0xff]
    %v27 = vld [vmem:[%s0 + $0x8] sm:$0xff]
    %v28 = vld [vmem:[%s0 + $0x10] sm:$0xff]
    %v29 = vld [vmem:[%s0 + $0x18] sm:$0xff]
    %v30 = vld [vmem:[%s0 + $0x20] sm:$0xff]
    %v31 = vld [vmem:[%s0 + $0x28] sm:$0xff]
    %v32 = vld [vmem:[%s0 + $0x30] sm:$0xff]
    %v33 = vld [vmem:[%s0 + $0x38] sm:$0xff]
    %v34 = vld [vmem:[%s1] sm:$0xff]
    %v35 = vld [vmem:[%s1 + $0x8] sm:$0xff]
    %v36 = vld [vmem:[%s1 + $0x10] sm:$0xff]
    %v37 = vld [vmem:[%s1 + $0x18] sm:$0xff]
    %v38 = vld [vmem:[%s1 + $0x20] sm:$0xff]
    %v39 = vld [vmem:[%s1 + $0x28] sm:$0xff]
    %v40 = vld [vmem:[%s1 + $0x30] sm:$0xff]
    %v41 = vld [vmem:[%s1 + $0x38] sm:$0xff]
    %v42 = vld [vmem:[%s1 + $0x40] sm:$0xff]
    %v43 = vld [vmem:[%s1 + $0x48] sm:$0xff]
    %v44 = vld [vmem:[%s1 + $0x50] sm:$0xff]
    %v45 = vld [vmem:[%s1 + $0x58] sm:$0xff]
    %v46 = vld [vmem:[%s1 + $0x60] sm:$0xff]
    %v47 = vld [vmem:[%s1 + $0x68] sm:$0xff]
    %v48 = vld [vmem:[%s1 + $0x70] sm:$0xff]
    %v49 = vld [vmem:[%s1 + $0x78] sm:$0xff]
    %v50 = vld [vmem:[%s1 + $0x80] sm:$0xff]
    %v51 = vld [vmem:[%s1 + $0x88] sm:$0xff]
    %v52 = vld [vmem:[%s1 + $0x90] sm:$0xff]
    %v53 = vld [vmem:[%s1 + $0x98] sm:$0xff]
    %v54 = vld [vmem:[%s1 + $0xa0] sm:$0xff]
    %v55 = vld [vmem:[%s1 + $0xa8] sm:$0xff]
    %v56 = vld [vmem:[%s1 + $0xb0] sm:$0xff]
    %v57 = vld [vmem:[%s1 + $0xb8] sm:$0xff]
    %v58 = vld [vmem:[%s1 + $0xc0] sm:$0xff]
    %v59 = vld [vmem:[%s1 + $0xc8] sm:$0xff]
    %v60 = vld [vmem:[%s1 + $0xd0] sm:$0xff]
    %v61 = vld [vmem:[%s1 + $0xd8] sm:$0xff]
    %v62 = vld [vmem:[%s1 + $0xe0] sm:$0xff]
    %v63 = vld [vmem:[%s1 + $0xe8] sm:$0xff]
    %v64 = vld [vmem:[%s1 + $0xf0] sm:$0xff]
    %v65 = vld [vmem:[%s1 + $0xf8] sm:$0xff]
    %v66 = vld [vmem:[%s1 + $0x100] sm:$0xff]
    %v67 = vld [vmem:[%s1 + $0x108] sm:$0xff]
    %v68 = vld [vmem:[%s1 + $0x110] sm:$0xff]
    %v69 = vld [vmem:[%s1 + $0x118] sm:$0xff]
    %v70 = vld [vmem:[%s1 + $0x120] sm:$0xff]
    %v71 = vld [vmem:[%s1 + $0x128] sm:$0xff]
    %v72 = vld [vmem:[%s1 + $0x130] sm:$0xff]
    %v73 = vld [vmem:[%s1 + $0x138] sm:$0xff]
    %v74 = vld [vmem:[%s1 + $0x140] sm:$0xff]
    %v75 = vld [vmem:[%s1 + $0x148] sm:$0xff]
    %v76 = vld [vmem:[%s1 + $0x150] sm:$0xff]
    %v77 = vld [vmem:[%s1 + $0x158] sm:$0xff]
    %v78 = vld [vmem:[%s1 + $0x160] sm:$0xff]
    %v79 = vld [vmem:[%s1 + $0x168] sm:$0xff]
    %v80 = vld [vmem:[%s1 + $0x170] sm:$0xff]
    %v81 = vld [vmem:[%s1 + $0x178] sm:$0xff]
    %v82 = vld [vmem:[%s1 + $0x180] sm:$0xff]
    %v83 = vld [vmem:[%s1 + $0x188] sm:$0xff]
    %v84 = vld [vmem:[%s1 + $0x190] sm:$0xff]
    %v85 = vld [vmem:[%s1 + $0x198] sm:$0xff]
    %v86 = vld [vmem:[%s1 + $0x1a0] sm:$0xff]
    %v87 = vld [vmem:[%s1 + $0x1a8] sm:$0xff]
    %v88 = vld [vmem:[%s1 + $0x1b0] sm:$0xff]
    %v89 = vld [vmem:[%s1 + $0x1b8] sm:$0xff]
    %v90 = vld [vmem:[%s1 + $0x1c0] sm:$0xff]
    %v91 = vld [vmem:[%s1 + $0x1c8] sm:$0xff]
    %v92 = vld [vmem:[%s1 + $0x1d0] sm:$0xff]
    %v93 = vld [vmem:[%s1 + $0x1d8] sm:$0xff]
    %v94 = vld [vmem:[%s1 + $0x1e0] sm:$0xff]
    %v95 = vld [vmem:[%s1 + $0x1e8] sm:$0xff]
    %v96 = vld [vmem:[%s1 + $0x1f0] sm:$0xff]
    %v97 = vld [vmem:[%s1 + $0x1f8] sm:$0xff]
    %v98 = vld [vmem:[%s1 + $0x200] sm:$0xff]
    %v99 = vld [vmem:[%s1 + $0x208] sm:$0xff]
    %v100 = vld [vmem:[%s1 + $0x210] sm:$0xff]
    %v101 = vld [vmem:[%s1 + $0x218] sm:$0xff]
    %v102 = vld [vmem:[%s1 + $0x220] sm:$0xff]
    %v103 = vld [vmem:[%s1 + $0x228] sm:$0xff]
    %v104 = vld [vmem:[%s1 + $0x230] sm:$0xff]
    %v105 = vld [vmem:[%s1 + $0x238] sm:$0xff]
    %v106 = vld [vmem:[%s1 + $0x240] sm:$0xff]
    %v107 = vld [vmem:[%s1 + $0x248] sm:$0xff]
    %v108 = vld [vmem:[%s1 + $0x250] sm:$0xff]
    %v109 = vld [vmem:[%s1 + $0x258] sm:$0xff]
    %v110 = vld [vmem:[%s1 + $0x260] sm:$0xff]
    %v111 = vld [vmem:[%s1 + $0x268] sm:$0xff]
    %v112 = vld [vmem:[%s1 + $0x270] sm:$0xff]
    %v113 = vld [vmem:[%s1 + $0x278] sm:$0xff]
    %v114 = vld [vmem:[%s1 + $0x280] sm:$0xff]
    %v115 = vld [vmem:[%s1 + $0x288] sm:$0xff]
    %v116 = vld [vmem:[%s1 + $0x290] sm:$0xff]
    %v117 = vld [vmem:[%s1 + $0x298] sm:$0xff]
    %v118 = vld [vmem:[%s1 + $0x2a0] sm:$0xff]
    %v119 = vld [vmem:[%s1 + $0x2a8] sm:$0xff]
    %v120 = vld [vmem:[%s1 + $0x2b0] sm:$0xff]
    %v121 = vld [vmem:[%s1 + $0x2b8] sm:$0xff]
    %v122 = vld [vmem:[%s1 + $0x2c0] sm:$0xff]
    %v123 = vld [vmem:[%s1 + $0x2c8] sm:$0xff]
    %v124 = vld [vmem:[%s1 + $0x2d0] sm:$0xff]
    %v125 = vld [vmem:[%s1 + $0x2d8] sm:$0xff]
    %v126 = vld [vmem:[%s1 + $0x2e0] sm:$0xff]
    %v127 = vld [vmem:[%s1 + $0x2e8] sm:$0xff]
    %v128 = vld [vmem:[%s1 + $0x2f0] sm:$0xff]
    %v129 = vld [vmem:[%s1 + $0x2f8] sm:$0xff]
    %v130 = vld [vmem:[%s1 + $0x300] sm:$0xff]
    %v131 = vld [vmem:[%s1 + $0x308] sm:$0xff]
    %v132 = vld [vmem:[%s1 + $0x310] sm:$0xff]
    %v133 = vld [vmem:[%s1 + $0x318] sm:$0xff]
    %v134 = vld [vmem:[%s1 + $0x320] sm:$0xff]
    %v135 = vld [vmem:[%s1 + $0x328] sm:$0xff]
    %v136 = vld [vmem:[%s1 + $0x330] sm:$0xff]
    %v137 = vld [vmem:[%s1 + $0x338] sm:$0xff]
    %v138 = vld [vmem:[%s1 + $0x340] sm:$0xff]
    %v139 = vld [vmem:[%s1 + $0x348] sm:$0xff]
    %v140 = vld [vmem:[%s1 + $0x350] sm:$0xff]
    %v141 = vld [vmem:[%s1 + $0x358] sm:$0xff]
    %v142 = vld [vmem:[%s1 + $0x360] sm:$0xff]
    %v143 = vld [vmem:[%s1 + $0x368] sm:$0xff]
    %v144 = vld [vmem:[%s1 + $0x370] sm:$0xff]
    %v145 = vld [vmem:[%s1 + $0x378] sm:$0xff]
    %v146 = vld [vmem:[%s1 + $0x380] sm:$0xff]
    %v147 = vld [vmem:[%s1 + $0x388] sm:$0xff]
    %v148 = vld [vmem:[%s1 + $0x390] sm:$0xff]
    %v149 = vld [vmem:[%s1 + $0x398] sm:$0xff]
    %v150 = vld [vmem:[%s1 + $0x3a0] sm:$0xff]
    %v151 = vld [vmem:[%s1 + $0x3a8] sm:$0xff]
    %v152 = vld [vmem:[%s1 + $0x3b0] sm:$0xff]
    %v153 = vld [vmem:[%s1 + $0x3b8] sm:$0xff]
    %v154 = vld [vmem:[%s1 + $0x3c0] sm:$0xff]
    %v155 = vld [vmem:[%s1 + $0x3c8] sm:$0xff]
    %v156 = vld [vmem:[%s1 + $0x3d0] sm:$0xff]
    %v157 = vld [vmem:[%s1 + $0x3d8] sm:$0xff]
    %v158 = vld [vmem:[%s1 + $0x3e0] sm:$0xff]
    %v159 = vld [vmem:[%s1 + $0x3e8] sm:$0xff]
    %v160 = vld [vmem:[%s1 + $0x3f0] sm:$0xff]
    %v161 = vld [vmem:[%s1 + $0x3f8] sm:$0xff]
    %v162 = vld [vmem:[%s1 + $0x400] sm:$0xff]
    %v163 = vld [vmem:[%s1 + $0x408] sm:$0xff]
    %v164 = vld [vmem:[%s1 + $0x410] sm:$0xff]
    %v165 = vld [vmem:[%s1 + $0x418] sm:$0xff]
    %v166 = vld [vmem:[%s1 + $0x420] sm:$0xff]
    %v167 = vld [vmem:[%s1 + $0x428] sm:$0xff]
    %v168 = vld [vmem:[%s1 + $0x430] sm:$0xff]
    %v169 = vld [vmem:[%s1 + $0x438] sm:$0xff]
    %v170 = vld [vmem:[%s1 + $0x440] sm:$0xff]
    %v171 = vld [vmem:[%s1 + $0x448] sm:$0xff]
    %v172 = vld [vmem:[%s1 + $0x450] sm:$0xff]
    %v173 = vld [vmem:[%s1 + $0x458] sm:$0xff]
    %v174 = vld [vmem:[%s1 + $0x460] sm:$0xff]
    %v175 = vld [vmem:[%s1 + $0x468] sm:$0xff]
    %v176 = vld [vmem:[%s1 + $0x470] sm:$0xff]
    %v177 = vld [vmem:[%s1 + $0x478] sm:$0xff]
    %v178 = vld [vmem:[%s1 + $0x480] sm:$0xff]
    %v179 = vld [vmem:[%s1 + $0x488] sm:$0xff]
    %v180 = vld [vmem:[%s1 + $0x490] sm:$0xff]
    %v181 = vld [vmem:[%s1 + $0x498] sm:$0xff]
    %v182 = vld [vmem:[%s1 + $0x4a0] sm:$0xff]
    %v183 = vld [vmem:[%s1 + $0x4a8] sm:$0xff]
    %v184 = vld [vmem:[%s1 + $0x4b0] sm:$0xff]
    %v185 = vld [vmem:[%s1 + $0x4b8] sm:$0xff]
    %v186 = vld [vmem:[%s1 + $0x4c0] sm:$0xff]
    %v187 = vld [vmem:[%s1 + $0x4c8] sm:$0xff]
    %v188 = vld [vmem:[%s1 + $0x4d0] sm:$0xff]
    %v189 = vld [vmem:[%s1 + $0x4d8] sm:$0xff]
    %v190 = vld [vmem:[%s1 + $0x4e0] sm:$0xff]
    %v191 = vld [vmem:[%s1 + $0x4e8] sm:$0xff]
    %v192 = vld [vmem:[%s1 + $0x4f0] sm:$0xff]
    %v193 = vld [vmem:[%s1 + $0x4f8] sm:$0xff]
    %v194 = vld [vmem:[%s1 + $0x500] sm:$0xff]
    %v195 = vld [vmem:[%s1 + $0x508] sm:$0xff]
    %v196 = vld [vmem:[%s1 + $0x510] sm:$0xff]
    %v197 = vld [vmem:[%s1 + $0x518] sm:$0xff]
    %v198 = vld [vmem:[%s1 + $0x520] sm:$0xff]
    %v199 = vld [vmem:[%s1 + $0x528] sm:$0xff]
    %v200 = vld [vmem:[%s1 + $0x530] sm:$0xff]
    %v201 = vld [vmem:[%s1 + $0x538] sm:$0xff]
    %v202 = vld [vmem:[%s1 + $0x540] sm:$0xff]
    %v203 = vld [vmem:[%s1 + $0x548] sm:$0xff]
    %v204 = vld [vmem:[%s1 + $0x550] sm:$0xff]
    %v205 = vld [vmem:[%s1 + $0x558] sm:$0xff]
    %v206 = vld [vmem:[%s1 + $0x560] sm:$0xff]
    %v207 = vld [vmem:[%s1 + $0x568] sm:$0xff]
    %v208 = vld [vmem:[%s1 + $0x570] sm:$0xff]
    %v209 = vld [vmem:[%s1 + $0x578] sm:$0xff]
    %v210 = vld [vmem:[%s1 + $0x580] sm:$0xff]
    %v211 = vld [vmem:[%s1 + $0x588] sm:$0xff]
    %v212 = vld [vmem:[%s1 + $0x590] sm:$0xff]
    %v213 = vld [vmem:[%s1 + $0x598] sm:$0xff]
    %v214 = vld [vmem:[%s1 + $0x5a0] sm:$0xff]
    %v215 = vld [vmem:[%s1 + $0x5a8] sm:$0xff]
    %v216 = vld [vmem:[%s1 + $0x5b0] sm:$0xff]
    %v217 = vld [vmem:[%s1 + $0x5b8] sm:$0xff]
    %v218 = vld [vmem:[%s1 + $0x5c0] sm:$0xff]
    %v219 = vld [vmem:[%s1 + $0x5c8] sm:$0xff]
    %v220 = vld [vmem:[%s1 + $0x5d0] sm:$0xff]
    %v221 = vld [vmem:[%s1 + $0x5d8] sm:$0xff]
    %v222 = vld [vmem:[%s1 + $0x5e0] sm:$0xff]
    %v223 = vld [vmem:[%s1 + $0x5e8] sm:$0xff]
    %v224 = vld [vmem:[%s1 + $0x5f0] sm:$0xff]
    %v225 = vld [vmem:[%s1 + $0x5f8] sm:$0xff]
    %v226 = vld [vmem:[%s1 + $0x600] sm:$0xff]
    %v227 = vld [vmem:[%s1 + $0x608] sm:$0xff]
    %v228 = vld [vmem:[%s1 + $0x610] sm:$0xff]
    %v229 = vld [vmem:[%s1 + $0x618] sm:$0xff]
    %v230 = vld [vmem:[%s1 + $0x620] sm:$0xff]
    %v231 = vld [vmem:[%s1 + $0x628] sm:$0xff]
    %v232 = vld [vmem:[%s1 + $0x630] sm:$0xff]
    %v233 = vld [vmem:[%s1 + $0x638] sm:$0xff]
    %v234 = vld [vmem:[%s1 + $0x640] sm:$0xff]
    %v235 = vld [vmem:[%s1 + $0x648] sm:$0xff]
    %v236 = vld [vmem:[%s1 + $0x650] sm:$0xff]
    %v237 = vld [vmem:[%s1 + $0x658] sm:$0xff]
    %v238 = vld [vmem:[%s1 + $0x660] sm:$0xff]
    %v239 = vld [vmem:[%s1 + $0x668] sm:$0xff]
    %v240 = vld [vmem:[%s1 + $0x670] sm:$0xff]
    %v241 = vld [vmem:[%s1 + $0x678] sm:$0xff]
    %v242 = vld [vmem:[%s1 + $0x680] sm:$0xff]
    %v243 = vld [vmem:[%s1 + $0x688] sm:$0xff]
    %v244 = vld [vmem:[%s1 + $0x690] sm:$0xff]
    %v245 = vld [vmem:[%s1 + $0x698] sm:$0xff]
    %v246 = vld [vmem:[%s1 + $0x6a0] sm:$0xff]
    %v247 = vld [vmem:[%s1 + $0x6a8] sm:$0xff]
    %v248 = vld [vmem:[%s1 + $0x6b0] sm:$0xff]
    %v249 = vld [vmem:[%s1 + $0x6b8] sm:$0xff]
    %v250 = vld [vmem:[%s1 + $0x6c0] sm:$0xff]
    %v251 = vld [vmem:[%s1 + $0x6c8] sm:$0xff]
    %v252 = vld [vmem:[%s1 + $0x6d0] sm:$0xff]
    %v253 = vld [vmem:[%s1 + $0x6d8] sm:$0xff]
    %v254 = vld [vmem:[%s1 + $0x6e0] sm:$0xff]
    %v255 = vld [vmem:[%s1 + $0x6e8] sm:$0xff]
    %v256 = vld [vmem:[%s1 + $0x6f0] sm:$0xff]
    %v257 = vld [vmem:[%s1 + $0x6f8] sm:$0xff]
    %v258 = vld [vmem:[%s1 + $0x700] sm:$0xff]
    %v259 = vld [vmem:[%s1 + $0x708] sm:$0xff]
    %v260 = vld [vmem:[%s1 + $0x710] sm:$0xff]
    %v261 = vld [vmem:[%s1 + $0x718] sm:$0xff]
    %v262 = vld [vmem:[%s1 + $0x720] sm:$0xff]
    %v263 = vld [vmem:[%s1 + $0x728] sm:$0xff]
    %v264 = vld [vmem:[%s1 + $0x730] sm:$0xff]
    %v265 = vld [vmem:[%s1 + $0x738] sm:$0xff]
    %v266 = vld [vmem:[%s1 + $0x740] sm:$0xff]
    %v267 = vld [vmem:[%s1 + $0x748] sm:$0xff]
    %v268 = vld [vmem:[%s1 + $0x750] sm:$0xff]
    %v269 = vld [vmem:[%s1 + $0x758] sm:$0xff]
    %v270 = vld [vmem:[%s1 + $0x760] sm:$0xff]
    %v271 = vld [vmem:[%s1 + $0x768] sm:$0xff]
    %v272 = vld [vmem:[%s1 + $0x770] sm:$0xff]
    %v273 = vld [vmem:[%s1 + $0x778] sm:$0xff]
    %v274 = vld [vmem:[%s1 + $0x780] sm:$0xff]
    %v275 = vld [vmem:[%s1 + $0x788] sm:$0xff]
    %v276 = vld [vmem:[%s1 + $0x790] sm:$0xff]
    %v277 = vld [vmem:[%s1 + $0x798] sm:$0xff]
    %v278 = vld [vmem:[%s1 + $0x7a0] sm:$0xff]
    %v279 = vld [vmem:[%s1 + $0x7a8] sm:$0xff]
    %v280 = vld [vmem:[%s1 + $0x7b0] sm:$0xff]
    %v281 = vld [vmem:[%s1 + $0x7b8] sm:$0xff]
    %v282 = vld [vmem:[%s1 + $0x7c0] sm:$0xff]
    %v283 = vld [vmem:[%s1 + $0x7c8] sm:$0xff]
    %v284 = vld [vmem:[%s1 + $0x7d0] sm:$0xff]
    %v285 = vld [vmem:[%s1 + $0x7d8] sm:$0xff]
    %v286 = vld [vmem:[%s1 + $0x7e0] sm:$0xff]
    %v287 = vld [vmem:[%s1 + $0x7e8] sm:$0xff]
    %v288 = vld [vmem:[%s1 + $0x7f0] sm:$0xff]
    %v289 = vld [vmem:[%s1 + $0x7f8] sm:$0xff]
    %v290 = vld [vmem:[#allocation2] sm:$0x3]
    %v292 = vlaneseq
    %v293 = vshrl.u32 %v292, 7
    %v294 = vsub.s32 0, %v293
    %v295 = vrot.slane %v290, %v294
    %v296 = vlaneseq
    %v297 = vshrl.u32 %v296, 7
    %v298 = vsub.s32 1, %v297
    %v299 = vrot.slane %v290, %v298
    %v310 = vunpack.c.l.b16 %v26
    %v311 = vunpack.c.h.b16 %v26
    %v312 = vunpack.c.l.b16 %v27
    %v313 = vunpack.c.h.b16 %v27
    %v314 = vunpack.c.l.b16 %v28
    %v315 = vunpack.c.h.b16 %v28
    %v316 = vunpack.c.l.b16 %v29
    %v317 = vunpack.c.h.b16 %v29
    %v318 = vunpack.c.l.b16 %v30
    %v319 = vunpack.c.h.b16 %v30
    %v320 = vunpack.c.l.b16 %v31
    %v321 = vunpack.c.h.b16 %v31
    %v322 = vunpack.c.l.b16 %v32
    %v323 = vunpack.c.h.b16 %v32
    %v324 = vunpack.c.l.b16 %v33
    %v325 = vunpack.c.h.b16 %v33
    %v326 = vpack.c.b16 %v310, %v310
    %v327 = vpack.c.b16 %v311, %v311
    %v328 = vpack.c.b16 %v312, %v312
    %v329 = vpack.c.b16 %v313, %v313
    %v330 = vpack.c.b16 %v314, %v314
    %v331 = vpack.c.b16 %v315, %v315
    %v332 = vpack.c.b16 %v316, %v316
    %v333 = vpack.c.b16 %v317, %v317
    %v334 = vpack.c.b16 %v318, %v318
    %v335 = vpack.c.b16 %v319, %v319
    %v336 = vpack.c.b16 %v320, %v320
    %v337 = vpack.c.b16 %v321, %v321
    %v338 = vpack.c.b16 %v322, %v322
    %v339 = vpack.c.b16 %v323, %v323
    %v340 = vpack.c.b16 %v324, %v324
    %v341 = vpack.c.b16 %v325, %v325
    %v614 = vunpack.c.l.b16 %v34
    %v615 = vunpack.c.h.b16 %v34
    %v616 = vunpack.c.l.b16 %v35
    %v617 = vunpack.c.h.b16 %v35
    %v618 = vunpack.c.l.b16 %v36
    %v619 = vunpack.c.h.b16 %v36
    %v620 = vunpack.c.l.b16 %v37
    %v621 = vunpack.c.h.b16 %v37
    %v622 = vunpack.c.l.b16 %v38
    %v623 = vunpack.c.h.b16 %v38
    %v624 = vunpack.c.l.b16 %v39
    %v625 = vunpack.c.h.b16 %v39
    %v626 = vunpack.c.l.b16 %v40
    %v627 = vunpack.c.h.b16 %v40
    %v628 = vunpack.c.l.b16 %v41
    %v629 = vunpack.c.h.b16 %v41
    %v630 = vunpack.c.l.b16 %v42
    %v631 = vunpack.c.h.b16 %v42
    %v632 = vunpack.c.l.b16 %v43
    %v633 = vunpack.c.h.b16 %v43
    %v634 = vunpack.c.l.b16 %v44
    %v635 = vunpack.c.h.b16 %v44
    %v636 = vunpack.c.l.b16 %v45
    %v637 = vunpack.c.h.b16 %v45
    %v638 = vunpack.c.l.b16 %v46
    %v639 = vunpack.c.h.b16 %v46
    %v640 = vunpack.c.l.b16 %v47
    %v641 = vunpack.c.h.b16 %v47
    %v642 = vunpack.c.l.b16 %v48
    %v643 = vunpack.c.h.b16 %v48
    %v644 = vunpack.c.l.b16 %v49
    %v645 = vunpack.c.h.b16 %v49
    %v646 = vunpack.c.l.b16 %v50
    %v647 = vunpack.c.h.b16 %v50
    %v648 = vunpack.c.l.b16 %v51
    %v649 = vunpack.c.h.b16 %v51
    %v650 = vunpack.c.l.b16 %v52
    %v651 = vunpack.c.h.b16 %v52
    %v652 = vunpack.c.l.b16 %v53
    %v653 = vunpack.c.h.b16 %v53
    %v654 = vunpack.c.l.b16 %v54
    %v655 = vunpack.c.h.b16 %v54
    %v656 = vunpack.c.l.b16 %v55
    %v657 = vunpack.c.h.b16 %v55
    %v658 = vunpack.c.l.b16 %v56
    %v659 = vunpack.c.h.b16 %v56
    %v660 = vunpack.c.l.b16 %v57
    %v661 = vunpack.c.h.b16 %v57
    %v662 = vunpack.c.l.b16 %v58
    %v663 = vunpack.c.h.b16 %v58
    %v664 = vunpack.c.l.b16 %v59
    %v665 = vunpack.c.h.b16 %v59
    %v666 = vunpack.c.l.b16 %v60
    %v667 = vunpack.c.h.b16 %v60
    %v668 = vunpack.c.l.b16 %v61
    %v669 = vunpack.c.h.b16 %v61
    %v670 = vunpack.c.l.b16 %v62
    %v671 = vunpack.c.h.b16 %v62
    %v672 = vunpack.c.l.b16 %v63
    %v673 = vunpack.c.h.b16 %v63
    %v674 = vunpack.c.l.b16 %v64
    %v675 = vunpack.c.h.b16 %v64
    %v676 = vunpack.c.l.b16 %v65
    %v677 = vunpack.c.h.b16 %v65
    %v678 = vunpack.c.l.b16 %v66
    %v679 = vunpack.c.h.b16 %v66
    %v680 = vunpack.c.l.b16 %v67
    %v681 = vunpack.c.h.b16 %v67
    %v682 = vunpack.c.l.b16 %v68
    %v683 = vunpack.c.h.b16 %v68
    %v684 = vunpack.c.l.b16 %v69
    %v685 = vunpack.c.h.b16 %v69
    %v686 = vunpack.c.l.b16 %v70
    %v687 = vunpack.c.h.b16 %v70
    %v688 = vunpack.c.l.b16 %v71
    %v689 = vunpack.c.h.b16 %v71
    %v690 = vunpack.c.l.b16 %v72
    %v691 = vunpack.c.h.b16 %v72
    %v692 = vunpack.c.l.b16 %v73
    %v693 = vunpack.c.h.b16 %v73
    %v694 = vunpack.c.l.b16 %v74
    %v695 = vunpack.c.h.b16 %v74
    %v696 = vunpack.c.l.b16 %v75
    %v697 = vunpack.c.h.b16 %v75
    %v698 = vunpack.c.l.b16 %v76
    %v699 = vunpack.c.h.b16 %v76
    %v700 = vunpack.c.l.b16 %v77
    %v701 = vunpack.c.h.b16 %v77
    %v702 = vunpack.c.l.b16 %v78
    %v703 = vunpack.c.h.b16 %v78
    %v704 = vunpack.c.l.b16 %v79
    %v705 = vunpack.c.h.b16 %v79
    %v706 = vunpack.c.l.b16 %v80
    %v707 = vunpack.c.h.b16 %v80
    %v708 = vunpack.c.l.b16 %v81
    %v709 = vunpack.c.h.b16 %v81
    %v710 = vunpack.c.l.b16 %v82
    %v711 = vunpack.c.h.b16 %v82
    %v712 = vunpack.c.l.b16 %v83
    %v713 = vunpack.c.h.b16 %v83
    %v714 = vunpack.c.l.b16 %v84
    %v715 = vunpack.c.h.b16 %v84
    %v716 = vunpack.c.l.b16 %v85
    %v717 = vunpack.c.h.b16 %v85
    %v718 = vunpack.c.l.b16 %v86
    %v719 = vunpack.c.h.b16 %v86
    %v720 = vunpack.c.l.b16 %v87
    %v721 = vunpack.c.h.b16 %v87
    %v722 = vunpack.c.l.b16 %v88
    %v723 = vunpack.c.h.b16 %v88
    %v724 = vunpack.c.l.b16 %v89
    %v725 = vunpack.c.h.b16 %v89
    %v726 = vunpack.c.l.b16 %v90
    %v727 = vunpack.c.h.b16 %v90
    %v728 = vunpack.c.l.b16 %v91
    %v729 = vunpack.c.h.b16 %v91
    %v730 = vunpack.c.l.b16 %v92
    %v731 = vunpack.c.h.b16 %v92
    %v732 = vunpack.c.l.b16 %v93
    %v733 = vunpack.c.h.b16 %v93
    %v734 = vunpack.c.l.b16 %v94
    %v735 = vunpack.c.h.b16 %v94
    %v736 = vunpack.c.l.b16 %v95
    %v737 = vunpack.c.h.b16 %v95
    %v738 = vunpack.c.l.b16 %v96
    %v739 = vunpack.c.h.b16 %v96
    %v740 = vunpack.c.l.b16 %v97
    %v741 = vunpack.c.h.b16 %v97
    %v742 = vunpack.c.l.b16 %v98
    %v743 = vunpack.c.h.b16 %v98
    %v744 = vunpack.c.l.b16 %v99
    %v745 = vunpack.c.h.b16 %v99
    %v746 = vunpack.c.l.b16 %v100
    %v747 = vunpack.c.h.b16 %v100
    %v748 = vunpack.c.l.b16 %v101
    %v749 = vunpack.c.h.b16 %v101
    %v750 = vunpack.c.l.b16 %v102
    %v751 = vunpack.c.h.b16 %v102
    %v752 = vunpack.c.l.b16 %v103
    %v753 = vunpack.c.h.b16 %v103
    %v754 = vunpack.c.l.b16 %v104
    %v755 = vunpack.c.h.b16 %v104
    %v756 = vunpack.c.l.b16 %v105
    %v757 = vunpack.c.h.b16 %v105
    %v758 = vunpack.c.l.b16 %v106
    %v759 = vunpack.c.h.b16 %v106
    %v760 = vunpack.c.l.b16 %v107
    %v761 = vunpack.c.h.b16 %v107
    %v762 = vunpack.c.l.b16 %v108
    %v763 = vunpack.c.h.b16 %v108
    %v764 = vunpack.c.l.b16 %v109
    %v765 = vunpack.c.h.b16 %v109
    %v766 = vunpack.c.l.b16 %v110
    %v767 = vunpack.c.h.b16 %v110
    %v768 = vunpack.c.l.b16 %v111
    %v769 = vunpack.c.h.b16 %v111
    %v770 = vunpack.c.l.b16 %v112
    %v771 = vunpack.c.h.b16 %v112
    %v772 = vunpack.c.l.b16 %v113
    %v773 = vunpack.c.h.b16 %v113
    %v774 = vunpack.c.l.b16 %v114
    %v775 = vunpack.c.h.b16 %v114
    %v776 = vunpack.c.l.b16 %v115
    %v777 = vunpack.c.h.b16 %v115
    %v778 = vunpack.c.l.b16 %v116
    %v779 = vunpack.c.h.b16 %v116
    %v780 = vunpack.c.l.b16 %v117
    %v781 = vunpack.c.h.b16 %v117
    %v782 = vunpack.c.l.b16 %v118
    %v783 = vunpack.c.h.b16 %v118
    %v784 = vunpack.c.l.b16 %v119
    %v785 = vunpack.c.h.b16 %v119
    %v786 = vunpack.c.l.b16 %v120
    %v787 = vunpack.c.h.b16 %v120
    %v788 = vunpack.c.l.b16 %v121
    %v789 = vunpack.c.h.b16 %v121
    %v790 = vunpack.c.l.b16 %v122
    %v791 = vunpack.c.h.b16 %v122
    %v792 = vunpack.c.l.b16 %v123
    %v793 = vunpack.c.h.b16 %v123
    %v794 = vunpack.c.l.b16 %v124
    %v795 = vunpack.c.h.b16 %v124
    %v796 = vunpack.c.l.b16 %v125
    %v797 = vunpack.c.h.b16 %v125
    %v798 = vunpack.c.l.b16 %v126
    %v799 = vunpack.c.h.b16 %v126
    %v800 = vunpack.c.l.b16 %v127
    %v801 = vunpack.c.h.b16 %v127
    %v802 = vunpack.c.l.b16 %v128
    %v803 = vunpack.c.h.b16 %v128
    %v804 = vunpack.c.l.b16 %v129
    %v805 = vunpack.c.h.b16 %v129
    %v806 = vunpack.c.l.b16 %v130
    %v807 = vunpack.c.h.b16 %v130
    %v808 = vunpack.c.l.b16 %v131
    %v809 = vunpack.c.h.b16 %v131
    %v810 = vunpack.c.l.b16 %v132
    %v811 = vunpack.c.h.b16 %v132
    %v812 = vunpack.c.l.b16 %v133
    %v813 = vunpack.c.h.b16 %v133
    %v814 = vunpack.c.l.b16 %v134
    %v815 = vunpack.c.h.b16 %v134
    %v816 = vunpack.c.l.b16 %v135
    %v817 = vunpack.c.h.b16 %v135
    %v818 = vunpack.c.l.b16 %v136
    %v819 = vunpack.c.h.b16 %v136
    %v820 = vunpack.c.l.b16 %v137
    %v821 = vunpack.c.h.b16 %v137
    %v822 = vunpack.c.l.b16 %v138
    %v823 = vunpack.c.h.b16 %v138
    %v824 = vunpack.c.l.b16 %v139
    %v825 = vunpack.c.h.b16 %v139
    %v826 = vunpack.c.l.b16 %v140
    %v827 = vunpack.c.h.b16 %v140
    %v828 = vunpack.c.l.b16 %v141
    %v829 = vunpack.c.h.b16 %v141
    %v830 = vunpack.c.l.b16 %v142
    %v831 = vunpack.c.h.b16 %v142
    %v832 = vunpack.c.l.b16 %v143
    %v833 = vunpack.c.h.b16 %v143
    %v834 = vunpack.c.l.b16 %v144
    %v835 = vunpack.c.h.b16 %v144
    %v836 = vunpack.c.l.b16 %v145
    %v837 = vunpack.c.h.b16 %v145
    %v838 = vunpack.c.l.b16 %v146
    %v839 = vunpack.c.h.b16 %v146
    %v840 = vunpack.c.l.b16 %v147
    %v841 = vunpack.c.h.b16 %v147
    %v842 = vunpack.c.l.b16 %v148
    %v843 = vunpack.c.h.b16 %v148
    %v844 = vunpack.c.l.b16 %v149
    %v845 = vunpack.c.h.b16 %v149
    %v846 = vunpack.c.l.b16 %v150
    %v847 = vunpack.c.h.b16 %v150
    %v848 = vunpack.c.l.b16 %v151
    %v849 = vunpack.c.h.b16 %v151
    %v850 = vunpack.c.l.b16 %v152
    %v851 = vunpack.c.h.b16 %v152
    %v852 = vunpack.c.l.b16 %v153
    %v853 = vunpack.c.h.b16 %v153
    %v854 = vunpack.c.l.b16 %v154
    %v855 = vunpack.c.h.b16 %v154
    %v856 = vunpack.c.l.b16 %v155
    %v857 = vunpack.c.h.b16 %v155
    %v858 = vunpack.c.l.b16 %v156
    %v859 = vunpack.c.h.b16 %v156
    %v860 = vunpack.c.l.b16 %v157
    %v861 = vunpack.c.h.b16 %v157
    %v862 = vunpack.c.l.b16 %v158
    %v863 = vunpack.c.h.b16 %v158
    %v864 = vunpack.c.l.b16 %v159
    %v865 = vunpack.c.h.b16 %v159
    %v866 = vunpack.c.l.b16 %v160
    %v867 = vunpack.c.h.b16 %v160
    %v868 = vunpack.c.l.b16 %v161
    %v869 = vunpack.c.h.b16 %v161
    %v870 = vunpack.c.l.b16 %v162
    %v871 = vunpack.c.h.b16 %v162
    %v872 = vunpack.c.l.b16 %v163
    %v873 = vunpack.c.h.b16 %v163
    %v874 = vunpack.c.l.b16 %v164
    %v875 = vunpack.c.h.b16 %v164
    %v876 = vunpack.c.l.b16 %v165
    %v877 = vunpack.c.h.b16 %v165
    %v878 = vunpack.c.l.b16 %v166
    %v879 = vunpack.c.h.b16 %v166
    %v880 = vunpack.c.l.b16 %v167
    %v881 = vunpack.c.h.b16 %v167
    %v882 = vunpack.c.l.b16 %v168
    %v883 = vunpack.c.h.b16 %v168
    %v884 = vunpack.c.l.b16 %v169
    %v885 = vunpack.c.h.b16 %v169
    %v886 = vunpack.c.l.b16 %v170
    %v887 = vunpack.c.h.b16 %v170
    %v888 = vunpack.c.l.b16 %v171
    %v889 = vunpack.c.h.b16 %v171
    %v890 = vunpack.c.l.b16 %v172
    %v891 = vunpack.c.h.b16 %v172
    %v892 = vunpack.c.l.b16 %v173
    %v893 = vunpack.c.h.b16 %v173
    %v894 = vunpack.c.l.b16 %v174
    %v895 = vunpack.c.h.b16 %v174
    %v896 = vunpack.c.l.b16 %v175
    %v897 = vunpack.c.h.b16 %v175
    %v898 = vunpack.c.l.b16 %v176
    %v899 = vunpack.c.h.b16 %v176
    %v900 = vunpack.c.l.b16 %v177
    %v901 = vunpack.c.h.b16 %v177
    %v902 = vunpack.c.l.b16 %v178
    %v903 = vunpack.c.h.b16 %v178
    %v904 = vunpack.c.l.b16 %v179
    %v905 = vunpack.c.h.b16 %v179
    %v906 = vunpack.c.l.b16 %v180
    %v907 = vunpack.c.h.b16 %v180
    %v908 = vunpack.c.l.b16 %v181
    %v909 = vunpack.c.h.b16 %v181
    %v910 = vunpack.c.l.b16 %v182
    %v911 = vunpack.c.h.b16 %v182
    %v912 = vunpack.c.l.b16 %v183
    %v913 = vunpack.c.h.b16 %v183
    %v914 = vunpack.c.l.b16 %v184
    %v915 = vunpack.c.h.b16 %v184
    %v916 = vunpack.c.l.b16 %v185
    %v917 = vunpack.c.h.b16 %v185
    %v918 = vunpack.c.l.b16 %v186
    %v919 = vunpack.c.h.b16 %v186
    %v920 = vunpack.c.l.b16 %v187
    %v921 = vunpack.c.h.b16 %v187
    %v922 = vunpack.c.l.b16 %v188
    %v923 = vunpack.c.h.b16 %v188
    %v924 = vunpack.c.l.b16 %v189
    %v925 = vunpack.c.h.b16 %v189
    %v926 = vunpack.c.l.b16 %v190
    %v927 = vunpack.c.h.b16 %v190
    %v928 = vunpack.c.l.b16 %v191
    %v929 = vunpack.c.h.b16 %v191
    %v930 = vunpack.c.l.b16 %v192
    %v931 = vunpack.c.h.b16 %v192
    %v932 = vunpack.c.l.b16 %v193
    %v933 = vunpack.c.h.b16 %v193
    %v934 = vunpack.c.l.b16 %v194
    %v935 = vunpack.c.h.b16 %v194
    %v936 = vunpack.c.l.b16 %v195
    %v937 = vunpack.c.h.b16 %v195
    %v938 = vunpack.c.l.b16 %v196
    %v939 = vunpack.c.h.b16 %v196
    %v940 = vunpack.c.l.b16 %v197
    %v941 = vunpack.c.h.b16 %v197
    %v942 = vunpack.c.l.b16 %v198
    %v943 = vunpack.c.h.b16 %v198
    %v944 = vunpack.c.l.b16 %v199
    %v945 = vunpack.c.h.b16 %v199
    %v946 = vunpack.c.l.b16 %v200
    %v947 = vunpack.c.h.b16 %v200
    %v948 = vunpack.c.l.b16 %v201
    %v949 = vunpack.c.h.b16 %v201
    %v950 = vunpack.c.l.b16 %v202
    %v951 = vunpack.c.h.b16 %v202
    %v952 = vunpack.c.l.b16 %v203
    %v953 = vunpack.c.h.b16 %v203
    %v954 = vunpack.c.l.b16 %v204
    %v955 = vunpack.c.h.b16 %v204
    %v956 = vunpack.c.l.b16 %v205
    %v957 = vunpack.c.h.b16 %v205
    %v958 = vunpack.c.l.b16 %v206
    %v959 = vunpack.c.h.b16 %v206
    %v960 = vunpack.c.l.b16 %v207
    %v961 = vunpack.c.h.b16 %v207
    %v962 = vunpack.c.l.b16 %v208
    %v963 = vunpack.c.h.b16 %v208
    %v964 = vunpack.c.l.b16 %v209
    %v965 = vunpack.c.h.b16 %v209
    %v966 = vunpack.c.l.b16 %v210
    %v967 = vunpack.c.h.b16 %v210
    %v968 = vunpack.c.l.b16 %v211
    %v969 = vunpack.c.h.b16 %v211
    %v970 = vunpack.c.l.b16 %v212
    %v971 = vunpack.c.h.b16 %v212
    %v972 = vunpack.c.l.b16 %v213
    %v973 = vunpack.c.h.b16 %v213
    %v974 = vunpack.c.l.b16 %v214
    %v975 = vunpack.c.h.b16 %v214
    %v976 = vunpack.c.l.b16 %v215
    %v977 = vunpack.c.h.b16 %v215
    %v978 = vunpack.c.l.b16 %v216
    %v979 = vunpack.c.h.b16 %v216
    %v980 = vunpack.c.l.b16 %v217
    %v981 = vunpack.c.h.b16 %v217
    %v982 = vunpack.c.l.b16 %v218
    %v983 = vunpack.c.h.b16 %v218
    %v984 = vunpack.c.l.b16 %v219
    %v985 = vunpack.c.h.b16 %v219
    %v986 = vunpack.c.l.b16 %v220
    %v987 = vunpack.c.h.b16 %v220
    %v988 = vunpack.c.l.b16 %v221
    %v989 = vunpack.c.h.b16 %v221
    %v990 = vunpack.c.l.b16 %v222
    %v991 = vunpack.c.h.b16 %v222
    %v992 = vunpack.c.l.b16 %v223
    %v993 = vunpack.c.h.b16 %v223
    %v994 = vunpack.c.l.b16 %v224
    %v995 = vunpack.c.h.b16 %v224
    %v996 = vunpack.c.l.b16 %v225
    %v997 = vunpack.c.h.b16 %v225
    %v998 = vunpack.c.l.b16 %v226
    %v999 = vunpack.c.h.b16 %v226
    %v1000 = vunpack.c.l.b16 %v227
    %v1001 = vunpack.c.h.b16 %v227
    %v1002 = vunpack.c.l.b16 %v228
    %v1003 = vunpack.c.h.b16 %v228
    %v1004 = vunpack.c.l.b16 %v229
    %v1005 = vunpack.c.h.b16 %v229
    %v1006 = vunpack.c.l.b16 %v230
    %v1007 = vunpack.c.h.b16 %v230
    %v1008 = vunpack.c.l.b16 %v231
    %v1009 = vunpack.c.h.b16 %v231
    %v1010 = vunpack.c.l.b16 %v232
    %v1011 = vunpack.c.h.b16 %v232
    %v1012 = vunpack.c.l.b16 %v233
    %v1013 = vunpack.c.h.b16 %v233
    %v1014 = vunpack.c.l.b16 %v234
    %v1015 = vunpack.c.h.b16 %v234
    %v1016 = vunpack.c.l.b16 %v235
    %v1017 = vunpack.c.h.b16 %v235
    %v1018 = vunpack.c.l.b16 %v236
    %v1019 = vunpack.c.h.b16 %v236
    %v1020 = vunpack.c.l.b16 %v237
    %v1021 = vunpack.c.h.b16 %v237
    %v1022 = vunpack.c.l.b16 %v238
    %v1023 = vunpack.c.h.b16 %v238
    %v1024 = vunpack.c.l.b16 %v239
    %v1025 = vunpack.c.h.b16 %v239
    %v1026 = vunpack.c.l.b16 %v240
    %v1027 = vunpack.c.h.b16 %v240
    %v1028 = vunpack.c.l.b16 %v241
    %v1029 = vunpack.c.h.b16 %v241
    %v1030 = vunpack.c.l.b16 %v242
    %v1031 = vunpack.c.h.b16 %v242
    %v1032 = vunpack.c.l.b16 %v243
    %v1033 = vunpack.c.h.b16 %v243
    %v1034 = vunpack.c.l.b16 %v244
    %v1035 = vunpack.c.h.b16 %v244
    %v1036 = vunpack.c.l.b16 %v245
    %v1037 = vunpack.c.h.b16 %v245
    %v1038 = vunpack.c.l.b16 %v246
    %v1039 = vunpack.c.h.b16 %v246
    %v1040 = vunpack.c.l.b16 %v247
    %v1041 = vunpack.c.h.b16 %v247
    %v1042 = vunpack.c.l.b16 %v248
    %v1043 = vunpack.c.h.b16 %v248
    %v1044 = vunpack.c.l.b16 %v249
    %v1045 = vunpack.c.h.b16 %v249
    %v1046 = vunpack.c.l.b16 %v250
    %v1047 = vunpack.c.h.b16 %v250
    %v1048 = vunpack.c.l.b16 %v251
    %v1049 = vunpack.c.h.b16 %v251
    %v1050 = vunpack.c.l.b16 %v252
    %v1051 = vunpack.c.h.b16 %v252
    %v1052 = vunpack.c.l.b16 %v253
    %v1053 = vunpack.c.h.b16 %v253
    %v1054 = vunpack.c.l.b16 %v254
    %v1055 = vunpack.c.h.b16 %v254
    %v1056 = vunpack.c.l.b16 %v255
    %v1057 = vunpack.c.h.b16 %v255
    %v1058 = vunpack.c.l.b16 %v256
    %v1059 = vunpack.c.h.b16 %v256
    %v1060 = vunpack.c.l.b16 %v257
    %v1061 = vunpack.c.h.b16 %v257
    %v1062 = vunpack.c.l.b16 %v258
    %v1063 = vunpack.c.h.b16 %v258
    %v1064 = vunpack.c.l.b16 %v259
    %v1065 = vunpack.c.h.b16 %v259
    %v1066 = vunpack.c.l.b16 %v260
    %v1067 = vunpack.c.h.b16 %v260
    %v1068 = vunpack.c.l.b16 %v261
    %v1069 = vunpack.c.h.b16 %v261
    %v1070 = vunpack.c.l.b16 %v262
    %v1071 = vunpack.c.h.b16 %v262
    %v1072 = vunpack.c.l.b16 %v263
    %v1073 = vunpack.c.h.b16 %v263
    %v1074 = vunpack.c.l.b16 %v264
    %v1075 = vunpack.c.h.b16 %v264
    %v1076 = vunpack.c.l.b16 %v265
    %v1077 = vunpack.c.h.b16 %v265
    %v1078 = vunpack.c.l.b16 %v266
    %v1079 = vunpack.c.h.b16 %v266
    %v1080 = vunpack.c.l.b16 %v267
    %v1081 = vunpack.c.h.b16 %v267
    %v1082 = vunpack.c.l.b16 %v268
    %v1083 = vunpack.c.h.b16 %v268
    %v1084 = vunpack.c.l.b16 %v269
    %v1085 = vunpack.c.h.b16 %v269
    %v1086 = vunpack.c.l.b16 %v270
    %v1087 = vunpack.c.h.b16 %v270
    %v1088 = vunpack.c.l.b16 %v271
    %v1089 = vunpack.c.h.b16 %v271
    %v1090 = vunpack.c.l.b16 %v272
    %v1091 = vunpack.c.h.b16 %v272
    %v1092 = vunpack.c.l.b16 %v273
    %v1093 = vunpack.c.h.b16 %v273
    %v1094 = vunpack.c.l.b16 %v274
    %v1095 = vunpack.c.h.b16 %v274
    %v1096 = vunpack.c.l.b16 %v275
    %v1097 = vunpack.c.h.b16 %v275
    %v1098 = vunpack.c.l.b16 %v276
    %v1099 = vunpack.c.h.b16 %v276
    %v1100 = vunpack.c.l.b16 %v277
    %v1101 = vunpack.c.h.b16 %v277
    %v1102 = vunpack.c.l.b16 %v278
    %v1103 = vunpack.c.h.b16 %v278
    %v1104 = vunpack.c.l.b16 %v279
    %v1105 = vunpack.c.h.b16 %v279
    %v1106 = vunpack.c.l.b16 %v280
    %v1107 = vunpack.c.h.b16 %v280
    %v1108 = vunpack.c.l.b16 %v281
    %v1109 = vunpack.c.h.b16 %v281
    %v1110 = vunpack.c.l.b16 %v282
    %v1111 = vunpack.c.h.b16 %v282
    %v1112 = vunpack.c.l.b16 %v283
    %v1113 = vunpack.c.h.b16 %v283
    %v1114 = vunpack.c.l.b16 %v284
    %v1115 = vunpack.c.h.b16 %v284
    %v1116 = vunpack.c.l.b16 %v285
    %v1117 = vunpack.c.h.b16 %v285
    %v1118 = vunpack.c.l.b16 %v286
    %v1119 = vunpack.c.h.b16 %v286
    %v1120 = vunpack.c.l.b16 %v287
    %v1121 = vunpack.c.h.b16 %v287
    %v1122 = vunpack.c.l.b16 %v288
    %v1123 = vunpack.c.h.b16 %v288
    %v1124 = vunpack.c.l.b16 %v289
    %v1125 = vunpack.c.h.b16 %v289
    %v1126 = vpack.c.b16 %v616, %v614
    %v1127 = vpack.c.b16 %v617, %v615
    %v1128 = vpack.c.b16 %v620, %v618
    %v1129 = vpack.c.b16 %v621, %v619
    %v1130 = vpack.c.b16 %v624, %v622
    %v1131 = vpack.c.b16 %v625, %v623
    %v1132 = vpack.c.b16 %v628, %v626
    %v1133 = vpack.c.b16 %v629, %v627
    %v1134 = vpack.c.b16 %v632, %v630
    %v1135 = vpack.c.b16 %v633, %v631
    %v1136 = vpack.c.b16 %v636, %v634
    %v1137 = vpack.c.b16 %v637, %v635
    %v1138 = vpack.c.b16 %v640, %v638
    %v1139 = vpack.c.b16 %v641, %v639
    %v1140 = vpack.c.b16 %v644, %v642
    %v1141 = vpack.c.b16 %v645, %v643
    %v1142 = vpack.c.b16 %v648, %v646
    %v1143 = vpack.c.b16 %v649, %v647
    %v1144 = vpack.c.b16 %v652, %v650
    %v1145 = vpack.c.b16 %v653, %v651
    %v1146 = vpack.c.b16 %v656, %v654
    %v1147 = vpack.c.b16 %v657, %v655
    %v1148 = vpack.c.b16 %v660, %v658
    %v1149 = vpack.c.b16 %v661, %v659
    %v1150 = vpack.c.b16 %v664, %v662
    %v1151 = vpack.c.b16 %v665, %v663
    %v1152 = vpack.c.b16 %v668, %v666
    %v1153 = vpack.c.b16 %v669, %v667
    %v1154 = vpack.c.b16 %v672, %v670
    %v1155 = vpack.c.b16 %v673, %v671
    %v1156 = vpack.c.b16 %v676, %v674
    %v1157 = vpack.c.b16 %v677, %v675
    %v1158 = vpack.c.b16 %v680, %v678
    %v1159 = vpack.c.b16 %v681, %v679
    %v1160 = vpack.c.b16 %v684, %v682
    %v1161 = vpack.c.b16 %v685, %v683
    %v1162 = vpack.c.b16 %v688, %v686
    %v1163 = vpack.c.b16 %v689, %v687
    %v1164 = vpack.c.b16 %v692, %v690
    %v1165 = vpack.c.b16 %v693, %v691
    %v1166 = vpack.c.b16 %v696, %v694
    %v1167 = vpack.c.b16 %v697, %v695
    %v1168 = vpack.c.b16 %v700, %v698
    %v1169 = vpack.c.b16 %v701, %v699
    %v1170 = vpack.c.b16 %v704, %v702
    %v1171 = vpack.c.b16 %v705, %v703
    %v1172 = vpack.c.b16 %v708, %v706
    %v1173 = vpack.c.b16 %v709, %v707
    %v1174 = vpack.c.b16 %v712, %v710
    %v1175 = vpack.c.b16 %v713, %v711
    %v1176 = vpack.c.b16 %v716, %v714
    %v1177 = vpack.c.b16 %v717, %v715
    %v1178 = vpack.c.b16 %v720, %v718
    %v1179 = vpack.c.b16 %v721, %v719
    %v1180 = vpack.c.b16 %v724, %v722
    %v1181 = vpack.c.b16 %v725, %v723
    %v1182 = vpack.c.b16 %v728, %v726
    %v1183 = vpack.c.b16 %v729, %v727
    %v1184 = vpack.c.b16 %v732, %v730
    %v1185 = vpack.c.b16 %v733, %v731
    %v1186 = vpack.c.b16 %v736, %v734
    %v1187 = vpack.c.b16 %v737, %v735
    %v1188 = vpack.c.b16 %v740, %v738
    %v1189 = vpack.c.b16 %v741, %v739
    %v1190 = vpack.c.b16 %v744, %v742
    %v1191 = vpack.c.b16 %v745, %v743
    %v1192 = vpack.c.b16 %v748, %v746
    %v1193 = vpack.c.b16 %v749, %v747
    %v1194 = vpack.c.b16 %v752, %v750
    %v1195 = vpack.c.b16 %v753, %v751
    %v1196 = vpack.c.b16 %v756, %v754
    %v1197 = vpack.c.b16 %v757, %v755
    %v1198 = vpack.c.b16 %v760, %v758
    %v1199 = vpack.c.b16 %v761, %v759
    %v1200 = vpack.c.b16 %v764, %v762
    %v1201 = vpack.c.b16 %v765, %v763
    %v1202 = vpack.c.b16 %v768, %v766
    %v1203 = vpack.c.b16 %v769, %v767
    %v1204 = vpack.c.b16 %v772, %v770
    %v1205 = vpack.c.b16 %v773, %v771
    %v1206 = vpack.c.b16 %v776, %v774
    %v1207 = vpack.c.b16 %v777, %v775
    %v1208 = vpack.c.b16 %v780, %v778
    %v1209 = vpack.c.b16 %v781, %v779
    %v1210 = vpack.c.b16 %v784, %v782
    %v1211 = vpack.c.b16 %v785, %v783
    %v1212 = vpack.c.b16 %v788, %v786
    %v1213 = vpack.c.b16 %v789, %v787
    %v1214 = vpack.c.b16 %v792, %v790
    %v1215 = vpack.c.b16 %v793, %v791
    %v1216 = vpack.c.b16 %v796, %v794
    %v1217 = vpack.c.b16 %v797, %v795
    %v1218 = vpack.c.b16 %v800, %v798
    %v1219 = vpack.c.b16 %v801, %v799
    %v1220 = vpack.c.b16 %v804, %v802
    %v1221 = vpack.c.b16 %v805, %v803
    %v1222 = vpack.c.b16 %v808, %v806
    %v1223 = vpack.c.b16 %v809, %v807
    %v1224 = vpack.c.b16 %v812, %v810
    %v1225 = vpack.c.b16 %v813, %v811
    %v1226 = vpack.c.b16 %v816, %v814
    %v1227 = vpack.c.b16 %v817, %v815
    %v1228 = vpack.c.b16 %v820, %v818
    %v1229 = vpack.c.b16 %v821, %v819
    %v1230 = vpack.c.b16 %v824, %v822
    %v1231 = vpack.c.b16 %v825, %v823
    %v1232 = vpack.c.b16 %v828, %v826
    %v1233 = vpack.c.b16 %v829, %v827
    %v1234 = vpack.c.b16 %v832, %v830
    %v1235 = vpack.c.b16 %v833, %v831
    %v1236 = vpack.c.b16 %v836, %v834
    %v1237 = vpack.c.b16 %v837, %v835
    %v1238 = vpack.c.b16 %v840, %v838
    %v1239 = vpack.c.b16 %v841, %v839
    %v1240 = vpack.c.b16 %v844, %v842
    %v1241 = vpack.c.b16 %v845, %v843
    %v1242 = vpack.c.b16 %v848, %v846
    %v1243 = vpack.c.b16 %v849, %v847
    %v1244 = vpack.c.b16 %v852, %v850
    %v1245 = vpack.c.b16 %v853, %v851
    %v1246 = vpack.c.b16 %v856, %v854
    %v1247 = vpack.c.b16 %v857, %v855
    %v1248 = vpack.c.b16 %v860, %v858
    %v1249 = vpack.c.b16 %v861, %v859
    %v1250 = vpack.c.b16 %v864, %v862
    %v1251 = vpack.c.b16 %v865, %v863
    %v1252 = vpack.c.b16 %v868, %v866
    %v1253 = vpack.c.b16 %v869, %v867
    %v1254 = vpack.c.b16 %v872, %v870
    %v1255 = vpack.c.b16 %v873, %v871
    %v1256 = vpack.c.b16 %v876, %v874
    %v1257 = vpack.c.b16 %v877, %v875
    %v1258 = vpack.c.b16 %v880, %v878
    %v1259 = vpack.c.b16 %v881, %v879
    %v1260 = vpack.c.b16 %v884, %v882
    %v1261 = vpack.c.b16 %v885, %v883
    %v1262 = vpack.c.b16 %v888, %v886
    %v1263 = vpack.c.b16 %v889, %v887
    %v1264 = vpack.c.b16 %v892, %v890
    %v1265 = vpack.c.b16 %v893, %v891
    %v1266 = vpack.c.b16 %v896, %v894
    %v1267 = vpack.c.b16 %v897, %v895
    %v1268 = vpack.c.b16 %v900, %v898
    %v1269 = vpack.c.b16 %v901, %v899
    %v1270 = vpack.c.b16 %v904, %v902
    %v1271 = vpack.c.b16 %v905, %v903
    %v1272 = vpack.c.b16 %v908, %v906
    %v1273 = vpack.c.b16 %v909, %v907
    %v1274 = vpack.c.b16 %v912, %v910
    %v1275 = vpack.c.b16 %v913, %v911
    %v1276 = vpack.c.b16 %v916, %v914
    %v1277 = vpack.c.b16 %v917, %v915
    %v1278 = vpack.c.b16 %v920, %v918
    %v1279 = vpack.c.b16 %v921, %v919
    %v1280 = vpack.c.b16 %v924, %v922
    %v1281 = vpack.c.b16 %v925, %v923
    %v1282 = vpack.c.b16 %v928, %v926
    %v1283 = vpack.c.b16 %v929, %v927
    %v1284 = vpack.c.b16 %v932, %v930
    %v1285 = vpack.c.b16 %v933, %v931
    %v1286 = vpack.c.b16 %v936, %v934
    %v1287 = vpack.c.b16 %v937, %v935
    %v1288 = vpack.c.b16 %v940, %v938
    %v1289 = vpack.c.b16 %v941, %v939
    %v1290 = vpack.c.b16 %v944, %v942
    %v1291 = vpack.c.b16 %v945, %v943
    %v1292 = vpack.c.b16 %v948, %v946
    %v1293 = vpack.c.b16 %v949, %v947
    %v1294 = vpack.c.b16 %v952, %v950
    %v1295 = vpack.c.b16 %v953, %v951
    %v1296 = vpack.c.b16 %v956, %v954
    %v1297 = vpack.c.b16 %v957, %v955
    %v1298 = vpack.c.b16 %v960, %v958
    %v1299 = vpack.c.b16 %v961, %v959
    %v1300 = vpack.c.b16 %v964, %v962
    %v1301 = vpack.c.b16 %v965, %v963
    %v1302 = vpack.c.b16 %v968, %v966
    %v1303 = vpack.c.b16 %v969, %v967
    %v1304 = vpack.c.b16 %v972, %v970
    %v1305 = vpack.c.b16 %v973, %v971
    %v1306 = vpack.c.b16 %v976, %v974
    %v1307 = vpack.c.b16 %v977, %v975
    %v1308 = vpack.c.b16 %v980, %v978
    %v1309 = vpack.c.b16 %v981, %v979
    %v1310 = vpack.c.b16 %v984, %v982
    %v1311 = vpack.c.b16 %v985, %v983
    %v1312 = vpack.c.b16 %v988, %v986
    %v1313 = vpack.c.b16 %v989, %v987
    %v1314 = vpack.c.b16 %v992, %v990
    %v1315 = vpack.c.b16 %v993, %v991
    %v1316 = vpack.c.b16 %v996, %v994
    %v1317 = vpack.c.b16 %v997, %v995
    %v1318 = vpack.c.b16 %v1000, %v998
    %v1319 = vpack.c.b16 %v1001, %v999
    %v1320 = vpack.c.b16 %v1004, %v1002
    %v1321 = vpack.c.b16 %v1005, %v1003
    %v1322 = vpack.c.b16 %v1008, %v1006
    %v1323 = vpack.c.b16 %v1009, %v1007
    %v1324 = vpack.c.b16 %v1012, %v1010
    %v1325 = vpack.c.b16 %v1013, %v1011
    %v1326 = vpack.c.b16 %v1016, %v1014
    %v1327 = vpack.c.b16 %v1017, %v1015
    %v1328 = vpack.c.b16 %v1020, %v1018
    %v1329 = vpack.c.b16 %v1021, %v1019
    %v1330 = vpack.c.b16 %v1024, %v1022
    %v1331 = vpack.c.b16 %v1025, %v1023
    %v1332 = vpack.c.b16 %v1028, %v1026
    %v1333 = vpack.c.b16 %v1029, %v1027
    %v1334 = vpack.c.b16 %v1032, %v1030
    %v1335 = vpack.c.b16 %v1033, %v1031
    %v1336 = vpack.c.b16 %v1036, %v1034
    %v1337 = vpack.c.b16 %v1037, %v1035
    %v1338 = vpack.c.b16 %v1040, %v1038
    %v1339 = vpack.c.b16 %v1041, %v1039
    %v1340 = vpack.c.b16 %v1044, %v1042
    %v1341 = vpack.c.b16 %v1045, %v1043
    %v1342 = vpack.c.b16 %v1048, %v1046
    %v1343 = vpack.c.b16 %v1049, %v1047
    %v1344 = vpack.c.b16 %v1052, %v1050
    %v1345 = vpack.c.b16 %v1053, %v1051
    %v1346 = vpack.c.b16 %v1056, %v1054
    %v1347 = vpack.c.b16 %v1057, %v1055
    %v1348 = vpack.c.b16 %v1060, %v1058
    %v1349 = vpack.c.b16 %v1061, %v1059
    %v1350 = vpack.c.b16 %v1064, %v1062
    %v1351 = vpack.c.b16 %v1065, %v1063
    %v1352 = vpack.c.b16 %v1068, %v1066
    %v1353 = vpack.c.b16 %v1069, %v1067
    %v1354 = vpack.c.b16 %v1072, %v1070
    %v1355 = vpack.c.b16 %v1073, %v1071
    %v1356 = vpack.c.b16 %v1076, %v1074
    %v1357 = vpack.c.b16 %v1077, %v1075
    %v1358 = vpack.c.b16 %v1080, %v1078
    %v1359 = vpack.c.b16 %v1081, %v1079
    %v1360 = vpack.c.b16 %v1084, %v1082
    %v1361 = vpack.c.b16 %v1085, %v1083
    %v1362 = vpack.c.b16 %v1088, %v1086
    %v1363 = vpack.c.b16 %v1089, %v1087
    %v1364 = vpack.c.b16 %v1092, %v1090
    %v1365 = vpack.c.b16 %v1093, %v1091
    %v1366 = vpack.c.b16 %v1096, %v1094
    %v1367 = vpack.c.b16 %v1097, %v1095
    %v1368 = vpack.c.b16 %v1100, %v1098
    %v1369 = vpack.c.b16 %v1101, %v1099
    %v1370 = vpack.c.b16 %v1104, %v1102
    %v1371 = vpack.c.b16 %v1105, %v1103
    %v1372 = vpack.c.b16 %v1108, %v1106
    %v1373 = vpack.c.b16 %v1109, %v1107
    %v1374 = vpack.c.b16 %v1112, %v1110
    %v1375 = vpack.c.b16 %v1113, %v1111
    %v1376 = vpack.c.b16 %v1116, %v1114
    %v1377 = vpack.c.b16 %v1117, %v1115
    %v1378 = vpack.c.b16 %v1120, %v1118
    %v1379 = vpack.c.b16 %v1121, %v1119
    %v1380 = vpack.c.b16 %v1124, %v1122
    %v1381 = vpack.c.b16 %v1125, %v1123
    %1638 = vmatprep.subr.bf16.mxu0 %v1141
    %1639 = vmatpush1.bf16.msra.mxu0 %v1140
    %1640 = vmatprep.subr.bf16.mxu0 %v1139
    %1641 = vmatpush1.bf16.msra.mxu0 %v1138
    %1642 = vmatprep.subr.bf16.mxu0 %v1137
    %1643 = vmatpush1.bf16.msra.mxu0 %v1136
    %1644 = vmatprep.subr.bf16.mxu0 %v1135
    %1645 = vmatpush1.bf16.msra.mxu0 %v1134
    %1646 = vmatprep.subr.bf16.mxu0 %v1133
    %1647 = vmatpush1.bf16.msra.mxu0 %v1132
    %1648 = vmatprep.subr.bf16.mxu0 %v1131
    %1649 = vmatpush1.bf16.msra.mxu0 %v1130
    %1650 = vmatprep.subr.bf16.mxu0 %v1129
    %1651 = vmatpush1.bf16.msra.mxu0 %v1128
    %1652 = vmatprep.subr.bf16.mxu0 %v1127
    %1653 = vmatpush1.bf16.msra.mxu0 %v1126
    %1654 = vmatprep.subr.bf16.mxu0 %v1157
    %1655 = vmatpush2.bf16.msra.mxu0 %v1156
    %1656 = vmatprep.subr.bf16.mxu0 %v1155
    %1657 = vmatpush2.bf16.msra.mxu0 %v1154
    %1658 = vmatprep.subr.bf16.mxu0 %v1153
    %1659 = vmatpush2.bf16.msra.mxu0 %v1152
    %1660 = vmatprep.subr.bf16.mxu0 %v1151
    %1661 = vmatpush2.bf16.msra.mxu0 %v1150
    %1662 = vmatprep.subr.bf16.mxu0 %v1149
    %1663 = vmatpush2.bf16.msra.mxu0 %v1148
    %1664 = vmatprep.subr.bf16.mxu0 %v1147
    %1665 = vmatpush2.bf16.msra.mxu0 %v1146
    %1666 = vmatprep.subr.bf16.mxu0 %v1145
    %1667 = vmatpush2.bf16.msra.mxu0 %v1144
    %1668 = vmatprep.subr.bf16.mxu0 %v1143
    %1669 = vmatpush2.bf16.msra.mxu0 %v1142
    %1670 = vmatprep.mubr.bf16.mxu0 %v327
    %1671 = vmatmul.mubr.bf16.gmra.mxu0 %v326
    %v1672 = vpop.f32.mrf.mxu0
    %v1673 = vadd.f32 %v295, %v1672
    %v1674 = vpop.f32.mrf.mxu0
    %v1675 = vadd.f32 %v299, %v1674
    %v1676 = vpop.f32.mrf.mxu0
    %v1677 = vpop.f32.mrf.mxu0
    %1678 = vdwg.mxu0
    %1679 = vmatprep.subr.bf16.mxu0 %v1173
    %1680 = vmatpush1.bf16.msra.mxu0 %v1172
    %1681 = vmatprep.subr.bf16.mxu0 %v1171
    %1682 = vmatpush1.bf16.msra.mxu0 %v1170
    %1683 = vmatprep.subr.bf16.mxu0 %v1169
    %1684 = vmatpush1.bf16.msra.mxu0 %v1168
    %1685 = vmatprep.subr.bf16.mxu0 %v1167
    %1686 = vmatpush1.bf16.msra.mxu0 %v1166
    %1687 = vmatprep.subr.bf16.mxu0 %v1165
    %1688 = vmatpush1.bf16.msra.mxu0 %v1164
    %1689 = vmatprep.subr.bf16.mxu0 %v1163
    %1690 = vmatpush1.bf16.msra.mxu0 %v1162
    %1691 = vmatprep.subr.bf16.mxu0 %v1161
    %1692 = vmatpush1.bf16.msra.mxu0 %v1160
    %1693 = vmatprep.subr.bf16.mxu0 %v1159
    %1694 = vmatpush1.bf16.msra.mxu0 %v1158
    %1695 = vmatprep.subr.bf16.mxu0 %v1189
    %1696 = vmatpush2.bf16.msra.mxu0 %v1188
    %1697 = vmatprep.subr.bf16.mxu0 %v1187
    %1698 = vmatpush2.bf16.msra.mxu0 %v1186
    %1699 = vmatprep.subr.bf16.mxu0 %v1185
    %1700 = vmatpush2.bf16.msra.mxu0 %v1184
    %1701 = vmatprep.subr.bf16.mxu0 %v1183
    %1702 = vmatpush2.bf16.msra.mxu0 %v1182
    %1703 = vmatprep.subr.bf16.mxu0 %v1181
    %1704 = vmatpush2.bf16.msra.mxu0 %v1180
    %1705 = vmatprep.subr.bf16.mxu0 %v1179
    %1706 = vmatpush2.bf16.msra.mxu0 %v1178
    %1707 = vmatprep.subr.bf16.mxu0 %v1177
    %1708 = vmatpush2.bf16.msra.mxu0 %v1176
    %1709 = vmatprep.subr.bf16.mxu0 %v1175
    %1710 = vmatpush2.bf16.msra.mxu0 %v1174
    %1711 = vmatprep.mubr.bf16.mxu0 %v329
    %1712 = vmatmul.mubr.bf16.gmra.mxu0 %v328
    %v1713 = vpop.f32.mrf.mxu0
    %v1714 = vadd.f32 %v1673, %v1713
    %v1715 = vpop.f32.mrf.mxu0
    %v1716 = vadd.f32 %v1675, %v1715
    %v1717 = vpop.f32.mrf.mxu0
    %v1718 = vpop.f32.mrf.mxu0
    %1719 = vdwg.mxu0
    %1720 = vmatprep.subr.bf16.mxu0 %v1205
    %1721 = vmatpush1.bf16.msra.mxu0 %v1204
    %1722 = vmatprep.subr.bf16.mxu0 %v1203
    %1723 = vmatpush1.bf16.msra.mxu0 %v1202
    %1724 = vmatprep.subr.bf16.mxu0 %v1201
    %1725 = vmatpush1.bf16.msra.mxu0 %v1200
    %1726 = vmatprep.subr.bf16.mxu0 %v1199
    %1727 = vmatpush1.bf16.msra.mxu0 %v1198
    %1728 = vmatprep.subr.bf16.mxu0 %v1197
    %1729 = vmatpush1.bf16.msra.mxu0 %v1196
    %1730 = vmatprep.subr.bf16.mxu0 %v1195
    %1731 = vmatpush1.bf16.msra.mxu0 %v1194
    %1732 = vmatprep.subr.bf16.mxu0 %v1193
    %1733 = vmatpush1.bf16.msra.mxu0 %v1192
    %1734 = vmatprep.subr.bf16.mxu0 %v1191
    %1735 = vmatpush1.bf16.msra.mxu0 %v1190
    %1736 = vmatprep.subr.bf16.mxu0 %v1221
    %1737 = vmatpush2.bf16.msra.mxu0 %v1220
    %1738 = vmatprep.subr.bf16.mxu0 %v1219
    %1739 = vmatpush2.bf16.msra.mxu0 %v1218
    %1740 = vmatprep.subr.bf16.mxu0 %v1217
    %1741 = vmatpush2.bf16.msra.mxu0 %v1216
    %1742 = vmatprep.subr.bf16.mxu0 %v1215
    %1743 = vmatpush2.bf16.msra.mxu0 %v1214
    %1744 = vmatprep.subr.bf16.mxu0 %v1213
    %1745 = vmatpush2.bf16.msra.mxu0 %v1212
    %1746 = vmatprep.subr.bf16.mxu0 %v1211
    %1747 = vmatpush2.bf16.msra.mxu0 %v1210
    %1748 = vmatprep.subr.bf16.mxu0 %v1209
    %1749 = vmatpush2.bf16.msra.mxu0 %v1208
    %1750 = vmatprep.subr.bf16.mxu0 %v1207
    %1751 = vmatpush2.bf16.msra.mxu0 %v1206
    %1752 = vmatprep.mubr.bf16.mxu0 %v331
    %1753 = vmatmul.mubr.bf16.gmra.mxu0 %v330
    %v1754 = vpop.f32.mrf.mxu0
    %v1755 = vadd.f32 %v1714, %v1754
    %v1756 = vpop.f32.mrf.mxu0
    %v1757 = vadd.f32 %v1716, %v1756
    %v1758 = vpop.f32.mrf.mxu0
    %v1759 = vpop.f32.mrf.mxu0
    %1760 = vdwg.mxu0
    %1761 = vmatprep.subr.bf16.mxu0 %v1237
    %1762 = vmatpush1.bf16.msra.mxu0 %v1236
    %1763 = vmatprep.subr.bf16.mxu0 %v1235
    %1764 = vmatpush1.bf16.msra.mxu0 %v1234
    %1765 = vmatprep.subr.bf16.mxu0 %v1233
    %1766 = vmatpush1.bf16.msra.mxu0 %v1232
    %1767 = vmatprep.subr.bf16.mxu0 %v1231
    %1768 = vmatpush1.bf16.msra.mxu0 %v1230
    %1769 = vmatprep.subr.bf16.mxu0 %v1229
    %1770 = vmatpush1.bf16.msra.mxu0 %v1228
    %1771 = vmatprep.subr.bf16.mxu0 %v1227
    %1772 = vmatpush1.bf16.msra.mxu0 %v1226
    %1773 = vmatprep.subr.bf16.mxu0 %v1225
    %1774 = vmatpush1.bf16.msra.mxu0 %v1224
    %1775 = vmatprep.subr.bf16.mxu0 %v1223
    %1776 = vmatpush1.bf16.msra.mxu0 %v1222
    %1777 = vmatprep.subr.bf16.mxu0 %v1253
    %1778 = vmatpush2.bf16.msra.mxu0 %v1252
    %1779 = vmatprep.subr.bf16.mxu0 %v1251
    %1780 = vmatpush2.bf16.msra.mxu0 %v1250
    %1781 = vmatprep.subr.bf16.mxu0 %v1249
    %1782 = vmatpush2.bf16.msra.mxu0 %v1248
    %1783 = vmatprep.subr.bf16.mxu0 %v1247
    %1784 = vmatpush2.bf16.msra.mxu0 %v1246
    %1785 = vmatprep.subr.bf16.mxu0 %v1245
    %1786 = vmatpush2.bf16.msra.mxu0 %v1244
    %1787 = vmatprep.subr.bf16.mxu0 %v1243
    %1788 = vmatpush2.bf16.msra.mxu0 %v1242
    %1789 = vmatprep.subr.bf16.mxu0 %v1241
    %1790 = vmatpush2.bf16.msra.mxu0 %v1240
    %1791 = vmatprep.subr.bf16.mxu0 %v1239
    %1792 = vmatpush2.bf16.msra.mxu0 %v1238
    %1793 = vmatprep.mubr.bf16.mxu0 %v333
    %1794 = vmatmul.mubr.bf16.gmra.mxu0 %v332
    %v1795 = vpop.f32.mrf.mxu0
    %v1796 = vadd.f32 %v1755, %v1795
    %v1797 = vpop.f32.mrf.mxu0
    %v1798 = vadd.f32 %v1757, %v1797
    %v1799 = vpop.f32.mrf.mxu0
    %v1800 = vpop.f32.mrf.mxu0
    %1801 = vdwg.mxu0
    %1802 = vmatprep.subr.bf16.mxu0 %v1269
    %1803 = vmatpush1.bf16.msra.mxu0 %v1268
    %1804 = vmatprep.subr.bf16.mxu0 %v1267
    %1805 = vmatpush1.bf16.msra.mxu0 %v1266
    %1806 = vmatprep.subr.bf16.mxu0 %v1265
    %1807 = vmatpush1.bf16.msra.mxu0 %v1264
    %1808 = vmatprep.subr.bf16.mxu0 %v1263
    %1809 = vmatpush1.bf16.msra.mxu0 %v1262
    %1810 = vmatprep.subr.bf16.mxu0 %v1261
    %1811 = vmatpush1.bf16.msra.mxu0 %v1260
    %1812 = vmatprep.subr.bf16.mxu0 %v1259
    %1813 = vmatpush1.bf16.msra.mxu0 %v1258
    %1814 = vmatprep.subr.bf16.mxu0 %v1257
    %1815 = vmatpush1.bf16.msra.mxu0 %v1256
    %1816 = vmatprep.subr.bf16.mxu0 %v1255
    %1817 = vmatpush1.bf16.msra.mxu0 %v1254
    %1818 = vmatprep.subr.bf16.mxu0 %v1285
    %1819 = vmatpush2.bf16.msra.mxu0 %v1284
    %1820 = vmatprep.subr.bf16.mxu0 %v1283
    %1821 = vmatpush2.bf16.msra.mxu0 %v1282
    %1822 = vmatprep.subr.bf16.mxu0 %v1281
    %1823 = vmatpush2.bf16.msra.mxu0 %v1280
    %1824 = vmatprep.subr.bf16.mxu0 %v1279
    %1825 = vmatpush2.bf16.msra.mxu0 %v1278
    %1826 = vmatprep.subr.bf16.mxu0 %v1277
    %1827 = vmatpush2.bf16.msra.mxu0 %v1276
    %1828 = vmatprep.subr.bf16.mxu0 %v1275
    %1829 = vmatpush2.bf16.msra.mxu0 %v1274
    %1830 = vmatprep.subr.bf16.mxu0 %v1273
    %1831 = vmatpush2.bf16.msra.mxu0 %v1272
    %1832 = vmatprep.subr.bf16.mxu0 %v1271
    %1833 = vmatpush2.bf16.msra.mxu0 %v1270
    %1834 = vmatprep.mubr.bf16.mxu0 %v335
    %1835 = vmatmul.mubr.bf16.gmra.mxu0 %v334
    %v1836 = vpop.f32.mrf.mxu0
    %v1837 = vadd.f32 %v1796, %v1836
    %v1838 = vpop.f32.mrf.mxu0
    %v1839 = vadd.f32 %v1798, %v1838
    %v1840 = vpop.f32.mrf.mxu0
    %v1841 = vpop.f32.mrf.mxu0
    %1842 = vdwg.mxu0
    %1843 = vmatprep.subr.bf16.mxu0 %v1301
    %1844 = vmatpush1.bf16.msra.mxu0 %v1300
    %1845 = vmatprep.subr.bf16.mxu0 %v1299
    %1846 = vmatpush1.bf16.msra.mxu0 %v1298
    %1847 = vmatprep.subr.bf16.mxu0 %v1297
    %1848 = vmatpush1.bf16.msra.mxu0 %v1296
    %1849 = vmatprep.subr.bf16.mxu0 %v1295
    %1850 = vmatpush1.bf16.msra.mxu0 %v1294
    %1851 = vmatprep.subr.bf16.mxu0 %v1293
    %1852 = vmatpush1.bf16.msra.mxu0 %v1292
    %1853 = vmatprep.subr.bf16.mxu0 %v1291
    %1854 = vmatpush1.bf16.msra.mxu0 %v1290
    %1855 = vmatprep.subr.bf16.mxu0 %v1289
    %1856 = vmatpush1.bf16.msra.mxu0 %v1288
    %1857 = vmatprep.subr.bf16.mxu0 %v1287
    %1858 = vmatpush1.bf16.msra.mxu0 %v1286
    %1859 = vmatprep.subr.bf16.mxu0 %v1317
    %1860 = vmatpush2.bf16.msra.mxu0 %v1316
    %1861 = vmatprep.subr.bf16.mxu0 %v1315
    %1862 = vmatpush2.bf16.msra.mxu0 %v1314
    %1863 = vmatprep.subr.bf16.mxu0 %v1313
    %1864 = vmatpush2.bf16.msra.mxu0 %v1312
    %1865 = vmatprep.subr.bf16.mxu0 %v1311
    %1866 = vmatpush2.bf16.msra.mxu0 %v1310
    %1867 = vmatprep.subr.bf16.mxu0 %v1309
    %1868 = vmatpush2.bf16.msra.mxu0 %v1308
    %1869 = vmatprep.subr.bf16.mxu0 %v1307
    %1870 = vmatpush2.bf16.msra.mxu0 %v1306
    %1871 = vmatprep.subr.bf16.mxu0 %v1305
    %1872 = vmatpush2.bf16.msra.mxu0 %v1304
    %1873 = vmatprep.subr.bf16.mxu0 %v1303
    %1874 = vmatpush2.bf16.msra.mxu0 %v1302
    %1875 = vmatprep.mubr.bf16.mxu0 %v337
    %1876 = vmatmul.mubr.bf16.gmra.mxu0 %v336
    %v1877 = vpop.f32.mrf.mxu0
    %v1878 = vadd.f32 %v1837, %v1877
    %v1879 = vpop.f32.mrf.mxu0
    %v1880 = vadd.f32 %v1839, %v1879
    %v1881 = vpop.f32.mrf.mxu0
    %v1882 = vpop.f32.mrf.mxu0
    %1883 = vdwg.mxu0
    %1884 = vmatprep.subr.bf16.mxu0 %v1333
    %1885 = vmatpush1.bf16.msra.mxu0 %v1332
    %1886 = vmatprep.subr.bf16.mxu0 %v1331
    %1887 = vmatpush1.bf16.msra.mxu0 %v1330
    %1888 = vmatprep.subr.bf16.mxu0 %v1329
    %1889 = vmatpush1.bf16.msra.mxu0 %v1328
    %1890 = vmatprep.subr.bf16.mxu0 %v1327
    %1891 = vmatpush1.bf16.msra.mxu0 %v1326
    %1892 = vmatprep.subr.bf16.mxu0 %v1325
    %1893 = vmatpush1.bf16.msra.mxu0 %v1324
    %1894 = vmatprep.subr.bf16.mxu0 %v1323
    %1895 = vmatpush1.bf16.msra.mxu0 %v1322
    %1896 = vmatprep.subr.bf16.mxu0 %v1321
    %1897 = vmatpush1.bf16.msra.mxu0 %v1320
    %1898 = vmatprep.subr.bf16.mxu0 %v1319
    %1899 = vmatpush1.bf16.msra.mxu0 %v1318
    %1900 = vmatprep.subr.bf16.mxu0 %v1349
    %1901 = vmatpush2.bf16.msra.mxu0 %v1348
    %1902 = vmatprep.subr.bf16.mxu0 %v1347
    %1903 = vmatpush2.bf16.msra.mxu0 %v1346
    %1904 = vmatprep.subr.bf16.mxu0 %v1345
    %1905 = vmatpush2.bf16.msra.mxu0 %v1344
    %1906 = vmatprep.subr.bf16.mxu0 %v1343
    %1907 = vmatpush2.bf16.msra.mxu0 %v1342
    %1908 = vmatprep.subr.bf16.mxu0 %v1341
    %1909 = vmatpush2.bf16.msra.mxu0 %v1340
    %1910 = vmatprep.subr.bf16.mxu0 %v1339
    %1911 = vmatpush2.bf16.msra.mxu0 %v1338
    %1912 = vmatprep.subr.bf16.mxu0 %v1337
    %1913 = vmatpush2.bf16.msra.mxu0 %v1336
    %1914 = vmatprep.subr.bf16.mxu0 %v1335
    %1915 = vmatpush2.bf16.msra.mxu0 %v1334
    %1916 = vmatprep.mubr.bf16.mxu0 %v339
    %1917 = vmatmul.mubr.bf16.gmra.mxu0 %v338
    %v1918 = vpop.f32.mrf.mxu0
    %v1919 = vadd.f32 %v1878, %v1918
    %v1920 = vpop.f32.mrf.mxu0
    %v1921 = vadd.f32 %v1880, %v1920
    %v1922 = vpop.f32.mrf.mxu0
    %v1923 = vpop.f32.mrf.mxu0
    %1924 = vdwg.mxu0
    %1925 = vmatprep.subr.bf16.mxu0 %v1365
    %1926 = vmatpush1.bf16.msra.mxu0 %v1364
    %1927 = vmatprep.subr.bf16.mxu0 %v1363
    %1928 = vmatpush1.bf16.msra.mxu0 %v1362
    %1929 = vmatprep.subr.bf16.mxu0 %v1361
    %1930 = vmatpush1.bf16.msra.mxu0 %v1360
    %1931 = vmatprep.subr.bf16.mxu0 %v1359
    %1932 = vmatpush1.bf16.msra.mxu0 %v1358
    %1933 = vmatprep.subr.bf16.mxu0 %v1357
    %1934 = vmatpush1.bf16.msra.mxu0 %v1356
    %1935 = vmatprep.subr.bf16.mxu0 %v1355
    %1936 = vmatpush1.bf16.msra.mxu0 %v1354
    %1937 = vmatprep.subr.bf16.mxu0 %v1353
    %1938 = vmatpush1.bf16.msra.mxu0 %v1352
    %1939 = vmatprep.subr.bf16.mxu0 %v1351
    %1940 = vmatpush1.bf16.msra.mxu0 %v1350
    %1941 = vmatprep.subr.bf16.mxu0 %v1381
    %1942 = vmatpush2.bf16.msra.mxu0 %v1380
    %1943 = vmatprep.subr.bf16.mxu0 %v1379
    %1944 = vmatpush2.bf16.msra.mxu0 %v1378
    %1945 = vmatprep.subr.bf16.mxu0 %v1377
    %1946 = vmatpush2.bf16.msra.mxu0 %v1376
    %1947 = vmatprep.subr.bf16.mxu0 %v1375
    %1948 = vmatpush2.bf16.msra.mxu0 %v1374
    %1949 = vmatprep.subr.bf16.mxu0 %v1373
    %1950 = vmatpush2.bf16.msra.mxu0 %v1372
    %1951 = vmatprep.subr.bf16.mxu0 %v1371
    %1952 = vmatpush2.bf16.msra.mxu0 %v1370
    %1953 = vmatprep.subr.bf16.mxu0 %v1369
    %1954 = vmatpush2.bf16.msra.mxu0 %v1368
    %1955 = vmatprep.subr.bf16.mxu0 %v1367
    %1956 = vmatpush2.bf16.msra.mxu0 %v1366
    %1957 = vmatprep.mubr.bf16.mxu0 %v341
    %1958 = vmatmul.mubr.bf16.gmra.mxu0 %v340
    %v1959 = vpop.f32.mrf.mxu0
    %v1960 = vadd.f32 %v1919, %v1959
    %v1961 = vpop.f32.mrf.mxu0
    %v1962 = vadd.f32 %v1921, %v1961
    %v1963 = vpop.f32.mrf.mxu0
    %v1964 = vpop.f32.mrf.mxu0
    %1965 = vdwg.mxu0
    %v1966 = vmax.f32 %v1960, 0.0
    %v1967 = vmax.f32 %v1962, 0.0
    %v1968 = vpack.c.bf16 %v1966, %v1966
    %v1969 = vpack.c.bf16 %v1967, %v1967
    %v1972 = vunpack.c.l.b16 %v1968
    %v1973 = vunpack.c.l.b16 %v1969
    %v1974 = vpack.c.b16 %v1973, %v1972
    %1976 = vst [vmem:[%s3] sm:$0xff] %v1974
    // Predicated region
    $region18: #{vae_forward.9} parent=1 // pred_check
      _
    $region19: #{vae_forward.9} parent=1 // pred_check_branch
      %1978 = sbr.rel (0) target = $region21
    $region20: #{vae_forward.9} parent=1 // pred_region
      _
    $region21: #{vae_forward.9} parent=1 // pred_fallthru
      _
    // Predicated region
    $region22: #{vae_forward.9} parent=1 // pred_check
      _
    $region23: #{vae_forward.9} parent=1 // pred_check_branch
      %1980 = sbr.rel (0) target = $region25
    $region24: #{vae_forward.9} parent=1 // pred_region
      _
    $region25: #{vae_forward.9} parent=1 // pred_fallthru
      _
    %1981 = vsyncpa [#allocation3], 1

// kernel: vae_forward.10
$region0: #{vae_forward.10}
  #allocation0 [shape = 'u32[]', space=smem, size = 0x4, offset = 0x4, fixed_abs, tag = 'smem constant byte address 0x4 - core index']
  #allocation1 [shape = 'u32[144,128]{1,0:T(1,128)}', space=vmem, size = 0x12000, scoped, tag = 'internal scratch']
  %s0 = inlined_call_operand.vmem [shape: bf16[2,1024], index: 0, kind: input, shape index: {}]
  %s1 = inlined_call_operand.vmem [shape: bf16[1024,8], index: 1, kind: input, shape index: {}]
  %s2 = inlined_call_operand.vmem [shape: f32[1,8], index: 2, kind: input, shape index: {}]
  %s3 = inlined_call_operand.vmem [shape: bf16[1024,8], index: 3, kind: input, shape index: {}]
  %s4 = inlined_call_operand.vmem [shape: f32[1,8], index: 4, kind: input, shape index: {}]
  %s5 = inlined_call_operand.vmem [shape: f32[2,8], index: 5, kind: input, shape index: {}]
  %s6 = inlined_call_operand.vmem [shape: bf16[8,1024], index: 6, kind: input, shape index: {}]
  %s7 = inlined_call_operand.vmem [shape: f32[1,1024], index: 7, kind: input, shape index: {}]
  %s8 = inlined_call_operand.hbm [shape: f32[2,8], index: 8, kind: output, shape index: {0}]
  %s9 = inlined_call_operand.hbm [shape: f32[2,8], index: 9, kind: output, shape index: {1}]
  %s10 = inlined_call_operand.vmem [shape: bf16[2,1024], index: 10, kind: output, shape index: {2}]
  %11 = xla_tuple %s8, %s9, %s10
  %s12 = sld [smem:[#allocation0]]
  $region58: #{vae_forward.10} parent=0
    _
  %s14 = ssub.s32 1, %s12
  %s15 = scalar_select 0, %s14, %s12
  $region1: #{vae_forward.10} parent=0
    #allocation2 [shape = 'u8[1024]{0}', space=vmem, size = 0x400, scoped, tag = 'output window, operand 0, single buffered']
    #allocation3 [shape = 's32[1]{0}', space=sflag, size = 0x4, scoped, tag = 'scoped memory for vae_forward.10']
    #allocation4 [shape = 'u8[1024]{0}', space=vmem, size = 0x400, scoped, tag = 'output window, operand 1, single buffered']
    #allocation5 [shape = 's32[1]{0}', space=sflag, size = 0x4, scoped, tag = 'scoped memory for vae_forward.10']
    %16 = vsyncpa [#allocation3], 0
    %17 = vsyncpa [#allocation5], 0
    // Predicated region
    $region2: #{vae_forward.10} parent=1 // pred_check
      _
    $region3: #{vae_forward.10} parent=1 // pred_check_branch
      %19 = sbr.rel (0) target = $region5
    $region4: #{vae_forward.10} parent=1 // pred_region
      _
    $region5: #{vae_forward.10} parent=1 // pred_fallthru
      _
    // Predicated region
    $region6: #{vae_forward.10} parent=1 // pred_check
      _
    $region7: #{vae_forward.10} parent=1 // pred_check_branch
      %21 = sbr.rel (0) target = $region9
    $region8: #{vae_forward.10} parent=1 // pred_region
      _
    $region9: #{vae_forward.10} parent=1 // pred_fallthru
      _
    // Predicated region
    $region10: #{vae_forward.10} parent=1 // pred_check
      _
    $region11: #{vae_forward.10} parent=1 // pred_check_branch
      %23 = sbr.rel (0) target = $region13
    $region12: #{vae_forward.10} parent=1 // pred_region
      _
    $region13: #{vae_forward.10} parent=1 // pred_fallthru
      _
    // Predicated region
    $region14: #{vae_forward.10} parent=1 // pred_check
      _
    $region15: #{vae_forward.10} parent=1 // pred_check_branch
      %25 = sbr.rel (0) target = $region17
    $region16: #{vae_forward.10} parent=1 // pred_region
      _
    $region17: #{vae_forward.10} parent=1 // pred_fallthru
      _
    // Predicated region
    $region18: #{vae_forward.10} parent=1 // pred_check
      _
    $region19: #{vae_forward.10} parent=1 // pred_check_branch
      %27 = sbr.rel (0) target = $region21
    $region20: #{vae_forward.10} parent=1 // pred_region
      _
    $region21: #{vae_forward.10} parent=1 // pred_fallthru
      _
    // Predicated region
    $region22: #{vae_forward.10} parent=1 // pred_check
      _
    $region23: #{vae_forward.10} parent=1 // pred_check_branch
      %29 = sbr.rel (0) target = $region25
    $region24: #{vae_forward.10} parent=1 // pred_region
      _
    $region25: #{vae_forward.10} parent=1 // pred_fallthru
      _
    // Predicated region
    $region26: #{vae_forward.10} parent=1 // pred_check
      _
    $region27: #{vae_forward.10} parent=1 // pred_check_branch
      %31 = sbr.rel (0) target = $region29
    $region28: #{vae_forward.10} parent=1 // pred_region
      _
    $region29: #{vae_forward.10} parent=1 // pred_fallthru
      _
    // Predicated region
    $region30: #{vae_forward.10} parent=1 // pred_check
      _
    $region31: #{vae_forward.10} parent=1 // pred_check_branch
      %33 = sbr.rel (0) target = $region33
    $region32: #{vae_forward.10} parent=1 // pred_region
      _
    $region33: #{vae_forward.10} parent=1 // pred_fallthru
      _
    %v35 = vld [vmem:[%s0] sm:$0xff]
    %v36 = vld [vmem:[%s1] sm:$0xf]
    %v37 = vld [vmem:[%s1 + $0x4] sm:$0xf]
    %v38 = vld [vmem:[%s1 + $0x8] sm:$0xf]
    %v39 = vld [vmem:[%s1 + $0xc] sm:$0xf]
    %v40 = vld [vmem:[%s1 + $0x10] sm:$0xf]
    %v41 = vld [vmem:[%s1 + $0x14] sm:$0xf]
    %v42 = vld [vmem:[%s1 + $0x18] sm:$0xf]
    %v43 = vld [vmem:[%s1 + $0x1c] sm:$0xf]
    %v44 = vld [vmem:[%s1 + $0x20] sm:$0xf]
    %v45 = vld [vmem:[%s1 + $0x24] sm:$0xf]
    %v46 = vld [vmem:[%s1 + $0x28] sm:$0xf]
    %v47 = vld [vmem:[%s1 + $0x2c] sm:$0xf]
    %v48 = vld [vmem:[%s1 + $0x30] sm:$0xf]
    %v49 = vld [vmem:[%s1 + $0x34] sm:$0xf]
    %v50 = vld [vmem:[%s1 + $0x38] sm:$0xf]
    %v51 = vld [vmem:[%s1 + $0x3c] sm:$0xf]
    %v52 = vld [vmem:[%s1 + $0x40] sm:$0xf]
    %v53 = vld [vmem:[%s1 + $0x44] sm:$0xf]
    %v54 = vld [vmem:[%s1 + $0x48] sm:$0xf]
    %v55 = vld [vmem:[%s1 + $0x4c] sm:$0xf]
    %v56 = vld [vmem:[%s1 + $0x50] sm:$0xf]
    %v57 = vld [vmem:[%s1 + $0x54] sm:$0xf]
    %v58 = vld [vmem:[%s1 + $0x58] sm:$0xf]
    %v59 = vld [vmem:[%s1 + $0x5c] sm:$0xf]
    %v60 = vld [vmem:[%s1 + $0x60] sm:$0xf]
    %v61 = vld [vmem:[%s1 + $0x64] sm:$0xf]
    %v62 = vld [vmem:[%s1 + $0x68] sm:$0xf]
    %v63 = vld [vmem:[%s1 + $0x6c] sm:$0xf]
    %v64 = vld [vmem:[%s1 + $0x70] sm:$0xf]
    %v65 = vld [vmem:[%s1 + $0x74] sm:$0xf]
    %v66 = vld [vmem:[%s1 + $0x78] sm:$0xf]
    %v67 = vld [vmem:[%s1 + $0x7c] sm:$0xf]
    %v68 = vld [vmem:[%s1 + $0x80] sm:$0xf]
    %v69 = vld [vmem:[%s1 + $0x84] sm:$0xf]
    %v70 = vld [vmem:[%s1 + $0x88] sm:$0xf]
    %v71 = vld [vmem:[%s1 + $0x8c] sm:$0xf]
    %v72 = vld [vmem:[%s1 + $0x90] sm:$0xf]
    %v73 = vld [vmem:[%s1 + $0x94] sm:$0xf]
    %v74 = vld [vmem:[%s1 + $0x98] sm:$0xf]
    %v75 = vld [vmem:[%s1 + $0x9c] sm:$0xf]
    %v76 = vld [vmem:[%s1 + $0xa0] sm:$0xf]
    %v77 = vld [vmem:[%s1 + $0xa4] sm:$0xf]
    %v78 = vld [vmem:[%s1 + $0xa8] sm:$0xf]
    %v79 = vld [vmem:[%s1 + $0xac] sm:$0xf]
    %v80 = vld [vmem:[%s1 + $0xb0] sm:$0xf]
    %v81 = vld [vmem:[%s1 + $0xb4] sm:$0xf]
    %v82 = vld [vmem:[%s1 + $0xb8] sm:$0xf]
    %v83 = vld [vmem:[%s1 + $0xbc] sm:$0xf]
    %v84 = vld [vmem:[%s1 + $0xc0] sm:$0xf]
    %v85 = vld [vmem:[%s1 + $0xc4] sm:$0xf]
    %v86 = vld [vmem:[%s1 + $0xc8] sm:$0xf]
    %v87 = vld [vmem:[%s1 + $0xcc] sm:$0xf]
    %v88 = vld [vmem:[%s1 + $0xd0] sm:$0xf]
    %v89 = vld [vmem:[%s1 + $0xd4] sm:$0xf]
    %v90 = vld [vmem:[%s1 + $0xd8] sm:$0xf]
    %v91 = vld [vmem:[%s1 + $0xdc] sm:$0xf]
    %v92 = vld [vmem:[%s1 + $0xe0] sm:$0xf]
    %v93 = vld [vmem:[%s1 + $0xe4] sm:$0xf]
    %v94 = vld [vmem:[%s1 + $0xe8] sm:$0xf]
    %v95 = vld [vmem:[%s1 + $0xec] sm:$0xf]
    %v96 = vld [vmem:[%s1 + $0xf0] sm:$0xf]
    %v97 = vld [vmem:[%s1 + $0xf4] sm:$0xf]
    %v98 = vld [vmem:[%s1 + $0xf8] sm:$0xf]
    %v99 = vld [vmem:[%s1 + $0xfc] sm:$0xf]
    %v100 = vld [vmem:[%s1 + $0x100] sm:$0xf]
    %v101 = vld [vmem:[%s1 + $0x104] sm:$0xf]
    %v102 = vld [vmem:[%s1 + $0x108] sm:$0xf]
    %v103 = vld [vmem:[%s1 + $0x10c] sm:$0xf]
    %v104 = vld [vmem:[%s1 + $0x110] sm:$0xf]
    %v105 = vld [vmem:[%s1 + $0x114] sm:$0xf]
    %v106 = vld [vmem:[%s1 + $0x118] sm:$0xf]
    %v107 = vld [vmem:[%s1 + $0x11c] sm:$0xf]
    %v108 = vld [vmem:[%s1 + $0x120] sm:$0xf]
    %v109 = vld [vmem:[%s1 + $0x124] sm:$0xf]
    %v110 = vld [vmem:[%s1 + $0x128] sm:$0xf]
    %v111 = vld [vmem:[%s1 + $0x12c] sm:$0xf]
    %v112 = vld [vmem:[%s1 + $0x130] sm:$0xf]
    %v113 = vld [vmem:[%s1 + $0x134] sm:$0xf]
    %v114 = vld [vmem:[%s1 + $0x138] sm:$0xf]
    %v115 = vld [vmem:[%s1 + $0x13c] sm:$0xf]
    %v116 = vld [vmem:[%s1 + $0x140] sm:$0xf]
    %v117 = vld [vmem:[%s1 + $0x144] sm:$0xf]
    %v118 = vld [vmem:[%s1 + $0x148] sm:$0xf]
    %v119 = vld [vmem:[%s1 + $0x14c] sm:$0xf]
    %v120 = vld [vmem:[%s1 + $0x150] sm:$0xf]
    %v121 = vld [vmem:[%s1 + $0x154] sm:$0xf]
    %v122 = vld [vmem:[%s1 + $0x158] sm:$0xf]
    %v123 = vld [vmem:[%s1 + $0x15c] sm:$0xf]
    %v124 = vld [vmem:[%s1 + $0x160] sm:$0xf]
    %v125 = vld [vmem:[%s1 + $0x164] sm:$0xf]
    %v126 = vld [vmem:[%s1 + $0x168] sm:$0xf]
    %v127 = vld [vmem:[%s1 + $0x16c] sm:$0xf]
    %v128 = vld [vmem:[%s1 + $0x170] sm:$0xf]
    %v129 = vld [vmem:[%s1 + $0x174] sm:$0xf]
    %v130 = vld [vmem:[%s1 + $0x178] sm:$0xf]
    %v131 = vld [vmem:[%s1 + $0x17c] sm:$0xf]
    %v132 = vld [vmem:[%s1 + $0x180] sm:$0xf]
    %v133 = vld [vmem:[%s1 + $0x184] sm:$0xf]
    %v134 = vld [vmem:[%s1 + $0x188] sm:$0xf]
    %v135 = vld [vmem:[%s1 + $0x18c] sm:$0xf]
    %v136 = vld [vmem:[%s1 + $0x190] sm:$0xf]
    %v137 = vld [vmem:[%s1 + $0x194] sm:$0xf]
    %v138 = vld [vmem:[%s1 + $0x198] sm:$0xf]
    %v139 = vld [vmem:[%s1 + $0x19c] sm:$0xf]
    %v140 = vld [vmem:[%s1 + $0x1a0] sm:$0xf]
    %v141 = vld [vmem:[%s1 + $0x1a4] sm:$0xf]
    %v142 = vld [vmem:[%s1 + $0x1a8] sm:$0xf]
    %v143 = vld [vmem:[%s1 + $0x1ac] sm:$0xf]
    %v144 = vld [vmem:[%s1 + $0x1b0] sm:$0xf]
    %v145 = vld [vmem:[%s1 + $0x1b4] sm:$0xf]
    %v146 = vld [vmem:[%s1 + $0x1b8] sm:$0xf]
    %v147 = vld [vmem:[%s1 + $0x1bc] sm:$0xf]
    %v148 = vld [vmem:[%s1 + $0x1c0] sm:$0xf]
    %v149 = vld [vmem:[%s1 + $0x1c4] sm:$0xf]
    %v150 = vld [vmem:[%s1 + $0x1c8] sm:$0xf]
    %v151 = vld [vmem:[%s1 + $0x1cc] sm:$0xf]
    %v152 = vld [vmem:[%s1 + $0x1d0] sm:$0xf]
    %v153 = vld [vmem:[%s1 + $0x1d4] sm:$0xf]
    %v154 = vld [vmem:[%s1 + $0x1d8] sm:$0xf]
    %v155 = vld [vmem:[%s1 + $0x1dc] sm:$0xf]
    %v156 = vld [vmem:[%s1 + $0x1e0] sm:$0xf]
    %v157 = vld [vmem:[%s1 + $0x1e4] sm:$0xf]
    %v158 = vld [vmem:[%s1 + $0x1e8] sm:$0xf]
    %v159 = vld [vmem:[%s1 + $0x1ec] sm:$0xf]
    %v160 = vld [vmem:[%s1 + $0x1f0] sm:$0xf]
    %v161 = vld [vmem:[%s1 + $0x1f4] sm:$0xf]
    %v162 = vld [vmem:[%s1 + $0x1f8] sm:$0xf]
    %v163 = vld [vmem:[%s1 + $0x1fc] sm:$0xf]
    %v164 = vld [vmem:[%s2] sm:$0x1]
    %v166 = vlaneseq
    %v167 = vshrl.u32 %v166, 7
    %v168 = vsub.s32 0, %v167
    %v169 = vrot.slane %v164, %v168
    %v172 = vcombine.high %v35, %v35
    %v174 = vunpack.c.l.s4 1966171168
    %v175 = vunpack.c.0.s8 %v174
    %v176 = vlaneseq
    %v177 = vshrl.u32 %v176, 7
    %v178 = vsub.s32 %v175, %v177
    %v179 = vrot.slane %v35, %v178
    %v181 = vunpack.c.l.s4 1966171168
    %v182 = vunpack.c.0.s8 %v181
    %v183 = vlaneseq
    %v184 = vshrl.u32 %v183, 7
    %v185 = vsub.s32 %v182, %v184
    %v186 = vrot.slane %v172, %v185
    %v187 = vcombine.high %v179, %v179
    %v188 = vcombine.high %v186, %v186
    %v190 = vunpack.c.l.s4 1966171168
    %v191 = vunpack.c.0.s8 %v190
    %v192 = vlaneseq
    %v193 = vshrl.u32 %v192, 7
    %v194 = vsub.s32 %v191, %v193
    %v195 = vrot.slane %v179, %v194
    %v197 = vunpack.c.l.s4 1966171168
    %v198 = vunpack.c.0.s8 %v197
    %v199 = vlaneseq
    %v200 = vshrl.u32 %v199, 7
    %v201 = vsub.s32 %v198, %v200
    %v202 = vrot.slane %v186, %v201
    %v204 = vunpack.c.l.s4 1966171168
    %v205 = vunpack.c.0.s8 %v204
    %v206 = vlaneseq
    %v207 = vshrl.u32 %v206, 7
    %v208 = vsub.s32 %v205, %v207
    %v209 = vrot.slane %v187, %v208
    %v211 = vunpack.c.l.s4 1966171168
    %v212 = vunpack.c.0.s8 %v211
    %v213 = vlaneseq
    %v214 = vshrl.u32 %v213, 7
    %v215 = vsub.s32 %v212, %v214
    %v216 = vrot.slane %v188, %v215
    %v217 = vcombine.high %v195, %v195
    %v218 = vcombine.high %v202, %v202
    %v219 = vcombine.high %v209, %v209
    %v220 = vcombine.high %v216, %v216
    %v357 = vunpack.c.l.b16 %v36
    %v358 = vunpack.c.l.b16 %v37
    %v359 = vunpack.c.l.b16 %v38
    %v360 = vunpack.c.l.b16 %v39
    %v361 = vunpack.c.l.b16 %v40
    %v362 = vunpack.c.l.b16 %v41
    %v363 = vunpack.c.l.b16 %v42
    %v364 = vunpack.c.l.b16 %v43
    %v365 = vunpack.c.l.b16 %v44
    %v366 = vunpack.c.l.b16 %v45
    %v367 = vunpack.c.l.b16 %v46
    %v368 = vunpack.c.l.b16 %v47
    %v369 = vunpack.c.l.b16 %v48
    %v370 = vunpack.c.l.b16 %v49
    %v371 = vunpack.c.l.b16 %v50
    %v372 = vunpack.c.l.b16 %v51
    %v373 = vunpack.c.l.b16 %v52
    %v374 = vunpack.c.l.b16 %v53
    %v375 = vunpack.c.l.b16 %v54
    %v376 = vunpack.c.l.b16 %v55
    %v377 = vunpack.c.l.b16 %v56
    %v378 = vunpack.c.l.b16 %v57
    %v379 = vunpack.c.l.b16 %v58
    %v380 = vunpack.c.l.b16 %v59
    %v381 = vunpack.c.l.b16 %v60
    %v382 = vunpack.c.l.b16 %v61
    %v383 = vunpack.c.l.b16 %v62
    %v384 = vunpack.c.l.b16 %v63
    %v385 = vunpack.c.l.b16 %v64
    %v386 = vunpack.c.l.b16 %v65
    %v387 = vunpack.c.l.b16 %v66
    %v388 = vunpack.c.l.b16 %v67
    %v389 = vunpack.c.l.b16 %v68
    %v390 = vunpack.c.l.b16 %v69
    %v391 = vunpack.c.l.b16 %v70
    %v392 = vunpack.c.l.b16 %v71
    %v393 = vunpack.c.l.b16 %v72
    %v394 = vunpack.c.l.b16 %v73
    %v395 = vunpack.c.l.b16 %v74
    %v396 = vunpack.c.l.b16 %v75
    %v397 = vunpack.c.l.b16 %v76
    %v398 = vunpack.c.l.b16 %v77
    %v399 = vunpack.c.l.b16 %v78
    %v400 = vunpack.c.l.b16 %v79
    %v401 = vunpack.c.l.b16 %v80
    %v402 = vunpack.c.l.b16 %v81
    %v403 = vunpack.c.l.b16 %v82
    %v404 = vunpack.c.l.b16 %v83
    %v405 = vunpack.c.l.b16 %v84
    %v406 = vunpack.c.l.b16 %v85
    %v407 = vunpack.c.l.b16 %v86
    %v408 = vunpack.c.l.b16 %v87
    %v409 = vunpack.c.l.b16 %v88
    %v410 = vunpack.c.l.b16 %v89
    %v411 = vunpack.c.l.b16 %v90
    %v412 = vunpack.c.l.b16 %v91
    %v413 = vunpack.c.l.b16 %v92
    %v414 = vunpack.c.l.b16 %v93
    %v415 = vunpack.c.l.b16 %v94
    %v416 = vunpack.c.l.b16 %v95
    %v417 = vunpack.c.l.b16 %v96
    %v418 = vunpack.c.l.b16 %v97
    %v419 = vunpack.c.l.b16 %v98
    %v420 = vunpack.c.l.b16 %v99
    %v421 = vunpack.c.l.b16 %v100
    %v422 = vunpack.c.l.b16 %v101
    %v423 = vunpack.c.l.b16 %v102
    %v424 = vunpack.c.l.b16 %v103
    %v425 = vunpack.c.l.b16 %v104
    %v426 = vunpack.c.l.b16 %v105
    %v427 = vunpack.c.l.b16 %v106
    %v428 = vunpack.c.l.b16 %v107
    %v429 = vunpack.c.l.b16 %v108
    %v430 = vunpack.c.l.b16 %v109
    %v431 = vunpack.c.l.b16 %v110
    %v432 = vunpack.c.l.b16 %v111
    %v433 = vunpack.c.l.b16 %v112
    %v434 = vunpack.c.l.b16 %v113
    %v435 = vunpack.c.l.b16 %v114
    %v436 = vunpack.c.l.b16 %v115
    %v437 = vunpack.c.l.b16 %v116
    %v438 = vunpack.c.l.b16 %v117
    %v439 = vunpack.c.l.b16 %v118
    %v440 = vunpack.c.l.b16 %v119
    %v441 = vunpack.c.l.b16 %v120
    %v442 = vunpack.c.l.b16 %v121
    %v443 = vunpack.c.l.b16 %v122
    %v444 = vunpack.c.l.b16 %v123
    %v445 = vunpack.c.l.b16 %v124
    %v446 = vunpack.c.l.b16 %v125
    %v447 = vunpack.c.l.b16 %v126
    %v448 = vunpack.c.l.b16 %v127
    %v449 = vunpack.c.l.b16 %v128
    %v450 = vunpack.c.l.b16 %v129
    %v451 = vunpack.c.l.b16 %v130
    %v452 = vunpack.c.l.b16 %v131
    %v453 = vunpack.c.l.b16 %v132
    %v454 = vunpack.c.l.b16 %v133
    %v455 = vunpack.c.l.b16 %v134
    %v456 = vunpack.c.l.b16 %v135
    %v457 = vunpack.c.l.b16 %v136
    %v458 = vunpack.c.l.b16 %v137
    %v459 = vunpack.c.l.b16 %v138
    %v460 = vunpack.c.l.b16 %v139
    %v461 = vunpack.c.l.b16 %v140
    %v462 = vunpack.c.l.b16 %v141
    %v463 = vunpack.c.l.b16 %v142
    %v464 = vunpack.c.l.b16 %v143
    %v465 = vunpack.c.l.b16 %v144
    %v466 = vunpack.c.l.b16 %v145
    %v467 = vunpack.c.l.b16 %v146
    %v468 = vunpack.c.l.b16 %v147
    %v469 = vunpack.c.l.b16 %v148
    %v470 = vunpack.c.l.b16 %v149
    %v471 = vunpack.c.l.b16 %v150
    %v472 = vunpack.c.l.b16 %v151
    %v473 = vunpack.c.l.b16 %v152
    %v474 = vunpack.c.l.b16 %v153
    %v475 = vunpack.c.l.b16 %v154
    %v476 = vunpack.c.l.b16 %v155
    %v477 = vunpack.c.l.b16 %v156
    %v478 = vunpack.c.l.b16 %v157
    %v479 = vunpack.c.l.b16 %v158
    %v480 = vunpack.c.l.b16 %v159
    %v481 = vunpack.c.l.b16 %v160
    %v482 = vunpack.c.l.b16 %v161
    %v483 = vunpack.c.l.b16 %v162
    %v484 = vunpack.c.l.b16 %v163
    %v485 = vpack.c.b16 %v358, %v357
    %v486 = vpack.c.b16 %v360, %v359
    %v487 = vpack.c.b16 %v362, %v361
    %v488 = vpack.c.b16 %v364, %v363
    %v489 = vpack.c.b16 %v366, %v365
    %v490 = vpack.c.b16 %v368, %v367
    %v491 = vpack.c.b16 %v370, %v369
    %v492 = vpack.c.b16 %v372, %v371
    %v493 = vpack.c.b16 %v374, %v373
    %v494 = vpack.c.b16 %v376, %v375
    %v495 = vpack.c.b16 %v378, %v377
    %v496 = vpack.c.b16 %v380, %v379
    %v497 = vpack.c.b16 %v382, %v381
    %v498 = vpack.c.b16 %v384, %v383
    %v499 = vpack.c.b16 %v386, %v385
    %v500 = vpack.c.b16 %v388, %v387
    %v501 = vpack.c.b16 %v390, %v389
    %v502 = vpack.c.b16 %v392, %v391
    %v503 = vpack.c.b16 %v394, %v393
    %v504 = vpack.c.b16 %v396, %v395
    %v505 = vpack.c.b16 %v398, %v397
    %v506 = vpack.c.b16 %v400, %v399
    %v507 = vpack.c.b16 %v402, %v401
    %v508 = vpack.c.b16 %v404, %v403
    %v509 = vpack.c.b16 %v406, %v405
    %v510 = vpack.c.b16 %v408, %v407
    %v511 = vpack.c.b16 %v410, %v409
    %v512 = vpack.c.b16 %v412, %v411
    %v513 = vpack.c.b16 %v414, %v413
    %v514 = vpack.c.b16 %v416, %v415
    %v515 = vpack.c.b16 %v418, %v417
    %v516 = vpack.c.b16 %v420, %v419
    %v517 = vpack.c.b16 %v422, %v421
    %v518 = vpack.c.b16 %v424, %v423
    %v519 = vpack.c.b16 %v426, %v425
    %v520 = vpack.c.b16 %v428, %v427
    %v521 = vpack.c.b16 %v430, %v429
    %v522 = vpack.c.b16 %v432, %v431
    %v523 = vpack.c.b16 %v434, %v433
    %v524 = vpack.c.b16 %v436, %v435
    %v525 = vpack.c.b16 %v438, %v437
    %v526 = vpack.c.b16 %v440, %v439
    %v527 = vpack.c.b16 %v442, %v441
    %v528 = vpack.c.b16 %v444, %v443
    %v529 = vpack.c.b16 %v446, %v445
    %v530 = vpack.c.b16 %v448, %v447
    %v531 = vpack.c.b16 %v450, %v449
    %v532 = vpack.c.b16 %v452, %v451
    %v533 = vpack.c.b16 %v454, %v453
    %v534 = vpack.c.b16 %v456, %v455
    %v535 = vpack.c.b16 %v458, %v457
    %v536 = vpack.c.b16 %v460, %v459
    %v537 = vpack.c.b16 %v462, %v461
    %v538 = vpack.c.b16 %v464, %v463
    %v539 = vpack.c.b16 %v466, %v465
    %v540 = vpack.c.b16 %v468, %v467
    %v541 = vpack.c.b16 %v470, %v469
    %v542 = vpack.c.b16 %v472, %v471
    %v543 = vpack.c.b16 %v474, %v473
    %v544 = vpack.c.b16 %v476, %v475
    %v545 = vpack.c.b16 %v478, %v477
    %v546 = vpack.c.b16 %v480, %v479
    %v547 = vpack.c.b16 %v482, %v481
    %v548 = vpack.c.b16 %v484, %v483
    %613 = vmatprep.subr.bf16.mxu0 0
    %614 = vmatpush1.bf16.msra.mxu0 %v492
    %615 = vmatprep.subr.bf16.mxu0 0
    %616 = vmatpush1.bf16.msra.mxu0 %v491
    %617 = vmatprep.subr.bf16.mxu0 0
    %618 = vmatpush1.bf16.msra.mxu0 %v490
    %619 = vmatprep.subr.bf16.mxu0 0
    %620 = vmatpush1.bf16.msra.mxu0 %v489
    %621 = vmatprep.subr.bf16.mxu0 0
    %622 = vmatpush1.bf16.msra.mxu0 %v488
    %623 = vmatprep.subr.bf16.mxu0 0
    %624 = vmatpush1.bf16.msra.mxu0 %v487
    %625 = vmatprep.subr.bf16.mxu0 0
    %626 = vmatpush1.bf16.msra.mxu0 %v486
    %627 = vmatprep.subr.bf16.mxu0 0
    %628 = vmatpush1.bf16.msra.mxu0 %v485
    %629 = vmatprep.subr.bf16.mxu0 0
    %630 = vmatpush2.bf16.msra.mxu0 %v500
    %631 = vmatprep.subr.bf16.mxu0 0
    %632 = vmatpush2.bf16.msra.mxu0 %v499
    %633 = vmatprep.subr.bf16.mxu0 0
    %634 = vmatpush2.bf16.msra.mxu0 %v498
    %635 = vmatprep.subr.bf16.mxu0 0
    %636 = vmatpush2.bf16.msra.mxu0 %v497
    %637 = vmatprep.subr.bf16.mxu0 0
    %638 = vmatpush2.bf16.msra.mxu0 %v496
    %639 = vmatprep.subr.bf16.mxu0 0
    %640 = vmatpush2.bf16.msra.mxu0 %v495
    %641 = vmatprep.subr.bf16.mxu0 0
    %642 = vmatpush2.bf16.msra.mxu0 %v494
    %643 = vmatprep.subr.bf16.mxu0 0
    %644 = vmatpush2.bf16.msra.mxu0 %v493
    %645 = vmatprep.mubr.bf16.mxu0 %v209
    %646 = vmatmul.mubr.bf16.gmra.mxu0 %v195
    %v647 = vpop.f32.mrf.mxu0
    %v648 = vadd.f32 %v169, %v647
    %v649 = vpop.f32.mrf.mxu0
    %v650 = vpop.f32.mrf.mxu0
    %v651 = vpop.f32.mrf.mxu0
    %652 = vdwg.mxu0
    %653 = vmatprep.subr.bf16.mxu0 0
    %654 = vmatpush1.bf16.msra.mxu0 %v508
    %655 = vmatprep.subr.bf16.mxu0 0
    %656 = vmatpush1.bf16.msra.mxu0 %v507
    %657 = vmatprep.subr.bf16.mxu0 0
    %658 = vmatpush1.bf16.msra.mxu0 %v506
    %659 = vmatprep.subr.bf16.mxu0 0
    %660 = vmatpush1.bf16.msra.mxu0 %v505
    %661 = vmatprep.subr.bf16.mxu0 0
    %662 = vmatpush1.bf16.msra.mxu0 %v504
    %663 = vmatprep.subr.bf16.mxu0 0
    %664 = vmatpush1.bf16.msra.mxu0 %v503
    %665 = vmatprep.subr.bf16.mxu0 0
    %666 = vmatpush1.bf16.msra.mxu0 %v502
    %667 = vmatprep.subr.bf16.mxu0 0
    %668 = vmatpush1.bf16.msra.mxu0 %v501
    %669 = vmatprep.subr.bf16.mxu0 0
    %670 = vmatpush2.bf16.msra.mxu0 %v516
    %671 = vmatprep.subr.bf16.mxu0 0
    %672 = vmatpush2.bf16.msra.mxu0 %v515
    %673 = vmatprep.subr.bf16.mxu0 0
    %674 = vmatpush2.bf16.msra.mxu0 %v514
    %675 = vmatprep.subr.bf16.mxu0 0
    %676 = vmatpush2.bf16.msra.mxu0 %v513
    %677 = vmatprep.subr.bf16.mxu0 0
    %678 = vmatpush2.bf16.msra.mxu0 %v512
    %679 = vmatprep.subr.bf16.mxu0 0
    %680 = vmatpush2.bf16.msra.mxu0 %v511
    %681 = vmatprep.subr.bf16.mxu0 0
    %682 = vmatpush2.bf16.msra.mxu0 %v510
    %683 = vmatprep.subr.bf16.mxu0 0
    %684 = vmatpush2.bf16.msra.mxu0 %v509
    %685 = vmatprep.mubr.bf16.mxu0 %v219
    %686 = vmatmul.mubr.bf16.gmra.mxu0 %v217
    %v687 = vpop.f32.mrf.mxu0
    %v688 = vadd.f32 %v648, %v687
    %v689 = vpop.f32.mrf.mxu0
    %v690 = vpop.f32.mrf.mxu0
    %v691 = vpop.f32.mrf.mxu0
    %692 = vdwg.mxu0
    %693 = vmatprep.subr.bf16.mxu0 0
    %694 = vmatpush1.bf16.msra.mxu0 %v524
    %695 = vmatprep.subr.bf16.mxu0 0
    %696 = vmatpush1.bf16.msra.mxu0 %v523
    %697 = vmatprep.subr.bf16.mxu0 0
    %698 = vmatpush1.bf16.msra.mxu0 %v522
    %699 = vmatprep.subr.bf16.mxu0 0
    %700 = vmatpush1.bf16.msra.mxu0 %v521
    %701 = vmatprep.subr.bf16.mxu0 0
    %702 = vmatpush1.bf16.msra.mxu0 %v520
    %703 = vmatprep.subr.bf16.mxu0 0
    %704 = vmatpush1.bf16.msra.mxu0 %v519
    %705 = vmatprep.subr.bf16.mxu0 0
    %706 = vmatpush1.bf16.msra.mxu0 %v518
    %707 = vmatprep.subr.bf16.mxu0 0
    %708 = vmatpush1.bf16.msra.mxu0 %v517
    %709 = vmatprep.subr.bf16.mxu0 0
    %710 = vmatpush2.bf16.msra.mxu0 %v532
    %711 = vmatprep.subr.bf16.mxu0 0
    %712 = vmatpush2.bf16.msra.mxu0 %v531
    %713 = vmatprep.subr.bf16.mxu0 0
    %714 = vmatpush2.bf16.msra.mxu0 %v530
    %715 = vmatprep.subr.bf16.mxu0 0
    %716 = vmatpush2.bf16.msra.mxu0 %v529
    %717 = vmatprep.subr.bf16.mxu0 0
    %718 = vmatpush2.bf16.msra.mxu0 %v528
    %719 = vmatprep.subr.bf16.mxu0 0
    %720 = vmatpush2.bf16.msra.mxu0 %v527
    %721 = vmatprep.subr.bf16.mxu0 0
    %722 = vmatpush2.bf16.msra.mxu0 %v526
    %723 = vmatprep.subr.bf16.mxu0 0
    %724 = vmatpush2.bf16.msra.mxu0 %v525
    %725 = vmatprep.mubr.bf16.mxu0 %v216
    %726 = vmatmul.mubr.bf16.gmra.mxu0 %v202
    %v727 = vpop.f32.mrf.mxu0
    %v728 = vadd.f32 %v688, %v727
    %v729 = vpop.f32.mrf.mxu0
    %v730 = vpop.f32.mrf.mxu0
    %v731 = vpop.f32.mrf.mxu0
    %732 = vdwg.mxu0
    %733 = vmatprep.subr.bf16.mxu0 0
    %734 = vmatpush1.bf16.msra.mxu0 %v540
    %735 = vmatprep.subr.bf16.mxu0 0
    %736 = vmatpush1.bf16.msra.mxu0 %v539
    %737 = vmatprep.subr.bf16.mxu0 0
    %738 = vmatpush1.bf16.msra.mxu0 %v538
    %739 = vmatprep.subr.bf16.mxu0 0
    %740 = vmatpush1.bf16.msra.mxu0 %v537
    %741 = vmatprep.subr.bf16.mxu0 0
    %742 = vmatpush1.bf16.msra.mxu0 %v536
    %743 = vmatprep.subr.bf16.mxu0 0
    %744 = vmatpush1.bf16.msra.mxu0 %v535
    %745 = vmatprep.subr.bf16.mxu0 0
    %746 = vmatpush1.bf16.msra.mxu0 %v534
    %747 = vmatprep.subr.bf16.mxu0 0
    %748 = vmatpush1.bf16.msra.mxu0 %v533
    %749 = vmatprep.subr.bf16.mxu0 0
    %750 = vmatpush2.bf16.msra.mxu0 %v548
    %751 = vmatprep.subr.bf16.mxu0 0
    %752 = vmatpush2.bf16.msra.mxu0 %v547
    %753 = vmatprep.subr.bf16.mxu0 0
    %754 = vmatpush2.bf16.msra.mxu0 %v546
    %755 = vmatprep.subr.bf16.mxu0 0
    %756 = vmatpush2.bf16.msra.mxu0 %v545
    %757 = vmatprep.subr.bf16.mxu0 0
    %758 = vmatpush2.bf16.msra.mxu0 %v544
    %759 = vmatprep.subr.bf16.mxu0 0
    %760 = vmatpush2.bf16.msra.mxu0 %v543
    %761 = vmatprep.subr.bf16.mxu0 0
    %762 = vmatpush2.bf16.msra.mxu0 %v542
    %763 = vmatprep.subr.bf16.mxu0 0
    %764 = vmatpush2.bf16.msra.mxu0 %v541
    %765 = vmatprep.mubr.bf16.mxu0 %v220
    %766 = vmatmul.mubr.bf16.gmra.mxu0 %v218
    %v767 = vpop.f32.mrf.mxu0
    %v768 = vadd.f32 %v728, %v767
    %v769 = vpop.f32.mrf.mxu0
    %v770 = vpop.f32.mrf.mxu0
    %v771 = vpop.f32.mrf.mxu0
    %772 = vdwg.mxu0
    %v773 = vld [vmem:[%s3] sm:$0xf]
    %v774 = vld [vmem:[%s3 + $0x4] sm:$0xf]
    %v775 = vld [vmem:[%s3 + $0x8] sm:$0xf]
    %v776 = vld [vmem:[%s3 + $0xc] sm:$0xf]
    %v777 = vld [vmem:[%s3 + $0x10] sm:$0xf]
    %v778 = vld [vmem:[%s3 + $0x14] sm:$0xf]
    %v779 = vld [vmem:[%s3 + $0x18] sm:$0xf]
    %v780 = vld [vmem:[%s3 + $0x1c] sm:$0xf]
    %v781 = vld [vmem:[%s3 + $0x20] sm:$0xf]
    %v782 = vld [vmem:[%s3 + $0x24] sm:$0xf]
    %v783 = vld [vmem:[%s3 + $0x28] sm:$0xf]
    %v784 = vld [vmem:[%s3 + $0x2c] sm:$0xf]
    %v785 = vld [vmem:[%s3 + $0x30] sm:$0xf]
    %v786 = vld [vmem:[%s3 + $0x34] sm:$0xf]
    %v787 = vld [vmem:[%s3 + $0x38] sm:$0xf]
    %v788 = vld [vmem:[%s3 + $0x3c] sm:$0xf]
    %v789 = vld [vmem:[%s3 + $0x40] sm:$0xf]
    %v790 = vld [vmem:[%s3 + $0x44] sm:$0xf]
    %v791 = vld [vmem:[%s3 + $0x48] sm:$0xf]
    %v792 = vld [vmem:[%s3 + $0x4c] sm:$0xf]
    %v793 = vld [vmem:[%s3 + $0x50] sm:$0xf]
    %v794 = vld [vmem:[%s3 + $0x54] sm:$0xf]
    %v795 = vld [vmem:[%s3 + $0x58] sm:$0xf]
    %v796 = vld [vmem:[%s3 + $0x5c] sm:$0xf]
    %v797 = vld [vmem:[%s3 + $0x60] sm:$0xf]
    %v798 = vld [vmem:[%s3 + $0x64] sm:$0xf]
    %v799 = vld [vmem:[%s3 + $0x68] sm:$0xf]
    %v800 = vld [vmem:[%s3 + $0x6c] sm:$0xf]
    %v801 = vld [vmem:[%s3 + $0x70] sm:$0xf]
    %v802 = vld [vmem:[%s3 + $0x74] sm:$0xf]
    %v803 = vld [vmem:[%s3 + $0x78] sm:$0xf]
    %v804 = vld [vmem:[%s3 + $0x7c] sm:$0xf]
    %v805 = vld [vmem:[%s3 + $0x80] sm:$0xf]
    %v806 = vld [vmem:[%s3 + $0x84] sm:$0xf]
    %v807 = vld [vmem:[%s3 + $0x88] sm:$0xf]
    %v808 = vld [vmem:[%s3 + $0x8c] sm:$0xf]
    %v809 = vld [vmem:[%s3 + $0x90] sm:$0xf]
    %v810 = vld [vmem:[%s3 + $0x94] sm:$0xf]
    %v811 = vld [vmem:[%s3 + $0x98] sm:$0xf]
    %v812 = vld [vmem:[%s3 + $0x9c] sm:$0xf]
    %v813 = vld [vmem:[%s3 + $0xa0] sm:$0xf]
    %v814 = vld [vmem:[%s3 + $0xa4] sm:$0xf]
    %v815 = vld [vmem:[%s3 + $0xa8] sm:$0xf]
    %v816 = vld [vmem:[%s3 + $0xac] sm:$0xf]
    %v817 = vld [vmem:[%s3 + $0xb0] sm:$0xf]
    %v818 = vld [vmem:[%s3 + $0xb4] sm:$0xf]
    %v819 = vld [vmem:[%s3 + $0xb8] sm:$0xf]
    %v820 = vld [vmem:[%s3 + $0xbc] sm:$0xf]
    %v821 = vld [vmem:[%s3 + $0xc0] sm:$0xf]
    %v822 = vld [vmem:[%s3 + $0xc4] sm:$0xf]
    %v823 = vld [vmem:[%s3 + $0xc8] sm:$0xf]
    %v824 = vld [vmem:[%s3 + $0xcc] sm:$0xf]
    %v825 = vld [vmem:[%s3 + $0xd0] sm:$0xf]
    %v826 = vld [vmem:[%s3 + $0xd4] sm:$0xf]
    %v827 = vld [vmem:[%s3 + $0xd8] sm:$0xf]
    %v828 = vld [vmem:[%s3 + $0xdc] sm:$0xf]
    %v829 = vld [vmem:[%s3 + $0xe0] sm:$0xf]
    %v830 = vld [vmem:[%s3 + $0xe4] sm:$0xf]
    %v831 = vld [vmem:[%s3 + $0xe8] sm:$0xf]
    %v832 = vld [vmem:[%s3 + $0xec] sm:$0xf]
    %v833 = vld [vmem:[%s3 + $0xf0] sm:$0xf]
    %v834 = vld [vmem:[%s3 + $0xf4] sm:$0xf]
    %v835 = vld [vmem:[%s3 + $0xf8] sm:$0xf]
    %v836 = vld [vmem:[%s3 + $0xfc] sm:$0xf]
    %v837 = vld [vmem:[%s3 + $0x100] sm:$0xf]
    %v838 = vld [vmem:[%s3 + $0x104] sm:$0xf]
    %v839 = vld [vmem:[%s3 + $0x108] sm:$0xf]
    %v840 = vld [vmem:[%s3 + $0x10c] sm:$0xf]
    %v841 = vld [vmem:[%s3 + $0x110] sm:$0xf]
    %v842 = vld [vmem:[%s3 + $0x114] sm:$0xf]
    %v843 = vld [vmem:[%s3 + $0x118] sm:$0xf]
    %v844 = vld [vmem:[%s3 + $0x11c] sm:$0xf]
    %v845 = vld [vmem:[%s3 + $0x120] sm:$0xf]
    %v846 = vld [vmem:[%s3 + $0x124] sm:$0xf]
    %v847 = vld [vmem:[%s3 + $0x128] sm:$0xf]
    %v848 = vld [vmem:[%s3 + $0x12c] sm:$0xf]
    %v849 = vld [vmem:[%s3 + $0x130] sm:$0xf]
    %v850 = vld [vmem:[%s3 + $0x134] sm:$0xf]
    %v851 = vld [vmem:[%s3 + $0x138] sm:$0xf]
    %v852 = vld [vmem:[%s3 + $0x13c] sm:$0xf]
    %v853 = vld [vmem:[%s3 + $0x140] sm:$0xf]
    %v854 = vld [vmem:[%s3 + $0x144] sm:$0xf]
    %v855 = vld [vmem:[%s3 + $0x148] sm:$0xf]
    %v856 = vld [vmem:[%s3 + $0x14c] sm:$0xf]
    %v857 = vld [vmem:[%s3 + $0x150] sm:$0xf]
    %v858 = vld [vmem:[%s3 + $0x154] sm:$0xf]
    %v859 = vld [vmem:[%s3 + $0x158] sm:$0xf]
    %v860 = vld [vmem:[%s3 + $0x15c] sm:$0xf]
    %v861 = vld [vmem:[%s3 + $0x160] sm:$0xf]
    %v862 = vld [vmem:[%s3 + $0x164] sm:$0xf]
    %v863 = vld [vmem:[%s3 + $0x168] sm:$0xf]
    %v864 = vld [vmem:[%s3 + $0x16c] sm:$0xf]
    %v865 = vld [vmem:[%s3 + $0x170] sm:$0xf]
    %v866 = vld [vmem:[%s3 + $0x174] sm:$0xf]
    %v867 = vld [vmem:[%s3 + $0x178] sm:$0xf]
    %v868 = vld [vmem:[%s3 + $0x17c] sm:$0xf]
    %v869 = vld [vmem:[%s3 + $0x180] sm:$0xf]
    %v870 = vld [vmem:[%s3 + $0x184] sm:$0xf]
    %v871 = vld [vmem:[%s3 + $0x188] sm:$0xf]
    %v872 = vld [vmem:[%s3 + $0x18c] sm:$0xf]
    %v873 = vld [vmem:[%s3 + $0x190] sm:$0xf]
    %v874 = vld [vmem:[%s3 + $0x194] sm:$0xf]
    %v875 = vld [vmem:[%s3 + $0x198] sm:$0xf]
    %v876 = vld [vmem:[%s3 + $0x19c] sm:$0xf]
    %v877 = vld [vmem:[%s3 + $0x1a0] sm:$0xf]
    %v878 = vld [vmem:[%s3 + $0x1a4] sm:$0xf]
    %v879 = vld [vmem:[%s3 + $0x1a8] sm:$0xf]
    %v880 = vld [vmem:[%s3 + $0x1ac] sm:$0xf]
    %v881 = vld [vmem:[%s3 + $0x1b0] sm:$0xf]
    %v882 = vld [vmem:[%s3 + $0x1b4] sm:$0xf]
    %v883 = vld [vmem:[%s3 + $0x1b8] sm:$0xf]
    %v884 = vld [vmem:[%s3 + $0x1bc] sm:$0xf]
    %v885 = vld [vmem:[%s3 + $0x1c0] sm:$0xf]
    %v886 = vld [vmem:[%s3 + $0x1c4] sm:$0xf]
    %v887 = vld [vmem:[%s3 + $0x1c8] sm:$0xf]
    %v888 = vld [vmem:[%s3 + $0x1cc] sm:$0xf]
    %v889 = vld [vmem:[%s3 + $0x1d0] sm:$0xf]
    %v890 = vld [vmem:[%s3 + $0x1d4] sm:$0xf]
    %v891 = vld [vmem:[%s3 + $0x1d8] sm:$0xf]
    %v892 = vld [vmem:[%s3 + $0x1dc] sm:$0xf]
    %v893 = vld [vmem:[%s3 + $0x1e0] sm:$0xf]
    %v894 = vld [vmem:[%s3 + $0x1e4] sm:$0xf]
    %v895 = vld [vmem:[%s3 + $0x1e8] sm:$0xf]
    %v896 = vld [vmem:[%s3 + $0x1ec] sm:$0xf]
    %v897 = vld [vmem:[%s3 + $0x1f0] sm:$0xf]
    %v898 = vld [vmem:[%s3 + $0x1f4] sm:$0xf]
    %v899 = vld [vmem:[%s3 + $0x1f8] sm:$0xf]
    %v900 = vld [vmem:[%s3 + $0x1fc] sm:$0xf]
    %v901 = vld [vmem:[%s4] sm:$0x1]
    %v903 = vlaneseq
    %v904 = vshrl.u32 %v903, 7
    %v905 = vsub.s32 0, %v904
    %v906 = vrot.slane %v901, %v905
    %v1036 = vunpack.c.l.b16 %v773
    %v1037 = vunpack.c.l.b16 %v774
    %v1038 = vunpack.c.l.b16 %v775
    %v1039 = vunpack.c.l.b16 %v776
    %v1040 = vunpack.c.l.b16 %v777
    %v1041 = vunpack.c.l.b16 %v778
    %v1042 = vunpack.c.l.b16 %v779
    %v1043 = vunpack.c.l.b16 %v780
    %v1044 = vunpack.c.l.b16 %v781
    %v1045 = vunpack.c.l.b16 %v782
    %v1046 = vunpack.c.l.b16 %v783
    %v1047 = vunpack.c.l.b16 %v784
    %v1048 = vunpack.c.l.b16 %v785
    %v1049 = vunpack.c.l.b16 %v786
    %v1050 = vunpack.c.l.b16 %v787
    %v1051 = vunpack.c.l.b16 %v788
    %v1052 = vunpack.c.l.b16 %v789
    %v1053 = vunpack.c.l.b16 %v790
    %v1054 = vunpack.c.l.b16 %v791
    %v1055 = vunpack.c.l.b16 %v792
    %v1056 = vunpack.c.l.b16 %v793
    %v1057 = vunpack.c.l.b16 %v794
    %v1058 = vunpack.c.l.b16 %v795
    %v1059 = vunpack.c.l.b16 %v796
    %v1060 = vunpack.c.l.b16 %v797
    %v1061 = vunpack.c.l.b16 %v798
    %v1062 = vunpack.c.l.b16 %v799
    %v1063 = vunpack.c.l.b16 %v800
    %v1064 = vunpack.c.l.b16 %v801
    %v1065 = vunpack.c.l.b16 %v802
    %v1066 = vunpack.c.l.b16 %v803
    %v1067 = vunpack.c.l.b16 %v804
    %v1068 = vunpack.c.l.b16 %v805
    %v1069 = vunpack.c.l.b16 %v806
    %v1070 = vunpack.c.l.b16 %v807
    %v1071 = vunpack.c.l.b16 %v808
    %v1072 = vunpack.c.l.b16 %v809
    %v1073 = vunpack.c.l.b16 %v810
    %v1074 = vunpack.c.l.b16 %v811
    %v1075 = vunpack.c.l.b16 %v812
    %v1076 = vunpack.c.l.b16 %v813
    %v1077 = vunpack.c.l.b16 %v814
    %v1078 = vunpack.c.l.b16 %v815
    %v1079 = vunpack.c.l.b16 %v816
    %v1080 = vunpack.c.l.b16 %v817
    %v1081 = vunpack.c.l.b16 %v818
    %v1082 = vunpack.c.l.b16 %v819
    %v1083 = vunpack.c.l.b16 %v820
    %v1084 = vunpack.c.l.b16 %v821
    %v1085 = vunpack.c.l.b16 %v822
    %v1086 = vunpack.c.l.b16 %v823
    %v1087 = vunpack.c.l.b16 %v824
    %v1088 = vunpack.c.l.b16 %v825
    %v1089 = vunpack.c.l.b16 %v826
    %v1090 = vunpack.c.l.b16 %v827
    %v1091 = vunpack.c.l.b16 %v828
    %v1092 = vunpack.c.l.b16 %v829
    %v1093 = vunpack.c.l.b16 %v830
    %v1094 = vunpack.c.l.b16 %v831
    %v1095 = vunpack.c.l.b16 %v832
    %v1096 = vunpack.c.l.b16 %v833
    %v1097 = vunpack.c.l.b16 %v834
    %v1098 = vunpack.c.l.b16 %v835
    %v1099 = vunpack.c.l.b16 %v836
    %v1100 = vunpack.c.l.b16 %v837
    %v1101 = vunpack.c.l.b16 %v838
    %v1102 = vunpack.c.l.b16 %v839
    %v1103 = vunpack.c.l.b16 %v840
    %v1104 = vunpack.c.l.b16 %v841
    %v1105 = vunpack.c.l.b16 %v842
    %v1106 = vunpack.c.l.b16 %v843
    %v1107 = vunpack.c.l.b16 %v844
    %v1108 = vunpack.c.l.b16 %v845
    %v1109 = vunpack.c.l.b16 %v846
    %v1110 = vunpack.c.l.b16 %v847
    %v1111 = vunpack.c.l.b16 %v848
    %v1112 = vunpack.c.l.b16 %v849
    %v1113 = vunpack.c.l.b16 %v850
    %v1114 = vunpack.c.l.b16 %v851
    %v1115 = vunpack.c.l.b16 %v852
    %v1116 = vunpack.c.l.b16 %v853
    %v1117 = vunpack.c.l.b16 %v854
    %v1118 = vunpack.c.l.b16 %v855
    %v1119 = vunpack.c.l.b16 %v856
    %v1120 = vunpack.c.l.b16 %v857
    %v1121 = vunpack.c.l.b16 %v858
    %v1122 = vunpack.c.l.b16 %v859
    %v1123 = vunpack.c.l.b16 %v860
    %v1124 = vunpack.c.l.b16 %v861
    %v1125 = vunpack.c.l.b16 %v862
    %v1126 = vunpack.c.l.b16 %v863
    %v1127 = vunpack.c.l.b16 %v864
    %v1128 = vunpack.c.l.b16 %v865
    %v1129 = vunpack.c.l.b16 %v866
    %v1130 = vunpack.c.l.b16 %v867
    %v1131 = vunpack.c.l.b16 %v868
    %v1132 = vunpack.c.l.b16 %v869
    %v1133 = vunpack.c.l.b16 %v870
    %v1134 = vunpack.c.l.b16 %v871
    %v1135 = vunpack.c.l.b16 %v872
    %v1136 = vunpack.c.l.b16 %v873
    %v1137 = vunpack.c.l.b16 %v874
    %v1138 = vunpack.c.l.b16 %v875
    %v1139 = vunpack.c.l.b16 %v876
    %v1140 = vunpack.c.l.b16 %v877
    %v1141 = vunpack.c.l.b16 %v878
    %v1142 = vunpack.c.l.b16 %v879
    %v1143 = vunpack.c.l.b16 %v880
    %v1144 = vunpack.c.l.b16 %v881
    %v1145 = vunpack.c.l.b16 %v882
    %v1146 = vunpack.c.l.b16 %v883
    %v1147 = vunpack.c.l.b16 %v884
    %v1148 = vunpack.c.l.b16 %v885
    %v1149 = vunpack.c.l.b16 %v886
    %v1150 = vunpack.c.l.b16 %v887
    %v1151 = vunpack.c.l.b16 %v888
    %v1152 = vunpack.c.l.b16 %v889
    %v1153 = vunpack.c.l.b16 %v890
    %v1154 = vunpack.c.l.b16 %v891
    %v1155 = vunpack.c.l.b16 %v892
    %v1156 = vunpack.c.l.b16 %v893
    %v1157 = vunpack.c.l.b16 %v894
    %v1158 = vunpack.c.l.b16 %v895
    %v1159 = vunpack.c.l.b16 %v896
    %v1160 = vunpack.c.l.b16 %v897
    %v1161 = vunpack.c.l.b16 %v898
    %v1162 = vunpack.c.l.b16 %v899
    %v1163 = vunpack.c.l.b16 %v900
    %v1164 = vpack.c.b16 %v1037, %v1036
    %v1165 = vpack.c.b16 %v1039, %v1038
    %v1166 = vpack.c.b16 %v1041, %v1040
    %v1167 = vpack.c.b16 %v1043, %v1042
    %v1168 = vpack.c.b16 %v1045, %v1044
    %v1169 = vpack.c.b16 %v1047, %v1046
    %v1170 = vpack.c.b16 %v1049, %v1048
    %v1171 = vpack.c.b16 %v1051, %v1050
    %v1172 = vpack.c.b16 %v1053, %v1052
    %v1173 = vpack.c.b16 %v1055, %v1054
    %v1174 = vpack.c.b16 %v1057, %v1056
    %v1175 = vpack.c.b16 %v1059, %v1058
    %v1176 = vpack.c.b16 %v1061, %v1060
    %v1177 = vpack.c.b16 %v1063, %v1062
    %v1178 = vpack.c.b16 %v1065, %v1064
    %v1179 = vpack.c.b16 %v1067, %v1066
    %v1180 = vpack.c.b16 %v1069, %v1068
    %v1181 = vpack.c.b16 %v1071, %v1070
    %v1182 = vpack.c.b16 %v1073, %v1072
    %v1183 = vpack.c.b16 %v1075, %v1074
    %v1184 = vpack.c.b16 %v1077, %v1076
    %v1185 = vpack.c.b16 %v1079, %v1078
    %v1186 = vpack.c.b16 %v1081, %v1080
    %v1187 = vpack.c.b16 %v1083, %v1082
    %v1188 = vpack.c.b16 %v1085, %v1084
    %v1189 = vpack.c.b16 %v1087, %v1086
    %v1190 = vpack.c.b16 %v1089, %v1088
    %v1191 = vpack.c.b16 %v1091, %v1090
    %v1192 = vpack.c.b16 %v1093, %v1092
    %v1193 = vpack.c.b16 %v1095, %v1094
    %v1194 = vpack.c.b16 %v1097, %v1096
    %v1195 = vpack.c.b16 %v1099, %v1098
    %v1196 = vpack.c.b16 %v1101, %v1100
    %v1197 = vpack.c.b16 %v1103, %v1102
    %v1198 = vpack.c.b16 %v1105, %v1104
    %v1199 = vpack.c.b16 %v1107, %v1106
    %v1200 = vpack.c.b16 %v1109, %v1108
    %v1201 = vpack.c.b16 %v1111, %v1110
    %v1202 = vpack.c.b16 %v1113, %v1112
    %v1203 = vpack.c.b16 %v1115, %v1114
    %v1204 = vpack.c.b16 %v1117, %v1116
    %v1205 = vpack.c.b16 %v1119, %v1118
    %v1206 = vpack.c.b16 %v1121, %v1120
    %v1207 = vpack.c.b16 %v1123, %v1122
    %v1208 = vpack.c.b16 %v1125, %v1124
    %v1209 = vpack.c.b16 %v1127, %v1126
    %v1210 = vpack.c.b16 %v1129, %v1128
    %v1211 = vpack.c.b16 %v1131, %v1130
    %v1212 = vpack.c.b16 %v1133, %v1132
    %v1213 = vpack.c.b16 %v1135, %v1134
    %v1214 = vpack.c.b16 %v1137, %v1136
    %v1215 = vpack.c.b16 %v1139, %v1138
    %v1216 = vpack.c.b16 %v1141, %v1140
    %v1217 = vpack.c.b16 %v1143, %v1142
    %v1218 = vpack.c.b16 %v1145, %v1144
    %v1219 = vpack.c.b16 %v1147, %v1146
    %v1220 = vpack.c.b16 %v1149, %v1148
    %v1221 = vpack.c.b16 %v1151, %v1150
    %v1222 = vpack.c.b16 %v1153, %v1152
    %v1223 = vpack.c.b16 %v1155, %v1154
    %v1224 = vpack.c.b16 %v1157, %v1156
    %v1225 = vpack.c.b16 %v1159, %v1158
    %v1226 = vpack.c.b16 %v1161, %v1160
    %v1227 = vpack.c.b16 %v1163, %v1162
    %1292 = vmatprep.subr.bf16.mxu0 0
    %1293 = vmatpush1.bf16.msra.mxu0 %v1171
    %1294 = vmatprep.subr.bf16.mxu0 0
    %1295 = vmatpush1.bf16.msra.mxu0 %v1170
    %1296 = vmatprep.subr.bf16.mxu0 0
    %1297 = vmatpush1.bf16.msra.mxu0 %v1169
    %1298 = vmatprep.subr.bf16.mxu0 0
    %1299 = vmatpush1.bf16.msra.mxu0 %v1168
    %1300 = vmatprep.subr.bf16.mxu0 0
    %1301 = vmatpush1.bf16.msra.mxu0 %v1167
    %1302 = vmatprep.subr.bf16.mxu0 0
    %1303 = vmatpush1.bf16.msra.mxu0 %v1166
    %1304 = vmatprep.subr.bf16.mxu0 0
    %1305 = vmatpush1.bf16.msra.mxu0 %v1165
    %1306 = vmatprep.subr.bf16.mxu0 0
    %1307 = vmatpush1.bf16.msra.mxu0 %v1164
    %1308 = vmatprep.subr.bf16.mxu0 0
    %1309 = vmatpush2.bf16.msra.mxu0 %v1179
    %1310 = vmatprep.subr.bf16.mxu0 0
    %1311 = vmatpush2.bf16.msra.mxu0 %v1178
    %1312 = vmatprep.subr.bf16.mxu0 0
    %1313 = vmatpush2.bf16.msra.mxu0 %v1177
    %1314 = vmatprep.subr.bf16.mxu0 0
    %1315 = vmatpush2.bf16.msra.mxu0 %v1176
    %1316 = vmatprep.subr.bf16.mxu0 0
    %1317 = vmatpush2.bf16.msra.mxu0 %v1175
    %1318 = vmatprep.subr.bf16.mxu0 0
    %1319 = vmatpush2.bf16.msra.mxu0 %v1174
    %1320 = vmatprep.subr.bf16.mxu0 0
    %1321 = vmatpush2.bf16.msra.mxu0 %v1173
    %1322 = vmatprep.subr.bf16.mxu0 0
    %1323 = vmatpush2.bf16.msra.mxu0 %v1172
    %1324 = vmatprep.mubr.bf16.mxu0 %v209
    %1325 = vmatmul.mubr.bf16.gmra.mxu0 %v195
    %v1326 = vpop.f32.mrf.mxu0
    %v1327 = vadd.f32 %v906, %v1326
    %v1328 = vpop.f32.mrf.mxu0
    %v1329 = vpop.f32.mrf.mxu0
    %v1330 = vpop.f32.mrf.mxu0
    %1331 = vdwg.mxu0
    %1332 = vmatprep.subr.bf16.mxu0 0
    %1333 = vmatpush1.bf16.msra.mxu0 %v1187
    %1334 = vmatprep.subr.bf16.mxu0 0
    %1335 = vmatpush1.bf16.msra.mxu0 %v1186
    %1336 = vmatprep.subr.bf16.mxu0 0
    %1337 = vmatpush1.bf16.msra.mxu0 %v1185
    %1338 = vmatprep.subr.bf16.mxu0 0
    %1339 = vmatpush1.bf16.msra.mxu0 %v1184
    %1340 = vmatprep.subr.bf16.mxu0 0
    %1341 = vmatpush1.bf16.msra.mxu0 %v1183
    %1342 = vmatprep.subr.bf16.mxu0 0
    %1343 = vmatpush1.bf16.msra.mxu0 %v1182
    %1344 = vmatprep.subr.bf16.mxu0 0
    %1345 = vmatpush1.bf16.msra.mxu0 %v1181
    %1346 = vmatprep.subr.bf16.mxu0 0
    %1347 = vmatpush1.bf16.msra.mxu0 %v1180
    %1348 = vmatprep.subr.bf16.mxu0 0
    %1349 = vmatpush2.bf16.msra.mxu0 %v1195
    %1350 = vmatprep.subr.bf16.mxu0 0
    %1351 = vmatpush2.bf16.msra.mxu0 %v1194
    %1352 = vmatprep.subr.bf16.mxu0 0
    %1353 = vmatpush2.bf16.msra.mxu0 %v1193
    %1354 = vmatprep.subr.bf16.mxu0 0
    %1355 = vmatpush2.bf16.msra.mxu0 %v1192
    %1356 = vmatprep.subr.bf16.mxu0 0
    %1357 = vmatpush2.bf16.msra.mxu0 %v1191
    %1358 = vmatprep.subr.bf16.mxu0 0
    %1359 = vmatpush2.bf16.msra.mxu0 %v1190
    %1360 = vmatprep.subr.bf16.mxu0 0
    %1361 = vmatpush2.bf16.msra.mxu0 %v1189
    %1362 = vmatprep.subr.bf16.mxu0 0
    %1363 = vmatpush2.bf16.msra.mxu0 %v1188
    %1364 = vmatprep.mubr.bf16.mxu0 %v219
    %1365 = vmatmul.mubr.bf16.gmra.mxu0 %v217
    %v1366 = vpop.f32.mrf.mxu0
    %v1367 = vadd.f32 %v1327, %v1366
    %v1368 = vpop.f32.mrf.mxu0
    %v1369 = vpop.f32.mrf.mxu0
    %v1370 = vpop.f32.mrf.mxu0
    %1371 = vdwg.mxu0
    %1372 = vmatprep.subr.bf16.mxu0 0
    %1373 = vmatpush1.bf16.msra.mxu0 %v1203
    %1374 = vmatprep.subr.bf16.mxu0 0
    %1375 = vmatpush1.bf16.msra.mxu0 %v1202
    %1376 = vmatprep.subr.bf16.mxu0 0
    %1377 = vmatpush1.bf16.msra.mxu0 %v1201
    %1378 = vmatprep.subr.bf16.mxu0 0
    %1379 = vmatpush1.bf16.msra.mxu0 %v1200
    %1380 = vmatprep.subr.bf16.mxu0 0
    %1381 = vmatpush1.bf16.msra.mxu0 %v1199
    %1382 = vmatprep.subr.bf16.mxu0 0
    %1383 = vmatpush1.bf16.msra.mxu0 %v1198
    %1384 = vmatprep.subr.bf16.mxu0 0
    %1385 = vmatpush1.bf16.msra.mxu0 %v1197
    %1386 = vmatprep.subr.bf16.mxu0 0
    %1387 = vmatpush1.bf16.msra.mxu0 %v1196
    %1388 = vmatprep.subr.bf16.mxu0 0
    %1389 = vmatpush2.bf16.msra.mxu0 %v1211
    %1390 = vmatprep.subr.bf16.mxu0 0
    %1391 = vmatpush2.bf16.msra.mxu0 %v1210
    %1392 = vmatprep.subr.bf16.mxu0 0
    %1393 = vmatpush2.bf16.msra.mxu0 %v1209
    %1394 = vmatprep.subr.bf16.mxu0 0
    %1395 = vmatpush2.bf16.msra.mxu0 %v1208
    %1396 = vmatprep.subr.bf16.mxu0 0
    %1397 = vmatpush2.bf16.msra.mxu0 %v1207
    %1398 = vmatprep.subr.bf16.mxu0 0
    %1399 = vmatpush2.bf16.msra.mxu0 %v1206
    %1400 = vmatprep.subr.bf16.mxu0 0
    %1401 = vmatpush2.bf16.msra.mxu0 %v1205
    %1402 = vmatprep.subr.bf16.mxu0 0
    %1403 = vmatpush2.bf16.msra.mxu0 %v1204
    %1404 = vmatprep.mubr.bf16.mxu0 %v216
    %1405 = vmatmul.mubr.bf16.gmra.mxu0 %v202
    %v1406 = vpop.f32.mrf.mxu0
    %v1407 = vadd.f32 %v1367, %v1406
    %v1408 = vpop.f32.mrf.mxu0
    %v1409 = vpop.f32.mrf.mxu0
    %v1410 = vpop.f32.mrf.mxu0
    %1411 = vdwg.mxu0
    %1412 = vmatprep.subr.bf16.mxu0 0
    %1413 = vmatpush1.bf16.msra.mxu0 %v1219
    %1414 = vmatprep.subr.bf16.mxu0 0
    %1415 = vmatpush1.bf16.msra.mxu0 %v1218
    %1416 = vmatprep.subr.bf16.mxu0 0
    %1417 = vmatpush1.bf16.msra.mxu0 %v1217
    %1418 = vmatprep.subr.bf16.mxu0 0
    %1419 = vmatpush1.bf16.msra.mxu0 %v1216
    %1420 = vmatprep.subr.bf16.mxu0 0
    %1421 = vmatpush1.bf16.msra.mxu0 %v1215
    %1422 = vmatprep.subr.bf16.mxu0 0
    %1423 = vmatpush1.bf16.msra.mxu0 %v1214
    %1424 = vmatprep.subr.bf16.mxu0 0
    %1425 = vmatpush1.bf16.msra.mxu0 %v1213
    %1426 = vmatprep.subr.bf16.mxu0 0
    %1427 = vmatpush1.bf16.msra.mxu0 %v1212
    %1428 = vmatprep.subr.bf16.mxu0 0
    %1429 = vmatpush2.bf16.msra.mxu0 %v1227
    %1430 = vmatprep.subr.bf16.mxu0 0
    %1431 = vmatpush2.bf16.msra.mxu0 %v1226
    %1432 = vmatprep.subr.bf16.mxu0 0
    %1433 = vmatpush2.bf16.msra.mxu0 %v1225
    %1434 = vmatprep.subr.bf16.mxu0 0
    %1435 = vmatpush2.bf16.msra.mxu0 %v1224
    %1436 = vmatprep.subr.bf16.mxu0 0
    %1437 = vmatpush2.bf16.msra.mxu0 %v1223
    %1438 = vmatprep.subr.bf16.mxu0 0
    %1439 = vmatpush2.bf16.msra.mxu0 %v1222
    %1440 = vmatprep.subr.bf16.mxu0 0
    %1441 = vmatpush2.bf16.msra.mxu0 %v1221
    %1442 = vmatprep.subr.bf16.mxu0 0
    %1443 = vmatpush2.bf16.msra.mxu0 %v1220
    %1444 = vmatprep.mubr.bf16.mxu0 %v220
    %1445 = vmatmul.mubr.bf16.gmra.mxu0 %v218
    %v1446 = vpop.f32.mrf.mxu0
    %v1447 = vadd.f32 %v1407, %v1446
    %v1448 = vpop.f32.mrf.mxu0
    %v1449 = vpop.f32.mrf.mxu0
    %v1450 = vpop.f32.mrf.mxu0
    %1451 = vdwg.mxu0
    %vm1452 = vcmask 58368
    %1453 = vst.msk [vmem:[#allocation2] sm:$0x3] %vm1452, %v768
    %1454 = vst.msk [vmem:[#allocation4] sm:$0x3] %vm1452, %v1447
    %v1455 = vld [vmem:[%s5] sm:$0x3]
    %v1456 = vmul.f32 %v1447, 0.5
    %v1457 = vmul.f32 %v1456, 1.442695
    %v1458 = vpow.pop %v1457
    %v1459 = vmul.f32 %v1455, %v1458
    %v1460 = vadd.f32 %v768, %v1459
    %v1461 = vpack.c.bf16 %v1460, %v1460
    %v1462 = vld [vmem:[%s6] sm:$0xff]
    %v1463 = vld [vmem:[%s6 + $0x8] sm:$0xff]
    %v1464 = vld [vmem:[%s6 + $0x10] sm:$0xff]
    %v1465 = vld [vmem:[%s6 + $0x18] sm:$0xff]
    %v1466 = vld [vmem:[%s7] sm:$0xff]
    %v1468 = vlaneseq
    %v1469 = vshrl.u32 %v1468, 7
    %v1470 = vsub.s32 0, %v1469
    %v1471 = vrot.slane %v1466, %v1470
    %v1472 = vlaneseq
    %v1473 = vshrl.u32 %v1472, 7
    %v1474 = vsub.s32 1, %v1473
    %v1475 = vrot.slane %v1466, %v1474
    %v1476 = vlaneseq
    %v1477 = vshrl.u32 %v1476, 7
    %v1478 = vsub.s32 2, %v1477
    %v1479 = vrot.slane %v1466, %v1478
    %v1480 = vlaneseq
    %v1481 = vshrl.u32 %v1480, 7
    %v1482 = vsub.s32 3, %v1481
    %v1483 = vrot.slane %v1466, %v1482
    %v1484 = vlaneseq
    %v1485 = vshrl.u32 %v1484, 7
    %v1486 = vsub.s32 4, %v1485
    %v1487 = vrot.slane %v1466, %v1486
    %v1488 = vlaneseq
    %v1489 = vshrl.u32 %v1488, 7
    %v1490 = vsub.s32 5, %v1489
    %v1491 = vrot.slane %v1466, %v1490
    %v1492 = vlaneseq
    %v1493 = vshrl.u32 %v1492, 7
    %v1494 = vsub.s32 6, %v1493
    %v1495 = vrot.slane %v1466, %v1494
    %v1496 = vlaneseq
    %v1497 = vshrl.u32 %v1496, 7
    %v1498 = vsub.s32 7, %v1497
    %v1499 = vrot.slane %v1466, %v1498
    %v1512 = vunpack.c.l.b16 %v1462
    %v1513 = vunpack.c.h.b16 %v1462
    %v1514 = vunpack.c.l.b16 %v1463
    %v1515 = vunpack.c.h.b16 %v1463
    %v1516 = vunpack.c.l.b16 %v1464
    %v1517 = vunpack.c.h.b16 %v1464
    %v1518 = vunpack.c.l.b16 %v1465
    %v1519 = vunpack.c.h.b16 %v1465
    %v1520 = vpack.c.b16 %v1512, %v1512
    %v1521 = vpack.c.b16 %v1513, %v1513
    %v1522 = vpack.c.b16 %v1514, %v1514
    %v1523 = vpack.c.b16 %v1515, %v1515
    %v1524 = vpack.c.b16 %v1516, %v1516
    %v1525 = vpack.c.b16 %v1517, %v1517
    %v1526 = vpack.c.b16 %v1518, %v1518
    %v1527 = vpack.c.b16 %v1519, %v1519
    %vm1528 = vcmask 64512
    %v1530 = vsel %vm1528, %v1461, 0
    %vm1532 = vcmask 1043456
    %v1534 = vsel %vm1532, %v1520, 0
    %v1537 = vsel %vm1532, %v1521, 0
    %v1540 = vsel %vm1532, %v1522, 0
    %v1543 = vsel %vm1532, %v1523, 0
    %v1546 = vsel %vm1532, %v1524, 0
    %v1549 = vsel %vm1532, %v1525, 0
    %v1552 = vsel %vm1532, %v1526, 0
    %v1555 = vsel %vm1532, %v1527, 0
    %1557 = vmatprep.subr.bf16.mxu0 0
    %1558 = vmatpush1.bf16.msra.mxu0 0
    %1559 = vmatprep.subr.bf16.mxu0 0
    %1560 = vmatpush1.bf16.msra.mxu0 0
    %1561 = vmatprep.subr.bf16.mxu0 0
    %1562 = vmatpush1.bf16.msra.mxu0 0
    %1563 = vmatprep.subr.bf16.mxu0 0
    %1564 = vmatpush1.bf16.msra.mxu0 0
    %1565 = vmatprep.subr.bf16.mxu0 0
    %1566 = vmatpush1.bf16.msra.mxu0 0
    %1567 = vmatprep.subr.bf16.mxu0 0
    %1568 = vmatpush1.bf16.msra.mxu0 0
    %1569 = vmatprep.subr.bf16.mxu0 0
    %1570 = vmatpush1.bf16.msra.mxu0 0
    %1571 = vmatprep.subr.bf16.mxu0 %v1537
    %1572 = vmatpush1.bf16.msra.mxu0 %v1534
    %1573 = vmatprep.subr.bf16.mxu0 0
    %1574 = vmatpush2.bf16.msra.mxu0 0
    %1575 = vmatprep.subr.bf16.mxu0 0
    %1576 = vmatpush2.bf16.msra.mxu0 0
    %1577 = vmatprep.subr.bf16.mxu0 0
    %1578 = vmatpush2.bf16.msra.mxu0 0
    %1579 = vmatprep.subr.bf16.mxu0 0
    %1580 = vmatpush2.bf16.msra.mxu0 0
    %1581 = vmatprep.subr.bf16.mxu0 0
    %1582 = vmatpush2.bf16.msra.mxu0 0
    %1583 = vmatprep.subr.bf16.mxu0 0
    %1584 = vmatpush2.bf16.msra.mxu0 0
    %1585 = vmatprep.subr.bf16.mxu0 0
    %1586 = vmatpush2.bf16.msra.mxu0 0
    %1587 = vmatprep.subr.bf16.mxu0 0
    %1588 = vmatpush2.bf16.msra.mxu0 0
    %1589 = vmatprep.mubr.bf16.mxu0 0
    %1590 = vmatmul.mubr.bf16.gmra.mxu0 %v1530
    %v1591 = vpop.f32.mrf.mxu0
    %v1592 = vadd.f32 %v1471, %v1591
    %v1593 = vpop.f32.mrf.mxu0
    %v1594 = vadd.f32 %v1475, %v1593
    %v1595 = vpop.f32.mrf.mxu0
    %v1596 = vpop.f32.mrf.mxu0
    %1597 = vdwg.mxu0
    %1598 = vmatprep.subr.bf16.mxu0 0
    %1599 = vmatpush1.bf16.msra.mxu0 0
    %1600 = vmatprep.subr.bf16.mxu0 0
    %1601 = vmatpush1.bf16.msra.mxu0 0
    %1602 = vmatprep.subr.bf16.mxu0 0
    %1603 = vmatpush1.bf16.msra.mxu0 0
    %1604 = vmatprep.subr.bf16.mxu0 0
    %1605 = vmatpush1.bf16.msra.mxu0 0
    %1606 = vmatprep.subr.bf16.mxu0 0
    %1607 = vmatpush1.bf16.msra.mxu0 0
    %1608 = vmatprep.subr.bf16.mxu0 0
    %1609 = vmatpush1.bf16.msra.mxu0 0
    %1610 = vmatprep.subr.bf16.mxu0 0
    %1611 = vmatpush1.bf16.msra.mxu0 0
    %1612 = vmatprep.subr.bf16.mxu0 %v1543
    %1613 = vmatpush1.bf16.msra.mxu0 %v1540
    %1614 = vmatprep.subr.bf16.mxu0 0
    %1615 = vmatpush2.bf16.msra.mxu0 0
    %1616 = vmatprep.subr.bf16.mxu0 0
    %1617 = vmatpush2.bf16.msra.mxu0 0
    %1618 = vmatprep.subr.bf16.mxu0 0
    %1619 = vmatpush2.bf16.msra.mxu0 0
    %1620 = vmatprep.subr.bf16.mxu0 0
    %1621 = vmatpush2.bf16.msra.mxu0 0
    %1622 = vmatprep.subr.bf16.mxu0 0
    %1623 = vmatpush2.bf16.msra.mxu0 0
    %1624 = vmatprep.subr.bf16.mxu0 0
    %1625 = vmatpush2.bf16.msra.mxu0 0
    %1626 = vmatprep.subr.bf16.mxu0 0
    %1627 = vmatpush2.bf16.msra.mxu0 0
    %1628 = vmatprep.subr.bf16.mxu0 0
    %1629 = vmatpush2.bf16.msra.mxu0 0
    %1630 = vmatprep.mubr.bf16.mxu0 0
    %1631 = vmatmul.mubr.bf16.gmra.mxu0 %v1530
    %v1632 = vpop.f32.mrf.mxu0
    %v1633 = vadd.f32 %v1479, %v1632
    %v1634 = vpop.f32.mrf.mxu0
    %v1635 = vadd.f32 %v1483, %v1634
    %v1636 = vpop.f32.mrf.mxu0
    %v1637 = vpop.f32.mrf.mxu0
    %1638 = vdwg.mxu0
    %1639 = vmatprep.subr.bf16.mxu0 0
    %1640 = vmatpush1.bf16.msra.mxu0 0
    %1641 = vmatprep.subr.bf16.mxu0 0
    %1642 = vmatpush1.bf16.msra.mxu0 0
    %1643 = vmatprep.subr.bf16.mxu0 0
    %1644 = vmatpush1.bf16.msra.mxu0 0
    %1645 = vmatprep.subr.bf16.mxu0 0
    %1646 = vmatpush1.bf16.msra.mxu0 0
    %1647 = vmatprep.subr.bf16.mxu0 0
    %1648 = vmatpush1.bf16.msra.mxu0 0
    %1649 = vmatprep.subr.bf16.mxu0 0
    %1650 = vmatpush1.bf16.msra.mxu0 0
    %1651 = vmatprep.subr.bf16.mxu0 0
    %1652 = vmatpush1.bf16.msra.mxu0 0
    %1653 = vmatprep.subr.bf16.mxu0 %v1549
    %1654 = vmatpush1.bf16.msra.mxu0 %v1546
    %1655 = vmatprep.subr.bf16.mxu0 0
    %1656 = vmatpush2.bf16.msra.mxu0 0
    %1657 = vmatprep.subr.bf16.mxu0 0
    %1658 = vmatpush2.bf16.msra.mxu0 0
    %1659 = vmatprep.subr.bf16.mxu0 0
    %1660 = vmatpush2.bf16.msra.mxu0 0
    %1661 = vmatprep.subr.bf16.mxu0 0
    %1662 = vmatpush2.bf16.msra.mxu0 0
    %1663 = vmatprep.subr.bf16.mxu0 0
    %1664 = vmatpush2.bf16.msra.mxu0 0
    %1665 = vmatprep.subr.bf16.mxu0 0
    %1666 = vmatpush2.bf16.msra.mxu0 0
    %1667 = vmatprep.subr.bf16.mxu0 0
    %1668 = vmatpush2.bf16.msra.mxu0 0
    %1669 = vmatprep.subr.bf16.mxu0 0
    %1670 = vmatpush2.bf16.msra.mxu0 0
    %1671 = vmatprep.mubr.bf16.mxu0 0
    %1672 = vmatmul.mubr.bf16.gmra.mxu0 %v1530
    %v1673 = vpop.f32.mrf.mxu0
    %v1674 = vadd.f32 %v1487, %v1673
    %v1675 = vpop.f32.mrf.mxu0
    %v1676 = vadd.f32 %v1491, %v1675
    %v1677 = vpop.f32.mrf.mxu0
    %v1678 = vpop.f32.mrf.mxu0
    %1679 = vdwg.mxu0
    %1680 = vmatprep.subr.bf16.mxu0 0
    %1681 = vmatpush1.bf16.msra.mxu0 0
    %1682 = vmatprep.subr.bf16.mxu0 0
    %1683 = vmatpush1.bf16.msra.mxu0 0
    %1684 = vmatprep.subr.bf16.mxu0 0
    %1685 = vmatpush1.bf16.msra.mxu0 0
    %1686 = vmatprep.subr.bf16.mxu0 0
    %1687 = vmatpush1.bf16.msra.mxu0 0
    %1688 = vmatprep.subr.bf16.mxu0 0
    %1689 = vmatpush1.bf16.msra.mxu0 0
    %1690 = vmatprep.subr.bf16.mxu0 0
    %1691 = vmatpush1.bf16.msra.mxu0 0
    %1692 = vmatprep.subr.bf16.mxu0 0
    %1693 = vmatpush1.bf16.msra.mxu0 0
    %1694 = vmatprep.subr.bf16.mxu0 %v1555
    %1695 = vmatpush1.bf16.msra.mxu0 %v1552
    %1696 = vmatprep.subr.bf16.mxu0 0
    %1697 = vmatpush2.bf16.msra.mxu0 0
    %1698 = vmatprep.subr.bf16.mxu0 0
    %1699 = vmatpush2.bf16.msra.mxu0 0
    %1700 = vmatprep.subr.bf16.mxu0 0
    %1701 = vmatpush2.bf16.msra.mxu0 0
    %1702 = vmatprep.subr.bf16.mxu0 0
    %1703 = vmatpush2.bf16.msra.mxu0 0
    %1704 = vmatprep.subr.bf16.mxu0 0
    %1705 = vmatpush2.bf16.msra.mxu0 0
    %1706 = vmatprep.subr.bf16.mxu0 0
    %1707 = vmatpush2.bf16.msra.mxu0 0
    %1708 = vmatprep.subr.bf16.mxu0 0
    %1709 = vmatpush2.bf16.msra.mxu0 0
    %1710 = vmatprep.subr.bf16.mxu0 0
    %1711 = vmatpush2.bf16.msra.mxu0 0
    %1712 = vmatprep.mubr.bf16.mxu0 0
    %1713 = vmatmul.mubr.bf16.gmra.mxu0 %v1530
    %v1714 = vpop.f32.mrf.mxu0
    %v1715 = vadd.f32 %v1495, %v1714
    %v1716 = vpop.f32.mrf.mxu0
    %v1717 = vadd.f32 %v1499, %v1716
    %v1718 = vpop.f32.mrf.mxu0
    %v1719 = vpop.f32.mrf.mxu0
    %1720 = vdwg.mxu0
    %v1721 = vmax.f32 %v1592, 0.0
    %v1722 = vmax.f32 %v1594, 0.0
    %v1723 = vmax.f32 %v1633, 0.0
    %v1724 = vmax.f32 %v1635, 0.0
    %v1725 = vmax.f32 %v1674, 0.0
    %v1726 = vmax.f32 %v1676, 0.0
    %v1727 = vmax.f32 %v1715, 0.0
    %v1728 = vmax.f32 %v1717, 0.0
    %v1729 = vpack.c.bf16 %v1721, %v1721
    %v1730 = vpack.c.bf16 %v1722, %v1722
    %v1731 = vpack.c.bf16 %v1723, %v1723
    %v1732 = vpack.c.bf16 %v1724, %v1724
    %v1733 = vpack.c.bf16 %v1725, %v1725
    %v1734 = vpack.c.bf16 %v1726, %v1726
    %v1735 = vpack.c.bf16 %v1727, %v1727
    %v1736 = vpack.c.bf16 %v1728, %v1728
    %v1745 = vcombine.low %v1729, %v1730
    %v1746 = vcombine.low %v1731, %v1732
    %v1747 = vcombine.low %v1733, %v1734
    %v1748 = vcombine.low %v1735, %v1736
    %v1750 = vunpack.c.l.s4 1966171168
    %v1751 = vunpack.c.0.s8 %v1750
    %v1752 = vlaneseq
    %v1753 = vshrl.u32 %v1752, 7
    %v1754 = vsub.s32 %v1751, %v1753
    %v1755 = vrot.slane %v1745, %v1754
    %v1757 = vunpack.c.l.s4 1966171168
    %v1758 = vunpack.c.0.s8 %v1757
    %v1759 = vlaneseq
    %v1760 = vshrl.u32 %v1759, 7
    %v1761 = vsub.s32 %v1758, %v1760
    %v1762 = vrot.slane %v1746, %v1761
    %v1764 = vunpack.c.l.s4 1966171168
    %v1765 = vunpack.c.0.s8 %v1764
    %v1766 = vlaneseq
    %v1767 = vshrl.u32 %v1766, 7
    %v1768 = vsub.s32 %v1765, %v1767
    %v1769 = vrot.slane %v1747, %v1768
    %v1771 = vunpack.c.l.s4 1966171168
    %v1772 = vunpack.c.0.s8 %v1771
    %v1773 = vlaneseq
    %v1774 = vshrl.u32 %v1773, 7
    %v1775 = vsub.s32 %v1772, %v1774
    %v1776 = vrot.slane %v1748, %v1775
    %v1777 = vcombine.low %v1755, %v1762
    %v1778 = vcombine.low %v1769, %v1776
    %v1780 = vunpack.c.l.s4 1966171168
    %v1781 = vunpack.c.0.s8 %v1780
    %v1782 = vlaneseq
    %v1783 = vshrl.u32 %v1782, 7
    %v1784 = vsub.s32 %v1781, %v1783
    %v1785 = vrot.slane %v1777, %v1784
    %v1787 = vunpack.c.l.s4 1966171168
    %v1788 = vunpack.c.0.s8 %v1787
    %v1789 = vlaneseq
    %v1790 = vshrl.u32 %v1789, 7
    %v1791 = vsub.s32 %v1788, %v1790
    %v1792 = vrot.slane %v1778, %v1791
    %v1793 = vcombine.low %v1785, %v1792
    %1795 = vst [vmem:[%s10] sm:$0xff] %v1793
    // Predicated region
    $region34: #{vae_forward.10} parent=1 // pred_check
      _
    $region35: #{vae_forward.10} parent=1 // pred_check_branch
      %1797 = sbr.rel (0) target = $region37
    $region36: #{vae_forward.10} parent=1 // pred_region
      %s1799 = ssub.s32 32, 32
      %1800 = vsyncadd [#allocation3], %s1799
      %s1802 = sshll.u32 [#allocation2], 4
      %s1803 = int_to_ptr.vmem [resolvable:$true] %s1802
      %1805 = dma.vmem_to_hbm [thread:$0]  %s1803, 32, %s8, [#allocation3]
    $region37: #{vae_forward.10} parent=1 // pred_fallthru
      _
    // Predicated region
    $region38: #{vae_forward.10} parent=1 // pred_check
      _
    $region39: #{vae_forward.10} parent=1 // pred_check_branch
      %1807 = sbr.rel (0) target = $region41
    $region40: #{vae_forward.10} parent=1 // pred_region
      %s1809 = ssub.s32 32, 32
      %1810 = vsyncadd [#allocation5], %s1809
      %s1812 = sshll.u32 [#allocation4], 4
      %s1813 = int_to_ptr.vmem [resolvable:$true] %s1812
      %1815 = dma.vmem_to_hbm [thread:$0]  %s1813, 32, %s9, [#allocation5]
    $region41: #{vae_forward.10} parent=1 // pred_fallthru
      _
    // Predicated region
    $region42: #{vae_forward.10} parent=1 // pred_check
      _
    $region43: #{vae_forward.10} parent=1 // pred_check_branch
      %1817 = sbr.rel (0) target = $region45
    $region44: #{vae_forward.10} parent=1 // pred_region
      _
    $region45: #{vae_forward.10} parent=1 // pred_fallthru
      _
    // Predicated region
    $region46: #{vae_forward.10} parent=1 // pred_check
      _
    $region47: #{vae_forward.10} parent=1 // pred_check_branch
      %1819 = sbr.rel (0) target = $region49
    $region48: #{vae_forward.10} parent=1 // pred_region
      %1820 = dma.done [#allocation3], 32
    $region49: #{vae_forward.10} parent=1 // pred_fallthru
      _
    // Predicated region
    $region50: #{vae_forward.10} parent=1 // pred_check
      _
    $region51: #{vae_forward.10} parent=1 // pred_check_branch
      %1822 = sbr.rel (0) target = $region53
    $region52: #{vae_forward.10} parent=1 // pred_region
      %1823 = dma.done [#allocation5], 32
    $region53: #{vae_forward.10} parent=1 // pred_fallthru
      _
    // Predicated region
    $region54: #{vae_forward.10} parent=1 // pred_check
      _
    $region55: #{vae_forward.10} parent=1 // pred_check_branch
      %1825 = sbr.rel (0) target = $region57
    $region56: #{vae_forward.10} parent=1 // pred_region
      _
    $region57: #{vae_forward.10} parent=1 // pred_fallthru
      _
    %1826 = vsyncpa [#allocation3], 1
    %1827 = vsyncpa [#allocation5], 1

// kernel: vae_forward.12
$region0: #{vae_forward.12}
  #allocation0 [shape = 'u32[]', space=smem, size = 0x4, offset = 0x4, fixed_abs, tag = 'smem constant byte address 0x4 - core index']
  #allocation1 [shape = 'u32[144,128]{1,0:T(1,128)}', space=vmem, size = 0x12000, scoped, tag = 'internal scratch']
  %s0 = inlined_call_operand.vmem [shape: bf16[32,1152], index: 0, kind: input, shape index: {}]
  %s1 = inlined_call_operand.vmem [shape: bf16[1152,256], index: 1, kind: input, shape index: {}]
  %s2 = inlined_call_operand.vmem [shape: f32[1,256], index: 2, kind: input, shape index: {}]
  %s3 = inlined_call_operand.vmem [shape: bf16[32,256], index: 3, kind: output, shape index: {}]
  %s4 = sld [smem:[#allocation0]]
  $region22: #{vae_forward.12} parent=0
    _
  %s6 = ssub.s32 1, %s4
  %s7 = scalar_select 0, %s6, %s4
  // Predicated region
  $region2: #{vae_forward.12} parent=0 // pred_check
    _
  $region3: #{vae_forward.12} parent=0 // pred_check_branch
    %9 = sbr.rel (0) target = $region5
  $region4: #{vae_forward.12} parent=0 // pred_region
    _
  $region5: #{vae_forward.12} parent=0 // pred_fallthru
    _
  // Predicated region
  $region6: #{vae_forward.12} parent=0 // pred_check
    _
  $region7: #{vae_forward.12} parent=0 // pred_check_branch
    %11 = sbr.rel (0) target = $region9
  $region8: #{vae_forward.12} parent=0 // pred_region
    _
  $region9: #{vae_forward.12} parent=0 // pred_fallthru
    _
  // Predicated region
  $region10: #{vae_forward.12} parent=0 // pred_check
    _
  $region11: #{vae_forward.12} parent=0 // pred_check_branch
    %13 = sbr.rel (0) target = $region13
  $region12: #{vae_forward.12} parent=0 // pred_region
    _
  $region13: #{vae_forward.12} parent=0 // pred_fallthru
    _
  %v15 = vld [vmem:[%s0] sm:$0xff]
  %v16 = vld [vmem:[%s0 + $0x8] sm:$0xff]
  %v17 = vld [vmem:[%s0 + $0x10] sm:$0xff]
  %v18 = vld [vmem:[%s0 + $0x18] sm:$0xff]
  %v19 = vld [vmem:[%s0 + $0x20] sm:$0xf]
  %v20 = vld [vmem:[%s0 + $0x24] sm:$0xff]
  %v21 = vld [vmem:[%s0 + $0x2c] sm:$0xff]
  %v22 = vld [vmem:[%s0 + $0x34] sm:$0xff]
  %v23 = vld [vmem:[%s0 + $0x3c] sm:$0xff]
  %v24 = vld [vmem:[%s0 + $0x44] sm:$0xf]
  %v25 = vld [vmem:[%s0 + $0x48] sm:$0xff]
  %v26 = vld [vmem:[%s0 + $0x50] sm:$0xff]
  %v27 = vld [vmem:[%s0 + $0x58] sm:$0xff]
  %v28 = vld [vmem:[%s0 + $0x60] sm:$0xff]
  %v29 = vld [vmem:[%s0 + $0x68] sm:$0xf]
  %v30 = vld [vmem:[%s0 + $0x6c] sm:$0xff]
  %v31 = vld [vmem:[%s0 + $0x74] sm:$0xff]
  %v32 = vld [vmem:[%s0 + $0x7c] sm:$0xff]
  %v33 = vld [vmem:[%s0 + $0x84] sm:$0xff]
  %v34 = vld [vmem:[%s0 + $0x8c] sm:$0xf]
  %v35 = vld [vmem:[%s1] sm:$0xff]
  %v36 = vld [vmem:[%s1 + $0x8] sm:$0xff]
  %v37 = vld [vmem:[%s1 + $0x10] sm:$0xff]
  %v38 = vld [vmem:[%s1 + $0x18] sm:$0xff]
  %v39 = vld [vmem:[%s1 + $0x20] sm:$0xff]
  %v40 = vld [vmem:[%s1 + $0x28] sm:$0xff]
  %v41 = vld [vmem:[%s1 + $0x30] sm:$0xff]
  %v42 = vld [vmem:[%s1 + $0x38] sm:$0xff]
  %v43 = vld [vmem:[%s1 + $0x40] sm:$0xff]
  %v44 = vld [vmem:[%s1 + $0x48] sm:$0xff]
  %v45 = vld [vmem:[%s1 + $0x50] sm:$0xff]
  %v46 = vld [vmem:[%s1 + $0x58] sm:$0xff]
  %v47 = vld [vmem:[%s1 + $0x60] sm:$0xff]
  %v48 = vld [vmem:[%s1 + $0x68] sm:$0xff]
  %v49 = vld [vmem:[%s1 + $0x70] sm:$0xff]
  %v50 = vld [vmem:[%s1 + $0x78] sm:$0xff]
  %v51 = vld [vmem:[%s1 + $0x80] sm:$0xff]
  %v52 = vld [vmem:[%s1 + $0x88] sm:$0xff]
  %v53 = vld [vmem:[%s1 + $0x90] sm:$0xff]
  %v54 = vld [vmem:[%s1 + $0x98] sm:$0xff]
  %v55 = vld [vmem:[%s1 + $0xa0] sm:$0xff]
  %v56 = vld [vmem:[%s1 + $0xa8] sm:$0xff]
  %v57 = vld [vmem:[%s1 + $0xb0] sm:$0xff]
  %v58 = vld [vmem:[%s1 + $0xb8] sm:$0xff]
  %v59 = vld [vmem:[%s1 + $0xc0] sm:$0xff]
  %v60 = vld [vmem:[%s1 + $0xc8] sm:$0xff]
  %v61 = vld [vmem:[%s1 + $0xd0] sm:$0xff]
  %v62 = vld [vmem:[%s1 + $0xd8] sm:$0xff]
  %v63 = vld [vmem:[%s1 + $0xe0] sm:$0xff]
  %v64 = vld [vmem:[%s1 + $0xe8] sm:$0xff]
  %v65 = vld [vmem:[%s1 + $0xf0] sm:$0xff]
  %v66 = vld [vmem:[%s1 + $0xf8] sm:$0xff]
  %v67 = vld [vmem:[%s1 + $0x100] sm:$0xff]
  %v68 = vld [vmem:[%s1 + $0x108] sm:$0xff]
  %v69 = vld [vmem:[%s1 + $0x110] sm:$0xff]
  %v70 = vld [vmem:[%s1 + $0x118] sm:$0xff]
  %v71 = vld [vmem:[%s1 + $0x120] sm:$0xff]
  %v72 = vld [vmem:[%s1 + $0x128] sm:$0xff]
  %v73 = vld [vmem:[%s1 + $0x130] sm:$0xff]
  %v74 = vld [vmem:[%s1 + $0x138] sm:$0xff]
  %v75 = vld [vmem:[%s1 + $0x140] sm:$0xff]
  %v76 = vld [vmem:[%s1 + $0x148] sm:$0xff]
  %v77 = vld [vmem:[%s1 + $0x150] sm:$0xff]
  %v78 = vld [vmem:[%s1 + $0x158] sm:$0xff]
  %v79 = vld [vmem:[%s1 + $0x160] sm:$0xff]
  %v80 = vld [vmem:[%s1 + $0x168] sm:$0xff]
  %v81 = vld [vmem:[%s1 + $0x170] sm:$0xff]
  %v82 = vld [vmem:[%s1 + $0x178] sm:$0xff]
  %v83 = vld [vmem:[%s1 + $0x180] sm:$0xff]
  %v84 = vld [vmem:[%s1 + $0x188] sm:$0xff]
  %v85 = vld [vmem:[%s1 + $0x190] sm:$0xff]
  %v86 = vld [vmem:[%s1 + $0x198] sm:$0xff]
  %v87 = vld [vmem:[%s1 + $0x1a0] sm:$0xff]
  %v88 = vld [vmem:[%s1 + $0x1a8] sm:$0xff]
  %v89 = vld [vmem:[%s1 + $0x1b0] sm:$0xff]
  %v90 = vld [vmem:[%s1 + $0x1b8] sm:$0xff]
  %v91 = vld [vmem:[%s1 + $0x1c0] sm:$0xff]
  %v92 = vld [vmem:[%s1 + $0x1c8] sm:$0xff]
  %v93 = vld [vmem:[%s1 + $0x1d0] sm:$0xff]
  %v94 = vld [vmem:[%s1 + $0x1d8] sm:$0xff]
  %v95 = vld [vmem:[%s1 + $0x1e0] sm:$0xff]
  %v96 = vld [vmem:[%s1 + $0x1e8] sm:$0xff]
  %v97 = vld [vmem:[%s1 + $0x1f0] sm:$0xff]
  %v98 = vld [vmem:[%s1 + $0x1f8] sm:$0xff]
  %v99 = vld [vmem:[%s1 + $0x200] sm:$0xff]
  %v100 = vld [vmem:[%s1 + $0x208] sm:$0xff]
  %v101 = vld [vmem:[%s1 + $0x210] sm:$0xff]
  %v102 = vld [vmem:[%s1 + $0x218] sm:$0xff]
  %v103 = vld [vmem:[%s1 + $0x220] sm:$0xff]
  %v104 = vld [vmem:[%s1 + $0x228] sm:$0xff]
  %v105 = vld [vmem:[%s1 + $0x230] sm:$0xff]
  %v106 = vld [vmem:[%s1 + $0x238] sm:$0xff]
  %v107 = vld [vmem:[%s1 + $0x240] sm:$0xff]
  %v108 = vld [vmem:[%s1 + $0x248] sm:$0xff]
  %v109 = vld [vmem:[%s1 + $0x250] sm:$0xff]
  %v110 = vld [vmem:[%s1 + $0x258] sm:$0xff]
  %v111 = vld [vmem:[%s1 + $0x260] sm:$0xff]
  %v112 = vld [vmem:[%s1 + $0x268] sm:$0xff]
  %v113 = vld [vmem:[%s1 + $0x270] sm:$0xff]
  %v114 = vld [vmem:[%s1 + $0x278] sm:$0xff]
  %v115 = vld [vmem:[%s1 + $0x280] sm:$0xff]
  %v116 = vld [vmem:[%s1 + $0x288] sm:$0xff]
  %v117 = vld [vmem:[%s1 + $0x290] sm:$0xff]
  %v118 = vld [vmem:[%s1 + $0x298] sm:$0xff]
  %v119 = vld [vmem:[%s1 + $0x2a0] sm:$0xff]
  %v120 = vld [vmem:[%s1 + $0x2a8] sm:$0xff]
  %v121 = vld [vmem:[%s1 + $0x2b0] sm:$0xff]
  %v122 = vld [vmem:[%s1 + $0x2b8] sm:$0xff]
  %v123 = vld [vmem:[%s1 + $0x2c0] sm:$0xff]
  %v124 = vld [vmem:[%s1 + $0x2c8] sm:$0xff]
  %v125 = vld [vmem:[%s1 + $0x2d0] sm:$0xff]
  %v126 = vld [vmem:[%s1 + $0x2d8] sm:$0xff]
  %v127 = vld [vmem:[%s1 + $0x2e0] sm:$0xff]
  %v128 = vld [vmem:[%s1 + $0x2e8] sm:$0xff]
  %v129 = vld [vmem:[%s1 + $0x2f0] sm:$0xff]
  %v130 = vld [vmem:[%s1 + $0x2f8] sm:$0xff]
  %v131 = vld [vmem:[%s1 + $0x300] sm:$0xff]
  %v132 = vld [vmem:[%s1 + $0x308] sm:$0xff]
  %v133 = vld [vmem:[%s1 + $0x310] sm:$0xff]
  %v134 = vld [vmem:[%s1 + $0x318] sm:$0xff]
  %v135 = vld [vmem:[%s1 + $0x320] sm:$0xff]
  %v136 = vld [vmem:[%s1 + $0x328] sm:$0xff]
  %v137 = vld [vmem:[%s1 + $0x330] sm:$0xff]
  %v138 = vld [vmem:[%s1 + $0x338] sm:$0xff]
  %v139 = vld [vmem:[%s1 + $0x340] sm:$0xff]
  %v140 = vld [vmem:[%s1 + $0x348] sm:$0xff]
  %v141 = vld [vmem:[%s1 + $0x350] sm:$0xff]
  %v142 = vld [vmem:[%s1 + $0x358] sm:$0xff]
  %v143 = vld [vmem:[%s1 + $0x360] sm:$0xff]
  %v144 = vld [vmem:[%s1 + $0x368] sm:$0xff]
  %v145 = vld [vmem:[%s1 + $0x370] sm:$0xff]
  %v146 = vld [vmem:[%s1 + $0x378] sm:$0xff]
  %v147 = vld [vmem:[%s1 + $0x380] sm:$0xff]
  %v148 = vld [vmem:[%s1 + $0x388] sm:$0xff]
  %v149 = vld [vmem:[%s1 + $0x390] sm:$0xff]
  %v150 = vld [vmem:[%s1 + $0x398] sm:$0xff]
  %v151 = vld [vmem:[%s1 + $0x3a0] sm:$0xff]
  %v152 = vld [vmem:[%s1 + $0x3a8] sm:$0xff]
  %v153 = vld [vmem:[%s1 + $0x3b0] sm:$0xff]
  %v154 = vld [vmem:[%s1 + $0x3b8] sm:$0xff]
  %v155 = vld [vmem:[%s1 + $0x3c0] sm:$0xff]
  %v156 = vld [vmem:[%s1 + $0x3c8] sm:$0xff]
  %v157 = vld [vmem:[%s1 + $0x3d0] sm:$0xff]
  %v158 = vld [vmem:[%s1 + $0x3d8] sm:$0xff]
  %v159 = vld [vmem:[%s1 + $0x3e0] sm:$0xff]
  %v160 = vld [vmem:[%s1 + $0x3e8] sm:$0xff]
  %v161 = vld [vmem:[%s1 + $0x3f0] sm:$0xff]
  %v162 = vld [vmem:[%s1 + $0x3f8] sm:$0xff]
  %v163 = vld [vmem:[%s1 + $0x400] sm:$0xff]
  %v164 = vld [vmem:[%s1 + $0x408] sm:$0xff]
  %v165 = vld [vmem:[%s1 + $0x410] sm:$0xff]
  %v166 = vld [vmem:[%s1 + $0x418] sm:$0xff]
  %v167 = vld [vmem:[%s1 + $0x420] sm:$0xff]
  %v168 = vld [vmem:[%s1 + $0x428] sm:$0xff]
  %v169 = vld [vmem:[%s1 + $0x430] sm:$0xff]
  %v170 = vld [vmem:[%s1 + $0x438] sm:$0xff]
  %v171 = vld [vmem:[%s1 + $0x440] sm:$0xff]
  %v172 = vld [vmem:[%s1 + $0x448] sm:$0xff]
  %v173 = vld [vmem:[%s1 + $0x450] sm:$0xff]
  %v174 = vld [vmem:[%s1 + $0x458] sm:$0xff]
  %v175 = vld [vmem:[%s1 + $0x460] sm:$0xff]
  %v176 = vld [vmem:[%s1 + $0x468] sm:$0xff]
  %v177 = vld [vmem:[%s1 + $0x470] sm:$0xff]
  %v178 = vld [vmem:[%s1 + $0x478] sm:$0xff]
  %v179 = vld [vmem:[%s2] sm:$0x3]
  %v181 = vlaneseq
  %v182 = vshrl.u32 %v181, 7
  %v183 = vsub.s32 0, %v182
  %v184 = vrot.slane %v179, %v183
  %v185 = vlaneseq
  %v186 = vshrl.u32 %v185, 7
  %v187 = vsub.s32 1, %v186
  %v188 = vrot.slane %v179, %v187
  %v211 = vunpack.c.l.b16 %v15
  %v212 = vunpack.c.h.b16 %v15
  %v213 = vunpack.c.l.b16 %v16
  %v214 = vunpack.c.h.b16 %v16
  %v215 = vunpack.c.l.b16 %v17
  %v216 = vunpack.c.h.b16 %v17
  %v217 = vunpack.c.l.b16 %v18
  %v218 = vunpack.c.h.b16 %v18
  %v219 = vunpack.c.l.b16 %v19
  %v220 = vunpack.c.l.b16 %v20
  %v221 = vunpack.c.h.b16 %v20
  %v222 = vunpack.c.l.b16 %v21
  %v223 = vunpack.c.h.b16 %v21
  %v224 = vunpack.c.l.b16 %v22
  %v225 = vunpack.c.h.b16 %v22
  %v226 = vunpack.c.l.b16 %v23
  %v227 = vunpack.c.h.b16 %v23
  %v228 = vunpack.c.l.b16 %v24
  %v229 = vunpack.c.l.b16 %v25
  %v230 = vunpack.c.h.b16 %v25
  %v231 = vunpack.c.l.b16 %v26
  %v232 = vunpack.c.h.b16 %v26
  %v233 = vunpack.c.l.b16 %v27
  %v234 = vunpack.c.h.b16 %v27
  %v235 = vunpack.c.l.b16 %v28
  %v236 = vunpack.c.h.b16 %v28
  %v237 = vunpack.c.l.b16 %v29
  %v238 = vunpack.c.l.b16 %v30
  %v239 = vunpack.c.h.b16 %v30
  %v240 = vunpack.c.l.b16 %v31
  %v241 = vunpack.c.h.b16 %v31
  %v242 = vunpack.c.l.b16 %v32
  %v243 = vunpack.c.h.b16 %v32
  %v244 = vunpack.c.l.b16 %v33
  %v245 = vunpack.c.h.b16 %v33
  %v246 = vunpack.c.l.b16 %v34
  %v247 = vpack.c.b16 %v220, %v211
  %v248 = vpack.c.b16 %v221, %v212
  %v249 = vpack.c.b16 %v222, %v213
  %v250 = vpack.c.b16 %v223, %v214
  %v251 = vpack.c.b16 %v224, %v215
  %v252 = vpack.c.b16 %v225, %v216
  %v253 = vpack.c.b16 %v226, %v217
  %v254 = vpack.c.b16 %v227, %v218
  %v255 = vpack.c.b16 %v228, %v219
  %v256 = vpack.c.b16 %v238, %v229
  %v257 = vpack.c.b16 %v239, %v230
  %v258 = vpack.c.b16 %v240, %v231
  %v259 = vpack.c.b16 %v241, %v232
  %v260 = vpack.c.b16 %v242, %v233
  %v261 = vpack.c.b16 %v243, %v234
  %v262 = vpack.c.b16 %v244, %v235
  %v263 = vpack.c.b16 %v245, %v236
  %v264 = vpack.c.b16 %v246, %v237
  %v427 = vunpack.c.l.b16 %v35
  %v428 = vunpack.c.h.b16 %v35
  %v429 = vunpack.c.l.b16 %v36
  %v430 = vunpack.c.h.b16 %v36
  %v431 = vunpack.c.l.b16 %v37
  %v432 = vunpack.c.h.b16 %v37
  %v433 = vunpack.c.l.b16 %v38
  %v434 = vunpack.c.h.b16 %v38
  %v435 = vunpack.c.l.b16 %v39
  %v436 = vunpack.c.h.b16 %v39
  %v437 = vunpack.c.l.b16 %v40
  %v438 = vunpack.c.h.b16 %v40
  %v439 = vunpack.c.l.b16 %v41
  %v440 = vunpack.c.h.b16 %v41
  %v441 = vunpack.c.l.b16 %v42
  %v442 = vunpack.c.h.b16 %v42
  %v443 = vunpack.c.l.b16 %v43
  %v444 = vunpack.c.h.b16 %v43
  %v445 = vunpack.c.l.b16 %v44
  %v446 = vunpack.c.h.b16 %v44
  %v447 = vunpack.c.l.b16 %v45
  %v448 = vunpack.c.h.b16 %v45
  %v449 = vunpack.c.l.b16 %v46
  %v450 = vunpack.c.h.b16 %v46
  %v451 = vunpack.c.l.b16 %v47
  %v452 = vunpack.c.h.b16 %v47
  %v453 = vunpack.c.l.b16 %v48
  %v454 = vunpack.c.h.b16 %v48
  %v455 = vunpack.c.l.b16 %v49
  %v456 = vunpack.c.h.b16 %v49
  %v457 = vunpack.c.l.b16 %v50
  %v458 = vunpack.c.h.b16 %v50
  %v459 = vunpack.c.l.b16 %v51
  %v460 = vunpack.c.h.b16 %v51
  %v461 = vunpack.c.l.b16 %v52
  %v462 = vunpack.c.h.b16 %v52
  %v463 = vunpack.c.l.b16 %v53
  %v464 = vunpack.c.h.b16 %v53
  %v465 = vunpack.c.l.b16 %v54
  %v466 = vunpack.c.h.b16 %v54
  %v467 = vunpack.c.l.b16 %v55
  %v468 = vunpack.c.h.b16 %v55
  %v469 = vunpack.c.l.b16 %v56
  %v470 = vunpack.c.h.b16 %v56
  %v471 = vunpack.c.l.b16 %v57
  %v472 = vunpack.c.h.b16 %v57
  %v473 = vunpack.c.l.b16 %v58
  %v474 = vunpack.c.h.b16 %v58
  %v475 = vunpack.c.l.b16 %v59
  %v476 = vunpack.c.h.b16 %v59
  %v477 = vunpack.c.l.b16 %v60
  %v478 = vunpack.c.h.b16 %v60
  %v479 = vunpack.c.l.b16 %v61
  %v480 = vunpack.c.h.b16 %v61
  %v481 = vunpack.c.l.b16 %v62
  %v482 = vunpack.c.h.b16 %v62
  %v483 = vunpack.c.l.b16 %v63
  %v484 = vunpack.c.h.b16 %v63
  %v485 = vunpack.c.l.b16 %v64
  %v486 = vunpack.c.h.b16 %v64
  %v487 = vunpack.c.l.b16 %v65
  %v488 = vunpack.c.h.b16 %v65
  %v489 = vunpack.c.l.b16 %v66
  %v490 = vunpack.c.h.b16 %v66
  %v491 = vunpack.c.l.b16 %v67
  %v492 = vunpack.c.h.b16 %v67
  %v493 = vunpack.c.l.b16 %v68
  %v494 = vunpack.c.h.b16 %v68
  %v495 = vunpack.c.l.b16 %v69
  %v496 = vunpack.c.h.b16 %v69
  %v497 = vunpack.c.l.b16 %v70
  %v498 = vunpack.c.h.b16 %v70
  %v499 = vunpack.c.l.b16 %v71
  %v500 = vunpack.c.h.b16 %v71
  %v501 = vunpack.c.l.b16 %v72
  %v502 = vunpack.c.h.b16 %v72
  %v503 = vunpack.c.l.b16 %v73
  %v504 = vunpack.c.h.b16 %v73
  %v505 = vunpack.c.l.b16 %v74
  %v506 = vunpack.c.h.b16 %v74
  %v507 = vunpack.c.l.b16 %v75
  %v508 = vunpack.c.h.b16 %v75
  %v509 = vunpack.c.l.b16 %v76
  %v510 = vunpack.c.h.b16 %v76
  %v511 = vunpack.c.l.b16 %v77
  %v512 = vunpack.c.h.b16 %v77
  %v513 = vunpack.c.l.b16 %v78
  %v514 = vunpack.c.h.b16 %v78
  %v515 = vunpack.c.l.b16 %v79
  %v516 = vunpack.c.h.b16 %v79
  %v517 = vunpack.c.l.b16 %v80
  %v518 = vunpack.c.h.b16 %v80
  %v519 = vunpack.c.l.b16 %v81
  %v520 = vunpack.c.h.b16 %v81
  %v521 = vunpack.c.l.b16 %v82
  %v522 = vunpack.c.h.b16 %v82
  %v523 = vunpack.c.l.b16 %v83
  %v524 = vunpack.c.h.b16 %v83
  %v525 = vunpack.c.l.b16 %v84
  %v526 = vunpack.c.h.b16 %v84
  %v527 = vunpack.c.l.b16 %v85
  %v528 = vunpack.c.h.b16 %v85
  %v529 = vunpack.c.l.b16 %v86
  %v530 = vunpack.c.h.b16 %v86
  %v531 = vunpack.c.l.b16 %v87
  %v532 = vunpack.c.h.b16 %v87
  %v533 = vunpack.c.l.b16 %v88
  %v534 = vunpack.c.h.b16 %v88
  %v535 = vunpack.c.l.b16 %v89
  %v536 = vunpack.c.h.b16 %v89
  %v537 = vunpack.c.l.b16 %v90
  %v538 = vunpack.c.h.b16 %v90
  %v539 = vunpack.c.l.b16 %v91
  %v540 = vunpack.c.h.b16 %v91
  %v541 = vunpack.c.l.b16 %v92
  %v542 = vunpack.c.h.b16 %v92
  %v543 = vunpack.c.l.b16 %v93
  %v544 = vunpack.c.h.b16 %v93
  %v545 = vunpack.c.l.b16 %v94
  %v546 = vunpack.c.h.b16 %v94
  %v547 = vunpack.c.l.b16 %v95
  %v548 = vunpack.c.h.b16 %v95
  %v549 = vunpack.c.l.b16 %v96
  %v550 = vunpack.c.h.b16 %v96
  %v551 = vunpack.c.l.b16 %v97
  %v552 = vunpack.c.h.b16 %v97
  %v553 = vunpack.c.l.b16 %v98
  %v554 = vunpack.c.h.b16 %v98
  %v555 = vunpack.c.l.b16 %v99
  %v556 = vunpack.c.h.b16 %v99
  %v557 = vunpack.c.l.b16 %v100
  %v558 = vunpack.c.h.b16 %v100
  %v559 = vunpack.c.l.b16 %v101
  %v560 = vunpack.c.h.b16 %v101
  %v561 = vunpack.c.l.b16 %v102
  %v562 = vunpack.c.h.b16 %v102
  %v563 = vunpack.c.l.b16 %v103
  %v564 = vunpack.c.h.b16 %v103
  %v565 = vunpack.c.l.b16 %v104
  %v566 = vunpack.c.h.b16 %v104
  %v567 = vunpack.c.l.b16 %v105
  %v568 = vunpack.c.h.b16 %v105
  %v569 = vunpack.c.l.b16 %v106
  %v570 = vunpack.c.h.b16 %v106
  %v571 = vunpack.c.l.b16 %v107
  %v572 = vunpack.c.h.b16 %v107
  %v573 = vunpack.c.l.b16 %v108
  %v574 = vunpack.c.h.b16 %v108
  %v575 = vunpack.c.l.b16 %v109
  %v576 = vunpack.c.h.b16 %v109
  %v577 = vunpack.c.l.b16 %v110
  %v578 = vunpack.c.h.b16 %v110
  %v579 = vunpack.c.l.b16 %v111
  %v580 = vunpack.c.h.b16 %v111
  %v581 = vunpack.c.l.b16 %v112
  %v582 = vunpack.c.h.b16 %v112
  %v583 = vunpack.c.l.b16 %v113
  %v584 = vunpack.c.h.b16 %v113
  %v585 = vunpack.c.l.b16 %v114
  %v586 = vunpack.c.h.b16 %v114
  %v587 = vunpack.c.l.b16 %v115
  %v588 = vunpack.c.h.b16 %v115
  %v589 = vunpack.c.l.b16 %v116
  %v590 = vunpack.c.h.b16 %v116
  %v591 = vunpack.c.l.b16 %v117
  %v592 = vunpack.c.h.b16 %v117
  %v593 = vunpack.c.l.b16 %v118
  %v594 = vunpack.c.h.b16 %v118
  %v595 = vunpack.c.l.b16 %v119
  %v596 = vunpack.c.h.b16 %v119
  %v597 = vunpack.c.l.b16 %v120
  %v598 = vunpack.c.h.b16 %v120
  %v599 = vunpack.c.l.b16 %v121
  %v600 = vunpack.c.h.b16 %v121
  %v601 = vunpack.c.l.b16 %v122
  %v602 = vunpack.c.h.b16 %v122
  %v603 = vunpack.c.l.b16 %v123
  %v604 = vunpack.c.h.b16 %v123
  %v605 = vunpack.c.l.b16 %v124
  %v606 = vunpack.c.h.b16 %v124
  %v607 = vunpack.c.l.b16 %v125
  %v608 = vunpack.c.h.b16 %v125
  %v609 = vunpack.c.l.b16 %v126
  %v610 = vunpack.c.h.b16 %v126
  %v611 = vunpack.c.l.b16 %v127
  %v612 = vunpack.c.h.b16 %v127
  %v613 = vunpack.c.l.b16 %v128
  %v614 = vunpack.c.h.b16 %v128
  %v615 = vunpack.c.l.b16 %v129
  %v616 = vunpack.c.h.b16 %v129
  %v617 = vunpack.c.l.b16 %v130
  %v618 = vunpack.c.h.b16 %v130
  %v619 = vunpack.c.l.b16 %v131
  %v620 = vunpack.c.h.b16 %v131
  %v621 = vunpack.c.l.b16 %v132
  %v622 = vunpack.c.h.b16 %v132
  %v623 = vunpack.c.l.b16 %v133
  %v624 = vunpack.c.h.b16 %v133
  %v625 = vunpack.c.l.b16 %v134
  %v626 = vunpack.c.h.b16 %v134
  %v627 = vunpack.c.l.b16 %v135
  %v628 = vunpack.c.h.b16 %v135
  %v629 = vunpack.c.l.b16 %v136
  %v630 = vunpack.c.h.b16 %v136
  %v631 = vunpack.c.l.b16 %v137
  %v632 = vunpack.c.h.b16 %v137
  %v633 = vunpack.c.l.b16 %v138
  %v634 = vunpack.c.h.b16 %v138
  %v635 = vunpack.c.l.b16 %v139
  %v636 = vunpack.c.h.b16 %v139
  %v637 = vunpack.c.l.b16 %v140
  %v638 = vunpack.c.h.b16 %v140
  %v639 = vunpack.c.l.b16 %v141
  %v640 = vunpack.c.h.b16 %v141
  %v641 = vunpack.c.l.b16 %v142
  %v642 = vunpack.c.h.b16 %v142
  %v643 = vunpack.c.l.b16 %v143
  %v644 = vunpack.c.h.b16 %v143
  %v645 = vunpack.c.l.b16 %v144
  %v646 = vunpack.c.h.b16 %v144
  %v647 = vunpack.c.l.b16 %v145
  %v648 = vunpack.c.h.b16 %v145
  %v649 = vunpack.c.l.b16 %v146
  %v650 = vunpack.c.h.b16 %v146
  %v651 = vunpack.c.l.b16 %v147
  %v652 = vunpack.c.h.b16 %v147
  %v653 = vunpack.c.l.b16 %v148
  %v654 = vunpack.c.h.b16 %v148
  %v655 = vunpack.c.l.b16 %v149
  %v656 = vunpack.c.h.b16 %v149
  %v657 = vunpack.c.l.b16 %v150
  %v658 = vunpack.c.h.b16 %v150
  %v659 = vunpack.c.l.b16 %v151
  %v660 = vunpack.c.h.b16 %v151
  %v661 = vunpack.c.l.b16 %v152
  %v662 = vunpack.c.h.b16 %v152
  %v663 = vunpack.c.l.b16 %v153
  %v664 = vunpack.c.h.b16 %v153
  %v665 = vunpack.c.l.b16 %v154
  %v666 = vunpack.c.h.b16 %v154
  %v667 = vunpack.c.l.b16 %v155
  %v668 = vunpack.c.h.b16 %v155
  %v669 = vunpack.c.l.b16 %v156
  %v670 = vunpack.c.h.b16 %v156
  %v671 = vunpack.c.l.b16 %v157
  %v672 = vunpack.c.h.b16 %v157
  %v673 = vunpack.c.l.b16 %v158
  %v674 = vunpack.c.h.b16 %v158
  %v675 = vunpack.c.l.b16 %v159
  %v676 = vunpack.c.h.b16 %v159
  %v677 = vunpack.c.l.b16 %v160
  %v678 = vunpack.c.h.b16 %v160
  %v679 = vunpack.c.l.b16 %v161
  %v680 = vunpack.c.h.b16 %v161
  %v681 = vunpack.c.l.b16 %v162
  %v682 = vunpack.c.h.b16 %v162
  %v683 = vunpack.c.l.b16 %v163
  %v684 = vunpack.c.h.b16 %v163
  %v685 = vunpack.c.l.b16 %v164
  %v686 = vunpack.c.h.b16 %v164
  %v687 = vunpack.c.l.b16 %v165
  %v688 = vunpack.c.h.b16 %v165
  %v689 = vunpack.c.l.b16 %v166
  %v690 = vunpack.c.h.b16 %v166
  %v691 = vunpack.c.l.b16 %v167
  %v692 = vunpack.c.h.b16 %v167
  %v693 = vunpack.c.l.b16 %v168
  %v694 = vunpack.c.h.b16 %v168
  %v695 = vunpack.c.l.b16 %v169
  %v696 = vunpack.c.h.b16 %v169
  %v697 = vunpack.c.l.b16 %v170
  %v698 = vunpack.c.h.b16 %v170
  %v699 = vunpack.c.l.b16 %v171
  %v700 = vunpack.c.h.b16 %v171
  %v701 = vunpack.c.l.b16 %v172
  %v702 = vunpack.c.h.b16 %v172
  %v703 = vunpack.c.l.b16 %v173
  %v704 = vunpack.c.h.b16 %v173
  %v705 = vunpack.c.l.b16 %v174
  %v706 = vunpack.c.h.b16 %v174
  %v707 = vunpack.c.l.b16 %v175
  %v708 = vunpack.c.h.b16 %v175
  %v709 = vunpack.c.l.b16 %v176
  %v710 = vunpack.c.h.b16 %v176
  %v711 = vunpack.c.l.b16 %v177
  %v712 = vunpack.c.h.b16 %v177
  %v713 = vunpack.c.l.b16 %v178
  %v714 = vunpack.c.h.b16 %v178
  %v715 = vpack.c.b16 %v429, %v427
  %v716 = vpack.c.b16 %v430, %v428
  %v717 = vpack.c.b16 %v433, %v431
  %v718 = vpack.c.b16 %v434, %v432
  %v719 = vpack.c.b16 %v437, %v435
  %v720 = vpack.c.b16 %v438, %v436
  %v721 = vpack.c.b16 %v441, %v439
  %v722 = vpack.c.b16 %v442, %v440
  %v723 = vpack.c.b16 %v445, %v443
  %v724 = vpack.c.b16 %v446, %v444
  %v725 = vpack.c.b16 %v449, %v447
  %v726 = vpack.c.b16 %v450, %v448
  %v727 = vpack.c.b16 %v453, %v451
  %v728 = vpack.c.b16 %v454, %v452
  %v729 = vpack.c.b16 %v457, %v455
  %v730 = vpack.c.b16 %v458, %v456
  %v731 = vpack.c.b16 %v461, %v459
  %v732 = vpack.c.b16 %v462, %v460
  %v733 = vpack.c.b16 %v465, %v463
  %v734 = vpack.c.b16 %v466, %v464
  %v735 = vpack.c.b16 %v469, %v467
  %v736 = vpack.c.b16 %v470, %v468
  %v737 = vpack.c.b16 %v473, %v471
  %v738 = vpack.c.b16 %v474, %v472
  %v739 = vpack.c.b16 %v477, %v475
  %v740 = vpack.c.b16 %v478, %v476
  %v741 = vpack.c.b16 %v481, %v479
  %v742 = vpack.c.b16 %v482, %v480
  %v743 = vpack.c.b16 %v485, %v483
  %v744 = vpack.c.b16 %v486, %v484
  %v745 = vpack.c.b16 %v489, %v487
  %v746 = vpack.c.b16 %v490, %v488
  %v747 = vpack.c.b16 %v493, %v491
  %v748 = vpack.c.b16 %v494, %v492
  %v749 = vpack.c.b16 %v497, %v495
  %v750 = vpack.c.b16 %v498, %v496
  %v751 = vpack.c.b16 %v501, %v499
  %v752 = vpack.c.b16 %v502, %v500
  %v753 = vpack.c.b16 %v505, %v503
  %v754 = vpack.c.b16 %v506, %v504
  %v755 = vpack.c.b16 %v509, %v507
  %v756 = vpack.c.b16 %v510, %v508
  %v757 = vpack.c.b16 %v513, %v511
  %v758 = vpack.c.b16 %v514, %v512
  %v759 = vpack.c.b16 %v517, %v515
  %v760 = vpack.c.b16 %v518, %v516
  %v761 = vpack.c.b16 %v521, %v519
  %v762 = vpack.c.b16 %v522, %v520
  %v763 = vpack.c.b16 %v525, %v523
  %v764 = vpack.c.b16 %v526, %v524
  %v765 = vpack.c.b16 %v529, %v527
  %v766 = vpack.c.b16 %v530, %v528
  %v767 = vpack.c.b16 %v533, %v531
  %v768 = vpack.c.b16 %v534, %v532
  %v769 = vpack.c.b16 %v537, %v535
  %v770 = vpack.c.b16 %v538, %v536
  %v771 = vpack.c.b16 %v541, %v539
  %v772 = vpack.c.b16 %v542, %v540
  %v773 = vpack.c.b16 %v545, %v543
  %v774 = vpack.c.b16 %v546, %v544
  %v775 = vpack.c.b16 %v549, %v547
  %v776 = vpack.c.b16 %v550, %v548
  %v777 = vpack.c.b16 %v553, %v551
  %v778 = vpack.c.b16 %v554, %v552
  %v779 = vpack.c.b16 %v557, %v555
  %v780 = vpack.c.b16 %v558, %v556
  %v781 = vpack.c.b16 %v561, %v559
  %v782 = vpack.c.b16 %v562, %v560
  %v783 = vpack.c.b16 %v565, %v563
  %v784 = vpack.c.b16 %v566, %v564
  %v785 = vpack.c.b16 %v569, %v567
  %v786 = vpack.c.b16 %v570, %v568
  %v787 = vpack.c.b16 %v573, %v571
  %v788 = vpack.c.b16 %v574, %v572
  %v789 = vpack.c.b16 %v577, %v575
  %v790 = vpack.c.b16 %v578, %v576
  %v791 = vpack.c.b16 %v581, %v579
  %v792 = vpack.c.b16 %v582, %v580
  %v793 = vpack.c.b16 %v585, %v583
  %v794 = vpack.c.b16 %v586, %v584
  %v795 = vpack.c.b16 %v589, %v587
  %v796 = vpack.c.b16 %v590, %v588
  %v797 = vpack.c.b16 %v593, %v591
  %v798 = vpack.c.b16 %v594, %v592
  %v799 = vpack.c.b16 %v597, %v595
  %v800 = vpack.c.b16 %v598, %v596
  %v801 = vpack.c.b16 %v601, %v599
  %v802 = vpack.c.b16 %v602, %v600
  %v803 = vpack.c.b16 %v605, %v603
  %v804 = vpack.c.b16 %v606, %v604
  %v805 = vpack.c.b16 %v609, %v607
  %v806 = vpack.c.b16 %v610, %v608
  %v807 = vpack.c.b16 %v613, %v611
  %v808 = vpack.c.b16 %v614, %v612
  %v809 = vpack.c.b16 %v617, %v615
  %v810 = vpack.c.b16 %v618, %v616
  %v811 = vpack.c.b16 %v621, %v619
  %v812 = vpack.c.b16 %v622, %v620
  %v813 = vpack.c.b16 %v625, %v623
  %v814 = vpack.c.b16 %v626, %v624
  %v815 = vpack.c.b16 %v629, %v627
  %v816 = vpack.c.b16 %v630, %v628
  %v817 = vpack.c.b16 %v633, %v631
  %v818 = vpack.c.b16 %v634, %v632
  %v819 = vpack.c.b16 %v637, %v635
  %v820 = vpack.c.b16 %v638, %v636
  %v821 = vpack.c.b16 %v641, %v639
  %v822 = vpack.c.b16 %v642, %v640
  %v823 = vpack.c.b16 %v645, %v643
  %v824 = vpack.c.b16 %v646, %v644
  %v825 = vpack.c.b16 %v649, %v647
  %v826 = vpack.c.b16 %v650, %v648
  %v827 = vpack.c.b16 %v653, %v651
  %v828 = vpack.c.b16 %v654, %v652
  %v829 = vpack.c.b16 %v657, %v655
  %v830 = vpack.c.b16 %v658, %v656
  %v831 = vpack.c.b16 %v661, %v659
  %v832 = vpack.c.b16 %v662, %v660
  %v833 = vpack.c.b16 %v665, %v663
  %v834 = vpack.c.b16 %v666, %v664
  %v835 = vpack.c.b16 %v669, %v667
  %v836 = vpack.c.b16 %v670, %v668
  %v837 = vpack.c.b16 %v673, %v671
  %v838 = vpack.c.b16 %v674, %v672
  %v839 = vpack.c.b16 %v677, %v675
  %v840 = vpack.c.b16 %v678, %v676
  %v841 = vpack.c.b16 %v681, %v679
  %v842 = vpack.c.b16 %v682, %v680
  %v843 = vpack.c.b16 %v685, %v683
  %v844 = vpack.c.b16 %v686, %v684
  %v845 = vpack.c.b16 %v689, %v687
  %v846 = vpack.c.b16 %v690, %v688
  %v847 = vpack.c.b16 %v693, %v691
  %v848 = vpack.c.b16 %v694, %v692
  %v849 = vpack.c.b16 %v697, %v695
  %v850 = vpack.c.b16 %v698, %v696
  %v851 = vpack.c.b16 %v701, %v699
  %v852 = vpack.c.b16 %v702, %v700
  %v853 = vpack.c.b16 %v705, %v703
  %v854 = vpack.c.b16 %v706, %v704
  %v855 = vpack.c.b16 %v709, %v707
  %v856 = vpack.c.b16 %v710, %v708
  %v857 = vpack.c.b16 %v713, %v711
  %v858 = vpack.c.b16 %v714, %v712
  %1003 = vmatprep.subr.bf16.mxu0 %v730
  %1004 = vmatpush1.bf16.msra.mxu0 %v729
  %1005 = vmatprep.subr.bf16.mxu0 %v728
  %1006 = vmatpush1.bf16.msra.mxu0 %v727
  %1007 = vmatprep.subr.bf16.mxu0 %v726
  %1008 = vmatpush1.bf16.msra.mxu0 %v725
  %1009 = vmatprep.subr.bf16.mxu0 %v724
  %1010 = vmatpush1.bf16.msra.mxu0 %v723
  %1011 = vmatprep.subr.bf16.mxu0 %v722
  %1012 = vmatpush1.bf16.msra.mxu0 %v721
  %1013 = vmatprep.subr.bf16.mxu0 %v720
  %1014 = vmatpush1.bf16.msra.mxu0 %v719
  %1015 = vmatprep.subr.bf16.mxu0 %v718
  %1016 = vmatpush1.bf16.msra.mxu0 %v717
  %1017 = vmatprep.subr.bf16.mxu0 %v716
  %1018 = vmatpush1.bf16.msra.mxu0 %v715
  %1019 = vmatprep.subr.bf16.mxu0 %v746
  %1020 = vmatpush2.bf16.msra.mxu0 %v745
  %1021 = vmatprep.subr.bf16.mxu0 %v744
  %1022 = vmatpush2.bf16.msra.mxu0 %v743
  %1023 = vmatprep.subr.bf16.mxu0 %v742
  %1024 = vmatpush2.bf16.msra.mxu0 %v741
  %1025 = vmatprep.subr.bf16.mxu0 %v740
  %1026 = vmatpush2.bf16.msra.mxu0 %v739
  %1027 = vmatprep.subr.bf16.mxu0 %v738
  %1028 = vmatpush2.bf16.msra.mxu0 %v737
  %1029 = vmatprep.subr.bf16.mxu0 %v736
  %1030 = vmatpush2.bf16.msra.mxu0 %v735
  %1031 = vmatprep.subr.bf16.mxu0 %v734
  %1032 = vmatpush2.bf16.msra.mxu0 %v733
  %1033 = vmatprep.subr.bf16.mxu0 %v732
  %1034 = vmatpush2.bf16.msra.mxu0 %v731
  %1035 = vmatprep.mubr.bf16.mxu0 %v248
  %1036 = vmatmul.mubr.bf16.gmra.mxu0 %v247
  %v1037 = vpop.f32.mrf.mxu0
  %v1038 = vadd.f32 %v184, %v1037
  %v1039 = vpop.f32.mrf.mxu0
  %v1040 = vadd.f32 %v188, %v1039
  %v1041 = vpop.f32.mrf.mxu0
  %v1042 = vadd.f32 %v184, %v1041
  %v1043 = vpop.f32.mrf.mxu0
  %v1044 = vadd.f32 %v188, %v1043
  %1045 = vmatprep.mubr.bf16.mxu0 %v257
  %1046 = vmatmul.mubr.bf16.gmra.mxu0 %v256
  %v1047 = vpop.f32.mrf.mxu0
  %v1048 = vadd.f32 %v184, %v1047
  %v1049 = vpop.f32.mrf.mxu0
  %v1050 = vadd.f32 %v188, %v1049
  %v1051 = vpop.f32.mrf.mxu0
  %v1052 = vadd.f32 %v184, %v1051
  %v1053 = vpop.f32.mrf.mxu0
  %v1054 = vadd.f32 %v188, %v1053
  %1055 = vdwg.mxu0
  %1056 = vmatprep.subr.bf16.mxu0 %v762
  %1057 = vmatpush1.bf16.msra.mxu0 %v761
  %1058 = vmatprep.subr.bf16.mxu0 %v760
  %1059 = vmatpush1.bf16.msra.mxu0 %v759
  %1060 = vmatprep.subr.bf16.mxu0 %v758
  %1061 = vmatpush1.bf16.msra.mxu0 %v757
  %1062 = vmatprep.subr.bf16.mxu0 %v756
  %1063 = vmatpush1.bf16.msra.mxu0 %v755
  %1064 = vmatprep.subr.bf16.mxu0 %v754
  %1065 = vmatpush1.bf16.msra.mxu0 %v753
  %1066 = vmatprep.subr.bf16.mxu0 %v752
  %1067 = vmatpush1.bf16.msra.mxu0 %v751
  %1068 = vmatprep.subr.bf16.mxu0 %v750
  %1069 = vmatpush1.bf16.msra.mxu0 %v749
  %1070 = vmatprep.subr.bf16.mxu0 %v748
  %1071 = vmatpush1.bf16.msra.mxu0 %v747
  %1072 = vmatprep.subr.bf16.mxu0 %v778
  %1073 = vmatpush2.bf16.msra.mxu0 %v777
  %1074 = vmatprep.subr.bf16.mxu0 %v776
  %1075 = vmatpush2.bf16.msra.mxu0 %v775
  %1076 = vmatprep.subr.bf16.mxu0 %v774
  %1077 = vmatpush2.bf16.msra.mxu0 %v773
  %1078 = vmatprep.subr.bf16.mxu0 %v772
  %1079 = vmatpush2.bf16.msra.mxu0 %v771
  %1080 = vmatprep.subr.bf16.mxu0 %v770
  %1081 = vmatpush2.bf16.msra.mxu0 %v769
  %1082 = vmatprep.subr.bf16.mxu0 %v768
  %1083 = vmatpush2.bf16.msra.mxu0 %v767
  %1084 = vmatprep.subr.bf16.mxu0 %v766
  %1085 = vmatpush2.bf16.msra.mxu0 %v765
  %1086 = vmatprep.subr.bf16.mxu0 %v764
  %1087 = vmatpush2.bf16.msra.mxu0 %v763
  %1088 = vmatprep.mubr.bf16.mxu0 %v250
  %1089 = vmatmul.mubr.bf16.gmra.mxu0 %v249
  %v1090 = vpop.f32.mrf.mxu0
  %v1091 = vadd.f32 %v1038, %v1090
  %v1092 = vpop.f32.mrf.mxu0
  %v1093 = vadd.f32 %v1040, %v1092
  %v1094 = vpop.f32.mrf.mxu0
  %v1095 = vadd.f32 %v1042, %v1094
  %v1096 = vpop.f32.mrf.mxu0
  %v1097 = vadd.f32 %v1044, %v1096
  %1098 = vmatprep.mubr.bf16.mxu0 %v259
  %1099 = vmatmul.mubr.bf16.gmra.mxu0 %v258
  %v1100 = vpop.f32.mrf.mxu0
  %v1101 = vadd.f32 %v1048, %v1100
  %v1102 = vpop.f32.mrf.mxu0
  %v1103 = vadd.f32 %v1050, %v1102
  %v1104 = vpop.f32.mrf.mxu0
  %v1105 = vadd.f32 %v1052, %v1104
  %v1106 = vpop.f32.mrf.mxu0
  %v1107 = vadd.f32 %v1054, %v1106
  %1108 = vdwg.mxu0
  %1109 = vmatprep.subr.bf16.mxu0 %v794
  %1110 = vmatpush1.bf16.msra.mxu0 %v793
  %1111 = vmatprep.subr.bf16.mxu0 %v792
  %1112 = vmatpush1.bf16.msra.mxu0 %v791
  %1113 = vmatprep.subr.bf16.mxu0 %v790
  %1114 = vmatpush1.bf16.msra.mxu0 %v789
  %1115 = vmatprep.subr.bf16.mxu0 %v788
  %1116 = vmatpush1.bf16.msra.mxu0 %v787
  %1117 = vmatprep.subr.bf16.mxu0 %v786
  %1118 = vmatpush1.bf16.msra.mxu0 %v785
  %1119 = vmatprep.subr.bf16.mxu0 %v784
  %1120 = vmatpush1.bf16.msra.mxu0 %v783
  %1121 = vmatprep.subr.bf16.mxu0 %v782
  %1122 = vmatpush1.bf16.msra.mxu0 %v781
  %1123 = vmatprep.subr.bf16.mxu0 %v780
  %1124 = vmatpush1.bf16.msra.mxu0 %v779
  %1125 = vmatprep.subr.bf16.mxu0 %v810
  %1126 = vmatpush2.bf16.msra.mxu0 %v809
  %1127 = vmatprep.subr.bf16.mxu0 %v808
  %1128 = vmatpush2.bf16.msra.mxu0 %v807
  %1129 = vmatprep.subr.bf16.mxu0 %v806
  %1130 = vmatpush2.bf16.msra.mxu0 %v805
  %1131 = vmatprep.subr.bf16.mxu0 %v804
  %1132 = vmatpush2.bf16.msra.mxu0 %v803
  %1133 = vmatprep.subr.bf16.mxu0 %v802
  %1134 = vmatpush2.bf16.msra.mxu0 %v801
  %1135 = vmatprep.subr.bf16.mxu0 %v800
  %1136 = vmatpush2.bf16.msra.mxu0 %v799
  %1137 = vmatprep.subr.bf16.mxu0 %v798
  %1138 = vmatpush2.bf16.msra.mxu0 %v797
  %1139 = vmatprep.subr.bf16.mxu0 %v796
  %1140 = vmatpush2.bf16.msra.mxu0 %v795
  %1141 = vmatprep.mubr.bf16.mxu0 %v252
  %1142 = vmatmul.mubr.bf16.gmra.mxu0 %v251
  %v1143 = vpop.f32.mrf.mxu0
  %v1144 = vadd.f32 %v1091, %v1143
  %v1145 = vpop.f32.mrf.mxu0
  %v1146 = vadd.f32 %v1093, %v1145
  %v1147 = vpop.f32.mrf.mxu0
  %v1148 = vadd.f32 %v1095, %v1147
  %v1149 = vpop.f32.mrf.mxu0
  %v1150 = vadd.f32 %v1097, %v1149
  %1151 = vmatprep.mubr.bf16.mxu0 %v261
  %1152 = vmatmul.mubr.bf16.gmra.mxu0 %v260
  %v1153 = vpop.f32.mrf.mxu0
  %v1154 = vadd.f32 %v1101, %v1153
  %v1155 = vpop.f32.mrf.mxu0
  %v1156 = vadd.f32 %v1103, %v1155
  %v1157 = vpop.f32.mrf.mxu0
  %v1158 = vadd.f32 %v1105, %v1157
  %v1159 = vpop.f32.mrf.mxu0
  %v1160 = vadd.f32 %v1107, %v1159
  %1161 = vdwg.mxu0
  %1162 = vmatprep.subr.bf16.mxu0 %v826
  %1163 = vmatpush1.bf16.msra.mxu0 %v825
  %1164 = vmatprep.subr.bf16.mxu0 %v824
  %1165 = vmatpush1.bf16.msra.mxu0 %v823
  %1166 = vmatprep.subr.bf16.mxu0 %v822
  %1167 = vmatpush1.bf16.msra.mxu0 %v821
  %1168 = vmatprep.subr.bf16.mxu0 %v820
  %1169 = vmatpush1.bf16.msra.mxu0 %v819
  %1170 = vmatprep.subr.bf16.mxu0 %v818
  %1171 = vmatpush1.bf16.msra.mxu0 %v817
  %1172 = vmatprep.subr.bf16.mxu0 %v816
  %1173 = vmatpush1.bf16.msra.mxu0 %v815
  %1174 = vmatprep.subr.bf16.mxu0 %v814
  %1175 = vmatpush1.bf16.msra.mxu0 %v813
  %1176 = vmatprep.subr.bf16.mxu0 %v812
  %1177 = vmatpush1.bf16.msra.mxu0 %v811
  %1178 = vmatprep.subr.bf16.mxu0 %v842
  %1179 = vmatpush2.bf16.msra.mxu0 %v841
  %1180 = vmatprep.subr.bf16.mxu0 %v840
  %1181 = vmatpush2.bf16.msra.mxu0 %v839
  %1182 = vmatprep.subr.bf16.mxu0 %v838
  %1183 = vmatpush2.bf16.msra.mxu0 %v837
  %1184 = vmatprep.subr.bf16.mxu0 %v836
  %1185 = vmatpush2.bf16.msra.mxu0 %v835
  %1186 = vmatprep.subr.bf16.mxu0 %v834
  %1187 = vmatpush2.bf16.msra.mxu0 %v833
  %1188 = vmatprep.subr.bf16.mxu0 %v832
  %1189 = vmatpush2.bf16.msra.mxu0 %v831
  %1190 = vmatprep.subr.bf16.mxu0 %v830
  %1191 = vmatpush2.bf16.msra.mxu0 %v829
  %1192 = vmatprep.subr.bf16.mxu0 %v828
  %1193 = vmatpush2.bf16.msra.mxu0 %v827
  %1194 = vmatprep.mubr.bf16.mxu0 %v254
  %1195 = vmatmul.mubr.bf16.gmra.mxu0 %v253
  %v1196 = vpop.f32.mrf.mxu0
  %v1197 = vadd.f32 %v1144, %v1196
  %v1198 = vpop.f32.mrf.mxu0
  %v1199 = vadd.f32 %v1146, %v1198
  %v1200 = vpop.f32.mrf.mxu0
  %v1201 = vadd.f32 %v1148, %v1200
  %v1202 = vpop.f32.mrf.mxu0
  %v1203 = vadd.f32 %v1150, %v1202
  %1204 = vmatprep.mubr.bf16.mxu0 %v263
  %1205 = vmatmul.mubr.bf16.gmra.mxu0 %v262
  %v1206 = vpop.f32.mrf.mxu0
  %v1207 = vadd.f32 %v1154, %v1206
  %v1208 = vpop.f32.mrf.mxu0
  %v1209 = vadd.f32 %v1156, %v1208
  %v1210 = vpop.f32.mrf.mxu0
  %v1211 = vadd.f32 %v1158, %v1210
  %v1212 = vpop.f32.mrf.mxu0
  %v1213 = vadd.f32 %v1160, %v1212
  %1214 = vdwg.mxu0
  %1215 = vmatprep.subr.bf16.mxu0 %v858
  %1216 = vmatpush1.bf16.msra.mxu0 %v857
  %1217 = vmatprep.subr.bf16.mxu0 %v856
  %1218 = vmatpush1.bf16.msra.mxu0 %v855
  %1219 = vmatprep.subr.bf16.mxu0 %v854
  %1220 = vmatpush1.bf16.msra.mxu0 %v853
  %1221 = vmatprep.subr.bf16.mxu0 %v852
  %1222 = vmatpush1.bf16.msra.mxu0 %v851
  %1223 = vmatprep.subr.bf16.mxu0 %v850
  %1224 = vmatpush1.bf16.msra.mxu0 %v849
  %1225 = vmatprep.subr.bf16.mxu0 %v848
  %1226 = vmatpush1.bf16.msra.mxu0 %v847
  %1227 = vmatprep.subr.bf16.mxu0 %v846
  %1228 = vmatpush1.bf16.msra.mxu0 %v845
  %1229 = vmatprep.subr.bf16.mxu0 %v844
  %1230 = vmatpush1.bf16.msra.mxu0 %v843
  %1231 = vmatprep.subr.bf16.mxu0 0
  %1232 = vmatpush2.bf16.msra.mxu0 0
  %1233 = vmatprep.subr.bf16.mxu0 0
  %1234 = vmatpush2.bf16.msra.mxu0 0
  %1235 = vmatprep.subr.bf16.mxu0 0
  %1236 = vmatpush2.bf16.msra.mxu0 0
  %1237 = vmatprep.subr.bf16.mxu0 0
  %1238 = vmatpush2.bf16.msra.mxu0 0
  %1239 = vmatprep.subr.bf16.mxu0 0
  %1240 = vmatpush2.bf16.msra.mxu0 0
  %1241 = vmatprep.subr.bf16.mxu0 0
  %1242 = vmatpush2.bf16.msra.mxu0 0
  %1243 = vmatprep.subr.bf16.mxu0 0
  %1244 = vmatpush2.bf16.msra.mxu0 0
  %1245 = vmatprep.subr.bf16.mxu0 0
  %1246 = vmatpush2.bf16.msra.mxu0 0
  %1247 = vmatprep.mubr.bf16.mxu0 0
  %1248 = vmatmul.mubr.bf16.gmra.mxu0 %v255
  %v1249 = vpop.f32.mrf.mxu0
  %v1250 = vadd.f32 %v1197, %v1249
  %v1251 = vpop.f32.mrf.mxu0
  %v1252 = vadd.f32 %v1199, %v1251
  %v1253 = vpop.f32.mrf.mxu0
  %v1254 = vadd.f32 %v1201, %v1253
  %v1255 = vpop.f32.mrf.mxu0
  %v1256 = vadd.f32 %v1203, %v1255
  %1257 = vmatprep.mubr.bf16.mxu0 0
  %1258 = vmatmul.mubr.bf16.gmra.mxu0 %v264
  %v1259 = vpop.f32.mrf.mxu0
  %v1260 = vadd.f32 %v1207, %v1259
  %v1261 = vpop.f32.mrf.mxu0
  %v1262 = vadd.f32 %v1209, %v1261
  %v1263 = vpop.f32.mrf.mxu0
  %v1264 = vadd.f32 %v1211, %v1263
  %v1265 = vpop.f32.mrf.mxu0
  %v1266 = vadd.f32 %v1213, %v1265
  %1267 = vdwg.mxu0
  %v1268 = vmax.f32 %v1250, 0.0
  %v1269 = vmax.f32 %v1252, 0.0
  %v1270 = vmax.f32 %v1254, 0.0
  %v1271 = vmax.f32 %v1256, 0.0
  %v1272 = vmax.f32 %v1260, 0.0
  %v1273 = vmax.f32 %v1262, 0.0
  %v1274 = vmax.f32 %v1264, 0.0
  %v1275 = vmax.f32 %v1266, 0.0
  %v1276 = vpack.c.bf16 %v1270, %v1268
  %v1277 = vpack.c.bf16 %v1271, %v1269
  %v1278 = vpack.c.bf16 %v1274, %v1272
  %v1279 = vpack.c.bf16 %v1275, %v1273
  %v1284 = vunpack.c.l.b16 %v1276
  %v1285 = vunpack.c.l.b16 %v1277
  %v1286 = vunpack.c.h.b16 %v1276
  %v1287 = vunpack.c.h.b16 %v1277
  %v1288 = vunpack.c.l.b16 %v1278
  %v1289 = vunpack.c.l.b16 %v1279
  %v1290 = vunpack.c.h.b16 %v1278
  %v1291 = vunpack.c.h.b16 %v1279
  %v1292 = vpack.c.b16 %v1285, %v1284
  %v1293 = vpack.c.b16 %v1287, %v1286
  %v1294 = vpack.c.b16 %v1289, %v1288
  %v1295 = vpack.c.b16 %v1291, %v1290
  %1300 = vst [vmem:[%s3] sm:$0xff] %v1292
  %1301 = vst [vmem:[%s3 + $0x8] sm:$0xff] %v1293
  %1302 = vst [vmem:[%s3 + $0x10] sm:$0xff] %v1294
  %1303 = vst [vmem:[%s3 + $0x18] sm:$0xff] %v1295
  // Predicated region
  $region14: #{vae_forward.12} parent=0 // pred_check
    _
  $region15: #{vae_forward.12} parent=0 // pred_check_branch
    %1305 = sbr.rel (0) target = $region17
  $region16: #{vae_forward.12} parent=0 // pred_region
    _
  $region17: #{vae_forward.12} parent=0 // pred_fallthru
    _
  // Predicated region
  $region18: #{vae_forward.12} parent=0 // pred_check
    _
  $region19: #{vae_forward.12} parent=0 // pred_check_branch
    %1307 = sbr.rel (0) target = $region21
  $region20: #{vae_forward.12} parent=0 // pred_region
    _
  $region21: #{vae_forward.12} parent=0 // pred_fallthru
    _

// kernel: vae_forward.11
$region0: #{vae_forward.11}
  #allocation0 [shape = 'u32[]', space=smem, size = 0x4, offset = 0x4, fixed_abs, tag = 'smem constant byte address 0x4 - core index']
  #allocation1 [shape = 'u32[144,128]{1,0:T(1,128)}', space=vmem, size = 0x12000, scoped, tag = 'internal scratch']
  %s0 = inlined_call_operand.vmem [shape: bf16[8,2304], index: 0, kind: input, shape index: {}]
  %s1 = inlined_call_operand.vmem [shape: bf16[2304,512], index: 1, kind: input, shape index: {}]
  %s2 = inlined_call_operand.vmem [shape: f32[1,512], index: 2, kind: input, shape index: {}]
  %s3 = inlined_call_operand.vmem [shape: bf16[8,512], index: 3, kind: output, shape index: {}]
  %s4 = sld [smem:[#allocation0]]
  $region22: #{vae_forward.11} parent=0
    _
  %s6 = ssub.s32 1, %s4
  %s7 = scalar_select 0, %s6, %s4
  // Predicated region
  $region2: #{vae_forward.11} parent=0 // pred_check
    _
  $region3: #{vae_forward.11} parent=0 // pred_check_branch
    %9 = sbr.rel (0) target = $region5
  $region4: #{vae_forward.11} parent=0 // pred_region
    _
  $region5: #{vae_forward.11} parent=0 // pred_fallthru
    _
  // Predicated region
  $region6: #{vae_forward.11} parent=0 // pred_check
    _
  $region7: #{vae_forward.11} parent=0 // pred_check_branch
    %11 = sbr.rel (0) target = $region9
  $region8: #{vae_forward.11} parent=0 // pred_region
    _
  $region9: #{vae_forward.11} parent=0 // pred_fallthru
    _
  // Predicated region
  $region10: #{vae_forward.11} parent=0 // pred_check
    _
  $region11: #{vae_forward.11} parent=0 // pred_check_branch
    %13 = sbr.rel (0) target = $region13
  $region12: #{vae_forward.11} parent=0 // pred_region
    _
  $region13: #{vae_forward.11} parent=0 // pred_fallthru
    _
  %v14 = vld [vmem:[%s0] sm:$0xff]
  %v15 = vld [vmem:[%s0 + $0x8] sm:$0xff]
  %v16 = vld [vmem:[%s0 + $0x10] sm:$0xff]
  %v17 = vld [vmem:[%s0 + $0x18] sm:$0xff]
  %v18 = vld [vmem:[%s0 + $0x20] sm:$0xff]
  %v19 = vld [vmem:[%s0 + $0x28] sm:$0xff]
  %v20 = vld [vmem:[%s0 + $0x30] sm:$0xff]
  %v21 = vld [vmem:[%s0 + $0x38] sm:$0xff]
  %v22 = vld [vmem:[%s0 + $0x40] sm:$0xff]
  %v23 = vld [vmem:[%s1] sm:$0xff]
  %v24 = vld [vmem:[%s1 + $0x8] sm:$0xff]
  %v25 = vld [vmem:[%s1 + $0x10] sm:$0xff]
  %v26 = vld [vmem:[%s1 + $0x18] sm:$0xff]
  %v27 = vld [vmem:[%s1 + $0x20] sm:$0xff]
  %v28 = vld [vmem:[%s1 + $0x28] sm:$0xff]
  %v29 = vld [vmem:[%s1 + $0x30] sm:$0xff]
  %v30 = vld [vmem:[%s1 + $0x38] sm:$0xff]
  %v31 = vld [vmem:[%s1 + $0x40] sm:$0xff]
  %v32 = vld [vmem:[%s1 + $0x48] sm:$0xff]
  %v33 = vld [vmem:[%s1 + $0x50] sm:$0xff]
  %v34 = vld [vmem:[%s1 + $0x58] sm:$0xff]
  %v35 = vld [vmem:[%s1 + $0x60] sm:$0xff]
  %v36 = vld [vmem:[%s1 + $0x68] sm:$0xff]
  %v37 = vld [vmem:[%s1 + $0x70] sm:$0xff]
  %v38 = vld [vmem:[%s1 + $0x78] sm:$0xff]
  %v39 = vld [vmem:[%s1 + $0x80] sm:$0xff]
  %v40 = vld [vmem:[%s1 + $0x88] sm:$0xff]
  %v41 = vld [vmem:[%s1 + $0x90] sm:$0xff]
  %v42 = vld [vmem:[%s1 + $0x98] sm:$0xff]
  %v43 = vld [vmem:[%s1 + $0xa0] sm:$0xff]
  %v44 = vld [vmem:[%s1 + $0xa8] sm:$0xff]
  %v45 = vld [vmem:[%s1 + $0xb0] sm:$0xff]
  %v46 = vld [vmem:[%s1 + $0xb8] sm:$0xff]
  %v47 = vld [vmem:[%s1 + $0xc0] sm:$0xff]
  %v48 = vld [vmem:[%s1 + $0xc8] sm:$0xff]
  %v49 = vld [vmem:[%s1 + $0xd0] sm:$0xff]
  %v50 = vld [vmem:[%s1 + $0xd8] sm:$0xff]
  %v51 = vld [vmem:[%s1 + $0xe0] sm:$0xff]
  %v52 = vld [vmem:[%s1 + $0xe8] sm:$0xff]
  %v53 = vld [vmem:[%s1 + $0xf0] sm:$0xff]
  %v54 = vld [vmem:[%s1 + $0xf8] sm:$0xff]
  %v55 = vld [vmem:[%s1 + $0x100] sm:$0xff]
  %v56 = vld [vmem:[%s1 + $0x108] sm:$0xff]
  %v57 = vld [vmem:[%s1 + $0x110] sm:$0xff]
  %v58 = vld [vmem:[%s1 + $0x118] sm:$0xff]
  %v59 = vld [vmem:[%s1 + $0x120] sm:$0xff]
  %v60 = vld [vmem:[%s1 + $0x128] sm:$0xff]
  %v61 = vld [vmem:[%s1 + $0x130] sm:$0xff]
  %v62 = vld [vmem:[%s1 + $0x138] sm:$0xff]
  %v63 = vld [vmem:[%s1 + $0x140] sm:$0xff]
  %v64 = vld [vmem:[%s1 + $0x148] sm:$0xff]
  %v65 = vld [vmem:[%s1 + $0x150] sm:$0xff]
  %v66 = vld [vmem:[%s1 + $0x158] sm:$0xff]
  %v67 = vld [vmem:[%s1 + $0x160] sm:$0xff]
  %v68 = vld [vmem:[%s1 + $0x168] sm:$0xff]
  %v69 = vld [vmem:[%s1 + $0x170] sm:$0xff]
  %v70 = vld [vmem:[%s1 + $0x178] sm:$0xff]
  %v71 = vld [vmem:[%s1 + $0x180] sm:$0xff]
  %v72 = vld [vmem:[%s1 + $0x188] sm:$0xff]
  %v73 = vld [vmem:[%s1 + $0x190] sm:$0xff]
  %v74 = vld [vmem:[%s1 + $0x198] sm:$0xff]
  %v75 = vld [vmem:[%s1 + $0x1a0] sm:$0xff]
  %v76 = vld [vmem:[%s1 + $0x1a8] sm:$0xff]
  %v77 = vld [vmem:[%s1 + $0x1b0] sm:$0xff]
  %v78 = vld [vmem:[%s1 + $0x1b8] sm:$0xff]
  %v79 = vld [vmem:[%s1 + $0x1c0] sm:$0xff]
  %v80 = vld [vmem:[%s1 + $0x1c8] sm:$0xff]
  %v81 = vld [vmem:[%s1 + $0x1d0] sm:$0xff]
  %v82 = vld [vmem:[%s1 + $0x1d8] sm:$0xff]
  %v83 = vld [vmem:[%s1 + $0x1e0] sm:$0xff]
  %v84 = vld [vmem:[%s1 + $0x1e8] sm:$0xff]
  %v85 = vld [vmem:[%s1 + $0x1f0] sm:$0xff]
  %v86 = vld [vmem:[%s1 + $0x1f8] sm:$0xff]
  %v87 = vld [vmem:[%s1 + $0x200] sm:$0xff]
  %v88 = vld [vmem:[%s1 + $0x208] sm:$0xff]
  %v89 = vld [vmem:[%s1 + $0x210] sm:$0xff]
  %v90 = vld [vmem:[%s1 + $0x218] sm:$0xff]
  %v91 = vld [vmem:[%s1 + $0x220] sm:$0xff]
  %v92 = vld [vmem:[%s1 + $0x228] sm:$0xff]
  %v93 = vld [vmem:[%s1 + $0x230] sm:$0xff]
  %v94 = vld [vmem:[%s1 + $0x238] sm:$0xff]
  %v95 = vld [vmem:[%s1 + $0x240] sm:$0xff]
  %v96 = vld [vmem:[%s1 + $0x248] sm:$0xff]
  %v97 = vld [vmem:[%s1 + $0x250] sm:$0xff]
  %v98 = vld [vmem:[%s1 + $0x258] sm:$0xff]
  %v99 = vld [vmem:[%s1 + $0x260] sm:$0xff]
  %v100 = vld [vmem:[%s1 + $0x268] sm:$0xff]
  %v101 = vld [vmem:[%s1 + $0x270] sm:$0xff]
  %v102 = vld [vmem:[%s1 + $0x278] sm:$0xff]
  %v103 = vld [vmem:[%s1 + $0x280] sm:$0xff]
  %v104 = vld [vmem:[%s1 + $0x288] sm:$0xff]
  %v105 = vld [vmem:[%s1 + $0x290] sm:$0xff]
  %v106 = vld [vmem:[%s1 + $0x298] sm:$0xff]
  %v107 = vld [vmem:[%s1 + $0x2a0] sm:$0xff]
  %v108 = vld [vmem:[%s1 + $0x2a8] sm:$0xff]
  %v109 = vld [vmem:[%s1 + $0x2b0] sm:$0xff]
  %v110 = vld [vmem:[%s1 + $0x2b8] sm:$0xff]
  %v111 = vld [vmem:[%s1 + $0x2c0] sm:$0xff]
  %v112 = vld [vmem:[%s1 + $0x2c8] sm:$0xff]
  %v113 = vld [vmem:[%s1 + $0x2d0] sm:$0xff]
  %v114 = vld [vmem:[%s1 + $0x2d8] sm:$0xff]
  %v115 = vld [vmem:[%s1 + $0x2e0] sm:$0xff]
  %v116 = vld [vmem:[%s1 + $0x2e8] sm:$0xff]
  %v117 = vld [vmem:[%s1 + $0x2f0] sm:$0xff]
  %v118 = vld [vmem:[%s1 + $0x2f8] sm:$0xff]
  %v119 = vld [vmem:[%s1 + $0x300] sm:$0xff]
  %v120 = vld [vmem:[%s1 + $0x308] sm:$0xff]
  %v121 = vld [vmem:[%s1 + $0x310] sm:$0xff]
  %v122 = vld [vmem:[%s1 + $0x318] sm:$0xff]
  %v123 = vld [vmem:[%s1 + $0x320] sm:$0xff]
  %v124 = vld [vmem:[%s1 + $0x328] sm:$0xff]
  %v125 = vld [vmem:[%s1 + $0x330] sm:$0xff]
  %v126 = vld [vmem:[%s1 + $0x338] sm:$0xff]
  %v127 = vld [vmem:[%s1 + $0x340] sm:$0xff]
  %v128 = vld [vmem:[%s1 + $0x348] sm:$0xff]
  %v129 = vld [vmem:[%s1 + $0x350] sm:$0xff]
  %v130 = vld [vmem:[%s1 + $0x358] sm:$0xff]
  %v131 = vld [vmem:[%s1 + $0x360] sm:$0xff]
  %v132 = vld [vmem:[%s1 + $0x368] sm:$0xff]
  %v133 = vld [vmem:[%s1 + $0x370] sm:$0xff]
  %v134 = vld [vmem:[%s1 + $0x378] sm:$0xff]
  %v135 = vld [vmem:[%s1 + $0x380] sm:$0xff]
  %v136 = vld [vmem:[%s1 + $0x388] sm:$0xff]
  %v137 = vld [vmem:[%s1 + $0x390] sm:$0xff]
  %v138 = vld [vmem:[%s1 + $0x398] sm:$0xff]
  %v139 = vld [vmem:[%s1 + $0x3a0] sm:$0xff]
  %v140 = vld [vmem:[%s1 + $0x3a8] sm:$0xff]
  %v141 = vld [vmem:[%s1 + $0x3b0] sm:$0xff]
  %v142 = vld [vmem:[%s1 + $0x3b8] sm:$0xff]
  %v143 = vld [vmem:[%s1 + $0x3c0] sm:$0xff]
  %v144 = vld [vmem:[%s1 + $0x3c8] sm:$0xff]
  %v145 = vld [vmem:[%s1 + $0x3d0] sm:$0xff]
  %v146 = vld [vmem:[%s1 + $0x3d8] sm:$0xff]
  %v147 = vld [vmem:[%s1 + $0x3e0] sm:$0xff]
  %v148 = vld [vmem:[%s1 + $0x3e8] sm:$0xff]
  %v149 = vld [vmem:[%s1 + $0x3f0] sm:$0xff]
  %v150 = vld [vmem:[%s1 + $0x3f8] sm:$0xff]
  %v151 = vld [vmem:[%s1 + $0x400] sm:$0xff]
  %v152 = vld [vmem:[%s1 + $0x408] sm:$0xff]
  %v153 = vld [vmem:[%s1 + $0x410] sm:$0xff]
  %v154 = vld [vmem:[%s1 + $0x418] sm:$0xff]
  %v155 = vld [vmem:[%s1 + $0x420] sm:$0xff]
  %v156 = vld [vmem:[%s1 + $0x428] sm:$0xff]
  %v157 = vld [vmem:[%s1 + $0x430] sm:$0xff]
  %v158 = vld [vmem:[%s1 + $0x438] sm:$0xff]
  %v159 = vld [vmem:[%s1 + $0x440] sm:$0xff]
  %v160 = vld [vmem:[%s1 + $0x448] sm:$0xff]
  %v161 = vld [vmem:[%s1 + $0x450] sm:$0xff]
  %v162 = vld [vmem:[%s1 + $0x458] sm:$0xff]
  %v163 = vld [vmem:[%s1 + $0x460] sm:$0xff]
  %v164 = vld [vmem:[%s1 + $0x468] sm:$0xff]
  %v165 = vld [vmem:[%s1 + $0x470] sm:$0xff]
  %v166 = vld [vmem:[%s1 + $0x478] sm:$0xff]
  %v167 = vld [vmem:[%s1 + $0x480] sm:$0xff]
  %v168 = vld [vmem:[%s1 + $0x488] sm:$0xff]
  %v169 = vld [vmem:[%s1 + $0x490] sm:$0xff]
  %v170 = vld [vmem:[%s1 + $0x498] sm:$0xff]
  %v171 = vld [vmem:[%s1 + $0x4a0] sm:$0xff]
  %v172 = vld [vmem:[%s1 + $0x4a8] sm:$0xff]
  %v173 = vld [vmem:[%s1 + $0x4b0] sm:$0xff]
  %v174 = vld [vmem:[%s1 + $0x4b8] sm:$0xff]
  %v175 = vld [vmem:[%s1 + $0x4c0] sm:$0xff]
  %v176 = vld [vmem:[%s1 + $0x4c8] sm:$0xff]
  %v177 = vld [vmem:[%s1 + $0x4d0] sm:$0xff]
  %v178 = vld [vmem:[%s1 + $0x4d8] sm:$0xff]
  %v179 = vld [vmem:[%s1 + $0x4e0] sm:$0xff]
  %v180 = vld [vmem:[%s1 + $0x4e8] sm:$0xff]
  %v181 = vld [vmem:[%s1 + $0x4f0] sm:$0xff]
  %v182 = vld [vmem:[%s1 + $0x4f8] sm:$0xff]
  %v183 = vld [vmem:[%s1 + $0x500] sm:$0xff]
  %v184 = vld [vmem:[%s1 + $0x508] sm:$0xff]
  %v185 = vld [vmem:[%s1 + $0x510] sm:$0xff]
  %v186 = vld [vmem:[%s1 + $0x518] sm:$0xff]
  %v187 = vld [vmem:[%s1 + $0x520] sm:$0xff]
  %v188 = vld [vmem:[%s1 + $0x528] sm:$0xff]
  %v189 = vld [vmem:[%s1 + $0x530] sm:$0xff]
  %v190 = vld [vmem:[%s1 + $0x538] sm:$0xff]
  %v191 = vld [vmem:[%s1 + $0x540] sm:$0xff]
  %v192 = vld [vmem:[%s1 + $0x548] sm:$0xff]
  %v193 = vld [vmem:[%s1 + $0x550] sm:$0xff]
  %v194 = vld [vmem:[%s1 + $0x558] sm:$0xff]
  %v195 = vld [vmem:[%s1 + $0x560] sm:$0xff]
  %v196 = vld [vmem:[%s1 + $0x568] sm:$0xff]
  %v197 = vld [vmem:[%s1 + $0x570] sm:$0xff]
  %v198 = vld [vmem:[%s1 + $0x578] sm:$0xff]
  %v199 = vld [vmem:[%s1 + $0x580] sm:$0xff]
  %v200 = vld [vmem:[%s1 + $0x588] sm:$0xff]
  %v201 = vld [vmem:[%s1 + $0x590] sm:$0xff]
  %v202 = vld [vmem:[%s1 + $0x598] sm:$0xff]
  %v203 = vld [vmem:[%s1 + $0x5a0] sm:$0xff]
  %v204 = vld [vmem:[%s1 + $0x5a8] sm:$0xff]
  %v205 = vld [vmem:[%s1 + $0x5b0] sm:$0xff]
  %v206 = vld [vmem:[%s1 + $0x5b8] sm:$0xff]
  %v207 = vld [vmem:[%s1 + $0x5c0] sm:$0xff]
  %v208 = vld [vmem:[%s1 + $0x5c8] sm:$0xff]
  %v209 = vld [vmem:[%s1 + $0x5d0] sm:$0xff]
  %v210 = vld [vmem:[%s1 + $0x5d8] sm:$0xff]
  %v211 = vld [vmem:[%s1 + $0x5e0] sm:$0xff]
  %v212 = vld [vmem:[%s1 + $0x5e8] sm:$0xff]
  %v213 = vld [vmem:[%s1 + $0x5f0] sm:$0xff]
  %v214 = vld [vmem:[%s1 + $0x5f8] sm:$0xff]
  %v215 = vld [vmem:[%s1 + $0x600] sm:$0xff]
  %v216 = vld [vmem:[%s1 + $0x608] sm:$0xff]
  %v217 = vld [vmem:[%s1 + $0x610] sm:$0xff]
  %v218 = vld [vmem:[%s1 + $0x618] sm:$0xff]
  %v219 = vld [vmem:[%s1 + $0x620] sm:$0xff]
  %v220 = vld [vmem:[%s1 + $0x628] sm:$0xff]
  %v221 = vld [vmem:[%s1 + $0x630] sm:$0xff]
  %v222 = vld [vmem:[%s1 + $0x638] sm:$0xff]
  %v223 = vld [vmem:[%s1 + $0x640] sm:$0xff]
  %v224 = vld [vmem:[%s1 + $0x648] sm:$0xff]
  %v225 = vld [vmem:[%s1 + $0x650] sm:$0xff]
  %v226 = vld [vmem:[%s1 + $0x658] sm:$0xff]
  %v227 = vld [vmem:[%s1 + $0x660] sm:$0xff]
  %v228 = vld [vmem:[%s1 + $0x668] sm:$0xff]
  %v229 = vld [vmem:[%s1 + $0x670] sm:$0xff]
  %v230 = vld [vmem:[%s1 + $0x678] sm:$0xff]
  %v231 = vld [vmem:[%s1 + $0x680] sm:$0xff]
  %v232 = vld [vmem:[%s1 + $0x688] sm:$0xff]
  %v233 = vld [vmem:[%s1 + $0x690] sm:$0xff]
  %v234 = vld [vmem:[%s1 + $0x698] sm:$0xff]
  %v235 = vld [vmem:[%s1 + $0x6a0] sm:$0xff]
  %v236 = vld [vmem:[%s1 + $0x6a8] sm:$0xff]
  %v237 = vld [vmem:[%s1 + $0x6b0] sm:$0xff]
  %v238 = vld [vmem:[%s1 + $0x6b8] sm:$0xff]
  %v239 = vld [vmem:[%s1 + $0x6c0] sm:$0xff]
  %v240 = vld [vmem:[%s1 + $0x6c8] sm:$0xff]
  %v241 = vld [vmem:[%s1 + $0x6d0] sm:$0xff]
  %v242 = vld [vmem:[%s1 + $0x6d8] sm:$0xff]
  %v243 = vld [vmem:[%s1 + $0x6e0] sm:$0xff]
  %v244 = vld [vmem:[%s1 + $0x6e8] sm:$0xff]
  %v245 = vld [vmem:[%s1 + $0x6f0] sm:$0xff]
  %v246 = vld [vmem:[%s1 + $0x6f8] sm:$0xff]
  %v247 = vld [vmem:[%s1 + $0x700] sm:$0xff]
  %v248 = vld [vmem:[%s1 + $0x708] sm:$0xff]
  %v249 = vld [vmem:[%s1 + $0x710] sm:$0xff]
  %v250 = vld [vmem:[%s1 + $0x718] sm:$0xff]
  %v251 = vld [vmem:[%s1 + $0x720] sm:$0xff]
  %v252 = vld [vmem:[%s1 + $0x728] sm:$0xff]
  %v253 = vld [vmem:[%s1 + $0x730] sm:$0xff]
  %v254 = vld [vmem:[%s1 + $0x738] sm:$0xff]
  %v255 = vld [vmem:[%s1 + $0x740] sm:$0xff]
  %v256 = vld [vmem:[%s1 + $0x748] sm:$0xff]
  %v257 = vld [vmem:[%s1 + $0x750] sm:$0xff]
  %v258 = vld [vmem:[%s1 + $0x758] sm:$0xff]
  %v259 = vld [vmem:[%s1 + $0x760] sm:$0xff]
  %v260 = vld [vmem:[%s1 + $0x768] sm:$0xff]
  %v261 = vld [vmem:[%s1 + $0x770] sm:$0xff]
  %v262 = vld [vmem:[%s1 + $0x778] sm:$0xff]
  %v263 = vld [vmem:[%s1 + $0x780] sm:$0xff]
  %v264 = vld [vmem:[%s1 + $0x788] sm:$0xff]
  %v265 = vld [vmem:[%s1 + $0x790] sm:$0xff]
  %v266 = vld [vmem:[%s1 + $0x798] sm:$0xff]
  %v267 = vld [vmem:[%s1 + $0x7a0] sm:$0xff]
  %v268 = vld [vmem:[%s1 + $0x7a8] sm:$0xff]
  %v269 = vld [vmem:[%s1 + $0x7b0] sm:$0xff]
  %v270 = vld [vmem:[%s1 + $0x7b8] sm:$0xff]
  %v271 = vld [vmem:[%s1 + $0x7c0] sm:$0xff]
  %v272 = vld [vmem:[%s1 + $0x7c8] sm:$0xff]
  %v273 = vld [vmem:[%s1 + $0x7d0] sm:$0xff]
  %v274 = vld [vmem:[%s1 + $0x7d8] sm:$0xff]
  %v275 = vld [vmem:[%s1 + $0x7e0] sm:$0xff]
  %v276 = vld [vmem:[%s1 + $0x7e8] sm:$0xff]
  %v277 = vld [vmem:[%s1 + $0x7f0] sm:$0xff]
  %v278 = vld [vmem:[%s1 + $0x7f8] sm:$0xff]
  %v279 = vld [vmem:[%s1 + $0x800] sm:$0xff]
  %v280 = vld [vmem:[%s1 + $0x808] sm:$0xff]
  %v281 = vld [vmem:[%s1 + $0x810] sm:$0xff]
  %v282 = vld [vmem:[%s1 + $0x818] sm:$0xff]
  %v283 = vld [vmem:[%s1 + $0x820] sm:$0xff]
  %v284 = vld [vmem:[%s1 + $0x828] sm:$0xff]
  %v285 = vld [vmem:[%s1 + $0x830] sm:$0xff]
  %v286 = vld [vmem:[%s1 + $0x838] sm:$0xff]
  %v287 = vld [vmem:[%s1 + $0x840] sm:$0xff]
  %v288 = vld [vmem:[%s1 + $0x848] sm:$0xff]
  %v289 = vld [vmem:[%s1 + $0x850] sm:$0xff]
  %v290 = vld [vmem:[%s1 + $0x858] sm:$0xff]
  %v291 = vld [vmem:[%s1 + $0x860] sm:$0xff]
  %v292 = vld [vmem:[%s1 + $0x868] sm:$0xff]
  %v293 = vld [vmem:[%s1 + $0x870] sm:$0xff]
  %v294 = vld [vmem:[%s1 + $0x878] sm:$0xff]
  %v295 = vld [vmem:[%s1 + $0x880] sm:$0xff]
  %v296 = vld [vmem:[%s1 + $0x888] sm:$0xff]
  %v297 = vld [vmem:[%s1 + $0x890] sm:$0xff]
  %v298 = vld [vmem:[%s1 + $0x898] sm:$0xff]
  %v299 = vld [vmem:[%s1 + $0x8a0] sm:$0xff]
  %v300 = vld [vmem:[%s1 + $0x8a8] sm:$0xff]
  %v301 = vld [vmem:[%s1 + $0x8b0] sm:$0xff]
  %v302 = vld [vmem:[%s1 + $0x8b8] sm:$0xff]
  %v303 = vld [vmem:[%s1 + $0x8c0] sm:$0xff]
  %v304 = vld [vmem:[%s1 + $0x8c8] sm:$0xff]
  %v305 = vld [vmem:[%s1 + $0x8d0] sm:$0xff]
  %v306 = vld [vmem:[%s1 + $0x8d8] sm:$0xff]
  %v307 = vld [vmem:[%s1 + $0x8e0] sm:$0xff]
  %v308 = vld [vmem:[%s1 + $0x8e8] sm:$0xff]
  %v309 = vld [vmem:[%s1 + $0x8f0] sm:$0xff]
  %v310 = vld [vmem:[%s1 + $0x8f8] sm:$0xff]
  %v311 = vld [vmem:[%s1 + $0x900] sm:$0xff]
  %v312 = vld [vmem:[%s1 + $0x908] sm:$0xff]
  %v313 = vld [vmem:[%s1 + $0x910] sm:$0xff]
  %v314 = vld [vmem:[%s1 + $0x918] sm:$0xff]
  %v315 = vld [vmem:[%s1 + $0x920] sm:$0xff]
  %v316 = vld [vmem:[%s1 + $0x928] sm:$0xff]
  %v317 = vld [vmem:[%s1 + $0x930] sm:$0xff]
  %v318 = vld [vmem:[%s1 + $0x938] sm:$0xff]
  %v319 = vld [vmem:[%s1 + $0x940] sm:$0xff]
  %v320 = vld [vmem:[%s1 + $0x948] sm:$0xff]
  %v321 = vld [vmem:[%s1 + $0x950] sm:$0xff]
  %v322 = vld [vmem:[%s1 + $0x958] sm:$0xff]
  %v323 = vld [vmem:[%s1 + $0x960] sm:$0xff]
  %v324 = vld [vmem:[%s1 + $0x968] sm:$0xff]
  %v325 = vld [vmem:[%s1 + $0x970] sm:$0xff]
  %v326 = vld [vmem:[%s1 + $0x978] sm:$0xff]
  %v327 = vld [vmem:[%s1 + $0x980] sm:$0xff]
  %v328 = vld [vmem:[%s1 + $0x988] sm:$0xff]
  %v329 = vld [vmem:[%s1 + $0x990] sm:$0xff]
  %v330 = vld [vmem:[%s1 + $0x998] sm:$0xff]
  %v331 = vld [vmem:[%s1 + $0x9a0] sm:$0xff]
  %v332 = vld [vmem:[%s1 + $0x9a8] sm:$0xff]
  %v333 = vld [vmem:[%s1 + $0x9b0] sm:$0xff]
  %v334 = vld [vmem:[%s1 + $0x9b8] sm:$0xff]
  %v335 = vld [vmem:[%s1 + $0x9c0] sm:$0xff]
  %v336 = vld [vmem:[%s1 + $0x9c8] sm:$0xff]
  %v337 = vld [vmem:[%s1 + $0x9d0] sm:$0xff]
  %v338 = vld [vmem:[%s1 + $0x9d8] sm:$0xff]
  %v339 = vld [vmem:[%s1 + $0x9e0] sm:$0xff]
  %v340 = vld [vmem:[%s1 + $0x9e8] sm:$0xff]
  %v341 = vld [vmem:[%s1 + $0x9f0] sm:$0xff]
  %v342 = vld [vmem:[%s1 + $0x9f8] sm:$0xff]
  %v343 = vld [vmem:[%s1 + $0xa00] sm:$0xff]
  %v344 = vld [vmem:[%s1 + $0xa08] sm:$0xff]
  %v345 = vld [vmem:[%s1 + $0xa10] sm:$0xff]
  %v346 = vld [vmem:[%s1 + $0xa18] sm:$0xff]
  %v347 = vld [vmem:[%s1 + $0xa20] sm:$0xff]
  %v348 = vld [vmem:[%s1 + $0xa28] sm:$0xff]
  %v349 = vld [vmem:[%s1 + $0xa30] sm:$0xff]
  %v350 = vld [vmem:[%s1 + $0xa38] sm:$0xff]
  %v351 = vld [vmem:[%s1 + $0xa40] sm:$0xff]
  %v352 = vld [vmem:[%s1 + $0xa48] sm:$0xff]
  %v353 = vld [vmem:[%s1 + $0xa50] sm:$0xff]
  %v354 = vld [vmem:[%s1 + $0xa58] sm:$0xff]
  %v355 = vld [vmem:[%s1 + $0xa60] sm:$0xff]
  %v356 = vld [vmem:[%s1 + $0xa68] sm:$0xff]
  %v357 = vld [vmem:[%s1 + $0xa70] sm:$0xff]
  %v358 = vld [vmem:[%s1 + $0xa78] sm:$0xff]
  %v359 = vld [vmem:[%s1 + $0xa80] sm:$0xff]
  %v360 = vld [vmem:[%s1 + $0xa88] sm:$0xff]
  %v361 = vld [vmem:[%s1 + $0xa90] sm:$0xff]
  %v362 = vld [vmem:[%s1 + $0xa98] sm:$0xff]
  %v363 = vld [vmem:[%s1 + $0xaa0] sm:$0xff]
  %v364 = vld [vmem:[%s1 + $0xaa8] sm:$0xff]
  %v365 = vld [vmem:[%s1 + $0xab0] sm:$0xff]
  %v366 = vld [vmem:[%s1 + $0xab8] sm:$0xff]
  %v367 = vld [vmem:[%s1 + $0xac0] sm:$0xff]
  %v368 = vld [vmem:[%s1 + $0xac8] sm:$0xff]
  %v369 = vld [vmem:[%s1 + $0xad0] sm:$0xff]
  %v370 = vld [vmem:[%s1 + $0xad8] sm:$0xff]
  %v371 = vld [vmem:[%s1 + $0xae0] sm:$0xff]
  %v372 = vld [vmem:[%s1 + $0xae8] sm:$0xff]
  %v373 = vld [vmem:[%s1 + $0xaf0] sm:$0xff]
  %v374 = vld [vmem:[%s1 + $0xaf8] sm:$0xff]
  %v375 = vld [vmem:[%s1 + $0xb00] sm:$0xff]
  %v376 = vld [vmem:[%s1 + $0xb08] sm:$0xff]
  %v377 = vld [vmem:[%s1 + $0xb10] sm:$0xff]
  %v378 = vld [vmem:[%s1 + $0xb18] sm:$0xff]
  %v379 = vld [vmem:[%s1 + $0xb20] sm:$0xff]
  %v380 = vld [vmem:[%s1 + $0xb28] sm:$0xff]
  %v381 = vld [vmem:[%s1 + $0xb30] sm:$0xff]
  %v382 = vld [vmem:[%s1 + $0xb38] sm:$0xff]
  %v383 = vld [vmem:[%s1 + $0xb40] sm:$0xff]
  %v384 = vld [vmem:[%s1 + $0xb48] sm:$0xff]
  %v385 = vld [vmem:[%s1 + $0xb50] sm:$0xff]
  %v386 = vld [vmem:[%s1 + $0xb58] sm:$0xff]
  %v387 = vld [vmem:[%s1 + $0xb60] sm:$0xff]
  %v388 = vld [vmem:[%s1 + $0xb68] sm:$0xff]
  %v389 = vld [vmem:[%s1 + $0xb70] sm:$0xff]
  %v390 = vld [vmem:[%s1 + $0xb78] sm:$0xff]
  %v391 = vld [vmem:[%s1 + $0xb80] sm:$0xff]
  %v392 = vld [vmem:[%s1 + $0xb88] sm:$0xff]
  %v393 = vld [vmem:[%s1 + $0xb90] sm:$0xff]
  %v394 = vld [vmem:[%s1 + $0xb98] sm:$0xff]
  %v395 = vld [vmem:[%s1 + $0xba0] sm:$0xff]
  %v396 = vld [vmem:[%s1 + $0xba8] sm:$0xff]
  %v397 = vld [vmem:[%s1 + $0xbb0] sm:$0xff]
  %v398 = vld [vmem:[%s1 + $0xbb8] sm:$0xff]
  %v399 = vld [vmem:[%s1 + $0xbc0] sm:$0xff]
  %v400 = vld [vmem:[%s1 + $0xbc8] sm:$0xff]
  %v401 = vld [vmem:[%s1 + $0xbd0] sm:$0xff]
  %v402 = vld [vmem:[%s1 + $0xbd8] sm:$0xff]
  %v403 = vld [vmem:[%s1 + $0xbe0] sm:$0xff]
  %v404 = vld [vmem:[%s1 + $0xbe8] sm:$0xff]
  %v405 = vld [vmem:[%s1 + $0xbf0] sm:$0xff]
  %v406 = vld [vmem:[%s1 + $0xbf8] sm:$0xff]
  %v407 = vld [vmem:[%s1 + $0xc00] sm:$0xff]
  %v408 = vld [vmem:[%s1 + $0xc08] sm:$0xff]
  %v409 = vld [vmem:[%s1 + $0xc10] sm:$0xff]
  %v410 = vld [vmem:[%s1 + $0xc18] sm:$0xff]
  %v411 = vld [vmem:[%s1 + $0xc20] sm:$0xff]
  %v412 = vld [vmem:[%s1 + $0xc28] sm:$0xff]
  %v413 = vld [vmem:[%s1 + $0xc30] sm:$0xff]
  %v414 = vld [vmem:[%s1 + $0xc38] sm:$0xff]
  %v415 = vld [vmem:[%s1 + $0xc40] sm:$0xff]
  %v416 = vld [vmem:[%s1 + $0xc48] sm:$0xff]
  %v417 = vld [vmem:[%s1 + $0xc50] sm:$0xff]
  %v418 = vld [vmem:[%s1 + $0xc58] sm:$0xff]
  %v419 = vld [vmem:[%s1 + $0xc60] sm:$0xff]
  %v420 = vld [vmem:[%s1 + $0xc68] sm:$0xff]
  %v421 = vld [vmem:[%s1 + $0xc70] sm:$0xff]
  %v422 = vld [vmem:[%s1 + $0xc78] sm:$0xff]
  %v423 = vld [vmem:[%s1 + $0xc80] sm:$0xff]
  %v424 = vld [vmem:[%s1 + $0xc88] sm:$0xff]
  %v425 = vld [vmem:[%s1 + $0xc90] sm:$0xff]
  %v426 = vld [vmem:[%s1 + $0xc98] sm:$0xff]
  %v427 = vld [vmem:[%s1 + $0xca0] sm:$0xff]
  %v428 = vld [vmem:[%s1 + $0xca8] sm:$0xff]
  %v429 = vld [vmem:[%s1 + $0xcb0] sm:$0xff]
  %v430 = vld [vmem:[%s1 + $0xcb8] sm:$0xff]
  %v431 = vld [vmem:[%s1 + $0xcc0] sm:$0xff]
  %v432 = vld [vmem:[%s1 + $0xcc8] sm:$0xff]
  %v433 = vld [vmem:[%s1 + $0xcd0] sm:$0xff]
  %v434 = vld [vmem:[%s1 + $0xcd8] sm:$0xff]
  %v435 = vld [vmem:[%s1 + $0xce0] sm:$0xff]
  %v436 = vld [vmem:[%s1 + $0xce8] sm:$0xff]
  %v437 = vld [vmem:[%s1 + $0xcf0] sm:$0xff]
  %v438 = vld [vmem:[%s1 + $0xcf8] sm:$0xff]
  %v439 = vld [vmem:[%s1 + $0xd00] sm:$0xff]
  %v440 = vld [vmem:[%s1 + $0xd08] sm:$0xff]
  %v441 = vld [vmem:[%s1 + $0xd10] sm:$0xff]
  %v442 = vld [vmem:[%s1 + $0xd18] sm:$0xff]
  %v443 = vld [vmem:[%s1 + $0xd20] sm:$0xff]
  %v444 = vld [vmem:[%s1 + $0xd28] sm:$0xff]
  %v445 = vld [vmem:[%s1 + $0xd30] sm:$0xff]
  %v446 = vld [vmem:[%s1 + $0xd38] sm:$0xff]
  %v447 = vld [vmem:[%s1 + $0xd40] sm:$0xff]
  %v448 = vld [vmem:[%s1 + $0xd48] sm:$0xff]
  %v449 = vld [vmem:[%s1 + $0xd50] sm:$0xff]
  %v450 = vld [vmem:[%s1 + $0xd58] sm:$0xff]
  %v451 = vld [vmem:[%s1 + $0xd60] sm:$0xff]
  %v452 = vld [vmem:[%s1 + $0xd68] sm:$0xff]
  %v453 = vld [vmem:[%s1 + $0xd70] sm:$0xff]
  %v454 = vld [vmem:[%s1 + $0xd78] sm:$0xff]
  %v455 = vld [vmem:[%s1 + $0xd80] sm:$0xff]
  %v456 = vld [vmem:[%s1 + $0xd88] sm:$0xff]
  %v457 = vld [vmem:[%s1 + $0xd90] sm:$0xff]
  %v458 = vld [vmem:[%s1 + $0xd98] sm:$0xff]
  %v459 = vld [vmem:[%s1 + $0xda0] sm:$0xff]
  %v460 = vld [vmem:[%s1 + $0xda8] sm:$0xff]
  %v461 = vld [vmem:[%s1 + $0xdb0] sm:$0xff]
  %v462 = vld [vmem:[%s1 + $0xdb8] sm:$0xff]
  %v463 = vld [vmem:[%s1 + $0xdc0] sm:$0xff]
  %v464 = vld [vmem:[%s1 + $0xdc8] sm:$0xff]
  %v465 = vld [vmem:[%s1 + $0xdd0] sm:$0xff]
  %v466 = vld [vmem:[%s1 + $0xdd8] sm:$0xff]
  %v467 = vld [vmem:[%s1 + $0xde0] sm:$0xff]
  %v468 = vld [vmem:[%s1 + $0xde8] sm:$0xff]
  %v469 = vld [vmem:[%s1 + $0xdf0] sm:$0xff]
  %v470 = vld [vmem:[%s1 + $0xdf8] sm:$0xff]
  %v471 = vld [vmem:[%s1 + $0xe00] sm:$0xff]
  %v472 = vld [vmem:[%s1 + $0xe08] sm:$0xff]
  %v473 = vld [vmem:[%s1 + $0xe10] sm:$0xff]
  %v474 = vld [vmem:[%s1 + $0xe18] sm:$0xff]
  %v475 = vld [vmem:[%s1 + $0xe20] sm:$0xff]
  %v476 = vld [vmem:[%s1 + $0xe28] sm:$0xff]
  %v477 = vld [vmem:[%s1 + $0xe30] sm:$0xff]
  %v478 = vld [vmem:[%s1 + $0xe38] sm:$0xff]
  %v479 = vld [vmem:[%s1 + $0xe40] sm:$0xff]
  %v480 = vld [vmem:[%s1 + $0xe48] sm:$0xff]
  %v481 = vld [vmem:[%s1 + $0xe50] sm:$0xff]
  %v482 = vld [vmem:[%s1 + $0xe58] sm:$0xff]
  %v483 = vld [vmem:[%s1 + $0xe60] sm:$0xff]
  %v484 = vld [vmem:[%s1 + $0xe68] sm:$0xff]
  %v485 = vld [vmem:[%s1 + $0xe70] sm:$0xff]
  %v486 = vld [vmem:[%s1 + $0xe78] sm:$0xff]
  %v487 = vld [vmem:[%s1 + $0xe80] sm:$0xff]
  %v488 = vld [vmem:[%s1 + $0xe88] sm:$0xff]
  %v489 = vld [vmem:[%s1 + $0xe90] sm:$0xff]
  %v490 = vld [vmem:[%s1 + $0xe98] sm:$0xff]
  %v491 = vld [vmem:[%s1 + $0xea0] sm:$0xff]
  %v492 = vld [vmem:[%s1 + $0xea8] sm:$0xff]
  %v493 = vld [vmem:[%s1 + $0xeb0] sm:$0xff]
  %v494 = vld [vmem:[%s1 + $0xeb8] sm:$0xff]
  %v495 = vld [vmem:[%s1 + $0xec0] sm:$0xff]
  %v496 = vld [vmem:[%s1 + $0xec8] sm:$0xff]
  %v497 = vld [vmem:[%s1 + $0xed0] sm:$0xff]
  %v498 = vld [vmem:[%s1 + $0xed8] sm:$0xff]
  %v499 = vld [vmem:[%s1 + $0xee0] sm:$0xff]
  %v500 = vld [vmem:[%s1 + $0xee8] sm:$0xff]
  %v501 = vld [vmem:[%s1 + $0xef0] sm:$0xff]
  %v502 = vld [vmem:[%s1 + $0xef8] sm:$0xff]
  %v503 = vld [vmem:[%s1 + $0xf00] sm:$0xff]
  %v504 = vld [vmem:[%s1 + $0xf08] sm:$0xff]
  %v505 = vld [vmem:[%s1 + $0xf10] sm:$0xff]
  %v506 = vld [vmem:[%s1 + $0xf18] sm:$0xff]
  %v507 = vld [vmem:[%s1 + $0xf20] sm:$0xff]
  %v508 = vld [vmem:[%s1 + $0xf28] sm:$0xff]
  %v509 = vld [vmem:[%s1 + $0xf30] sm:$0xff]
  %v510 = vld [vmem:[%s1 + $0xf38] sm:$0xff]
  %v511 = vld [vmem:[%s1 + $0xf40] sm:$0xff]
  %v512 = vld [vmem:[%s1 + $0xf48] sm:$0xff]
  %v513 = vld [vmem:[%s1 + $0xf50] sm:$0xff]
  %v514 = vld [vmem:[%s1 + $0xf58] sm:$0xff]
  %v515 = vld [vmem:[%s1 + $0xf60] sm:$0xff]
  %v516 = vld [vmem:[%s1 + $0xf68] sm:$0xff]
  %v517 = vld [vmem:[%s1 + $0xf70] sm:$0xff]
  %v518 = vld [vmem:[%s1 + $0xf78] sm:$0xff]
  %v519 = vld [vmem:[%s1 + $0xf80] sm:$0xff]
  %v520 = vld [vmem:[%s1 + $0xf88] sm:$0xff]
  %v521 = vld [vmem:[%s1 + $0xf90] sm:$0xff]
  %v522 = vld [vmem:[%s1 + $0xf98] sm:$0xff]
  %v523 = vld [vmem:[%s1 + $0xfa0] sm:$0xff]
  %v524 = vld [vmem:[%s1 + $0xfa8] sm:$0xff]
  %v525 = vld [vmem:[%s1 + $0xfb0] sm:$0xff]
  %v526 = vld [vmem:[%s1 + $0xfb8] sm:$0xff]
  %v527 = vld [vmem:[%s1 + $0xfc0] sm:$0xff]
  %v528 = vld [vmem:[%s1 + $0xfc8] sm:$0xff]
  %v529 = vld [vmem:[%s1 + $0xfd0] sm:$0xff]
  %v530 = vld [vmem:[%s1 + $0xfd8] sm:$0xff]
  %v531 = vld [vmem:[%s1 + $0xfe0] sm:$0xff]
  %v532 = vld [vmem:[%s1 + $0xfe8] sm:$0xff]
  %v533 = vld [vmem:[%s1 + $0xff0] sm:$0xff]
  %v534 = vld [vmem:[%s1 + $0xff8] sm:$0xff]
  %v535 = vld [vmem:[%s1 + $0x1000] sm:$0xff]
  %v536 = vld [vmem:[%s1 + $0x1008] sm:$0xff]
  %v537 = vld [vmem:[%s1 + $0x1010] sm:$0xff]
  %v538 = vld [vmem:[%s1 + $0x1018] sm:$0xff]
  %v539 = vld [vmem:[%s1 + $0x1020] sm:$0xff]
  %v540 = vld [vmem:[%s1 + $0x1028] sm:$0xff]
  %v541 = vld [vmem:[%s1 + $0x1030] sm:$0xff]
  %v542 = vld [vmem:[%s1 + $0x1038] sm:$0xff]
  %v543 = vld [vmem:[%s1 + $0x1040] sm:$0xff]
  %v544 = vld [vmem:[%s1 + $0x1048] sm:$0xff]
  %v545 = vld [vmem:[%s1 + $0x1050] sm:$0xff]
  %v546 = vld [vmem:[%s1 + $0x1058] sm:$0xff]
  %v547 = vld [vmem:[%s1 + $0x1060] sm:$0xff]
  %v548 = vld [vmem:[%s1 + $0x1068] sm:$0xff]
  %v549 = vld [vmem:[%s1 + $0x1070] sm:$0xff]
  %v550 = vld [vmem:[%s1 + $0x1078] sm:$0xff]
  %v551 = vld [vmem:[%s1 + $0x1080] sm:$0xff]
  %v552 = vld [vmem:[%s1 + $0x1088] sm:$0xff]
  %v553 = vld [vmem:[%s1 + $0x1090] sm:$0xff]
  %v554 = vld [vmem:[%s1 + $0x1098] sm:$0xff]
  %v555 = vld [vmem:[%s1 + $0x10a0] sm:$0xff]
  %v556 = vld [vmem:[%s1 + $0x10a8] sm:$0xff]
  %v557 = vld [vmem:[%s1 + $0x10b0] sm:$0xff]
  %v558 = vld [vmem:[%s1 + $0x10b8] sm:$0xff]
  %v559 = vld [vmem:[%s1 + $0x10c0] sm:$0xff]
  %v560 = vld [vmem:[%s1 + $0x10c8] sm:$0xff]
  %v561 = vld [vmem:[%s1 + $0x10d0] sm:$0xff]
  %v562 = vld [vmem:[%s1 + $0x10d8] sm:$0xff]
  %v563 = vld [vmem:[%s1 + $0x10e0] sm:$0xff]
  %v564 = vld [vmem:[%s1 + $0x10e8] sm:$0xff]
  %v565 = vld [vmem:[%s1 + $0x10f0] sm:$0xff]
  %v566 = vld [vmem:[%s1 + $0x10f8] sm:$0xff]
  %v567 = vld [vmem:[%s1 + $0x1100] sm:$0xff]
  %v568 = vld [vmem:[%s1 + $0x1108] sm:$0xff]
  %v569 = vld [vmem:[%s1 + $0x1110] sm:$0xff]
  %v570 = vld [vmem:[%s1 + $0x1118] sm:$0xff]
  %v571 = vld [vmem:[%s1 + $0x1120] sm:$0xff]
  %v572 = vld [vmem:[%s1 + $0x1128] sm:$0xff]
  %v573 = vld [vmem:[%s1 + $0x1130] sm:$0xff]
  %v574 = vld [vmem:[%s1 + $0x1138] sm:$0xff]
  %v575 = vld [vmem:[%s1 + $0x1140] sm:$0xff]
  %v576 = vld [vmem:[%s1 + $0x1148] sm:$0xff]
  %v577 = vld [vmem:[%s1 + $0x1150] sm:$0xff]
  %v578 = vld [vmem:[%s1 + $0x1158] sm:$0xff]
  %v579 = vld [vmem:[%s1 + $0x1160] sm:$0xff]
  %v580 = vld [vmem:[%s1 + $0x1168] sm:$0xff]
  %v581 = vld [vmem:[%s1 + $0x1170] sm:$0xff]
  %v582 = vld [vmem:[%s1 + $0x1178] sm:$0xff]
  %v583 = vld [vmem:[%s1 + $0x1180] sm:$0xff]
  %v584 = vld [vmem:[%s1 + $0x1188] sm:$0xff]
  %v585 = vld [vmem:[%s1 + $0x1190] sm:$0xff]
  %v586 = vld [vmem:[%s1 + $0x1198] sm:$0xff]
  %v587 = vld [vmem:[%s1 + $0x11a0] sm:$0xff]
  %v588 = vld [vmem:[%s1 + $0x11a8] sm:$0xff]
  %v589 = vld [vmem:[%s1 + $0x11b0] sm:$0xff]
  %v590 = vld [vmem:[%s1 + $0x11b8] sm:$0xff]
  %v591 = vld [vmem:[%s1 + $0x11c0] sm:$0xff]
  %v592 = vld [vmem:[%s1 + $0x11c8] sm:$0xff]
  %v593 = vld [vmem:[%s1 + $0x11d0] sm:$0xff]
  %v594 = vld [vmem:[%s1 + $0x11d8] sm:$0xff]
  %v595 = vld [vmem:[%s1 + $0x11e0] sm:$0xff]
  %v596 = vld [vmem:[%s1 + $0x11e8] sm:$0xff]
  %v597 = vld [vmem:[%s1 + $0x11f0] sm:$0xff]
  %v598 = vld [vmem:[%s1 + $0x11f8] sm:$0xff]
  %v599 = vld [vmem:[%s2] sm:$0xf]
  %v601 = vlaneseq
  %v602 = vshrl.u32 %v601, 7
  %v603 = vsub.s32 0, %v602
  %v604 = vrot.slane %v599, %v603
  %v605 = vlaneseq
  %v606 = vshrl.u32 %v605, 7
  %v607 = vsub.s32 1, %v606
  %v608 = vrot.slane %v599, %v607
  %v609 = vlaneseq
  %v610 = vshrl.u32 %v609, 7
  %v611 = vsub.s32 2, %v610
  %v612 = vrot.slane %v599, %v611
  %v613 = vlaneseq
  %v614 = vshrl.u32 %v613, 7
  %v615 = vsub.s32 3, %v614
  %v616 = vrot.slane %v599, %v615
  %v630 = vunpack.c.l.b16 %v14
  %v631 = vunpack.c.h.b16 %v14
  %v632 = vunpack.c.l.b16 %v15
  %v633 = vunpack.c.h.b16 %v15
  %v634 = vunpack.c.l.b16 %v16
  %v635 = vunpack.c.h.b16 %v16
  %v636 = vunpack.c.l.b16 %v17
  %v637 = vunpack.c.h.b16 %v17
  %v638 = vunpack.c.l.b16 %v18
  %v639 = vunpack.c.h.b16 %v18
  %v640 = vunpack.c.l.b16 %v19
  %v641 = vunpack.c.h.b16 %v19
  %v642 = vunpack.c.l.b16 %v20
  %v643 = vunpack.c.h.b16 %v20
  %v644 = vunpack.c.l.b16 %v21
  %v645 = vunpack.c.h.b16 %v21
  %v646 = vunpack.c.l.b16 %v22
  %v647 = vunpack.c.h.b16 %v22
  %v648 = vpack.c.b16 %v630, %v630
  %v649 = vpack.c.b16 %v631, %v631
  %v650 = vpack.c.b16 %v632, %v632
  %v651 = vpack.c.b16 %v633, %v633
  %v652 = vpack.c.b16 %v634, %v634
  %v653 = vpack.c.b16 %v635, %v635
  %v654 = vpack.c.b16 %v636, %v636
  %v655 = vpack.c.b16 %v637, %v637
  %v656 = vpack.c.b16 %v638, %v638
  %v657 = vpack.c.b16 %v639, %v639
  %v658 = vpack.c.b16 %v640, %v640
  %v659 = vpack.c.b16 %v641, %v641
  %v660 = vpack.c.b16 %v642, %v642
  %v661 = vpack.c.b16 %v643, %v643
  %v662 = vpack.c.b16 %v644, %v644
  %v663 = vpack.c.b16 %v645, %v645
  %v664 = vpack.c.b16 %v646, %v646
  %v665 = vpack.c.b16 %v647, %v647
  %v1260 = vunpack.c.l.b16 %v23
  %v1261 = vunpack.c.h.b16 %v23
  %v1262 = vunpack.c.l.b16 %v24
  %v1263 = vunpack.c.h.b16 %v24
  %v1264 = vunpack.c.l.b16 %v25
  %v1265 = vunpack.c.h.b16 %v25
  %v1266 = vunpack.c.l.b16 %v26
  %v1267 = vunpack.c.h.b16 %v26
  %v1268 = vunpack.c.l.b16 %v27
  %v1269 = vunpack.c.h.b16 %v27
  %v1270 = vunpack.c.l.b16 %v28
  %v1271 = vunpack.c.h.b16 %v28
  %v1272 = vunpack.c.l.b16 %v29
  %v1273 = vunpack.c.h.b16 %v29
  %v1274 = vunpack.c.l.b16 %v30
  %v1275 = vunpack.c.h.b16 %v30
  %v1276 = vunpack.c.l.b16 %v31
  %v1277 = vunpack.c.h.b16 %v31
  %v1278 = vunpack.c.l.b16 %v32
  %v1279 = vunpack.c.h.b16 %v32
  %v1280 = vunpack.c.l.b16 %v33
  %v1281 = vunpack.c.h.b16 %v33
  %v1282 = vunpack.c.l.b16 %v34
  %v1283 = vunpack.c.h.b16 %v34
  %v1284 = vunpack.c.l.b16 %v35
  %v1285 = vunpack.c.h.b16 %v35
  %v1286 = vunpack.c.l.b16 %v36
  %v1287 = vunpack.c.h.b16 %v36
  %v1288 = vunpack.c.l.b16 %v37
  %v1289 = vunpack.c.h.b16 %v37
  %v1290 = vunpack.c.l.b16 %v38
  %v1291 = vunpack.c.h.b16 %v38
  %v1292 = vunpack.c.l.b16 %v39
  %v1293 = vunpack.c.h.b16 %v39
  %v1294 = vunpack.c.l.b16 %v40
  %v1295 = vunpack.c.h.b16 %v40
  %v1296 = vunpack.c.l.b16 %v41
  %v1297 = vunpack.c.h.b16 %v41
  %v1298 = vunpack.c.l.b16 %v42
  %v1299 = vunpack.c.h.b16 %v42
  %v1300 = vunpack.c.l.b16 %v43
  %v1301 = vunpack.c.h.b16 %v43
  %v1302 = vunpack.c.l.b16 %v44
  %v1303 = vunpack.c.h.b16 %v44
  %v1304 = vunpack.c.l.b16 %v45
  %v1305 = vunpack.c.h.b16 %v45
  %v1306 = vunpack.c.l.b16 %v46
  %v1307 = vunpack.c.h.b16 %v46
  %v1308 = vunpack.c.l.b16 %v47
  %v1309 = vunpack.c.h.b16 %v47
  %v1310 = vunpack.c.l.b16 %v48
  %v1311 = vunpack.c.h.b16 %v48
  %v1312 = vunpack.c.l.b16 %v49
  %v1313 = vunpack.c.h.b16 %v49
  %v1314 = vunpack.c.l.b16 %v50
  %v1315 = vunpack.c.h.b16 %v50
  %v1316 = vunpack.c.l.b16 %v51
  %v1317 = vunpack.c.h.b16 %v51
  %v1318 = vunpack.c.l.b16 %v52
  %v1319 = vunpack.c.h.b16 %v52
  %v1320 = vunpack.c.l.b16 %v53
  %v1321 = vunpack.c.h.b16 %v53
  %v1322 = vunpack.c.l.b16 %v54
  %v1323 = vunpack.c.h.b16 %v54
  %v1324 = vunpack.c.l.b16 %v55
  %v1325 = vunpack.c.h.b16 %v55
  %v1326 = vunpack.c.l.b16 %v56
  %v1327 = vunpack.c.h.b16 %v56
  %v1328 = vunpack.c.l.b16 %v57
  %v1329 = vunpack.c.h.b16 %v57
  %v1330 = vunpack.c.l.b16 %v58
  %v1331 = vunpack.c.h.b16 %v58
  %v1332 = vunpack.c.l.b16 %v59
  %v1333 = vunpack.c.h.b16 %v59
  %v1334 = vunpack.c.l.b16 %v60
  %v1335 = vunpack.c.h.b16 %v60
  %v1336 = vunpack.c.l.b16 %v61
  %v1337 = vunpack.c.h.b16 %v61
  %v1338 = vunpack.c.l.b16 %v62
  %v1339 = vunpack.c.h.b16 %v62
  %v1340 = vunpack.c.l.b16 %v63
  %v1341 = vunpack.c.h.b16 %v63
  %v1342 = vunpack.c.l.b16 %v64
  %v1343 = vunpack.c.h.b16 %v64
  %v1344 = vunpack.c.l.b16 %v65
  %v1345 = vunpack.c.h.b16 %v65
  %v1346 = vunpack.c.l.b16 %v66
  %v1347 = vunpack.c.h.b16 %v66
  %v1348 = vunpack.c.l.b16 %v67
  %v1349 = vunpack.c.h.b16 %v67
  %v1350 = vunpack.c.l.b16 %v68
  %v1351 = vunpack.c.h.b16 %v68
  %v1352 = vunpack.c.l.b16 %v69
  %v1353 = vunpack.c.h.b16 %v69
  %v1354 = vunpack.c.l.b16 %v70
  %v1355 = vunpack.c.h.b16 %v70
  %v1356 = vunpack.c.l.b16 %v71
  %v1357 = vunpack.c.h.b16 %v71
  %v1358 = vunpack.c.l.b16 %v72
  %v1359 = vunpack.c.h.b16 %v72
  %v1360 = vunpack.c.l.b16 %v73
  %v1361 = vunpack.c.h.b16 %v73
  %v1362 = vunpack.c.l.b16 %v74
  %v1363 = vunpack.c.h.b16 %v74
  %v1364 = vunpack.c.l.b16 %v75
  %v1365 = vunpack.c.h.b16 %v75
  %v1366 = vunpack.c.l.b16 %v76
  %v1367 = vunpack.c.h.b16 %v76
  %v1368 = vunpack.c.l.b16 %v77
  %v1369 = vunpack.c.h.b16 %v77
  %v1370 = vunpack.c.l.b16 %v78
  %v1371 = vunpack.c.h.b16 %v78
  %v1372 = vunpack.c.l.b16 %v79
  %v1373 = vunpack.c.h.b16 %v79
  %v1374 = vunpack.c.l.b16 %v80
  %v1375 = vunpack.c.h.b16 %v80
  %v1376 = vunpack.c.l.b16 %v81
  %v1377 = vunpack.c.h.b16 %v81
  %v1378 = vunpack.c.l.b16 %v82
  %v1379 = vunpack.c.h.b16 %v82
  %v1380 = vunpack.c.l.b16 %v83
  %v1381 = vunpack.c.h.b16 %v83
  %v1382 = vunpack.c.l.b16 %v84
  %v1383 = vunpack.c.h.b16 %v84
  %v1384 = vunpack.c.l.b16 %v85
  %v1385 = vunpack.c.h.b16 %v85
  %v1386 = vunpack.c.l.b16 %v86
  %v1387 = vunpack.c.h.b16 %v86
  %v1388 = vunpack.c.l.b16 %v87
  %v1389 = vunpack.c.h.b16 %v87
  %v1390 = vunpack.c.l.b16 %v88
  %v1391 = vunpack.c.h.b16 %v88
  %v1392 = vunpack.c.l.b16 %v89
  %v1393 = vunpack.c.h.b16 %v89
  %v1394 = vunpack.c.l.b16 %v90
  %v1395 = vunpack.c.h.b16 %v90
  %v1396 = vunpack.c.l.b16 %v91
  %v1397 = vunpack.c.h.b16 %v91
  %v1398 = vunpack.c.l.b16 %v92
  %v1399 = vunpack.c.h.b16 %v92
  %v1400 = vunpack.c.l.b16 %v93
  %v1401 = vunpack.c.h.b16 %v93
  %v1402 = vunpack.c.l.b16 %v94
  %v1403 = vunpack.c.h.b16 %v94
  %v1404 = vunpack.c.l.b16 %v95
  %v1405 = vunpack.c.h.b16 %v95
  %v1406 = vunpack.c.l.b16 %v96
  %v1407 = vunpack.c.h.b16 %v96
  %v1408 = vunpack.c.l.b16 %v97
  %v1409 = vunpack.c.h.b16 %v97
  %v1410 = vunpack.c.l.b16 %v98
  %v1411 = vunpack.c.h.b16 %v98
  %v1412 = vunpack.c.l.b16 %v99
  %v1413 = vunpack.c.h.b16 %v99
  %v1414 = vunpack.c.l.b16 %v100
  %v1415 = vunpack.c.h.b16 %v100
  %v1416 = vunpack.c.l.b16 %v101
  %v1417 = vunpack.c.h.b16 %v101
  %v1418 = vunpack.c.l.b16 %v102
  %v1419 = vunpack.c.h.b16 %v102
  %v1420 = vunpack.c.l.b16 %v103
  %v1421 = vunpack.c.h.b16 %v103
  %v1422 = vunpack.c.l.b16 %v104
  %v1423 = vunpack.c.h.b16 %v104
  %v1424 = vunpack.c.l.b16 %v105
  %v1425 = vunpack.c.h.b16 %v105
  %v1426 = vunpack.c.l.b16 %v106
  %v1427 = vunpack.c.h.b16 %v106
  %v1428 = vunpack.c.l.b16 %v107
  %v1429 = vunpack.c.h.b16 %v107
  %v1430 = vunpack.c.l.b16 %v108
  %v1431 = vunpack.c.h.b16 %v108
  %v1432 = vunpack.c.l.b16 %v109
  %v1433 = vunpack.c.h.b16 %v109
  %v1434 = vunpack.c.l.b16 %v110
  %v1435 = vunpack.c.h.b16 %v110
  %v1436 = vunpack.c.l.b16 %v111
  %v1437 = vunpack.c.h.b16 %v111
  %v1438 = vunpack.c.l.b16 %v112
  %v1439 = vunpack.c.h.b16 %v112
  %v1440 = vunpack.c.l.b16 %v113
  %v1441 = vunpack.c.h.b16 %v113
  %v1442 = vunpack.c.l.b16 %v114
  %v1443 = vunpack.c.h.b16 %v114
  %v1444 = vunpack.c.l.b16 %v115
  %v1445 = vunpack.c.h.b16 %v115
  %v1446 = vunpack.c.l.b16 %v116
  %v1447 = vunpack.c.h.b16 %v116
  %v1448 = vunpack.c.l.b16 %v117
  %v1449 = vunpack.c.h.b16 %v117
  %v1450 = vunpack.c.l.b16 %v118
  %v1451 = vunpack.c.h.b16 %v118
  %v1452 = vunpack.c.l.b16 %v119
  %v1453 = vunpack.c.h.b16 %v119
  %v1454 = vunpack.c.l.b16 %v120
  %v1455 = vunpack.c.h.b16 %v120
  %v1456 = vunpack.c.l.b16 %v121
  %v1457 = vunpack.c.h.b16 %v121
  %v1458 = vunpack.c.l.b16 %v122
  %v1459 = vunpack.c.h.b16 %v122
  %v1460 = vunpack.c.l.b16 %v123
  %v1461 = vunpack.c.h.b16 %v123
  %v1462 = vunpack.c.l.b16 %v124
  %v1463 = vunpack.c.h.b16 %v124
  %v1464 = vunpack.c.l.b16 %v125
  %v1465 = vunpack.c.h.b16 %v125
  %v1466 = vunpack.c.l.b16 %v126
  %v1467 = vunpack.c.h.b16 %v126
  %v1468 = vunpack.c.l.b16 %v127
  %v1469 = vunpack.c.h.b16 %v127
  %v1470 = vunpack.c.l.b16 %v128
  %v1471 = vunpack.c.h.b16 %v128
  %v1472 = vunpack.c.l.b16 %v129
  %v1473 = vunpack.c.h.b16 %v129
  %v1474 = vunpack.c.l.b16 %v130
  %v1475 = vunpack.c.h.b16 %v130
  %v1476 = vunpack.c.l.b16 %v131
  %v1477 = vunpack.c.h.b16 %v131
  %v1478 = vunpack.c.l.b16 %v132
  %v1479 = vunpack.c.h.b16 %v132
  %v1480 = vunpack.c.l.b16 %v133
  %v1481 = vunpack.c.h.b16 %v133
  %v1482 = vunpack.c.l.b16 %v134
  %v1483 = vunpack.c.h.b16 %v134
  %v1484 = vunpack.c.l.b16 %v135
  %v1485 = vunpack.c.h.b16 %v135
  %v1486 = vunpack.c.l.b16 %v136
  %v1487 = vunpack.c.h.b16 %v136
  %v1488 = vunpack.c.l.b16 %v137
  %v1489 = vunpack.c.h.b16 %v137
  %v1490 = vunpack.c.l.b16 %v138
  %v1491 = vunpack.c.h.b16 %v138
  %v1492 = vunpack.c.l.b16 %v139
  %v1493 = vunpack.c.h.b16 %v139
  %v1494 = vunpack.c.l.b16 %v140
  %v1495 = vunpack.c.h.b16 %v140
  %v1496 = vunpack.c.l.b16 %v141
  %v1497 = vunpack.c.h.b16 %v141
  %v1498 = vunpack.c.l.b16 %v142
  %v1499 = vunpack.c.h.b16 %v142
  %v1500 = vunpack.c.l.b16 %v143
  %v1501 = vunpack.c.h.b16 %v143
  %v1502 = vunpack.c.l.b16 %v144
  %v1503 = vunpack.c.h.b16 %v144
  %v1504 = vunpack.c.l.b16 %v145
  %v1505 = vunpack.c.h.b16 %v145
  %v1506 = vunpack.c.l.b16 %v146
  %v1507 = vunpack.c.h.b16 %v146
  %v1508 = vunpack.c.l.b16 %v147
  %v1509 = vunpack.c.h.b16 %v147
  %v1510 = vunpack.c.l.b16 %v148
  %v1511 = vunpack.c.h.b16 %v148
  %v1512 = vunpack.c.l.b16 %v149
  %v1513 = vunpack.c.h.b16 %v149
  %v1514 = vunpack.c.l.b16 %v150
  %v1515 = vunpack.c.h.b16 %v150
  %v1516 = vunpack.c.l.b16 %v151
  %v1517 = vunpack.c.h.b16 %v151
  %v1518 = vunpack.c.l.b16 %v152
  %v1519 = vunpack.c.h.b16 %v152
  %v1520 = vunpack.c.l.b16 %v153
  %v1521 = vunpack.c.h.b16 %v153
  %v1522 = vunpack.c.l.b16 %v154
  %v1523 = vunpack.c.h.b16 %v154
  %v1524 = vunpack.c.l.b16 %v155
  %v1525 = vunpack.c.h.b16 %v155
  %v1526 = vunpack.c.l.b16 %v156
  %v1527 = vunpack.c.h.b16 %v156
  %v1528 = vunpack.c.l.b16 %v157
  %v1529 = vunpack.c.h.b16 %v157
  %v1530 = vunpack.c.l.b16 %v158
  %v1531 = vunpack.c.h.b16 %v158
  %v1532 = vunpack.c.l.b16 %v159
  %v1533 = vunpack.c.h.b16 %v159
  %v1534 = vunpack.c.l.b16 %v160
  %v1535 = vunpack.c.h.b16 %v160
  %v1536 = vunpack.c.l.b16 %v161
  %v1537 = vunpack.c.h.b16 %v161
  %v1538 = vunpack.c.l.b16 %v162
  %v1539 = vunpack.c.h.b16 %v162
  %v1540 = vunpack.c.l.b16 %v163
  %v1541 = vunpack.c.h.b16 %v163
  %v1542 = vunpack.c.l.b16 %v164
  %v1543 = vunpack.c.h.b16 %v164
  %v1544 = vunpack.c.l.b16 %v165
  %v1545 = vunpack.c.h.b16 %v165
  %v1546 = vunpack.c.l.b16 %v166
  %v1547 = vunpack.c.h.b16 %v166
  %v1548 = vunpack.c.l.b16 %v167
  %v1549 = vunpack.c.h.b16 %v167
  %v1550 = vunpack.c.l.b16 %v168
  %v1551 = vunpack.c.h.b16 %v168
  %v1552 = vunpack.c.l.b16 %v169
  %v1553 = vunpack.c.h.b16 %v169
  %v1554 = vunpack.c.l.b16 %v170
  %v1555 = vunpack.c.h.b16 %v170
  %v1556 = vunpack.c.l.b16 %v171
  %v1557 = vunpack.c.h.b16 %v171
  %v1558 = vunpack.c.l.b16 %v172
  %v1559 = vunpack.c.h.b16 %v172
  %v1560 = vunpack.c.l.b16 %v173
  %v1561 = vunpack.c.h.b16 %v173
  %v1562 = vunpack.c.l.b16 %v174
  %v1563 = vunpack.c.h.b16 %v174
  %v1564 = vunpack.c.l.b16 %v175
  %v1565 = vunpack.c.h.b16 %v175
  %v1566 = vunpack.c.l.b16 %v176
  %v1567 = vunpack.c.h.b16 %v176
  %v1568 = vunpack.c.l.b16 %v177
  %v1569 = vunpack.c.h.b16 %v177
  %v1570 = vunpack.c.l.b16 %v178
  %v1571 = vunpack.c.h.b16 %v178
  %v1572 = vunpack.c.l.b16 %v179
  %v1573 = vunpack.c.h.b16 %v179
  %v1574 = vunpack.c.l.b16 %v180
  %v1575 = vunpack.c.h.b16 %v180
  %v1576 = vunpack.c.l.b16 %v181
  %v1577 = vunpack.c.h.b16 %v181
  %v1578 = vunpack.c.l.b16 %v182
  %v1579 = vunpack.c.h.b16 %v182
  %v1580 = vunpack.c.l.b16 %v183
  %v1581 = vunpack.c.h.b16 %v183
  %v1582 = vunpack.c.l.b16 %v184
  %v1583 = vunpack.c.h.b16 %v184
  %v1584 = vunpack.c.l.b16 %v185
  %v1585 = vunpack.c.h.b16 %v185
  %v1586 = vunpack.c.l.b16 %v186
  %v1587 = vunpack.c.h.b16 %v186
  %v1588 = vunpack.c.l.b16 %v187
  %v1589 = vunpack.c.h.b16 %v187
  %v1590 = vunpack.c.l.b16 %v188
  %v1591 = vunpack.c.h.b16 %v188
  %v1592 = vunpack.c.l.b16 %v189
  %v1593 = vunpack.c.h.b16 %v189
  %v1594 = vunpack.c.l.b16 %v190
  %v1595 = vunpack.c.h.b16 %v190
  %v1596 = vunpack.c.l.b16 %v191
  %v1597 = vunpack.c.h.b16 %v191
  %v1598 = vunpack.c.l.b16 %v192
  %v1599 = vunpack.c.h.b16 %v192
  %v1600 = vunpack.c.l.b16 %v193
  %v1601 = vunpack.c.h.b16 %v193
  %v1602 = vunpack.c.l.b16 %v194
  %v1603 = vunpack.c.h.b16 %v194
  %v1604 = vunpack.c.l.b16 %v195
  %v1605 = vunpack.c.h.b16 %v195
  %v1606 = vunpack.c.l.b16 %v196
  %v1607 = vunpack.c.h.b16 %v196
  %v1608 = vunpack.c.l.b16 %v197
  %v1609 = vunpack.c.h.b16 %v197
  %v1610 = vunpack.c.l.b16 %v198
  %v1611 = vunpack.c.h.b16 %v198
  %v1612 = vunpack.c.l.b16 %v199
  %v1613 = vunpack.c.h.b16 %v199
  %v1614 = vunpack.c.l.b16 %v200
  %v1615 = vunpack.c.h.b16 %v200
  %v1616 = vunpack.c.l.b16 %v201
  %v1617 = vunpack.c.h.b16 %v201
  %v1618 = vunpack.c.l.b16 %v202
  %v1619 = vunpack.c.h.b16 %v202
  %v1620 = vunpack.c.l.b16 %v203
  %v1621 = vunpack.c.h.b16 %v203
  %v1622 = vunpack.c.l.b16 %v204
  %v1623 = vunpack.c.h.b16 %v204
  %v1624 = vunpack.c.l.b16 %v205
  %v1625 = vunpack.c.h.b16 %v205
  %v1626 = vunpack.c.l.b16 %v206
  %v1627 = vunpack.c.h.b16 %v206
  %v1628 = vunpack.c.l.b16 %v207
  %v1629 = vunpack.c.h.b16 %v207
  %v1630 = vunpack.c.l.b16 %v208
  %v1631 = vunpack.c.h.b16 %v208
  %v1632 = vunpack.c.l.b16 %v209
  %v1633 = vunpack.c.h.b16 %v209
  %v1634 = vunpack.c.l.b16 %v210
  %v1635 = vunpack.c.h.b16 %v210
  %v1636 = vunpack.c.l.b16 %v211
  %v1637 = vunpack.c.h.b16 %v211
  %v1638 = vunpack.c.l.b16 %v212
  %v1639 = vunpack.c.h.b16 %v212
  %v1640 = vunpack.c.l.b16 %v213
  %v1641 = vunpack.c.h.b16 %v213
  %v1642 = vunpack.c.l.b16 %v214
  %v1643 = vunpack.c.h.b16 %v214
  %v1644 = vunpack.c.l.b16 %v215
  %v1645 = vunpack.c.h.b16 %v215
  %v1646 = vunpack.c.l.b16 %v216
  %v1647 = vunpack.c.h.b16 %v216
  %v1648 = vunpack.c.l.b16 %v217
  %v1649 = vunpack.c.h.b16 %v217
  %v1650 = vunpack.c.l.b16 %v218
  %v1651 = vunpack.c.h.b16 %v218
  %v1652 = vunpack.c.l.b16 %v219
  %v1653 = vunpack.c.h.b16 %v219
  %v1654 = vunpack.c.l.b16 %v220
  %v1655 = vunpack.c.h.b16 %v220
  %v1656 = vunpack.c.l.b16 %v221
  %v1657 = vunpack.c.h.b16 %v221
  %v1658 = vunpack.c.l.b16 %v222
  %v1659 = vunpack.c.h.b16 %v222
  %v1660 = vunpack.c.l.b16 %v223
  %v1661 = vunpack.c.h.b16 %v223
  %v1662 = vunpack.c.l.b16 %v224
  %v1663 = vunpack.c.h.b16 %v224
  %v1664 = vunpack.c.l.b16 %v225
  %v1665 = vunpack.c.h.b16 %v225
  %v1666 = vunpack.c.l.b16 %v226
  %v1667 = vunpack.c.h.b16 %v226
  %v1668 = vunpack.c.l.b16 %v227
  %v1669 = vunpack.c.h.b16 %v227
  %v1670 = vunpack.c.l.b16 %v228
  %v1671 = vunpack.c.h.b16 %v228
  %v1672 = vunpack.c.l.b16 %v229
  %v1673 = vunpack.c.h.b16 %v229
  %v1674 = vunpack.c.l.b16 %v230
  %v1675 = vunpack.c.h.b16 %v230
  %v1676 = vunpack.c.l.b16 %v231
  %v1677 = vunpack.c.h.b16 %v231
  %v1678 = vunpack.c.l.b16 %v232
  %v1679 = vunpack.c.h.b16 %v232
  %v1680 = vunpack.c.l.b16 %v233
  %v1681 = vunpack.c.h.b16 %v233
  %v1682 = vunpack.c.l.b16 %v234
  %v1683 = vunpack.c.h.b16 %v234
  %v1684 = vunpack.c.l.b16 %v235
  %v1685 = vunpack.c.h.b16 %v235
  %v1686 = vunpack.c.l.b16 %v236
  %v1687 = vunpack.c.h.b16 %v236
  %v1688 = vunpack.c.l.b16 %v237
  %v1689 = vunpack.c.h.b16 %v237
  %v1690 = vunpack.c.l.b16 %v238
  %v1691 = vunpack.c.h.b16 %v238
  %v1692 = vunpack.c.l.b16 %v239
  %v1693 = vunpack.c.h.b16 %v239
  %v1694 = vunpack.c.l.b16 %v240
  %v1695 = vunpack.c.h.b16 %v240
  %v1696 = vunpack.c.l.b16 %v241
  %v1697 = vunpack.c.h.b16 %v241
  %v1698 = vunpack.c.l.b16 %v242
  %v1699 = vunpack.c.h.b16 %v242
  %v1700 = vunpack.c.l.b16 %v243
  %v1701 = vunpack.c.h.b16 %v243
  %v1702 = vunpack.c.l.b16 %v244
  %v1703 = vunpack.c.h.b16 %v244
  %v1704 = vunpack.c.l.b16 %v245
  %v1705 = vunpack.c.h.b16 %v245
  %v1706 = vunpack.c.l.b16 %v246
  %v1707 = vunpack.c.h.b16 %v246
  %v1708 = vunpack.c.l.b16 %v247
  %v1709 = vunpack.c.h.b16 %v247
  %v1710 = vunpack.c.l.b16 %v248
  %v1711 = vunpack.c.h.b16 %v248
  %v1712 = vunpack.c.l.b16 %v249
  %v1713 = vunpack.c.h.b16 %v249
  %v1714 = vunpack.c.l.b16 %v250
  %v1715 = vunpack.c.h.b16 %v250
  %v1716 = vunpack.c.l.b16 %v251
  %v1717 = vunpack.c.h.b16 %v251
  %v1718 = vunpack.c.l.b16 %v252
  %v1719 = vunpack.c.h.b16 %v252
  %v1720 = vunpack.c.l.b16 %v253
  %v1721 = vunpack.c.h.b16 %v253
  %v1722 = vunpack.c.l.b16 %v254
  %v1723 = vunpack.c.h.b16 %v254
  %v1724 = vunpack.c.l.b16 %v255
  %v1725 = vunpack.c.h.b16 %v255
  %v1726 = vunpack.c.l.b16 %v256
  %v1727 = vunpack.c.h.b16 %v256
  %v1728 = vunpack.c.l.b16 %v257
  %v1729 = vunpack.c.h.b16 %v257
  %v1730 = vunpack.c.l.b16 %v258
  %v1731 = vunpack.c.h.b16 %v258
  %v1732 = vunpack.c.l.b16 %v259
  %v1733 = vunpack.c.h.b16 %v259
  %v1734 = vunpack.c.l.b16 %v260
  %v1735 = vunpack.c.h.b16 %v260
  %v1736 = vunpack.c.l.b16 %v261
  %v1737 = vunpack.c.h.b16 %v261
  %v1738 = vunpack.c.l.b16 %v262
  %v1739 = vunpack.c.h.b16 %v262
  %v1740 = vunpack.c.l.b16 %v263
  %v1741 = vunpack.c.h.b16 %v263
  %v1742 = vunpack.c.l.b16 %v264
  %v1743 = vunpack.c.h.b16 %v264
  %v1744 = vunpack.c.l.b16 %v265
  %v1745 = vunpack.c.h.b16 %v265
  %v1746 = vunpack.c.l.b16 %v266
  %v1747 = vunpack.c.h.b16 %v266
  %v1748 = vunpack.c.l.b16 %v267
  %v1749 = vunpack.c.h.b16 %v267
  %v1750 = vunpack.c.l.b16 %v268
  %v1751 = vunpack.c.h.b16 %v268
  %v1752 = vunpack.c.l.b16 %v269
  %v1753 = vunpack.c.h.b16 %v269
  %v1754 = vunpack.c.l.b16 %v270
  %v1755 = vunpack.c.h.b16 %v270
  %v1756 = vunpack.c.l.b16 %v271
  %v1757 = vunpack.c.h.b16 %v271
  %v1758 = vunpack.c.l.b16 %v272
  %v1759 = vunpack.c.h.b16 %v272
  %v1760 = vunpack.c.l.b16 %v273
  %v1761 = vunpack.c.h.b16 %v273
  %v1762 = vunpack.c.l.b16 %v274
  %v1763 = vunpack.c.h.b16 %v274
  %v1764 = vunpack.c.l.b16 %v275
  %v1765 = vunpack.c.h.b16 %v275
  %v1766 = vunpack.c.l.b16 %v276
  %v1767 = vunpack.c.h.b16 %v276
  %v1768 = vunpack.c.l.b16 %v277
  %v1769 = vunpack.c.h.b16 %v277
  %v1770 = vunpack.c.l.b16 %v278
  %v1771 = vunpack.c.h.b16 %v278
  %v1772 = vunpack.c.l.b16 %v279
  %v1773 = vunpack.c.h.b16 %v279
  %v1774 = vunpack.c.l.b16 %v280
  %v1775 = vunpack.c.h.b16 %v280
  %v1776 = vunpack.c.l.b16 %v281
  %v1777 = vunpack.c.h.b16 %v281
  %v1778 = vunpack.c.l.b16 %v282
  %v1779 = vunpack.c.h.b16 %v282
  %v1780 = vunpack.c.l.b16 %v283
  %v1781 = vunpack.c.h.b16 %v283
  %v1782 = vunpack.c.l.b16 %v284
  %v1783 = vunpack.c.h.b16 %v284
  %v1784 = vunpack.c.l.b16 %v285
  %v1785 = vunpack.c.h.b16 %v285
  %v1786 = vunpack.c.l.b16 %v286
  %v1787 = vunpack.c.h.b16 %v286
  %v1788 = vunpack.c.l.b16 %v287
  %v1789 = vunpack.c.h.b16 %v287
  %v1790 = vunpack.c.l.b16 %v288
  %v1791 = vunpack.c.h.b16 %v288
  %v1792 = vunpack.c.l.b16 %v289
  %v1793 = vunpack.c.h.b16 %v289
  %v1794 = vunpack.c.l.b16 %v290
  %v1795 = vunpack.c.h.b16 %v290
  %v1796 = vunpack.c.l.b16 %v291
  %v1797 = vunpack.c.h.b16 %v291
  %v1798 = vunpack.c.l.b16 %v292
  %v1799 = vunpack.c.h.b16 %v292
  %v1800 = vunpack.c.l.b16 %v293
  %v1801 = vunpack.c.h.b16 %v293
  %v1802 = vunpack.c.l.b16 %v294
  %v1803 = vunpack.c.h.b16 %v294
  %v1804 = vunpack.c.l.b16 %v295
  %v1805 = vunpack.c.h.b16 %v295
  %v1806 = vunpack.c.l.b16 %v296
  %v1807 = vunpack.c.h.b16 %v296
  %v1808 = vunpack.c.l.b16 %v297
  %v1809 = vunpack.c.h.b16 %v297
  %v1810 = vunpack.c.l.b16 %v298
  %v1811 = vunpack.c.h.b16 %v298
  %v1812 = vunpack.c.l.b16 %v299
  %v1813 = vunpack.c.h.b16 %v299
  %v1814 = vunpack.c.l.b16 %v300
  %v1815 = vunpack.c.h.b16 %v300
  %v1816 = vunpack.c.l.b16 %v301
  %v1817 = vunpack.c.h.b16 %v301
  %v1818 = vunpack.c.l.b16 %v302
  %v1819 = vunpack.c.h.b16 %v302
  %v1820 = vunpack.c.l.b16 %v303
  %v1821 = vunpack.c.h.b16 %v303
  %v1822 = vunpack.c.l.b16 %v304
  %v1823 = vunpack.c.h.b16 %v304
  %v1824 = vunpack.c.l.b16 %v305
  %v1825 = vunpack.c.h.b16 %v305
  %v1826 = vunpack.c.l.b16 %v306
  %v1827 = vunpack.c.h.b16 %v306
  %v1828 = vunpack.c.l.b16 %v307
  %v1829 = vunpack.c.h.b16 %v307
  %v1830 = vunpack.c.l.b16 %v308
  %v1831 = vunpack.c.h.b16 %v308
  %v1832 = vunpack.c.l.b16 %v309
  %v1833 = vunpack.c.h.b16 %v309
  %v1834 = vunpack.c.l.b16 %v310
  %v1835 = vunpack.c.h.b16 %v310
  %v1836 = vunpack.c.l.b16 %v311
  %v1837 = vunpack.c.h.b16 %v311
  %v1838 = vunpack.c.l.b16 %v312
  %v1839 = vunpack.c.h.b16 %v312
  %v1840 = vunpack.c.l.b16 %v313
  %v1841 = vunpack.c.h.b16 %v313
  %v1842 = vunpack.c.l.b16 %v314
  %v1843 = vunpack.c.h.b16 %v314
  %v1844 = vunpack.c.l.b16 %v315
  %v1845 = vunpack.c.h.b16 %v315
  %v1846 = vunpack.c.l.b16 %v316
  %v1847 = vunpack.c.h.b16 %v316
  %v1848 = vunpack.c.l.b16 %v317
  %v1849 = vunpack.c.h.b16 %v317
  %v1850 = vunpack.c.l.b16 %v318
  %v1851 = vunpack.c.h.b16 %v318
  %v1852 = vunpack.c.l.b16 %v319
  %v1853 = vunpack.c.h.b16 %v319
  %v1854 = vunpack.c.l.b16 %v320
  %v1855 = vunpack.c.h.b16 %v320
  %v1856 = vunpack.c.l.b16 %v321
  %v1857 = vunpack.c.h.b16 %v321
  %v1858 = vunpack.c.l.b16 %v322
  %v1859 = vunpack.c.h.b16 %v322
  %v1860 = vunpack.c.l.b16 %v323
  %v1861 = vunpack.c.h.b16 %v323
  %v1862 = vunpack.c.l.b16 %v324
  %v1863 = vunpack.c.h.b16 %v324
  %v1864 = vunpack.c.l.b16 %v325
  %v1865 = vunpack.c.h.b16 %v325
  %v1866 = vunpack.c.l.b16 %v326
  %v1867 = vunpack.c.h.b16 %v326
  %v1868 = vunpack.c.l.b16 %v327
  %v1869 = vunpack.c.h.b16 %v327
  %v1870 = vunpack.c.l.b16 %v328
  %v1871 = vunpack.c.h.b16 %v328
  %v1872 = vunpack.c.l.b16 %v329
  %v1873 = vunpack.c.h.b16 %v329
  %v1874 = vunpack.c.l.b16 %v330
  %v1875 = vunpack.c.h.b16 %v330
  %v1876 = vunpack.c.l.b16 %v331
  %v1877 = vunpack.c.h.b16 %v331
  %v1878 = vunpack.c.l.b16 %v332
  %v1879 = vunpack.c.h.b16 %v332
  %v1880 = vunpack.c.l.b16 %v333
  %v1881 = vunpack.c.h.b16 %v333
  %v1882 = vunpack.c.l.b16 %v334
  %v1883 = vunpack.c.h.b16 %v334
  %v1884 = vunpack.c.l.b16 %v335
  %v1885 = vunpack.c.h.b16 %v335
  %v1886 = vunpack.c.l.b16 %v336
  %v1887 = vunpack.c.h.b16 %v336
  %v1888 = vunpack.c.l.b16 %v337
  %v1889 = vunpack.c.h.b16 %v337
  %v1890 = vunpack.c.l.b16 %v338
  %v1891 = vunpack.c.h.b16 %v338
  %v1892 = vunpack.c.l.b16 %v339
  %v1893 = vunpack.c.h.b16 %v339
  %v1894 = vunpack.c.l.b16 %v340
  %v1895 = vunpack.c.h.b16 %v340
  %v1896 = vunpack.c.l.b16 %v341
  %v1897 = vunpack.c.h.b16 %v341
  %v1898 = vunpack.c.l.b16 %v342
  %v1899 = vunpack.c.h.b16 %v342
  %v1900 = vunpack.c.l.b16 %v343
  %v1901 = vunpack.c.h.b16 %v343
  %v1902 = vunpack.c.l.b16 %v344
  %v1903 = vunpack.c.h.b16 %v344
  %v1904 = vunpack.c.l.b16 %v345
  %v1905 = vunpack.c.h.b16 %v345
  %v1906 = vunpack.c.l.b16 %v346
  %v1907 = vunpack.c.h.b16 %v346
  %v1908 = vunpack.c.l.b16 %v347
  %v1909 = vunpack.c.h.b16 %v347
  %v1910 = vunpack.c.l.b16 %v348
  %v1911 = vunpack.c.h.b16 %v348
  %v1912 = vunpack.c.l.b16 %v349
  %v1913 = vunpack.c.h.b16 %v349
  %v1914 = vunpack.c.l.b16 %v350
  %v1915 = vunpack.c.h.b16 %v350
  %v1916 = vunpack.c.l.b16 %v351
  %v1917 = vunpack.c.h.b16 %v351
  %v1918 = vunpack.c.l.b16 %v352
  %v1919 = vunpack.c.h.b16 %v352
  %v1920 = vunpack.c.l.b16 %v353
  %v1921 = vunpack.c.h.b16 %v353
  %v1922 = vunpack.c.l.b16 %v354
  %v1923 = vunpack.c.h.b16 %v354
  %v1924 = vunpack.c.l.b16 %v355
  %v1925 = vunpack.c.h.b16 %v355
  %v1926 = vunpack.c.l.b16 %v356
  %v1927 = vunpack.c.h.b16 %v356
  %v1928 = vunpack.c.l.b16 %v357
  %v1929 = vunpack.c.h.b16 %v357
  %v1930 = vunpack.c.l.b16 %v358
  %v1931 = vunpack.c.h.b16 %v358
  %v1932 = vunpack.c.l.b16 %v359
  %v1933 = vunpack.c.h.b16 %v359
  %v1934 = vunpack.c.l.b16 %v360
  %v1935 = vunpack.c.h.b16 %v360
  %v1936 = vunpack.c.l.b16 %v361
  %v1937 = vunpack.c.h.b16 %v361
  %v1938 = vunpack.c.l.b16 %v362
  %v1939 = vunpack.c.h.b16 %v362
  %v1940 = vunpack.c.l.b16 %v363
  %v1941 = vunpack.c.h.b16 %v363
  %v1942 = vunpack.c.l.b16 %v364
  %v1943 = vunpack.c.h.b16 %v364
  %v1944 = vunpack.c.l.b16 %v365
  %v1945 = vunpack.c.h.b16 %v365
  %v1946 = vunpack.c.l.b16 %v366
  %v1947 = vunpack.c.h.b16 %v366
  %v1948 = vunpack.c.l.b16 %v367
  %v1949 = vunpack.c.h.b16 %v367
  %v1950 = vunpack.c.l.b16 %v368
  %v1951 = vunpack.c.h.b16 %v368
  %v1952 = vunpack.c.l.b16 %v369
  %v1953 = vunpack.c.h.b16 %v369
  %v1954 = vunpack.c.l.b16 %v370
  %v1955 = vunpack.c.h.b16 %v370
  %v1956 = vunpack.c.l.b16 %v371
  %v1957 = vunpack.c.h.b16 %v371
  %v1958 = vunpack.c.l.b16 %v372
  %v1959 = vunpack.c.h.b16 %v372
  %v1960 = vunpack.c.l.b16 %v373
  %v1961 = vunpack.c.h.b16 %v373
  %v1962 = vunpack.c.l.b16 %v374
  %v1963 = vunpack.c.h.b16 %v374
  %v1964 = vunpack.c.l.b16 %v375
  %v1965 = vunpack.c.h.b16 %v375
  %v1966 = vunpack.c.l.b16 %v376
  %v1967 = vunpack.c.h.b16 %v376
  %v1968 = vunpack.c.l.b16 %v377
  %v1969 = vunpack.c.h.b16 %v377
  %v1970 = vunpack.c.l.b16 %v378
  %v1971 = vunpack.c.h.b16 %v378
  %v1972 = vunpack.c.l.b16 %v379
  %v1973 = vunpack.c.h.b16 %v379
  %v1974 = vunpack.c.l.b16 %v380
  %v1975 = vunpack.c.h.b16 %v380
  %v1976 = vunpack.c.l.b16 %v381
  %v1977 = vunpack.c.h.b16 %v381
  %v1978 = vunpack.c.l.b16 %v382
  %v1979 = vunpack.c.h.b16 %v382
  %v1980 = vunpack.c.l.b16 %v383
  %v1981 = vunpack.c.h.b16 %v383
  %v1982 = vunpack.c.l.b16 %v384
  %v1983 = vunpack.c.h.b16 %v384
  %v1984 = vunpack.c.l.b16 %v385
  %v1985 = vunpack.c.h.b16 %v385
  %v1986 = vunpack.c.l.b16 %v386
  %v1987 = vunpack.c.h.b16 %v386
  %v1988 = vunpack.c.l.b16 %v387
  %v1989 = vunpack.c.h.b16 %v387
  %v1990 = vunpack.c.l.b16 %v388
  %v1991 = vunpack.c.h.b16 %v388
  %v1992 = vunpack.c.l.b16 %v389
  %v1993 = vunpack.c.h.b16 %v389
  %v1994 = vunpack.c.l.b16 %v390
  %v1995 = vunpack.c.h.b16 %v390
  %v1996 = vunpack.c.l.b16 %v391
  %v1997 = vunpack.c.h.b16 %v391
  %v1998 = vunpack.c.l.b16 %v392
  %v1999 = vunpack.c.h.b16 %v392
  %v2000 = vunpack.c.l.b16 %v393
  %v2001 = vunpack.c.h.b16 %v393
  %v2002 = vunpack.c.l.b16 %v394
  %v2003 = vunpack.c.h.b16 %v394
  %v2004 = vunpack.c.l.b16 %v395
  %v2005 = vunpack.c.h.b16 %v395
  %v2006 = vunpack.c.l.b16 %v396
  %v2007 = vunpack.c.h.b16 %v396
  %v2008 = vunpack.c.l.b16 %v397
  %v2009 = vunpack.c.h.b16 %v397
  %v2010 = vunpack.c.l.b16 %v398
  %v2011 = vunpack.c.h.b16 %v398
  %v2012 = vunpack.c.l.b16 %v399
  %v2013 = vunpack.c.h.b16 %v399
  %v2014 = vunpack.c.l.b16 %v400
  %v2015 = vunpack.c.h.b16 %v400
  %v2016 = vunpack.c.l.b16 %v401
  %v2017 = vunpack.c.h.b16 %v401
  %v2018 = vunpack.c.l.b16 %v402
  %v2019 = vunpack.c.h.b16 %v402
  %v2020 = vunpack.c.l.b16 %v403
  %v2021 = vunpack.c.h.b16 %v403
  %v2022 = vunpack.c.l.b16 %v404
  %v2023 = vunpack.c.h.b16 %v404
  %v2024 = vunpack.c.l.b16 %v405
  %v2025 = vunpack.c.h.b16 %v405
  %v2026 = vunpack.c.l.b16 %v406
  %v2027 = vunpack.c.h.b16 %v406
  %v2028 = vunpack.c.l.b16 %v407
  %v2029 = vunpack.c.h.b16 %v407
  %v2030 = vunpack.c.l.b16 %v408
  %v2031 = vunpack.c.h.b16 %v408
  %v2032 = vunpack.c.l.b16 %v409
  %v2033 = vunpack.c.h.b16 %v409
  %v2034 = vunpack.c.l.b16 %v410
  %v2035 = vunpack.c.h.b16 %v410
  %v2036 = vunpack.c.l.b16 %v411
  %v2037 = vunpack.c.h.b16 %v411
  %v2038 = vunpack.c.l.b16 %v412
  %v2039 = vunpack.c.h.b16 %v412
  %v2040 = vunpack.c.l.b16 %v413
  %v2041 = vunpack.c.h.b16 %v413
  %v2042 = vunpack.c.l.b16 %v414
  %v2043 = vunpack.c.h.b16 %v414
  %v2044 = vunpack.c.l.b16 %v415
  %v2045 = vunpack.c.h.b16 %v415
  %v2046 = vunpack.c.l.b16 %v416
  %v2047 = vunpack.c.h.b16 %v416
  %v2048 = vunpack.c.l.b16 %v417
  %v2049 = vunpack.c.h.b16 %v417
  %v2050 = vunpack.c.l.b16 %v418
  %v2051 = vunpack.c.h.b16 %v418
  %v2052 = vunpack.c.l.b16 %v419
  %v2053 = vunpack.c.h.b16 %v419
  %v2054 = vunpack.c.l.b16 %v420
  %v2055 = vunpack.c.h.b16 %v420
  %v2056 = vunpack.c.l.b16 %v421
  %v2057 = vunpack.c.h.b16 %v421
  %v2058 = vunpack.c.l.b16 %v422
  %v2059 = vunpack.c.h.b16 %v422
  %v2060 = vunpack.c.l.b16 %v423
  %v2061 = vunpack.c.h.b16 %v423
  %v2062 = vunpack.c.l.b16 %v424
  %v2063 = vunpack.c.h.b16 %v424
  %v2064 = vunpack.c.l.b16 %v425
  %v2065 = vunpack.c.h.b16 %v425
  %v2066 = vunpack.c.l.b16 %v426
  %v2067 = vunpack.c.h.b16 %v426
  %v2068 = vunpack.c.l.b16 %v427
  %v2069 = vunpack.c.h.b16 %v427
  %v2070 = vunpack.c.l.b16 %v428
  %v2071 = vunpack.c.h.b16 %v428
  %v2072 = vunpack.c.l.b16 %v429
  %v2073 = vunpack.c.h.b16 %v429
  %v2074 = vunpack.c.l.b16 %v430
  %v2075 = vunpack.c.h.b16 %v430
  %v2076 = vunpack.c.l.b16 %v431
  %v2077 = vunpack.c.h.b16 %v431
  %v2078 = vunpack.c.l.b16 %v432
  %v2079 = vunpack.c.h.b16 %v432
  %v2080 = vunpack.c.l.b16 %v433
  %v2081 = vunpack.c.h.b16 %v433
  %v2082 = vunpack.c.l.b16 %v434
  %v2083 = vunpack.c.h.b16 %v434
  %v2084 = vunpack.c.l.b16 %v435
  %v2085 = vunpack.c.h.b16 %v435
  %v2086 = vunpack.c.l.b16 %v436
  %v2087 = vunpack.c.h.b16 %v436
  %v2088 = vunpack.c.l.b16 %v437
  %v2089 = vunpack.c.h.b16 %v437
  %v2090 = vunpack.c.l.b16 %v438
  %v2091 = vunpack.c.h.b16 %v438
  %v2092 = vunpack.c.l.b16 %v439
  %v2093 = vunpack.c.h.b16 %v439
  %v2094 = vunpack.c.l.b16 %v440
  %v2095 = vunpack.c.h.b16 %v440
  %v2096 = vunpack.c.l.b16 %v441
  %v2097 = vunpack.c.h.b16 %v441
  %v2098 = vunpack.c.l.b16 %v442
  %v2099 = vunpack.c.h.b16 %v442
  %v2100 = vunpack.c.l.b16 %v443
  %v2101 = vunpack.c.h.b16 %v443
  %v2102 = vunpack.c.l.b16 %v444
  %v2103 = vunpack.c.h.b16 %v444
  %v2104 = vunpack.c.l.b16 %v445
  %v2105 = vunpack.c.h.b16 %v445
  %v2106 = vunpack.c.l.b16 %v446
  %v2107 = vunpack.c.h.b16 %v446
  %v2108 = vunpack.c.l.b16 %v447
  %v2109 = vunpack.c.h.b16 %v447
  %v2110 = vunpack.c.l.b16 %v448
  %v2111 = vunpack.c.h.b16 %v448
  %v2112 = vunpack.c.l.b16 %v449
  %v2113 = vunpack.c.h.b16 %v449
  %v2114 = vunpack.c.l.b16 %v450
  %v2115 = vunpack.c.h.b16 %v450
  %v2116 = vunpack.c.l.b16 %v451
  %v2117 = vunpack.c.h.b16 %v451
  %v2118 = vunpack.c.l.b16 %v452
  %v2119 = vunpack.c.h.b16 %v452
  %v2120 = vunpack.c.l.b16 %v453
  %v2121 = vunpack.c.h.b16 %v453
  %v2122 = vunpack.c.l.b16 %v454
  %v2123 = vunpack.c.h.b16 %v454
  %v2124 = vunpack.c.l.b16 %v455
  %v2125 = vunpack.c.h.b16 %v455
  %v2126 = vunpack.c.l.b16 %v456
  %v2127 = vunpack.c.h.b16 %v456
  %v2128 = vunpack.c.l.b16 %v457
  %v2129 = vunpack.c.h.b16 %v457
  %v2130 = vunpack.c.l.b16 %v458
  %v2131 = vunpack.c.h.b16 %v458
  %v2132 = vunpack.c.l.b16 %v459
  %v2133 = vunpack.c.h.b16 %v459
  %v2134 = vunpack.c.l.b16 %v460
  %v2135 = vunpack.c.h.b16 %v460
  %v2136 = vunpack.c.l.b16 %v461
  %v2137 = vunpack.c.h.b16 %v461
  %v2138 = vunpack.c.l.b16 %v462
  %v2139 = vunpack.c.h.b16 %v462
  %v2140 = vunpack.c.l.b16 %v463
  %v2141 = vunpack.c.h.b16 %v463
  %v2142 = vunpack.c.l.b16 %v464
  %v2143 = vunpack.c.h.b16 %v464
  %v2144 = vunpack.c.l.b16 %v465
  %v2145 = vunpack.c.h.b16 %v465
  %v2146 = vunpack.c.l.b16 %v466
  %v2147 = vunpack.c.h.b16 %v466
  %v2148 = vunpack.c.l.b16 %v467
  %v2149 = vunpack.c.h.b16 %v467
  %v2150 = vunpack.c.l.b16 %v468
  %v2151 = vunpack.c.h.b16 %v468
  %v2152 = vunpack.c.l.b16 %v469
  %v2153 = vunpack.c.h.b16 %v469
  %v2154 = vunpack.c.l.b16 %v470
  %v2155 = vunpack.c.h.b16 %v470
  %v2156 = vunpack.c.l.b16 %v471
  %v2157 = vunpack.c.h.b16 %v471
  %v2158 = vunpack.c.l.b16 %v472
  %v2159 = vunpack.c.h.b16 %v472
  %v2160 = vunpack.c.l.b16 %v473
  %v2161 = vunpack.c.h.b16 %v473
  %v2162 = vunpack.c.l.b16 %v474
  %v2163 = vunpack.c.h.b16 %v474
  %v2164 = vunpack.c.l.b16 %v475
  %v2165 = vunpack.c.h.b16 %v475
  %v2166 = vunpack.c.l.b16 %v476
  %v2167 = vunpack.c.h.b16 %v476
  %v2168 = vunpack.c.l.b16 %v477
  %v2169 = vunpack.c.h.b16 %v477
  %v2170 = vunpack.c.l.b16 %v478
  %v2171 = vunpack.c.h.b16 %v478
  %v2172 = vunpack.c.l.b16 %v479
  %v2173 = vunpack.c.h.b16 %v479
  %v2174 = vunpack.c.l.b16 %v480
  %v2175 = vunpack.c.h.b16 %v480
  %v2176 = vunpack.c.l.b16 %v481
  %v2177 = vunpack.c.h.b16 %v481
  %v2178 = vunpack.c.l.b16 %v482
  %v2179 = vunpack.c.h.b16 %v482
  %v2180 = vunpack.c.l.b16 %v483
  %v2181 = vunpack.c.h.b16 %v483
  %v2182 = vunpack.c.l.b16 %v484
  %v2183 = vunpack.c.h.b16 %v484
  %v2184 = vunpack.c.l.b16 %v485
  %v2185 = vunpack.c.h.b16 %v485
  %v2186 = vunpack.c.l.b16 %v486
  %v2187 = vunpack.c.h.b16 %v486
  %v2188 = vunpack.c.l.b16 %v487
  %v2189 = vunpack.c.h.b16 %v487
  %v2190 = vunpack.c.l.b16 %v488
  %v2191 = vunpack.c.h.b16 %v488
  %v2192 = vunpack.c.l.b16 %v489
  %v2193 = vunpack.c.h.b16 %v489
  %v2194 = vunpack.c.l.b16 %v490
  %v2195 = vunpack.c.h.b16 %v490
  %v2196 = vunpack.c.l.b16 %v491
  %v2197 = vunpack.c.h.b16 %v491
  %v2198 = vunpack.c.l.b16 %v492
  %v2199 = vunpack.c.h.b16 %v492
  %v2200 = vunpack.c.l.b16 %v493
  %v2201 = vunpack.c.h.b16 %v493
  %v2202 = vunpack.c.l.b16 %v494
  %v2203 = vunpack.c.h.b16 %v494
  %v2204 = vunpack.c.l.b16 %v495
  %v2205 = vunpack.c.h.b16 %v495
  %v2206 = vunpack.c.l.b16 %v496
  %v2207 = vunpack.c.h.b16 %v496
  %v2208 = vunpack.c.l.b16 %v497
  %v2209 = vunpack.c.h.b16 %v497
  %v2210 = vunpack.c.l.b16 %v498
  %v2211 = vunpack.c.h.b16 %v498
  %v2212 = vunpack.c.l.b16 %v499
  %v2213 = vunpack.c.h.b16 %v499
  %v2214 = vunpack.c.l.b16 %v500
  %v2215 = vunpack.c.h.b16 %v500
  %v2216 = vunpack.c.l.b16 %v501
  %v2217 = vunpack.c.h.b16 %v501
  %v2218 = vunpack.c.l.b16 %v502
  %v2219 = vunpack.c.h.b16 %v502
  %v2220 = vunpack.c.l.b16 %v503
  %v2221 = vunpack.c.h.b16 %v503
  %v2222 = vunpack.c.l.b16 %v504
  %v2223 = vunpack.c.h.b16 %v504
  %v2224 = vunpack.c.l.b16 %v505
  %v2225 = vunpack.c.h.b16 %v505
  %v2226 = vunpack.c.l.b16 %v506
  %v2227 = vunpack.c.h.b16 %v506
  %v2228 = vunpack.c.l.b16 %v507
  %v2229 = vunpack.c.h.b16 %v507
  %v2230 = vunpack.c.l.b16 %v508
  %v2231 = vunpack.c.h.b16 %v508
  %v2232 = vunpack.c.l.b16 %v509
  %v2233 = vunpack.c.h.b16 %v509
  %v2234 = vunpack.c.l.b16 %v510
  %v2235 = vunpack.c.h.b16 %v510
  %v2236 = vunpack.c.l.b16 %v511
  %v2237 = vunpack.c.h.b16 %v511
  %v2238 = vunpack.c.l.b16 %v512
  %v2239 = vunpack.c.h.b16 %v512
  %v2240 = vunpack.c.l.b16 %v513
  %v2241 = vunpack.c.h.b16 %v513
  %v2242 = vunpack.c.l.b16 %v514
  %v2243 = vunpack.c.h.b16 %v514
  %v2244 = vunpack.c.l.b16 %v515
  %v2245 = vunpack.c.h.b16 %v515
  %v2246 = vunpack.c.l.b16 %v516
  %v2247 = vunpack.c.h.b16 %v516
  %v2248 = vunpack.c.l.b16 %v517
  %v2249 = vunpack.c.h.b16 %v517
  %v2250 = vunpack.c.l.b16 %v518
  %v2251 = vunpack.c.h.b16 %v518
  %v2252 = vunpack.c.l.b16 %v519
  %v2253 = vunpack.c.h.b16 %v519
  %v2254 = vunpack.c.l.b16 %v520
  %v2255 = vunpack.c.h.b16 %v520
  %v2256 = vunpack.c.l.b16 %v521
  %v2257 = vunpack.c.h.b16 %v521
  %v2258 = vunpack.c.l.b16 %v522
  %v2259 = vunpack.c.h.b16 %v522
  %v2260 = vunpack.c.l.b16 %v523
  %v2261 = vunpack.c.h.b16 %v523
  %v2262 = vunpack.c.l.b16 %v524
  %v2263 = vunpack.c.h.b16 %v524
  %v2264 = vunpack.c.l.b16 %v525
  %v2265 = vunpack.c.h.b16 %v525
  %v2266 = vunpack.c.l.b16 %v526
  %v2267 = vunpack.c.h.b16 %v526
  %v2268 = vunpack.c.l.b16 %v527
  %v2269 = vunpack.c.h.b16 %v527
  %v2270 = vunpack.c.l.b16 %v528
  %v2271 = vunpack.c.h.b16 %v528
  %v2272 = vunpack.c.l.b16 %v529
  %v2273 = vunpack.c.h.b16 %v529
  %v2274 = vunpack.c.l.b16 %v530
  %v2275 = vunpack.c.h.b16 %v530
  %v2276 = vunpack.c.l.b16 %v531
  %v2277 = vunpack.c.h.b16 %v531
  %v2278 = vunpack.c.l.b16 %v532
  %v2279 = vunpack.c.h.b16 %v532
  %v2280 = vunpack.c.l.b16 %v533
  %v2281 = vunpack.c.h.b16 %v533
  %v2282 = vunpack.c.l.b16 %v534
  %v2283 = vunpack.c.h.b16 %v534
  %v2284 = vunpack.c.l.b16 %v535
  %v2285 = vunpack.c.h.b16 %v535
  %v2286 = vunpack.c.l.b16 %v536
  %v2287 = vunpack.c.h.b16 %v536
  %v2288 = vunpack.c.l.b16 %v537
  %v2289 = vunpack.c.h.b16 %v537
  %v2290 = vunpack.c.l.b16 %v538
  %v2291 = vunpack.c.h.b16 %v538
  %v2292 = vunpack.c.l.b16 %v539
  %v2293 = vunpack.c.h.b16 %v539
  %v2294 = vunpack.c.l.b16 %v540
  %v2295 = vunpack.c.h.b16 %v540
  %v2296 = vunpack.c.l.b16 %v541
  %v2297 = vunpack.c.h.b16 %v541
  %v2298 = vunpack.c.l.b16 %v542
  %v2299 = vunpack.c.h.b16 %v542
  %v2300 = vunpack.c.l.b16 %v543
  %v2301 = vunpack.c.h.b16 %v543
  %v2302 = vunpack.c.l.b16 %v544
  %v2303 = vunpack.c.h.b16 %v544
  %v2304 = vunpack.c.l.b16 %v545
  %v2305 = vunpack.c.h.b16 %v545
  %v2306 = vunpack.c.l.b16 %v546
  %v2307 = vunpack.c.h.b16 %v546
  %v2308 = vunpack.c.l.b16 %v547
  %v2309 = vunpack.c.h.b16 %v547
  %v2310 = vunpack.c.l.b16 %v548
  %v2311 = vunpack.c.h.b16 %v548
  %v2312 = vunpack.c.l.b16 %v549
  %v2313 = vunpack.c.h.b16 %v549
  %v2314 = vunpack.c.l.b16 %v550
  %v2315 = vunpack.c.h.b16 %v550
  %v2316 = vunpack.c.l.b16 %v551
  %v2317 = vunpack.c.h.b16 %v551
  %v2318 = vunpack.c.l.b16 %v552
  %v2319 = vunpack.c.h.b16 %v552
  %v2320 = vunpack.c.l.b16 %v553
  %v2321 = vunpack.c.h.b16 %v553
  %v2322 = vunpack.c.l.b16 %v554
  %v2323 = vunpack.c.h.b16 %v554
  %v2324 = vunpack.c.l.b16 %v555
  %v2325 = vunpack.c.h.b16 %v555
  %v2326 = vunpack.c.l.b16 %v556
  %v2327 = vunpack.c.h.b16 %v556
  %v2328 = vunpack.c.l.b16 %v557
  %v2329 = vunpack.c.h.b16 %v557
  %v2330 = vunpack.c.l.b16 %v558
  %v2331 = vunpack.c.h.b16 %v558
  %v2332 = vunpack.c.l.b16 %v559
  %v2333 = vunpack.c.h.b16 %v559
  %v2334 = vunpack.c.l.b16 %v560
  %v2335 = vunpack.c.h.b16 %v560
  %v2336 = vunpack.c.l.b16 %v561
  %v2337 = vunpack.c.h.b16 %v561
  %v2338 = vunpack.c.l.b16 %v562
  %v2339 = vunpack.c.h.b16 %v562
  %v2340 = vunpack.c.l.b16 %v563
  %v2341 = vunpack.c.h.b16 %v563
  %v2342 = vunpack.c.l.b16 %v564
  %v2343 = vunpack.c.h.b16 %v564
  %v2344 = vunpack.c.l.b16 %v565
  %v2345 = vunpack.c.h.b16 %v565
  %v2346 = vunpack.c.l.b16 %v566
  %v2347 = vunpack.c.h.b16 %v566
  %v2348 = vunpack.c.l.b16 %v567
  %v2349 = vunpack.c.h.b16 %v567
  %v2350 = vunpack.c.l.b16 %v568
  %v2351 = vunpack.c.h.b16 %v568
  %v2352 = vunpack.c.l.b16 %v569
  %v2353 = vunpack.c.h.b16 %v569
  %v2354 = vunpack.c.l.b16 %v570
  %v2355 = vunpack.c.h.b16 %v570
  %v2356 = vunpack.c.l.b16 %v571
  %v2357 = vunpack.c.h.b16 %v571
  %v2358 = vunpack.c.l.b16 %v572
  %v2359 = vunpack.c.h.b16 %v572
  %v2360 = vunpack.c.l.b16 %v573
  %v2361 = vunpack.c.h.b16 %v573
  %v2362 = vunpack.c.l.b16 %v574
  %v2363 = vunpack.c.h.b16 %v574
  %v2364 = vunpack.c.l.b16 %v575
  %v2365 = vunpack.c.h.b16 %v575
  %v2366 = vunpack.c.l.b16 %v576
  %v2367 = vunpack.c.h.b16 %v576
  %v2368 = vunpack.c.l.b16 %v577
  %v2369 = vunpack.c.h.b16 %v577
  %v2370 = vunpack.c.l.b16 %v578
  %v2371 = vunpack.c.h.b16 %v578
  %v2372 = vunpack.c.l.b16 %v579
  %v2373 = vunpack.c.h.b16 %v579
  %v2374 = vunpack.c.l.b16 %v580
  %v2375 = vunpack.c.h.b16 %v580
  %v2376 = vunpack.c.l.b16 %v581
  %v2377 = vunpack.c.h.b16 %v581
  %v2378 = vunpack.c.l.b16 %v582
  %v2379 = vunpack.c.h.b16 %v582
  %v2380 = vunpack.c.l.b16 %v583
  %v2381 = vunpack.c.h.b16 %v583
  %v2382 = vunpack.c.l.b16 %v584
  %v2383 = vunpack.c.h.b16 %v584
  %v2384 = vunpack.c.l.b16 %v585
  %v2385 = vunpack.c.h.b16 %v585
  %v2386 = vunpack.c.l.b16 %v586
  %v2387 = vunpack.c.h.b16 %v586
  %v2388 = vunpack.c.l.b16 %v587
  %v2389 = vunpack.c.h.b16 %v587
  %v2390 = vunpack.c.l.b16 %v588
  %v2391 = vunpack.c.h.b16 %v588
  %v2392 = vunpack.c.l.b16 %v589
  %v2393 = vunpack.c.h.b16 %v589
  %v2394 = vunpack.c.l.b16 %v590
  %v2395 = vunpack.c.h.b16 %v590
  %v2396 = vunpack.c.l.b16 %v591
  %v2397 = vunpack.c.h.b16 %v591
  %v2398 = vunpack.c.l.b16 %v592
  %v2399 = vunpack.c.h.b16 %v592
  %v2400 = vunpack.c.l.b16 %v593
  %v2401 = vunpack.c.h.b16 %v593
  %v2402 = vunpack.c.l.b16 %v594
  %v2403 = vunpack.c.h.b16 %v594
  %v2404 = vunpack.c.l.b16 %v595
  %v2405 = vunpack.c.h.b16 %v595
  %v2406 = vunpack.c.l.b16 %v596
  %v2407 = vunpack.c.h.b16 %v596
  %v2408 = vunpack.c.l.b16 %v597
  %v2409 = vunpack.c.h.b16 %v597
  %v2410 = vunpack.c.l.b16 %v598
  %v2411 = vunpack.c.h.b16 %v598
  %v2412 = vpack.c.b16 %v1264, %v1260
  %v2413 = vpack.c.b16 %v1265, %v1261
  %v2414 = vpack.c.b16 %v1266, %v1262
  %v2415 = vpack.c.b16 %v1267, %v1263
  %v2416 = vpack.c.b16 %v1272, %v1268
  %v2417 = vpack.c.b16 %v1273, %v1269
  %v2418 = vpack.c.b16 %v1274, %v1270
  %v2419 = vpack.c.b16 %v1275, %v1271
  %v2420 = vpack.c.b16 %v1280, %v1276
  %v2421 = vpack.c.b16 %v1281, %v1277
  %v2422 = vpack.c.b16 %v1282, %v1278
  %v2423 = vpack.c.b16 %v1283, %v1279
  %v2424 = vpack.c.b16 %v1288, %v1284
  %v2425 = vpack.c.b16 %v1289, %v1285
  %v2426 = vpack.c.b16 %v1290, %v1286
  %v2427 = vpack.c.b16 %v1291, %v1287
  %v2428 = vpack.c.b16 %v1296, %v1292
  %v2429 = vpack.c.b16 %v1297, %v1293
  %v2430 = vpack.c.b16 %v1298, %v1294
  %v2431 = vpack.c.b16 %v1299, %v1295
  %v2432 = vpack.c.b16 %v1304, %v1300
  %v2433 = vpack.c.b16 %v1305, %v1301
  %v2434 = vpack.c.b16 %v1306, %v1302
  %v2435 = vpack.c.b16 %v1307, %v1303
  %v2436 = vpack.c.b16 %v1312, %v1308
  %v2437 = vpack.c.b16 %v1313, %v1309
  %v2438 = vpack.c.b16 %v1314, %v1310
  %v2439 = vpack.c.b16 %v1315, %v1311
  %v2440 = vpack.c.b16 %v1320, %v1316
  %v2441 = vpack.c.b16 %v1321, %v1317
  %v2442 = vpack.c.b16 %v1322, %v1318
  %v2443 = vpack.c.b16 %v1323, %v1319
  %v2444 = vpack.c.b16 %v1328, %v1324
  %v2445 = vpack.c.b16 %v1329, %v1325
  %v2446 = vpack.c.b16 %v1330, %v1326
  %v2447 = vpack.c.b16 %v1331, %v1327
  %v2448 = vpack.c.b16 %v1336, %v1332
  %v2449 = vpack.c.b16 %v1337, %v1333
  %v2450 = vpack.c.b16 %v1338, %v1334
  %v2451 = vpack.c.b16 %v1339, %v1335
  %v2452 = vpack.c.b16 %v1344, %v1340
  %v2453 = vpack.c.b16 %v1345, %v1341
  %v2454 = vpack.c.b16 %v1346, %v1342
  %v2455 = vpack.c.b16 %v1347, %v1343
  %v2456 = vpack.c.b16 %v1352, %v1348
  %v2457 = vpack.c.b16 %v1353, %v1349
  %v2458 = vpack.c.b16 %v1354, %v1350
  %v2459 = vpack.c.b16 %v1355, %v1351
  %v2460 = vpack.c.b16 %v1360, %v1356
  %v2461 = vpack.c.b16 %v1361, %v1357
  %v2462 = vpack.c.b16 %v1362, %v1358
  %v2463 = vpack.c.b16 %v1363, %v1359
  %v2464 = vpack.c.b16 %v1368, %v1364
  %v2465 = vpack.c.b16 %v1369, %v1365
  %v2466 = vpack.c.b16 %v1370, %v1366
  %v2467 = vpack.c.b16 %v1371, %v1367
  %v2468 = vpack.c.b16 %v1376, %v1372
  %v2469 = vpack.c.b16 %v1377, %v1373
  %v2470 = vpack.c.b16 %v1378, %v1374
  %v2471 = vpack.c.b16 %v1379, %v1375
  %v2472 = vpack.c.b16 %v1384, %v1380
  %v2473 = vpack.c.b16 %v1385, %v1381
  %v2474 = vpack.c.b16 %v1386, %v1382
  %v2475 = vpack.c.b16 %v1387, %v1383
  %v2476 = vpack.c.b16 %v1392, %v1388
  %v2477 = vpack.c.b16 %v1393, %v1389
  %v2478 = vpack.c.b16 %v1394, %v1390
  %v2479 = vpack.c.b16 %v1395, %v1391
  %v2480 = vpack.c.b16 %v1400, %v1396
  %v2481 = vpack.c.b16 %v1401, %v1397
  %v2482 = vpack.c.b16 %v1402, %v1398
  %v2483 = vpack.c.b16 %v1403, %v1399
  %v2484 = vpack.c.b16 %v1408, %v1404
  %v2485 = vpack.c.b16 %v1409, %v1405
  %v2486 = vpack.c.b16 %v1410, %v1406
  %v2487 = vpack.c.b16 %v1411, %v1407
  %v2488 = vpack.c.b16 %v1416, %v1412
  %v2489 = vpack.c.b16 %v1417, %v1413
  %v2490 = vpack.c.b16 %v1418, %v1414
  %v2491 = vpack.c.b16 %v1419, %v1415
  %v2492 = vpack.c.b16 %v1424, %v1420
  %v2493 = vpack.c.b16 %v1425, %v1421
  %v2494 = vpack.c.b16 %v1426, %v1422
  %v2495 = vpack.c.b16 %v1427, %v1423
  %v2496 = vpack.c.b16 %v1432, %v1428
  %v2497 = vpack.c.b16 %v1433, %v1429
  %v2498 = vpack.c.b16 %v1434, %v1430
  %v2499 = vpack.c.b16 %v1435, %v1431
  %v2500 = vpack.c.b16 %v1440, %v1436
  %v2501 = vpack.c.b16 %v1441, %v1437
  %v2502 = vpack.c.b16 %v1442, %v1438
  %v2503 = vpack.c.b16 %v1443, %v1439
  %v2504 = vpack.c.b16 %v1448, %v1444
  %v2505 = vpack.c.b16 %v1449, %v1445
  %v2506 = vpack.c.b16 %v1450, %v1446
  %v2507 = vpack.c.b16 %v1451, %v1447
  %v2508 = vpack.c.b16 %v1456, %v1452
  %v2509 = vpack.c.b16 %v1457, %v1453
  %v2510 = vpack.c.b16 %v1458, %v1454
  %v2511 = vpack.c.b16 %v1459, %v1455
  %v2512 = vpack.c.b16 %v1464, %v1460
  %v2513 = vpack.c.b16 %v1465, %v1461
  %v2514 = vpack.c.b16 %v1466, %v1462
  %v2515 = vpack.c.b16 %v1467, %v1463
  %v2516 = vpack.c.b16 %v1472, %v1468
  %v2517 = vpack.c.b16 %v1473, %v1469
  %v2518 = vpack.c.b16 %v1474, %v1470
  %v2519 = vpack.c.b16 %v1475, %v1471
  %v2520 = vpack.c.b16 %v1480, %v1476
  %v2521 = vpack.c.b16 %v1481, %v1477
  %v2522 = vpack.c.b16 %v1482, %v1478
  %v2523 = vpack.c.b16 %v1483, %v1479
  %v2524 = vpack.c.b16 %v1488, %v1484
  %v2525 = vpack.c.b16 %v1489, %v1485
  %v2526 = vpack.c.b16 %v1490, %v1486
  %v2527 = vpack.c.b16 %v1491, %v1487
  %v2528 = vpack.c.b16 %v1496, %v1492
  %v2529 = vpack.c.b16 %v1497, %v1493
  %v2530 = vpack.c.b16 %v1498, %v1494
  %v2531 = vpack.c.b16 %v1499, %v1495
  %v2532 = vpack.c.b16 %v1504, %v1500
  %v2533 = vpack.c.b16 %v1505, %v1501
  %v2534 = vpack.c.b16 %v1506, %v1502
  %v2535 = vpack.c.b16 %v1507, %v1503
  %v2536 = vpack.c.b16 %v1512, %v1508
  %v2537 = vpack.c.b16 %v1513, %v1509
  %v2538 = vpack.c.b16 %v1514, %v1510
  %v2539 = vpack.c.b16 %v1515, %v1511
  %v2540 = vpack.c.b16 %v1520, %v1516
  %v2541 = vpack.c.b16 %v1521, %v1517
  %v2542 = vpack.c.b16 %v1522, %v1518
  %v2543 = vpack.c.b16 %v1523, %v1519
  %v2544 = vpack.c.b16 %v1528, %v1524
  %v2545 = vpack.c.b16 %v1529, %v1525
  %v2546 = vpack.c.b16 %v1530, %v1526
  %v2547 = vpack.c.b16 %v1531, %v1527
  %v2548 = vpack.c.b16 %v1536, %v1532
  %v2549 = vpack.c.b16 %v1537, %v1533
  %v2550 = vpack.c.b16 %v1538, %v1534
  %v2551 = vpack.c.b16 %v1539, %v1535
  %v2552 = vpack.c.b16 %v1544, %v1540
  %v2553 = vpack.c.b16 %v1545, %v1541
  %v2554 = vpack.c.b16 %v1546, %v1542
  %v2555 = vpack.c.b16 %v1547, %v1543
  %v2556 = vpack.c.b16 %v1552, %v1548
  %v2557 = vpack.c.b16 %v1553, %v1549
  %v2558 = vpack.c.b16 %v1554, %v1550
  %v2559 = vpack.c.b16 %v1555, %v1551
  %v2560 = vpack.c.b16 %v1560, %v1556
  %v2561 = vpack.c.b16 %v1561, %v1557
  %v2562 = vpack.c.b16 %v1562, %v1558
  %v2563 = vpack.c.b16 %v1563, %v1559
  %v2564 = vpack.c.b16 %v1568, %v1564
  %v2565 = vpack.c.b16 %v1569, %v1565
  %v2566 = vpack.c.b16 %v1570, %v1566
  %v2567 = vpack.c.b16 %v1571, %v1567
  %v2568 = vpack.c.b16 %v1576, %v1572
  %v2569 = vpack.c.b16 %v1577, %v1573
  %v2570 = vpack.c.b16 %v1578, %v1574
  %v2571 = vpack.c.b16 %v1579, %v1575
  %v2572 = vpack.c.b16 %v1584, %v1580
  %v2573 = vpack.c.b16 %v1585, %v1581
  %v2574 = vpack.c.b16 %v1586, %v1582
  %v2575 = vpack.c.b16 %v1587, %v1583
  %v2576 = vpack.c.b16 %v1592, %v1588
  %v2577 = vpack.c.b16 %v1593, %v1589
  %v2578 = vpack.c.b16 %v1594, %v1590
  %v2579 = vpack.c.b16 %v1595, %v1591
  %v2580 = vpack.c.b16 %v1600, %v1596
  %v2581 = vpack.c.b16 %v1601, %v1597
  %v2582 = vpack.c.b16 %v1602, %v1598
  %v2583 = vpack.c.b16 %v1603, %v1599
  %v2584 = vpack.c.b16 %v1608, %v1604
  %v2585 = vpack.c.b16 %v1609, %v1605
  %v2586 = vpack.c.b16 %v1610, %v1606
  %v2587 = vpack.c.b16 %v1611, %v1607
  %v2588 = vpack.c.b16 %v1616, %v1612
  %v2589 = vpack.c.b16 %v1617, %v1613
  %v2590 = vpack.c.b16 %v1618, %v1614
  %v2591 = vpack.c.b16 %v1619, %v1615
  %v2592 = vpack.c.b16 %v1624, %v1620
  %v2593 = vpack.c.b16 %v1625, %v1621
  %v2594 = vpack.c.b16 %v1626, %v1622
  %v2595 = vpack.c.b16 %v1627, %v1623
  %v2596 = vpack.c.b16 %v1632, %v1628
  %v2597 = vpack.c.b16 %v1633, %v1629
  %v2598 = vpack.c.b16 %v1634, %v1630
  %v2599 = vpack.c.b16 %v1635, %v1631
  %v2600 = vpack.c.b16 %v1640, %v1636
  %v2601 = vpack.c.b16 %v1641, %v1637
  %v2602 = vpack.c.b16 %v1642, %v1638
  %v2603 = vpack.c.b16 %v1643, %v1639
  %v2604 = vpack.c.b16 %v1648, %v1644
  %v2605 = vpack.c.b16 %v1649, %v1645
  %v2606 = vpack.c.b16 %v1650, %v1646
  %v2607 = vpack.c.b16 %v1651, %v1647
  %v2608 = vpack.c.b16 %v1656, %v1652
  %v2609 = vpack.c.b16 %v1657, %v1653
  %v2610 = vpack.c.b16 %v1658, %v1654
  %v2611 = vpack.c.b16 %v1659, %v1655
  %v2612 = vpack.c.b16 %v1664, %v1660
  %v2613 = vpack.c.b16 %v1665, %v1661
  %v2614 = vpack.c.b16 %v1666, %v1662
  %v2615 = vpack.c.b16 %v1667, %v1663
  %v2616 = vpack.c.b16 %v1672, %v1668
  %v2617 = vpack.c.b16 %v1673, %v1669
  %v2618 = vpack.c.b16 %v1674, %v1670
  %v2619 = vpack.c.b16 %v1675, %v1671
  %v2620 = vpack.c.b16 %v1680, %v1676
  %v2621 = vpack.c.b16 %v1681, %v1677
  %v2622 = vpack.c.b16 %v1682, %v1678
  %v2623 = vpack.c.b16 %v1683, %v1679
  %v2624 = vpack.c.b16 %v1688, %v1684
  %v2625 = vpack.c.b16 %v1689, %v1685
  %v2626 = vpack.c.b16 %v1690, %v1686
  %v2627 = vpack.c.b16 %v1691, %v1687
  %v2628 = vpack.c.b16 %v1696, %v1692
  %v2629 = vpack.c.b16 %v1697, %v1693
  %v2630 = vpack.c.b16 %v1698, %v1694
  %v2631 = vpack.c.b16 %v1699, %v1695
  %v2632 = vpack.c.b16 %v1704, %v1700
  %v2633 = vpack.c.b16 %v1705, %v1701
  %v2634 = vpack.c.b16 %v1706, %v1702
  %v2635 = vpack.c.b16 %v1707, %v1703
  %v2636 = vpack.c.b16 %v1712, %v1708
  %v2637 = vpack.c.b16 %v1713, %v1709
  %v2638 = vpack.c.b16 %v1714, %v1710
  %v2639 = vpack.c.b16 %v1715, %v1711
  %v2640 = vpack.c.b16 %v1720, %v1716
  %v2641 = vpack.c.b16 %v1721, %v1717
  %v2642 = vpack.c.b16 %v1722, %v1718
  %v2643 = vpack.c.b16 %v1723, %v1719
  %v2644 = vpack.c.b16 %v1728, %v1724
  %v2645 = vpack.c.b16 %v1729, %v1725
  %v2646 = vpack.c.b16 %v1730, %v1726
  %v2647 = vpack.c.b16 %v1731, %v1727
  %v2648 = vpack.c.b16 %v1736, %v1732
  %v2649 = vpack.c.b16 %v1737, %v1733
  %v2650 = vpack.c.b16 %v1738, %v1734
  %v2651 = vpack.c.b16 %v1739, %v1735
  %v2652 = vpack.c.b16 %v1744, %v1740
  %v2653 = vpack.c.b16 %v1745, %v1741
  %v2654 = vpack.c.b16 %v1746, %v1742
  %v2655 = vpack.c.b16 %v1747, %v1743
  %v2656 = vpack.c.b16 %v1752, %v1748
  %v2657 = vpack.c.b16 %v1753, %v1749
  %v2658 = vpack.c.b16 %v1754, %v1750
  %v2659 = vpack.c.b16 %v1755, %v1751
  %v2660 = vpack.c.b16 %v1760, %v1756
  %v2661 = vpack.c.b16 %v1761, %v1757
  %v2662 = vpack.c.b16 %v1762, %v1758
  %v2663 = vpack.c.b16 %v1763, %v1759
  %v2664 = vpack.c.b16 %v1768, %v1764
  %v2665 = vpack.c.b16 %v1769, %v1765
  %v2666 = vpack.c.b16 %v1770, %v1766
  %v2667 = vpack.c.b16 %v1771, %v1767
  %v2668 = vpack.c.b16 %v1776, %v1772
  %v2669 = vpack.c.b16 %v1777, %v1773
  %v2670 = vpack.c.b16 %v1778, %v1774
  %v2671 = vpack.c.b16 %v1779, %v1775
  %v2672 = vpack.c.b16 %v1784, %v1780
  %v2673 = vpack.c.b16 %v1785, %v1781
  %v2674 = vpack.c.b16 %v1786, %v1782
  %v2675 = vpack.c.b16 %v1787, %v1783
  %v2676 = vpack.c.b16 %v1792, %v1788
  %v2677 = vpack.c.b16 %v1793, %v1789
  %v2678 = vpack.c.b16 %v1794, %v1790
  %v2679 = vpack.c.b16 %v1795, %v1791
  %v2680 = vpack.c.b16 %v1800, %v1796
  %v2681 = vpack.c.b16 %v1801, %v1797
  %v2682 = vpack.c.b16 %v1802, %v1798
  %v2683 = vpack.c.b16 %v1803, %v1799
  %v2684 = vpack.c.b16 %v1808, %v1804
  %v2685 = vpack.c.b16 %v1809, %v1805
  %v2686 = vpack.c.b16 %v1810, %v1806
  %v2687 = vpack.c.b16 %v1811, %v1807
  %v2688 = vpack.c.b16 %v1816, %v1812
  %v2689 = vpack.c.b16 %v1817, %v1813
  %v2690 = vpack.c.b16 %v1818, %v1814
  %v2691 = vpack.c.b16 %v1819, %v1815
  %v2692 = vpack.c.b16 %v1824, %v1820
  %v2693 = vpack.c.b16 %v1825, %v1821
  %v2694 = vpack.c.b16 %v1826, %v1822
  %v2695 = vpack.c.b16 %v1827, %v1823
  %v2696 = vpack.c.b16 %v1832, %v1828
  %v2697 = vpack.c.b16 %v1833, %v1829
  %v2698 = vpack.c.b16 %v1834, %v1830
  %v2699 = vpack.c.b16 %v1835, %v1831
  %v2700 = vpack.c.b16 %v1840, %v1836
  %v2701 = vpack.c.b16 %v1841, %v1837
  %v2702 = vpack.c.b16 %v1842, %v1838
  %v2703 = vpack.c.b16 %v1843, %v1839
  %v2704 = vpack.c.b16 %v1848, %v1844
  %v2705 = vpack.c.b16 %v1849, %v1845
  %v2706 = vpack.c.b16 %v1850, %v1846
  %v2707 = vpack.c.b16 %v1851, %v1847
  %v2708 = vpack.c.b16 %v1856, %v1852
  %v2709 = vpack.c.b16 %v1857, %v1853
  %v2710 = vpack.c.b16 %v1858, %v1854
  %v2711 = vpack.c.b16 %v1859, %v1855
  %v2712 = vpack.c.b16 %v1864, %v1860
  %v2713 = vpack.c.b16 %v1865, %v1861
  %v2714 = vpack.c.b16 %v1866, %v1862
  %v2715 = vpack.c.b16 %v1867, %v1863
  %v2716 = vpack.c.b16 %v1872, %v1868
  %v2717 = vpack.c.b16 %v1873, %v1869
  %v2718 = vpack.c.b16 %v1874, %v1870
  %v2719 = vpack.c.b16 %v1875, %v1871
  %v2720 = vpack.c.b16 %v1880, %v1876
  %v2721 = vpack.c.b16 %v1881, %v1877
  %v2722 = vpack.c.b16 %v1882, %v1878
  %v2723 = vpack.c.b16 %v1883, %v1879
  %v2724 = vpack.c.b16 %v1888, %v1884
  %v2725 = vpack.c.b16 %v1889, %v1885
  %v2726 = vpack.c.b16 %v1890, %v1886
  %v2727 = vpack.c.b16 %v1891, %v1887
  %v2728 = vpack.c.b16 %v1896, %v1892
  %v2729 = vpack.c.b16 %v1897, %v1893
  %v2730 = vpack.c.b16 %v1898, %v1894
  %v2731 = vpack.c.b16 %v1899, %v1895
  %v2732 = vpack.c.b16 %v1904, %v1900
  %v2733 = vpack.c.b16 %v1905, %v1901
  %v2734 = vpack.c.b16 %v1906, %v1902
  %v2735 = vpack.c.b16 %v1907, %v1903
  %v2736 = vpack.c.b16 %v1912, %v1908
  %v2737 = vpack.c.b16 %v1913, %v1909
  %v2738 = vpack.c.b16 %v1914, %v1910
  %v2739 = vpack.c.b16 %v1915, %v1911
  %v2740 = vpack.c.b16 %v1920, %v1916
  %v2741 = vpack.c.b16 %v1921, %v1917
  %v2742 = vpack.c.b16 %v1922, %v1918
  %v2743 = vpack.c.b16 %v1923, %v1919
  %v2744 = vpack.c.b16 %v1928, %v1924
  %v2745 = vpack.c.b16 %v1929, %v1925
  %v2746 = vpack.c.b16 %v1930, %v1926
  %v2747 = vpack.c.b16 %v1931, %v1927
  %v2748 = vpack.c.b16 %v1936, %v1932
  %v2749 = vpack.c.b16 %v1937, %v1933
  %v2750 = vpack.c.b16 %v1938, %v1934
  %v2751 = vpack.c.b16 %v1939, %v1935
  %v2752 = vpack.c.b16 %v1944, %v1940
  %v2753 = vpack.c.b16 %v1945, %v1941
  %v2754 = vpack.c.b16 %v1946, %v1942
  %v2755 = vpack.c.b16 %v1947, %v1943
  %v2756 = vpack.c.b16 %v1952, %v1948
  %v2757 = vpack.c.b16 %v1953, %v1949
  %v2758 = vpack.c.b16 %v1954, %v1950
  %v2759 = vpack.c.b16 %v1955, %v1951
  %v2760 = vpack.c.b16 %v1960, %v1956
  %v2761 = vpack.c.b16 %v1961, %v1957
  %v2762 = vpack.c.b16 %v1962, %v1958
  %v2763 = vpack.c.b16 %v1963, %v1959
  %v2764 = vpack.c.b16 %v1968, %v1964
  %v2765 = vpack.c.b16 %v1969, %v1965
  %v2766 = vpack.c.b16 %v1970, %v1966
  %v2767 = vpack.c.b16 %v1971, %v1967
  %v2768 = vpack.c.b16 %v1976, %v1972
  %v2769 = vpack.c.b16 %v1977, %v1973
  %v2770 = vpack.c.b16 %v1978, %v1974
  %v2771 = vpack.c.b16 %v1979, %v1975
  %v2772 = vpack.c.b16 %v1984, %v1980
  %v2773 = vpack.c.b16 %v1985, %v1981
  %v2774 = vpack.c.b16 %v1986, %v1982
  %v2775 = vpack.c.b16 %v1987, %v1983
  %v2776 = vpack.c.b16 %v1992, %v1988
  %v2777 = vpack.c.b16 %v1993, %v1989
  %v2778 = vpack.c.b16 %v1994, %v1990
  %v2779 = vpack.c.b16 %v1995, %v1991
  %v2780 = vpack.c.b16 %v2000, %v1996
  %v2781 = vpack.c.b16 %v2001, %v1997
  %v2782 = vpack.c.b16 %v2002, %v1998
  %v2783 = vpack.c.b16 %v2003, %v1999
  %v2784 = vpack.c.b16 %v2008, %v2004
  %v2785 = vpack.c.b16 %v2009, %v2005
  %v2786 = vpack.c.b16 %v2010, %v2006
  %v2787 = vpack.c.b16 %v2011, %v2007
  %v2788 = vpack.c.b16 %v2016, %v2012
  %v2789 = vpack.c.b16 %v2017, %v2013
  %v2790 = vpack.c.b16 %v2018, %v2014
  %v2791 = vpack.c.b16 %v2019, %v2015
  %v2792 = vpack.c.b16 %v2024, %v2020
  %v2793 = vpack.c.b16 %v2025, %v2021
  %v2794 = vpack.c.b16 %v2026, %v2022
  %v2795 = vpack.c.b16 %v2027, %v2023
  %v2796 = vpack.c.b16 %v2032, %v2028
  %v2797 = vpack.c.b16 %v2033, %v2029
  %v2798 = vpack.c.b16 %v2034, %v2030
  %v2799 = vpack.c.b16 %v2035, %v2031
  %v2800 = vpack.c.b16 %v2040, %v2036
  %v2801 = vpack.c.b16 %v2041, %v2037
  %v2802 = vpack.c.b16 %v2042, %v2038
  %v2803 = vpack.c.b16 %v2043, %v2039
  %v2804 = vpack.c.b16 %v2048, %v2044
  %v2805 = vpack.c.b16 %v2049, %v2045
  %v2806 = vpack.c.b16 %v2050, %v2046
  %v2807 = vpack.c.b16 %v2051, %v2047
  %v2808 = vpack.c.b16 %v2056, %v2052
  %v2809 = vpack.c.b16 %v2057, %v2053
  %v2810 = vpack.c.b16 %v2058, %v2054
  %v2811 = vpack.c.b16 %v2059, %v2055
  %v2812 = vpack.c.b16 %v2064, %v2060
  %v2813 = vpack.c.b16 %v2065, %v2061
  %v2814 = vpack.c.b16 %v2066, %v2062
  %v2815 = vpack.c.b16 %v2067, %v2063
  %v2816 = vpack.c.b16 %v2072, %v2068
  %v2817 = vpack.c.b16 %v2073, %v2069
  %v2818 = vpack.c.b16 %v2074, %v2070
  %v2819 = vpack.c.b16 %v2075, %v2071
  %v2820 = vpack.c.b16 %v2080, %v2076
  %v2821 = vpack.c.b16 %v2081, %v2077
  %v2822 = vpack.c.b16 %v2082, %v2078
  %v2823 = vpack.c.b16 %v2083, %v2079
  %v2824 = vpack.c.b16 %v2088, %v2084
  %v2825 = vpack.c.b16 %v2089, %v2085
  %v2826 = vpack.c.b16 %v2090, %v2086
  %v2827 = vpack.c.b16 %v2091, %v2087
  %v2828 = vpack.c.b16 %v2096, %v2092
  %v2829 = vpack.c.b16 %v2097, %v2093
  %v2830 = vpack.c.b16 %v2098, %v2094
  %v2831 = vpack.c.b16 %v2099, %v2095
  %v2832 = vpack.c.b16 %v2104, %v2100
  %v2833 = vpack.c.b16 %v2105, %v2101
  %v2834 = vpack.c.b16 %v2106, %v2102
  %v2835 = vpack.c.b16 %v2107, %v2103
  %v2836 = vpack.c.b16 %v2112, %v2108
  %v2837 = vpack.c.b16 %v2113, %v2109
  %v2838 = vpack.c.b16 %v2114, %v2110
  %v2839 = vpack.c.b16 %v2115, %v2111
  %v2840 = vpack.c.b16 %v2120, %v2116
  %v2841 = vpack.c.b16 %v2121, %v2117
  %v2842 = vpack.c.b16 %v2122, %v2118
  %v2843 = vpack.c.b16 %v2123, %v2119
  %v2844 = vpack.c.b16 %v2128, %v2124
  %v2845 = vpack.c.b16 %v2129, %v2125
  %v2846 = vpack.c.b16 %v2130, %v2126
  %v2847 = vpack.c.b16 %v2131, %v2127
  %v2848 = vpack.c.b16 %v2136, %v2132
  %v2849 = vpack.c.b16 %v2137, %v2133
  %v2850 = vpack.c.b16 %v2138, %v2134
  %v2851 = vpack.c.b16 %v2139, %v2135
  %v2852 = vpack.c.b16 %v2144, %v2140
  %v2853 = vpack.c.b16 %v2145, %v2141
  %v2854 = vpack.c.b16 %v2146, %v2142
  %v2855 = vpack.c.b16 %v2147, %v2143
  %v2856 = vpack.c.b16 %v2152, %v2148
  %v2857 = vpack.c.b16 %v2153, %v2149
  %v2858 = vpack.c.b16 %v2154, %v2150
  %v2859 = vpack.c.b16 %v2155, %v2151
  %v2860 = vpack.c.b16 %v2160, %v2156
  %v2861 = vpack.c.b16 %v2161, %v2157
  %v2862 = vpack.c.b16 %v2162, %v2158
  %v2863 = vpack.c.b16 %v2163, %v2159
  %v2864 = vpack.c.b16 %v2168, %v2164
  %v2865 = vpack.c.b16 %v2169, %v2165
  %v2866 = vpack.c.b16 %v2170, %v2166
  %v2867 = vpack.c.b16 %v2171, %v2167
  %v2868 = vpack.c.b16 %v2176, %v2172
  %v2869 = vpack.c.b16 %v2177, %v2173
  %v2870 = vpack.c.b16 %v2178, %v2174
  %v2871 = vpack.c.b16 %v2179, %v2175
  %v2872 = vpack.c.b16 %v2184, %v2180
  %v2873 = vpack.c.b16 %v2185, %v2181
  %v2874 = vpack.c.b16 %v2186, %v2182
  %v2875 = vpack.c.b16 %v2187, %v2183
  %v2876 = vpack.c.b16 %v2192, %v2188
  %v2877 = vpack.c.b16 %v2193, %v2189
  %v2878 = vpack.c.b16 %v2194, %v2190
  %v2879 = vpack.c.b16 %v2195, %v2191
  %v2880 = vpack.c.b16 %v2200, %v2196
  %v2881 = vpack.c.b16 %v2201, %v2197
  %v2882 = vpack.c.b16 %v2202, %v2198
  %v2883 = vpack.c.b16 %v2203, %v2199
  %v2884 = vpack.c.b16 %v2208, %v2204
  %v2885 = vpack.c.b16 %v2209, %v2205
  %v2886 = vpack.c.b16 %v2210, %v2206
  %v2887 = vpack.c.b16 %v2211, %v2207
  %v2888 = vpack.c.b16 %v2216, %v2212
  %v2889 = vpack.c.b16 %v2217, %v2213
  %v2890 = vpack.c.b16 %v2218, %v2214
  %v2891 = vpack.c.b16 %v2219, %v2215
  %v2892 = vpack.c.b16 %v2224, %v2220
  %v2893 = vpack.c.b16 %v2225, %v2221
  %v2894 = vpack.c.b16 %v2226, %v2222
  %v2895 = vpack.c.b16 %v2227, %v2223
  %v2896 = vpack.c.b16 %v2232, %v2228
  %v2897 = vpack.c.b16 %v2233, %v2229
  %v2898 = vpack.c.b16 %v2234, %v2230
  %v2899 = vpack.c.b16 %v2235, %v2231
  %v2900 = vpack.c.b16 %v2240, %v2236
  %v2901 = vpack.c.b16 %v2241, %v2237
  %v2902 = vpack.c.b16 %v2242, %v2238
  %v2903 = vpack.c.b16 %v2243, %v2239
  %v2904 = vpack.c.b16 %v2248, %v2244
  %v2905 = vpack.c.b16 %v2249, %v2245
  %v2906 = vpack.c.b16 %v2250, %v2246
  %v2907 = vpack.c.b16 %v2251, %v2247
  %v2908 = vpack.c.b16 %v2256, %v2252
  %v2909 = vpack.c.b16 %v2257, %v2253
  %v2910 = vpack.c.b16 %v2258, %v2254
  %v2911 = vpack.c.b16 %v2259, %v2255
  %v2912 = vpack.c.b16 %v2264, %v2260
  %v2913 = vpack.c.b16 %v2265, %v2261
  %v2914 = vpack.c.b16 %v2266, %v2262
  %v2915 = vpack.c.b16 %v2267, %v2263
  %v2916 = vpack.c.b16 %v2272, %v2268
  %v2917 = vpack.c.b16 %v2273, %v2269
  %v2918 = vpack.c.b16 %v2274, %v2270
  %v2919 = vpack.c.b16 %v2275, %v2271
  %v2920 = vpack.c.b16 %v2280, %v2276
  %v2921 = vpack.c.b16 %v2281, %v2277
  %v2922 = vpack.c.b16 %v2282, %v2278
  %v2923 = vpack.c.b16 %v2283, %v2279
  %v2924 = vpack.c.b16 %v2288, %v2284
  %v2925 = vpack.c.b16 %v2289, %v2285
  %v2926 = vpack.c.b16 %v2290, %v2286
  %v2927 = vpack.c.b16 %v2291, %v2287
  %v2928 = vpack.c.b16 %v2296, %v2292
  %v2929 = vpack.c.b16 %v2297, %v2293
  %v2930 = vpack.c.b16 %v2298, %v2294
  %v2931 = vpack.c.b16 %v2299, %v2295
  %v2932 = vpack.c.b16 %v2304, %v2300
  %v2933 = vpack.c.b16 %v2305, %v2301
  %v2934 = vpack.c.b16 %v2306, %v2302
  %v2935 = vpack.c.b16 %v2307, %v2303
  %v2936 = vpack.c.b16 %v2312, %v2308
  %v2937 = vpack.c.b16 %v2313, %v2309
  %v2938 = vpack.c.b16 %v2314, %v2310
  %v2939 = vpack.c.b16 %v2315, %v2311
  %v2940 = vpack.c.b16 %v2320, %v2316
  %v2941 = vpack.c.b16 %v2321, %v2317
  %v2942 = vpack.c.b16 %v2322, %v2318
  %v2943 = vpack.c.b16 %v2323, %v2319
  %v2944 = vpack.c.b16 %v2328, %v2324
  %v2945 = vpack.c.b16 %v2329, %v2325
  %v2946 = vpack.c.b16 %v2330, %v2326
  %v2947 = vpack.c.b16 %v2331, %v2327
  %v2948 = vpack.c.b16 %v2336, %v2332
  %v2949 = vpack.c.b16 %v2337, %v2333
  %v2950 = vpack.c.b16 %v2338, %v2334
  %v2951 = vpack.c.b16 %v2339, %v2335
  %v2952 = vpack.c.b16 %v2344, %v2340
  %v2953 = vpack.c.b16 %v2345, %v2341
  %v2954 = vpack.c.b16 %v2346, %v2342
  %v2955 = vpack.c.b16 %v2347, %v2343
  %v2956 = vpack.c.b16 %v2352, %v2348
  %v2957 = vpack.c.b16 %v2353, %v2349
  %v2958 = vpack.c.b16 %v2354, %v2350
  %v2959 = vpack.c.b16 %v2355, %v2351
  %v2960 = vpack.c.b16 %v2360, %v2356
  %v2961 = vpack.c.b16 %v2361, %v2357
  %v2962 = vpack.c.b16 %v2362, %v2358
  %v2963 = vpack.c.b16 %v2363, %v2359
  %v2964 = vpack.c.b16 %v2368, %v2364
  %v2965 = vpack.c.b16 %v2369, %v2365
  %v2966 = vpack.c.b16 %v2370, %v2366
  %v2967 = vpack.c.b16 %v2371, %v2367
  %v2968 = vpack.c.b16 %v2376, %v2372
  %v2969 = vpack.c.b16 %v2377, %v2373
  %v2970 = vpack.c.b16 %v2378, %v2374
  %v2971 = vpack.c.b16 %v2379, %v2375
  %v2972 = vpack.c.b16 %v2384, %v2380
  %v2973 = vpack.c.b16 %v2385, %v2381
  %v2974 = vpack.c.b16 %v2386, %v2382
  %v2975 = vpack.c.b16 %v2387, %v2383
  %v2976 = vpack.c.b16 %v2392, %v2388
  %v2977 = vpack.c.b16 %v2393, %v2389
  %v2978 = vpack.c.b16 %v2394, %v2390
  %v2979 = vpack.c.b16 %v2395, %v2391
  %v2980 = vpack.c.b16 %v2400, %v2396
  %v2981 = vpack.c.b16 %v2401, %v2397
  %v2982 = vpack.c.b16 %v2402, %v2398
  %v2983 = vpack.c.b16 %v2403, %v2399
  %v2984 = vpack.c.b16 %v2408, %v2404
  %v2985 = vpack.c.b16 %v2409, %v2405
  %v2986 = vpack.c.b16 %v2410, %v2406
  %v2987 = vpack.c.b16 %v2411, %v2407
  %3564 = vmatprep.subr.bf16.mxu0 %v2441
  %3565 = vmatpush1.bf16.msra.mxu0 %v2440
  %3566 = vmatprep.subr.bf16.mxu0 %v2437
  %3567 = vmatpush1.bf16.msra.mxu0 %v2436
  %3568 = vmatprep.subr.bf16.mxu0 %v2433
  %3569 = vmatpush1.bf16.msra.mxu0 %v2432
  %3570 = vmatprep.subr.bf16.mxu0 %v2429
  %3571 = vmatpush1.bf16.msra.mxu0 %v2428
  %3572 = vmatprep.subr.bf16.mxu0 %v2425
  %3573 = vmatpush1.bf16.msra.mxu0 %v2424
  %3574 = vmatprep.subr.bf16.mxu0 %v2421
  %3575 = vmatpush1.bf16.msra.mxu0 %v2420
  %3576 = vmatprep.subr.bf16.mxu0 %v2417
  %3577 = vmatpush1.bf16.msra.mxu0 %v2416
  %3578 = vmatprep.subr.bf16.mxu0 %v2413
  %3579 = vmatpush1.bf16.msra.mxu0 %v2412
  %3580 = vmatprep.subr.bf16.mxu0 %v2473
  %3581 = vmatpush2.bf16.msra.mxu0 %v2472
  %3582 = vmatprep.subr.bf16.mxu0 %v2469
  %3583 = vmatpush2.bf16.msra.mxu0 %v2468
  %3584 = vmatprep.subr.bf16.mxu0 %v2465
  %3585 = vmatpush2.bf16.msra.mxu0 %v2464
  %3586 = vmatprep.subr.bf16.mxu0 %v2461
  %3587 = vmatpush2.bf16.msra.mxu0 %v2460
  %3588 = vmatprep.subr.bf16.mxu0 %v2457
  %3589 = vmatpush2.bf16.msra.mxu0 %v2456
  %3590 = vmatprep.subr.bf16.mxu0 %v2453
  %3591 = vmatpush2.bf16.msra.mxu0 %v2452
  %3592 = vmatprep.subr.bf16.mxu0 %v2449
  %3593 = vmatpush2.bf16.msra.mxu0 %v2448
  %3594 = vmatprep.subr.bf16.mxu0 %v2445
  %3595 = vmatpush2.bf16.msra.mxu0 %v2444
  %3596 = vmatprep.mubr.bf16.mxu0 %v649
  %3597 = vmatmul.mubr.bf16.gmra.mxu0 %v648
  %v3598 = vpop.f32.mrf.mxu0
  %v3599 = vadd.f32 %v604, %v3598
  %v3600 = vpop.f32.mrf.mxu0
  %v3601 = vadd.f32 %v608, %v3600
  %v3602 = vpop.f32.mrf.mxu0
  %v3603 = vpop.f32.mrf.mxu0
  %3604 = vdwg.mxu0
  %3605 = vmatprep.subr.bf16.mxu0 %v2505
  %3606 = vmatpush1.bf16.msra.mxu0 %v2504
  %3607 = vmatprep.subr.bf16.mxu0 %v2501
  %3608 = vmatpush1.bf16.msra.mxu0 %v2500
  %3609 = vmatprep.subr.bf16.mxu0 %v2497
  %3610 = vmatpush1.bf16.msra.mxu0 %v2496
  %3611 = vmatprep.subr.bf16.mxu0 %v2493
  %3612 = vmatpush1.bf16.msra.mxu0 %v2492
  %3613 = vmatprep.subr.bf16.mxu0 %v2489
  %3614 = vmatpush1.bf16.msra.mxu0 %v2488
  %3615 = vmatprep.subr.bf16.mxu0 %v2485
  %3616 = vmatpush1.bf16.msra.mxu0 %v2484
  %3617 = vmatprep.subr.bf16.mxu0 %v2481
  %3618 = vmatpush1.bf16.msra.mxu0 %v2480
  %3619 = vmatprep.subr.bf16.mxu0 %v2477
  %3620 = vmatpush1.bf16.msra.mxu0 %v2476
  %3621 = vmatprep.subr.bf16.mxu0 %v2537
  %3622 = vmatpush2.bf16.msra.mxu0 %v2536
  %3623 = vmatprep.subr.bf16.mxu0 %v2533
  %3624 = vmatpush2.bf16.msra.mxu0 %v2532
  %3625 = vmatprep.subr.bf16.mxu0 %v2529
  %3626 = vmatpush2.bf16.msra.mxu0 %v2528
  %3627 = vmatprep.subr.bf16.mxu0 %v2525
  %3628 = vmatpush2.bf16.msra.mxu0 %v2524
  %3629 = vmatprep.subr.bf16.mxu0 %v2521
  %3630 = vmatpush2.bf16.msra.mxu0 %v2520
  %3631 = vmatprep.subr.bf16.mxu0 %v2517
  %3632 = vmatpush2.bf16.msra.mxu0 %v2516
  %3633 = vmatprep.subr.bf16.mxu0 %v2513
  %3634 = vmatpush2.bf16.msra.mxu0 %v2512
  %3635 = vmatprep.subr.bf16.mxu0 %v2509
  %3636 = vmatpush2.bf16.msra.mxu0 %v2508
  %3637 = vmatprep.mubr.bf16.mxu0 %v651
  %3638 = vmatmul.mubr.bf16.gmra.mxu0 %v650
  %v3639 = vpop.f32.mrf.mxu0
  %v3640 = vadd.f32 %v3599, %v3639
  %v3641 = vpop.f32.mrf.mxu0
  %v3642 = vadd.f32 %v3601, %v3641
  %v3643 = vpop.f32.mrf.mxu0
  %v3644 = vpop.f32.mrf.mxu0
  %3645 = vdwg.mxu0
  %3646 = vmatprep.subr.bf16.mxu0 %v2569
  %3647 = vmatpush1.bf16.msra.mxu0 %v2568
  %3648 = vmatprep.subr.bf16.mxu0 %v2565
  %3649 = vmatpush1.bf16.msra.mxu0 %v2564
  %3650 = vmatprep.subr.bf16.mxu0 %v2561
  %3651 = vmatpush1.bf16.msra.mxu0 %v2560
  %3652 = vmatprep.subr.bf16.mxu0 %v2557
  %3653 = vmatpush1.bf16.msra.mxu0 %v2556
  %3654 = vmatprep.subr.bf16.mxu0 %v2553
  %3655 = vmatpush1.bf16.msra.mxu0 %v2552
  %3656 = vmatprep.subr.bf16.mxu0 %v2549
  %3657 = vmatpush1.bf16.msra.mxu0 %v2548
  %3658 = vmatprep.subr.bf16.mxu0 %v2545
  %3659 = vmatpush1.bf16.msra.mxu0 %v2544
  %3660 = vmatprep.subr.bf16.mxu0 %v2541
  %3661 = vmatpush1.bf16.msra.mxu0 %v2540
  %3662 = vmatprep.subr.bf16.mxu0 %v2601
  %3663 = vmatpush2.bf16.msra.mxu0 %v2600
  %3664 = vmatprep.subr.bf16.mxu0 %v2597
  %3665 = vmatpush2.bf16.msra.mxu0 %v2596
  %3666 = vmatprep.subr.bf16.mxu0 %v2593
  %3667 = vmatpush2.bf16.msra.mxu0 %v2592
  %3668 = vmatprep.subr.bf16.mxu0 %v2589
  %3669 = vmatpush2.bf16.msra.mxu0 %v2588
  %3670 = vmatprep.subr.bf16.mxu0 %v2585
  %3671 = vmatpush2.bf16.msra.mxu0 %v2584
  %3672 = vmatprep.subr.bf16.mxu0 %v2581
  %3673 = vmatpush2.bf16.msra.mxu0 %v2580
  %3674 = vmatprep.subr.bf16.mxu0 %v2577
  %3675 = vmatpush2.bf16.msra.mxu0 %v2576
  %3676 = vmatprep.subr.bf16.mxu0 %v2573
  %3677 = vmatpush2.bf16.msra.mxu0 %v2572
  %3678 = vmatprep.mubr.bf16.mxu0 %v653
  %3679 = vmatmul.mubr.bf16.gmra.mxu0 %v652
  %v3680 = vpop.f32.mrf.mxu0
  %v3681 = vadd.f32 %v3640, %v3680
  %v3682 = vpop.f32.mrf.mxu0
  %v3683 = vadd.f32 %v3642, %v3682
  %v3684 = vpop.f32.mrf.mxu0
  %v3685 = vpop.f32.mrf.mxu0
  %3686 = vdwg.mxu0
  %3687 = vmatprep.subr.bf16.mxu0 %v2633
  %3688 = vmatpush1.bf16.msra.mxu0 %v2632
  %3689 = vmatprep.subr.bf16.mxu0 %v2629
  %3690 = vmatpush1.bf16.msra.mxu0 %v2628
  %3691 = vmatprep.subr.bf16.mxu0 %v2625
  %3692 = vmatpush1.bf16.msra.mxu0 %v2624
  %3693 = vmatprep.subr.bf16.mxu0 %v2621
  %3694 = vmatpush1.bf16.msra.mxu0 %v2620
  %3695 = vmatprep.subr.bf16.mxu0 %v2617
  %3696 = vmatpush1.bf16.msra.mxu0 %v2616
  %3697 = vmatprep.subr.bf16.mxu0 %v2613
  %3698 = vmatpush1.bf16.msra.mxu0 %v2612
  %3699 = vmatprep.subr.bf16.mxu0 %v2609
  %3700 = vmatpush1.bf16.msra.mxu0 %v2608
  %3701 = vmatprep.subr.bf16.mxu0 %v2605
  %3702 = vmatpush1.bf16.msra.mxu0 %v2604
  %3703 = vmatprep.subr.bf16.mxu0 %v2665
  %3704 = vmatpush2.bf16.msra.mxu0 %v2664
  %3705 = vmatprep.subr.bf16.mxu0 %v2661
  %3706 = vmatpush2.bf16.msra.mxu0 %v2660
  %3707 = vmatprep.subr.bf16.mxu0 %v2657
  %3708 = vmatpush2.bf16.msra.mxu0 %v2656
  %3709 = vmatprep.subr.bf16.mxu0 %v2653
  %3710 = vmatpush2.bf16.msra.mxu0 %v2652
  %3711 = vmatprep.subr.bf16.mxu0 %v2649
  %3712 = vmatpush2.bf16.msra.mxu0 %v2648
  %3713 = vmatprep.subr.bf16.mxu0 %v2645
  %3714 = vmatpush2.bf16.msra.mxu0 %v2644
  %3715 = vmatprep.subr.bf16.mxu0 %v2641
  %3716 = vmatpush2.bf16.msra.mxu0 %v2640
  %3717 = vmatprep.subr.bf16.mxu0 %v2637
  %3718 = vmatpush2.bf16.msra.mxu0 %v2636
  %3719 = vmatprep.mubr.bf16.mxu0 %v655
  %3720 = vmatmul.mubr.bf16.gmra.mxu0 %v654
  %v3721 = vpop.f32.mrf.mxu0
  %v3722 = vadd.f32 %v3681, %v3721
  %v3723 = vpop.f32.mrf.mxu0
  %v3724 = vadd.f32 %v3683, %v3723
  %v3725 = vpop.f32.mrf.mxu0
  %v3726 = vpop.f32.mrf.mxu0
  %3727 = vdwg.mxu0
  %3728 = vmatprep.subr.bf16.mxu0 %v2697
  %3729 = vmatpush1.bf16.msra.mxu0 %v2696
  %3730 = vmatprep.subr.bf16.mxu0 %v2693
  %3731 = vmatpush1.bf16.msra.mxu0 %v2692
  %3732 = vmatprep.subr.bf16.mxu0 %v2689
  %3733 = vmatpush1.bf16.msra.mxu0 %v2688
  %3734 = vmatprep.subr.bf16.mxu0 %v2685
  %3735 = vmatpush1.bf16.msra.mxu0 %v2684
  %3736 = vmatprep.subr.bf16.mxu0 %v2681
  %3737 = vmatpush1.bf16.msra.mxu0 %v2680
  %3738 = vmatprep.subr.bf16.mxu0 %v2677
  %3739 = vmatpush1.bf16.msra.mxu0 %v2676
  %3740 = vmatprep.subr.bf16.mxu0 %v2673
  %3741 = vmatpush1.bf16.msra.mxu0 %v2672
  %3742 = vmatprep.subr.bf16.mxu0 %v2669
  %3743 = vmatpush1.bf16.msra.mxu0 %v2668
  %3744 = vmatprep.subr.bf16.mxu0 %v2729
  %3745 = vmatpush2.bf16.msra.mxu0 %v2728
  %3746 = vmatprep.subr.bf16.mxu0 %v2725
  %3747 = vmatpush2.bf16.msra.mxu0 %v2724
  %3748 = vmatprep.subr.bf16.mxu0 %v2721
  %3749 = vmatpush2.bf16.msra.mxu0 %v2720
  %3750 = vmatprep.subr.bf16.mxu0 %v2717
  %3751 = vmatpush2.bf16.msra.mxu0 %v2716
  %3752 = vmatprep.subr.bf16.mxu0 %v2713
  %3753 = vmatpush2.bf16.msra.mxu0 %v2712
  %3754 = vmatprep.subr.bf16.mxu0 %v2709
  %3755 = vmatpush2.bf16.msra.mxu0 %v2708
  %3756 = vmatprep.subr.bf16.mxu0 %v2705
  %3757 = vmatpush2.bf16.msra.mxu0 %v2704
  %3758 = vmatprep.subr.bf16.mxu0 %v2701
  %3759 = vmatpush2.bf16.msra.mxu0 %v2700
  %3760 = vmatprep.mubr.bf16.mxu0 %v657
  %3761 = vmatmul.mubr.bf16.gmra.mxu0 %v656
  %v3762 = vpop.f32.mrf.mxu0
  %v3763 = vadd.f32 %v3722, %v3762
  %v3764 = vpop.f32.mrf.mxu0
  %v3765 = vadd.f32 %v3724, %v3764
  %v3766 = vpop.f32.mrf.mxu0
  %v3767 = vpop.f32.mrf.mxu0
  %3768 = vdwg.mxu0
  %3769 = vmatprep.subr.bf16.mxu0 %v2761
  %3770 = vmatpush1.bf16.msra.mxu0 %v2760
  %3771 = vmatprep.subr.bf16.mxu0 %v2757
  %3772 = vmatpush1.bf16.msra.mxu0 %v2756
  %3773 = vmatprep.subr.bf16.mxu0 %v2753
  %3774 = vmatpush1.bf16.msra.mxu0 %v2752
  %3775 = vmatprep.subr.bf16.mxu0 %v2749
  %3776 = vmatpush1.bf16.msra.mxu0 %v2748
  %3777 = vmatprep.subr.bf16.mxu0 %v2745
  %3778 = vmatpush1.bf16.msra.mxu0 %v2744
  %3779 = vmatprep.subr.bf16.mxu0 %v2741
  %3780 = vmatpush1.bf16.msra.mxu0 %v2740
  %3781 = vmatprep.subr.bf16.mxu0 %v2737
  %3782 = vmatpush1.bf16.msra.mxu0 %v2736
  %3783 = vmatprep.subr.bf16.mxu0 %v2733
  %3784 = vmatpush1.bf16.msra.mxu0 %v2732
  %3785 = vmatprep.subr.bf16.mxu0 %v2793
  %3786 = vmatpush2.bf16.msra.mxu0 %v2792
  %3787 = vmatprep.subr.bf16.mxu0 %v2789
  %3788 = vmatpush2.bf16.msra.mxu0 %v2788
  %3789 = vmatprep.subr.bf16.mxu0 %v2785
  %3790 = vmatpush2.bf16.msra.mxu0 %v2784
  %3791 = vmatprep.subr.bf16.mxu0 %v2781
  %3792 = vmatpush2.bf16.msra.mxu0 %v2780
  %3793 = vmatprep.subr.bf16.mxu0 %v2777
  %3794 = vmatpush2.bf16.msra.mxu0 %v2776
  %3795 = vmatprep.subr.bf16.mxu0 %v2773
  %3796 = vmatpush2.bf16.msra.mxu0 %v2772
  %3797 = vmatprep.subr.bf16.mxu0 %v2769
  %3798 = vmatpush2.bf16.msra.mxu0 %v2768
  %3799 = vmatprep.subr.bf16.mxu0 %v2765
  %3800 = vmatpush2.bf16.msra.mxu0 %v2764
  %3801 = vmatprep.mubr.bf16.mxu0 %v659
  %3802 = vmatmul.mubr.bf16.gmra.mxu0 %v658
  %v3803 = vpop.f32.mrf.mxu0
  %v3804 = vadd.f32 %v3763, %v3803
  %v3805 = vpop.f32.mrf.mxu0
  %v3806 = vadd.f32 %v3765, %v3805
  %v3807 = vpop.f32.mrf.mxu0
  %v3808 = vpop.f32.mrf.mxu0
  %3809 = vdwg.mxu0
  %3810 = vmatprep.subr.bf16.mxu0 %v2825
  %3811 = vmatpush1.bf16.msra.mxu0 %v2824
  %3812 = vmatprep.subr.bf16.mxu0 %v2821
  %3813 = vmatpush1.bf16.msra.mxu0 %v2820
  %3814 = vmatprep.subr.bf16.mxu0 %v2817
  %3815 = vmatpush1.bf16.msra.mxu0 %v2816
  %3816 = vmatprep.subr.bf16.mxu0 %v2813
  %3817 = vmatpush1.bf16.msra.mxu0 %v2812
  %3818 = vmatprep.subr.bf16.mxu0 %v2809
  %3819 = vmatpush1.bf16.msra.mxu0 %v2808
  %3820 = vmatprep.subr.bf16.mxu0 %v2805
  %3821 = vmatpush1.bf16.msra.mxu0 %v2804
  %3822 = vmatprep.subr.bf16.mxu0 %v2801
  %3823 = vmatpush1.bf16.msra.mxu0 %v2800
  %3824 = vmatprep.subr.bf16.mxu0 %v2797
  %3825 = vmatpush1.bf16.msra.mxu0 %v2796
  %3826 = vmatprep.subr.bf16.mxu0 %v2857
  %3827 = vmatpush2.bf16.msra.mxu0 %v2856
  %3828 = vmatprep.subr.bf16.mxu0 %v2853
  %3829 = vmatpush2.bf16.msra.mxu0 %v2852
  %3830 = vmatprep.subr.bf16.mxu0 %v2849
  %3831 = vmatpush2.bf16.msra.mxu0 %v2848
  %3832 = vmatprep.subr.bf16.mxu0 %v2845
  %3833 = vmatpush2.bf16.msra.mxu0 %v2844
  %3834 = vmatprep.subr.bf16.mxu0 %v2841
  %3835 = vmatpush2.bf16.msra.mxu0 %v2840
  %3836 = vmatprep.subr.bf16.mxu0 %v2837
  %3837 = vmatpush2.bf16.msra.mxu0 %v2836
  %3838 = vmatprep.subr.bf16.mxu0 %v2833
  %3839 = vmatpush2.bf16.msra.mxu0 %v2832
  %3840 = vmatprep.subr.bf16.mxu0 %v2829
  %3841 = vmatpush2.bf16.msra.mxu0 %v2828
  %3842 = vmatprep.mubr.bf16.mxu0 %v661
  %3843 = vmatmul.mubr.bf16.gmra.mxu0 %v660
  %v3844 = vpop.f32.mrf.mxu0
  %v3845 = vadd.f32 %v3804, %v3844
  %v3846 = vpop.f32.mrf.mxu0
  %v3847 = vadd.f32 %v3806, %v3846
  %v3848 = vpop.f32.mrf.mxu0
  %v3849 = vpop.f32.mrf.mxu0
  %3850 = vdwg.mxu0
  %3851 = vmatprep.subr.bf16.mxu0 %v2889
  %3852 = vmatpush1.bf16.msra.mxu0 %v2888
  %3853 = vmatprep.subr.bf16.mxu0 %v2885
  %3854 = vmatpush1.bf16.msra.mxu0 %v2884
  %3855 = vmatprep.subr.bf16.mxu0 %v2881
  %3856 = vmatpush1.bf16.msra.mxu0 %v2880
  %3857 = vmatprep.subr.bf16.mxu0 %v2877
  %3858 = vmatpush1.bf16.msra.mxu0 %v2876
  %3859 = vmatprep.subr.bf16.mxu0 %v2873
  %3860 = vmatpush1.bf16.msra.mxu0 %v2872
  %3861 = vmatprep.subr.bf16.mxu0 %v2869
  %3862 = vmatpush1.bf16.msra.mxu0 %v2868
  %3863 = vmatprep.subr.bf16.mxu0 %v2865
  %3864 = vmatpush1.bf16.msra.mxu0 %v2864
  %3865 = vmatprep.subr.bf16.mxu0 %v2861
  %3866 = vmatpush1.bf16.msra.mxu0 %v2860
  %3867 = vmatprep.subr.bf16.mxu0 %v2921
  %3868 = vmatpush2.bf16.msra.mxu0 %v2920
  %3869 = vmatprep.subr.bf16.mxu0 %v2917
  %3870 = vmatpush2.bf16.msra.mxu0 %v2916
  %3871 = vmatprep.subr.bf16.mxu0 %v2913
  %3872 = vmatpush2.bf16.msra.mxu0 %v2912
  %3873 = vmatprep.subr.bf16.mxu0 %v2909
  %3874 = vmatpush2.bf16.msra.mxu0 %v2908
  %3875 = vmatprep.subr.bf16.mxu0 %v2905
  %3876 = vmatpush2.bf16.msra.mxu0 %v2904
  %3877 = vmatprep.subr.bf16.mxu0 %v2901
  %3878 = vmatpush2.bf16.msra.mxu0 %v2900
  %3879 = vmatprep.subr.bf16.mxu0 %v2897
  %3880 = vmatpush2.bf16.msra.mxu0 %v2896
  %3881 = vmatprep.subr.bf16.mxu0 %v2893
  %3882 = vmatpush2.bf16.msra.mxu0 %v2892
  %3883 = vmatprep.mubr.bf16.mxu0 %v663
  %3884 = vmatmul.mubr.bf16.gmra.mxu0 %v662
  %v3885 = vpop.f32.mrf.mxu0
  %v3886 = vadd.f32 %v3845, %v3885
  %v3887 = vpop.f32.mrf.mxu0
  %v3888 = vadd.f32 %v3847, %v3887
  %v3889 = vpop.f32.mrf.mxu0
  %v3890 = vpop.f32.mrf.mxu0
  %3891 = vdwg.mxu0
  %3892 = vmatprep.subr.bf16.mxu0 %v2953
  %3893 = vmatpush1.bf16.msra.mxu0 %v2952
  %3894 = vmatprep.subr.bf16.mxu0 %v2949
  %3895 = vmatpush1.bf16.msra.mxu0 %v2948
  %3896 = vmatprep.subr.bf16.mxu0 %v2945
  %3897 = vmatpush1.bf16.msra.mxu0 %v2944
  %3898 = vmatprep.subr.bf16.mxu0 %v2941
  %3899 = vmatpush1.bf16.msra.mxu0 %v2940
  %3900 = vmatprep.subr.bf16.mxu0 %v2937
  %3901 = vmatpush1.bf16.msra.mxu0 %v2936
  %3902 = vmatprep.subr.bf16.mxu0 %v2933
  %3903 = vmatpush1.bf16.msra.mxu0 %v2932
  %3904 = vmatprep.subr.bf16.mxu0 %v2929
  %3905 = vmatpush1.bf16.msra.mxu0 %v2928
  %3906 = vmatprep.subr.bf16.mxu0 %v2925
  %3907 = vmatpush1.bf16.msra.mxu0 %v2924
  %3908 = vmatprep.subr.bf16.mxu0 %v2985
  %3909 = vmatpush2.bf16.msra.mxu0 %v2984
  %3910 = vmatprep.subr.bf16.mxu0 %v2981
  %3911 = vmatpush2.bf16.msra.mxu0 %v2980
  %3912 = vmatprep.subr.bf16.mxu0 %v2977
  %3913 = vmatpush2.bf16.msra.mxu0 %v2976
  %3914 = vmatprep.subr.bf16.mxu0 %v2973
  %3915 = vmatpush2.bf16.msra.mxu0 %v2972
  %3916 = vmatprep.subr.bf16.mxu0 %v2969
  %3917 = vmatpush2.bf16.msra.mxu0 %v2968
  %3918 = vmatprep.subr.bf16.mxu0 %v2965
  %3919 = vmatpush2.bf16.msra.mxu0 %v2964
  %3920 = vmatprep.subr.bf16.mxu0 %v2961
  %3921 = vmatpush2.bf16.msra.mxu0 %v2960
  %3922 = vmatprep.subr.bf16.mxu0 %v2957
  %3923 = vmatpush2.bf16.msra.mxu0 %v2956
  %3924 = vmatprep.mubr.bf16.mxu0 %v665
  %3925 = vmatmul.mubr.bf16.gmra.mxu0 %v664
  %v3926 = vpop.f32.mrf.mxu0
  %v3927 = vadd.f32 %v3886, %v3926
  %v3928 = vpop.f32.mrf.mxu0
  %v3929 = vadd.f32 %v3888, %v3928
  %v3930 = vpop.f32.mrf.mxu0
  %v3931 = vpop.f32.mrf.mxu0
  %3932 = vdwg.mxu0
  %3933 = vmatprep.subr.bf16.mxu0 %v2443
  %3934 = vmatpush1.bf16.msra.mxu0 %v2442
  %3935 = vmatprep.subr.bf16.mxu0 %v2439
  %3936 = vmatpush1.bf16.msra.mxu0 %v2438
  %3937 = vmatprep.subr.bf16.mxu0 %v2435
  %3938 = vmatpush1.bf16.msra.mxu0 %v2434
  %3939 = vmatprep.subr.bf16.mxu0 %v2431
  %3940 = vmatpush1.bf16.msra.mxu0 %v2430
  %3941 = vmatprep.subr.bf16.mxu0 %v2427
  %3942 = vmatpush1.bf16.msra.mxu0 %v2426
  %3943 = vmatprep.subr.bf16.mxu0 %v2423
  %3944 = vmatpush1.bf16.msra.mxu0 %v2422
  %3945 = vmatprep.subr.bf16.mxu0 %v2419
  %3946 = vmatpush1.bf16.msra.mxu0 %v2418
  %3947 = vmatprep.subr.bf16.mxu0 %v2415
  %3948 = vmatpush1.bf16.msra.mxu0 %v2414
  %3949 = vmatprep.subr.bf16.mxu0 %v2475
  %3950 = vmatpush2.bf16.msra.mxu0 %v2474
  %3951 = vmatprep.subr.bf16.mxu0 %v2471
  %3952 = vmatpush2.bf16.msra.mxu0 %v2470
  %3953 = vmatprep.subr.bf16.mxu0 %v2467
  %3954 = vmatpush2.bf16.msra.mxu0 %v2466
  %3955 = vmatprep.subr.bf16.mxu0 %v2463
  %3956 = vmatpush2.bf16.msra.mxu0 %v2462
  %3957 = vmatprep.subr.bf16.mxu0 %v2459
  %3958 = vmatpush2.bf16.msra.mxu0 %v2458
  %3959 = vmatprep.subr.bf16.mxu0 %v2455
  %3960 = vmatpush2.bf16.msra.mxu0 %v2454
  %3961 = vmatprep.subr.bf16.mxu0 %v2451
  %3962 = vmatpush2.bf16.msra.mxu0 %v2450
  %3963 = vmatprep.subr.bf16.mxu0 %v2447
  %3964 = vmatpush2.bf16.msra.mxu0 %v2446
  %3965 = vmatprep.mubr.bf16.mxu0 %v649
  %3966 = vmatmul.mubr.bf16.gmra.mxu0 %v648
  %v3967 = vpop.f32.mrf.mxu0
  %v3968 = vadd.f32 %v612, %v3967
  %v3969 = vpop.f32.mrf.mxu0
  %v3970 = vadd.f32 %v616, %v3969
  %v3971 = vpop.f32.mrf.mxu0
  %v3972 = vpop.f32.mrf.mxu0
  %3973 = vdwg.mxu0
  %3974 = vmatprep.subr.bf16.mxu0 %v2507
  %3975 = vmatpush1.bf16.msra.mxu0 %v2506
  %3976 = vmatprep.subr.bf16.mxu0 %v2503
  %3977 = vmatpush1.bf16.msra.mxu0 %v2502
  %3978 = vmatprep.subr.bf16.mxu0 %v2499
  %3979 = vmatpush1.bf16.msra.mxu0 %v2498
  %3980 = vmatprep.subr.bf16.mxu0 %v2495
  %3981 = vmatpush1.bf16.msra.mxu0 %v2494
  %3982 = vmatprep.subr.bf16.mxu0 %v2491
  %3983 = vmatpush1.bf16.msra.mxu0 %v2490
  %3984 = vmatprep.subr.bf16.mxu0 %v2487
  %3985 = vmatpush1.bf16.msra.mxu0 %v2486
  %3986 = vmatprep.subr.bf16.mxu0 %v2483
  %3987 = vmatpush1.bf16.msra.mxu0 %v2482
  %3988 = vmatprep.subr.bf16.mxu0 %v2479
  %3989 = vmatpush1.bf16.msra.mxu0 %v2478
  %3990 = vmatprep.subr.bf16.mxu0 %v2539
  %3991 = vmatpush2.bf16.msra.mxu0 %v2538
  %3992 = vmatprep.subr.bf16.mxu0 %v2535
  %3993 = vmatpush2.bf16.msra.mxu0 %v2534
  %3994 = vmatprep.subr.bf16.mxu0 %v2531
  %3995 = vmatpush2.bf16.msra.mxu0 %v2530
  %3996 = vmatprep.subr.bf16.mxu0 %v2527
  %3997 = vmatpush2.bf16.msra.mxu0 %v2526
  %3998 = vmatprep.subr.bf16.mxu0 %v2523
  %3999 = vmatpush2.bf16.msra.mxu0 %v2522
  %4000 = vmatprep.subr.bf16.mxu0 %v2519
  %4001 = vmatpush2.bf16.msra.mxu0 %v2518
  %4002 = vmatprep.subr.bf16.mxu0 %v2515
  %4003 = vmatpush2.bf16.msra.mxu0 %v2514
  %4004 = vmatprep.subr.bf16.mxu0 %v2511
  %4005 = vmatpush2.bf16.msra.mxu0 %v2510
  %4006 = vmatprep.mubr.bf16.mxu0 %v651
  %4007 = vmatmul.mubr.bf16.gmra.mxu0 %v650
  %v4008 = vpop.f32.mrf.mxu0
  %v4009 = vadd.f32 %v3968, %v4008
  %v4010 = vpop.f32.mrf.mxu0
  %v4011 = vadd.f32 %v3970, %v4010
  %v4012 = vpop.f32.mrf.mxu0
  %v4013 = vpop.f32.mrf.mxu0
  %4014 = vdwg.mxu0
  %4015 = vmatprep.subr.bf16.mxu0 %v2571
  %4016 = vmatpush1.bf16.msra.mxu0 %v2570
  %4017 = vmatprep.subr.bf16.mxu0 %v2567
  %4018 = vmatpush1.bf16.msra.mxu0 %v2566
  %4019 = vmatprep.subr.bf16.mxu0 %v2563
  %4020 = vmatpush1.bf16.msra.mxu0 %v2562
  %4021 = vmatprep.subr.bf16.mxu0 %v2559
  %4022 = vmatpush1.bf16.msra.mxu0 %v2558
  %4023 = vmatprep.subr.bf16.mxu0 %v2555
  %4024 = vmatpush1.bf16.msra.mxu0 %v2554
  %4025 = vmatprep.subr.bf16.mxu0 %v2551
  %4026 = vmatpush1.bf16.msra.mxu0 %v2550
  %4027 = vmatprep.subr.bf16.mxu0 %v2547
  %4028 = vmatpush1.bf16.msra.mxu0 %v2546
  %4029 = vmatprep.subr.bf16.mxu0 %v2543
  %4030 = vmatpush1.bf16.msra.mxu0 %v2542
  %4031 = vmatprep.subr.bf16.mxu0 %v2603
  %4032 = vmatpush2.bf16.msra.mxu0 %v2602
  %4033 = vmatprep.subr.bf16.mxu0 %v2599
  %4034 = vmatpush2.bf16.msra.mxu0 %v2598
  %4035 = vmatprep.subr.bf16.mxu0 %v2595
  %4036 = vmatpush2.bf16.msra.mxu0 %v2594
  %4037 = vmatprep.subr.bf16.mxu0 %v2591
  %4038 = vmatpush2.bf16.msra.mxu0 %v2590
  %4039 = vmatprep.subr.bf16.mxu0 %v2587
  %4040 = vmatpush2.bf16.msra.mxu0 %v2586
  %4041 = vmatprep.subr.bf16.mxu0 %v2583
  %4042 = vmatpush2.bf16.msra.mxu0 %v2582
  %4043 = vmatprep.subr.bf16.mxu0 %v2579
  %4044 = vmatpush2.bf16.msra.mxu0 %v2578
  %4045 = vmatprep.subr.bf16.mxu0 %v2575
  %4046 = vmatpush2.bf16.msra.mxu0 %v2574
  %4047 = vmatprep.mubr.bf16.mxu0 %v653
  %4048 = vmatmul.mubr.bf16.gmra.mxu0 %v652
  %v4049 = vpop.f32.mrf.mxu0
  %v4050 = vadd.f32 %v4009, %v4049
  %v4051 = vpop.f32.mrf.mxu0
  %v4052 = vadd.f32 %v4011, %v4051
  %v4053 = vpop.f32.mrf.mxu0
  %v4054 = vpop.f32.mrf.mxu0
  %4055 = vdwg.mxu0
  %4056 = vmatprep.subr.bf16.mxu0 %v2635
  %4057 = vmatpush1.bf16.msra.mxu0 %v2634
  %4058 = vmatprep.subr.bf16.mxu0 %v2631
  %4059 = vmatpush1.bf16.msra.mxu0 %v2630
  %4060 = vmatprep.subr.bf16.mxu0 %v2627
  %4061 = vmatpush1.bf16.msra.mxu0 %v2626
  %4062 = vmatprep.subr.bf16.mxu0 %v2623
  %4063 = vmatpush1.bf16.msra.mxu0 %v2622
  %4064 = vmatprep.subr.bf16.mxu0 %v2619
  %4065 = vmatpush1.bf16.msra.mxu0 %v2618
  %4066 = vmatprep.subr.bf16.mxu0 %v2615
  %4067 = vmatpush1.bf16.msra.mxu0 %v2614
  %4068 = vmatprep.subr.bf16.mxu0 %v2611
  %4069 = vmatpush1.bf16.msra.mxu0 %v2610
  %4070 = vmatprep.subr.bf16.mxu0 %v2607
  %4071 = vmatpush1.bf16.msra.mxu0 %v2606
  %4072 = vmatprep.subr.bf16.mxu0 %v2667
  %4073 = vmatpush2.bf16.msra.mxu0 %v2666
  %4074 = vmatprep.subr.bf16.mxu0 %v2663
  %4075 = vmatpush2.bf16.msra.mxu0 %v2662
  %4076 = vmatprep.subr.bf16.mxu0 %v2659
  %4077 = vmatpush2.bf16.msra.mxu0 %v2658
  %4078 = vmatprep.subr.bf16.mxu0 %v2655
  %4079 = vmatpush2.bf16.msra.mxu0 %v2654
  %4080 = vmatprep.subr.bf16.mxu0 %v2651
  %4081 = vmatpush2.bf16.msra.mxu0 %v2650
  %4082 = vmatprep.subr.bf16.mxu0 %v2647
  %4083 = vmatpush2.bf16.msra.mxu0 %v2646
  %4084 = vmatprep.subr.bf16.mxu0 %v2643
  %4085 = vmatpush2.bf16.msra.mxu0 %v2642
  %4086 = vmatprep.subr.bf16.mxu0 %v2639
  %4087 = vmatpush2.bf16.msra.mxu0 %v2638
  %4088 = vmatprep.mubr.bf16.mxu0 %v655
  %4089 = vmatmul.mubr.bf16.gmra.mxu0 %v654
  %v4090 = vpop.f32.mrf.mxu0
  %v4091 = vadd.f32 %v4050, %v4090
  %v4092 = vpop.f32.mrf.mxu0
  %v4093 = vadd.f32 %v4052, %v4092
  %v4094 = vpop.f32.mrf.mxu0
  %v4095 = vpop.f32.mrf.mxu0
  %4096 = vdwg.mxu0
  %4097 = vmatprep.subr.bf16.mxu0 %v2699
  %4098 = vmatpush1.bf16.msra.mxu0 %v2698
  %4099 = vmatprep.subr.bf16.mxu0 %v2695
  %4100 = vmatpush1.bf16.msra.mxu0 %v2694
  %4101 = vmatprep.subr.bf16.mxu0 %v2691
  %4102 = vmatpush1.bf16.msra.mxu0 %v2690
  %4103 = vmatprep.subr.bf16.mxu0 %v2687
  %4104 = vmatpush1.bf16.msra.mxu0 %v2686
  %4105 = vmatprep.subr.bf16.mxu0 %v2683
  %4106 = vmatpush1.bf16.msra.mxu0 %v2682
  %4107 = vmatprep.subr.bf16.mxu0 %v2679
  %4108 = vmatpush1.bf16.msra.mxu0 %v2678
  %4109 = vmatprep.subr.bf16.mxu0 %v2675
  %4110 = vmatpush1.bf16.msra.mxu0 %v2674
  %4111 = vmatprep.subr.bf16.mxu0 %v2671
  %4112 = vmatpush1.bf16.msra.mxu0 %v2670
  %4113 = vmatprep.subr.bf16.mxu0 %v2731
  %4114 = vmatpush2.bf16.msra.mxu0 %v2730
  %4115 = vmatprep.subr.bf16.mxu0 %v2727
  %4116 = vmatpush2.bf16.msra.mxu0 %v2726
  %4117 = vmatprep.subr.bf16.mxu0 %v2723
  %4118 = vmatpush2.bf16.msra.mxu0 %v2722
  %4119 = vmatprep.subr.bf16.mxu0 %v2719
  %4120 = vmatpush2.bf16.msra.mxu0 %v2718
  %4121 = vmatprep.subr.bf16.mxu0 %v2715
  %4122 = vmatpush2.bf16.msra.mxu0 %v2714
  %4123 = vmatprep.subr.bf16.mxu0 %v2711
  %4124 = vmatpush2.bf16.msra.mxu0 %v2710
  %4125 = vmatprep.subr.bf16.mxu0 %v2707
  %4126 = vmatpush2.bf16.msra.mxu0 %v2706
  %4127 = vmatprep.subr.bf16.mxu0 %v2703
  %4128 = vmatpush2.bf16.msra.mxu0 %v2702
  %4129 = vmatprep.mubr.bf16.mxu0 %v657
  %4130 = vmatmul.mubr.bf16.gmra.mxu0 %v656
  %v4131 = vpop.f32.mrf.mxu0
  %v4132 = vadd.f32 %v4091, %v4131
  %v4133 = vpop.f32.mrf.mxu0
  %v4134 = vadd.f32 %v4093, %v4133
  %v4135 = vpop.f32.mrf.mxu0
  %v4136 = vpop.f32.mrf.mxu0
  %4137 = vdwg.mxu0
  %4138 = vmatprep.subr.bf16.mxu0 %v2763
  %4139 = vmatpush1.bf16.msra.mxu0 %v2762
  %4140 = vmatprep.subr.bf16.mxu0 %v2759
  %4141 = vmatpush1.bf16.msra.mxu0 %v2758
  %4142 = vmatprep.subr.bf16.mxu0 %v2755
  %4143 = vmatpush1.bf16.msra.mxu0 %v2754
  %4144 = vmatprep.subr.bf16.mxu0 %v2751
  %4145 = vmatpush1.bf16.msra.mxu0 %v2750
  %4146 = vmatprep.subr.bf16.mxu0 %v2747
  %4147 = vmatpush1.bf16.msra.mxu0 %v2746
  %4148 = vmatprep.subr.bf16.mxu0 %v2743
  %4149 = vmatpush1.bf16.msra.mxu0 %v2742
  %4150 = vmatprep.subr.bf16.mxu0 %v2739
  %4151 = vmatpush1.bf16.msra.mxu0 %v2738
  %4152 = vmatprep.subr.bf16.mxu0 %v2735
  %4153 = vmatpush1.bf16.msra.mxu0 %v2734
  %4154 = vmatprep.subr.bf16.mxu0 %v2795
  %4155 = vmatpush2.bf16.msra.mxu0 %v2794
  %4156 = vmatprep.subr.bf16.mxu0 %v2791
  %4157 = vmatpush2.bf16.msra.mxu0 %v2790
  %4158 = vmatprep.subr.bf16.mxu0 %v2787
  %4159 = vmatpush2.bf16.msra.mxu0 %v2786
  %4160 = vmatprep.subr.bf16.mxu0 %v2783
  %4161 = vmatpush2.bf16.msra.mxu0 %v2782
  %4162 = vmatprep.subr.bf16.mxu0 %v2779
  %4163 = vmatpush2.bf16.msra.mxu0 %v2778
  %4164 = vmatprep.subr.bf16.mxu0 %v2775
  %4165 = vmatpush2.bf16.msra.mxu0 %v2774
  %4166 = vmatprep.subr.bf16.mxu0 %v2771
  %4167 = vmatpush2.bf16.msra.mxu0 %v2770
  %4168 = vmatprep.subr.bf16.mxu0 %v2767
  %4169 = vmatpush2.bf16.msra.mxu0 %v2766
  %4170 = vmatprep.mubr.bf16.mxu0 %v659
  %4171 = vmatmul.mubr.bf16.gmra.mxu0 %v658
  %v4172 = vpop.f32.mrf.mxu0
  %v4173 = vadd.f32 %v4132, %v4172
  %v4174 = vpop.f32.mrf.mxu0
  %v4175 = vadd.f32 %v4134, %v4174
  %v4176 = vpop.f32.mrf.mxu0
  %v4177 = vpop.f32.mrf.mxu0
  %4178 = vdwg.mxu0
  %4179 = vmatprep.subr.bf16.mxu0 %v2827
  %4180 = vmatpush1.bf16.msra.mxu0 %v2826
  %4181 = vmatprep.subr.bf16.mxu0 %v2823
  %4182 = vmatpush1.bf16.msra.mxu0 %v2822
  %4183 = vmatprep.subr.bf16.mxu0 %v2819
  %4184 = vmatpush1.bf16.msra.mxu0 %v2818
  %4185 = vmatprep.subr.bf16.mxu0 %v2815
  %4186 = vmatpush1.bf16.msra.mxu0 %v2814
  %4187 = vmatprep.subr.bf16.mxu0 %v2811
  %4188 = vmatpush1.bf16.msra.mxu0 %v2810
  %4189 = vmatprep.subr.bf16.mxu0 %v2807
  %4190 = vmatpush1.bf16.msra.mxu0 %v2806
  %4191 = vmatprep.subr.bf16.mxu0 %v2803
  %4192 = vmatpush1.bf16.msra.mxu0 %v2802
  %4193 = vmatprep.subr.bf16.mxu0 %v2799
  %4194 = vmatpush1.bf16.msra.mxu0 %v2798
  %4195 = vmatprep.subr.bf16.mxu0 %v2859
  %4196 = vmatpush2.bf16.msra.mxu0 %v2858
  %4197 = vmatprep.subr.bf16.mxu0 %v2855
  %4198 = vmatpush2.bf16.msra.mxu0 %v2854
  %4199 = vmatprep.subr.bf16.mxu0 %v2851
  %4200 = vmatpush2.bf16.msra.mxu0 %v2850
  %4201 = vmatprep.subr.bf16.mxu0 %v2847
  %4202 = vmatpush2.bf16.msra.mxu0 %v2846
  %4203 = vmatprep.subr.bf16.mxu0 %v2843
  %4204 = vmatpush2.bf16.msra.mxu0 %v2842
  %4205 = vmatprep.subr.bf16.mxu0 %v2839
  %4206 = vmatpush2.bf16.msra.mxu0 %v2838
  %4207 = vmatprep.subr.bf16.mxu0 %v2835
  %4208 = vmatpush2.bf16.msra.mxu0 %v2834
  %4209 = vmatprep.subr.bf16.mxu0 %v2831
  %4210 = vmatpush2.bf16.msra.mxu0 %v2830
  %4211 = vmatprep.mubr.bf16.mxu0 %v661
  %4212 = vmatmul.mubr.bf16.gmra.mxu0 %v660
  %v4213 = vpop.f32.mrf.mxu0
  %v4214 = vadd.f32 %v4173, %v4213
  %v4215 = vpop.f32.mrf.mxu0
  %v4216 = vadd.f32 %v4175, %v4215
  %v4217 = vpop.f32.mrf.mxu0
  %v4218 = vpop.f32.mrf.mxu0
  %4219 = vdwg.mxu0
  %4220 = vmatprep.subr.bf16.mxu0 %v2891
  %4221 = vmatpush1.bf16.msra.mxu0 %v2890
  %4222 = vmatprep.subr.bf16.mxu0 %v2887
  %4223 = vmatpush1.bf16.msra.mxu0 %v2886
  %4224 = vmatprep.subr.bf16.mxu0 %v2883
  %4225 = vmatpush1.bf16.msra.mxu0 %v2882
  %4226 = vmatprep.subr.bf16.mxu0 %v2879
  %4227 = vmatpush1.bf16.msra.mxu0 %v2878
  %4228 = vmatprep.subr.bf16.mxu0 %v2875
  %4229 = vmatpush1.bf16.msra.mxu0 %v2874
  %4230 = vmatprep.subr.bf16.mxu0 %v2871
  %4231 = vmatpush1.bf16.msra.mxu0 %v2870
  %4232 = vmatprep.subr.bf16.mxu0 %v2867
  %4233 = vmatpush1.bf16.msra.mxu0 %v2866
  %4234 = vmatprep.subr.bf16.mxu0 %v2863
  %4235 = vmatpush1.bf16.msra.mxu0 %v2862
  %4236 = vmatprep.subr.bf16.mxu0 %v2923
  %4237 = vmatpush2.bf16.msra.mxu0 %v2922
  %4238 = vmatprep.subr.bf16.mxu0 %v2919
  %4239 = vmatpush2.bf16.msra.mxu0 %v2918
  %4240 = vmatprep.subr.bf16.mxu0 %v2915
  %4241 = vmatpush2.bf16.msra.mxu0 %v2914
  %4242 = vmatprep.subr.bf16.mxu0 %v2911
  %4243 = vmatpush2.bf16.msra.mxu0 %v2910
  %4244 = vmatprep.subr.bf16.mxu0 %v2907
  %4245 = vmatpush2.bf16.msra.mxu0 %v2906
  %4246 = vmatprep.subr.bf16.mxu0 %v2903
  %4247 = vmatpush2.bf16.msra.mxu0 %v2902
  %4248 = vmatprep.subr.bf16.mxu0 %v2899
  %4249 = vmatpush2.bf16.msra.mxu0 %v2898
  %4250 = vmatprep.subr.bf16.mxu0 %v2895
  %4251 = vmatpush2.bf16.msra.mxu0 %v2894
  %4252 = vmatprep.mubr.bf16.mxu0 %v663
  %4253 = vmatmul.mubr.bf16.gmra.mxu0 %v662
  %v4254 = vpop.f32.mrf.mxu0
  %v4255 = vadd.f32 %v4214, %v4254
  %v4256 = vpop.f32.mrf.mxu0
  %v4257 = vadd.f32 %v4216, %v4256
  %v4258 = vpop.f32.mrf.mxu0
  %v4259 = vpop.f32.mrf.mxu0
  %4260 = vdwg.mxu0
  %4261 = vmatprep.subr.bf16.mxu0 %v2955
  %4262 = vmatpush1.bf16.msra.mxu0 %v2954
  %4263 = vmatprep.subr.bf16.mxu0 %v2951
  %4264 = vmatpush1.bf16.msra.mxu0 %v2950
  %4265 = vmatprep.subr.bf16.mxu0 %v2947
  %4266 = vmatpush1.bf16.msra.mxu0 %v2946
  %4267 = vmatprep.subr.bf16.mxu0 %v2943
  %4268 = vmatpush1.bf16.msra.mxu0 %v2942
  %4269 = vmatprep.subr.bf16.mxu0 %v2939
  %4270 = vmatpush1.bf16.msra.mxu0 %v2938
  %4271 = vmatprep.subr.bf16.mxu0 %v2935
  %4272 = vmatpush1.bf16.msra.mxu0 %v2934
  %4273 = vmatprep.subr.bf16.mxu0 %v2931
  %4274 = vmatpush1.bf16.msra.mxu0 %v2930
  %4275 = vmatprep.subr.bf16.mxu0 %v2927
  %4276 = vmatpush1.bf16.msra.mxu0 %v2926
  %4277 = vmatprep.subr.bf16.mxu0 %v2987
  %4278 = vmatpush2.bf16.msra.mxu0 %v2986
  %4279 = vmatprep.subr.bf16.mxu0 %v2983
  %4280 = vmatpush2.bf16.msra.mxu0 %v2982
  %4281 = vmatprep.subr.bf16.mxu0 %v2979
  %4282 = vmatpush2.bf16.msra.mxu0 %v2978
  %4283 = vmatprep.subr.bf16.mxu0 %v2975
  %4284 = vmatpush2.bf16.msra.mxu0 %v2974
  %4285 = vmatprep.subr.bf16.mxu0 %v2971
  %4286 = vmatpush2.bf16.msra.mxu0 %v2970
  %4287 = vmatprep.subr.bf16.mxu0 %v2967
  %4288 = vmatpush2.bf16.msra.mxu0 %v2966
  %4289 = vmatprep.subr.bf16.mxu0 %v2963
  %4290 = vmatpush2.bf16.msra.mxu0 %v2962
  %4291 = vmatprep.subr.bf16.mxu0 %v2959
  %4292 = vmatpush2.bf16.msra.mxu0 %v2958
  %4293 = vmatprep.mubr.bf16.mxu0 %v665
  %4294 = vmatmul.mubr.bf16.gmra.mxu0 %v664
  %v4295 = vpop.f32.mrf.mxu0
  %v4296 = vadd.f32 %v4255, %v4295
  %v4297 = vpop.f32.mrf.mxu0
  %v4298 = vadd.f32 %v4257, %v4297
  %v4299 = vpop.f32.mrf.mxu0
  %v4300 = vpop.f32.mrf.mxu0
  %4301 = vdwg.mxu0
  %v4302 = vmax.f32 %v3927, 0.0
  %v4303 = vmax.f32 %v3929, 0.0
  %v4304 = vmax.f32 %v4296, 0.0
  %v4305 = vmax.f32 %v4298, 0.0
  %v4306 = vpack.c.bf16 %v4302, %v4302
  %v4307 = vpack.c.bf16 %v4303, %v4303
  %v4308 = vpack.c.bf16 %v4304, %v4304
  %v4309 = vpack.c.bf16 %v4305, %v4305
  %v4314 = vunpack.c.l.b16 %v4306
  %v4315 = vunpack.c.l.b16 %v4307
  %v4316 = vunpack.c.l.b16 %v4308
  %v4317 = vunpack.c.l.b16 %v4309
  %v4318 = vpack.c.b16 %v4315, %v4314
  %v4319 = vpack.c.b16 %v4317, %v4316
  %4322 = vst [vmem:[%s3] sm:$0xff] %v4318
  %4323 = vst [vmem:[%s3 + $0x8] sm:$0xff] %v4319
  // Predicated region
  $region14: #{vae_forward.11} parent=0 // pred_check
    _
  $region15: #{vae_forward.11} parent=0 // pred_check_branch
    %4325 = sbr.rel (0) target = $region17
  $region16: #{vae_forward.11} parent=0 // pred_region
    _
  $region17: #{vae_forward.11} parent=0 // pred_fallthru
    _
  // Predicated region
  $region18: #{vae_forward.11} parent=0 // pred_check
    _
  $region19: #{vae_forward.11} parent=0 // pred_check_branch
    %4327 = sbr.rel (0) target = $region21
  $region20: #{vae_forward.11} parent=0 // pred_region
    _
  $region21: #{vae_forward.11} parent=0 // pred_fallthru
    _

// kernel: vae_forward.13
$region0: #{vae_forward.13}
  #allocation0 [shape = 'u32[]', space=smem, size = 0x4, offset = 0x4, fixed_abs, tag = 'smem constant byte address 0x4 - core index']
  #allocation1 [shape = 'u32[144,128]{1,0:T(1,128)}', space=vmem, size = 0x12000, scoped, tag = 'internal scratch']
  %s0 = inlined_call_operand.vmem [shape: bf16[128,576], index: 0, kind: input, shape index: {}]
  %s1 = inlined_call_operand.vmem [shape: bf16[576,4], index: 1, kind: input, shape index: {}]
  %s2 = inlined_call_operand.vmem [shape: f32[1,4], index: 2, kind: input, shape index: {}]
  %s3 = inlined_call_operand.vmem [shape: f32[128,4], index: 3, kind: output, shape index: {}]
  %s4 = sld [smem:[#allocation0]]
  $region22: #{vae_forward.13} parent=0
    _
  %s6 = ssub.s32 1, %s4
  %s7 = scalar_select 0, %s6, %s4
  // Predicated region
  $region2: #{vae_forward.13} parent=0 // pred_check
    _
  $region3: #{vae_forward.13} parent=0 // pred_check_branch
    %9 = sbr.rel (0) target = $region5
  $region4: #{vae_forward.13} parent=0 // pred_region
    _
  $region5: #{vae_forward.13} parent=0 // pred_fallthru
    _
  // Predicated region
  $region6: #{vae_forward.13} parent=0 // pred_check
    _
  $region7: #{vae_forward.13} parent=0 // pred_check_branch
    %11 = sbr.rel (0) target = $region9
  $region8: #{vae_forward.13} parent=0 // pred_region
    _
  $region9: #{vae_forward.13} parent=0 // pred_fallthru
    _
  // Predicated region
  $region10: #{vae_forward.13} parent=0 // pred_check
    _
  $region11: #{vae_forward.13} parent=0 // pred_check_branch
    %13 = sbr.rel (0) target = $region13
  $region12: #{vae_forward.13} parent=0 // pred_region
    _
  $region13: #{vae_forward.13} parent=0 // pred_fallthru
    _
  %v15 = vld [vmem:[%s0] sm:$0xff]
  %v16 = vld [vmem:[%s0 + $0x8] sm:$0xff]
  %v17 = vld [vmem:[%s0 + $0x10] sm:$0xf]
  %v18 = vld [vmem:[%s0 + $0x14] sm:$0xff]
  %v19 = vld [vmem:[%s0 + $0x1c] sm:$0xff]
  %v20 = vld [vmem:[%s0 + $0x24] sm:$0xf]
  %v21 = vld [vmem:[%s0 + $0x28] sm:$0xff]
  %v22 = vld [vmem:[%s0 + $0x30] sm:$0xff]
  %v23 = vld [vmem:[%s0 + $0x38] sm:$0xf]
  %v24 = vld [vmem:[%s0 + $0x3c] sm:$0xff]
  %v25 = vld [vmem:[%s0 + $0x44] sm:$0xff]
  %v26 = vld [vmem:[%s0 + $0x4c] sm:$0xf]
  %v27 = vld [vmem:[%s0 + $0x50] sm:$0xff]
  %v28 = vld [vmem:[%s0 + $0x58] sm:$0xff]
  %v29 = vld [vmem:[%s0 + $0x60] sm:$0xf]
  %v30 = vld [vmem:[%s0 + $0x64] sm:$0xff]
  %v31 = vld [vmem:[%s0 + $0x6c] sm:$0xff]
  %v32 = vld [vmem:[%s0 + $0x74] sm:$0xf]
  %v33 = vld [vmem:[%s0 + $0x78] sm:$0xff]
  %v34 = vld [vmem:[%s0 + $0x80] sm:$0xff]
  %v35 = vld [vmem:[%s0 + $0x88] sm:$0xf]
  %v36 = vld [vmem:[%s0 + $0x8c] sm:$0xff]
  %v37 = vld [vmem:[%s0 + $0x94] sm:$0xff]
  %v38 = vld [vmem:[%s0 + $0x9c] sm:$0xf]
  %v39 = vld [vmem:[%s0 + $0xa0] sm:$0xff]
  %v40 = vld [vmem:[%s0 + $0xa8] sm:$0xff]
  %v41 = vld [vmem:[%s0 + $0xb0] sm:$0xf]
  %v42 = vld [vmem:[%s0 + $0xb4] sm:$0xff]
  %v43 = vld [vmem:[%s0 + $0xbc] sm:$0xff]
  %v44 = vld [vmem:[%s0 + $0xc4] sm:$0xf]
  %v45 = vld [vmem:[%s0 + $0xc8] sm:$0xff]
  %v46 = vld [vmem:[%s0 + $0xd0] sm:$0xff]
  %v47 = vld [vmem:[%s0 + $0xd8] sm:$0xf]
  %v48 = vld [vmem:[%s0 + $0xdc] sm:$0xff]
  %v49 = vld [vmem:[%s0 + $0xe4] sm:$0xff]
  %v50 = vld [vmem:[%s0 + $0xec] sm:$0xf]
  %v51 = vld [vmem:[%s0 + $0xf0] sm:$0xff]
  %v52 = vld [vmem:[%s0 + $0xf8] sm:$0xff]
  %v53 = vld [vmem:[%s0 + $0x100] sm:$0xf]
  %v54 = vld [vmem:[%s0 + $0x104] sm:$0xff]
  %v55 = vld [vmem:[%s0 + $0x10c] sm:$0xff]
  %v56 = vld [vmem:[%s0 + $0x114] sm:$0xf]
  %v57 = vld [vmem:[%s0 + $0x118] sm:$0xff]
  %v58 = vld [vmem:[%s0 + $0x120] sm:$0xff]
  %v59 = vld [vmem:[%s0 + $0x128] sm:$0xf]
  %v60 = vld [vmem:[%s0 + $0x12c] sm:$0xff]
  %v61 = vld [vmem:[%s0 + $0x134] sm:$0xff]
  %v62 = vld [vmem:[%s0 + $0x13c] sm:$0xf]
  %v63 = vld [vmem:[%s1] sm:$0xf]
  %v64 = vld [vmem:[%s1 + $0x4] sm:$0xf]
  %v65 = vld [vmem:[%s1 + $0x8] sm:$0xf]
  %v66 = vld [vmem:[%s1 + $0xc] sm:$0xf]
  %v67 = vld [vmem:[%s1 + $0x10] sm:$0xf]
  %v68 = vld [vmem:[%s1 + $0x14] sm:$0xf]
  %v69 = vld [vmem:[%s1 + $0x18] sm:$0xf]
  %v70 = vld [vmem:[%s1 + $0x1c] sm:$0xf]
  %v71 = vld [vmem:[%s1 + $0x20] sm:$0xf]
  %v72 = vld [vmem:[%s1 + $0x24] sm:$0xf]
  %v73 = vld [vmem:[%s1 + $0x28] sm:$0xf]
  %v74 = vld [vmem:[%s1 + $0x2c] sm:$0xf]
  %v75 = vld [vmem:[%s1 + $0x30] sm:$0xf]
  %v76 = vld [vmem:[%s1 + $0x34] sm:$0xf]
  %v77 = vld [vmem:[%s1 + $0x38] sm:$0xf]
  %v78 = vld [vmem:[%s1 + $0x3c] sm:$0xf]
  %v79 = vld [vmem:[%s1 + $0x40] sm:$0xf]
  %v80 = vld [vmem:[%s1 + $0x44] sm:$0xf]
  %v81 = vld [vmem:[%s1 + $0x48] sm:$0xf]
  %v82 = vld [vmem:[%s1 + $0x4c] sm:$0xf]
  %v83 = vld [vmem:[%s1 + $0x50] sm:$0xf]
  %v84 = vld [vmem:[%s1 + $0x54] sm:$0xf]
  %v85 = vld [vmem:[%s1 + $0x58] sm:$0xf]
  %v86 = vld [vmem:[%s1 + $0x5c] sm:$0xf]
  %v87 = vld [vmem:[%s1 + $0x60] sm:$0xf]
  %v88 = vld [vmem:[%s1 + $0x64] sm:$0xf]
  %v89 = vld [vmem:[%s1 + $0x68] sm:$0xf]
  %v90 = vld [vmem:[%s1 + $0x6c] sm:$0xf]
  %v91 = vld [vmem:[%s1 + $0x70] sm:$0xf]
  %v92 = vld [vmem:[%s1 + $0x74] sm:$0xf]
  %v93 = vld [vmem:[%s1 + $0x78] sm:$0xf]
  %v94 = vld [vmem:[%s1 + $0x7c] sm:$0xf]
  %v95 = vld [vmem:[%s1 + $0x80] sm:$0xf]
  %v96 = vld [vmem:[%s1 + $0x84] sm:$0xf]
  %v97 = vld [vmem:[%s1 + $0x88] sm:$0xf]
  %v98 = vld [vmem:[%s1 + $0x8c] sm:$0xf]
  %v99 = vld [vmem:[%s1 + $0x90] sm:$0xf]
  %v100 = vld [vmem:[%s1 + $0x94] sm:$0xf]
  %v101 = vld [vmem:[%s1 + $0x98] sm:$0xf]
  %v102 = vld [vmem:[%s1 + $0x9c] sm:$0xf]
  %v103 = vld [vmem:[%s1 + $0xa0] sm:$0xf]
  %v104 = vld [vmem:[%s1 + $0xa4] sm:$0xf]
  %v105 = vld [vmem:[%s1 + $0xa8] sm:$0xf]
  %v106 = vld [vmem:[%s1 + $0xac] sm:$0xf]
  %v107 = vld [vmem:[%s1 + $0xb0] sm:$0xf]
  %v108 = vld [vmem:[%s1 + $0xb4] sm:$0xf]
  %v109 = vld [vmem:[%s1 + $0xb8] sm:$0xf]
  %v110 = vld [vmem:[%s1 + $0xbc] sm:$0xf]
  %v111 = vld [vmem:[%s1 + $0xc0] sm:$0xf]
  %v112 = vld [vmem:[%s1 + $0xc4] sm:$0xf]
  %v113 = vld [vmem:[%s1 + $0xc8] sm:$0xf]
  %v114 = vld [vmem:[%s1 + $0xcc] sm:$0xf]
  %v115 = vld [vmem:[%s1 + $0xd0] sm:$0xf]
  %v116 = vld [vmem:[%s1 + $0xd4] sm:$0xf]
  %v117 = vld [vmem:[%s1 + $0xd8] sm:$0xf]
  %v118 = vld [vmem:[%s1 + $0xdc] sm:$0xf]
  %v119 = vld [vmem:[%s1 + $0xe0] sm:$0xf]
  %v120 = vld [vmem:[%s1 + $0xe4] sm:$0xf]
  %v121 = vld [vmem:[%s1 + $0xe8] sm:$0xf]
  %v122 = vld [vmem:[%s1 + $0xec] sm:$0xf]
  %v123 = vld [vmem:[%s1 + $0xf0] sm:$0xf]
  %v124 = vld [vmem:[%s1 + $0xf4] sm:$0xf]
  %v125 = vld [vmem:[%s1 + $0xf8] sm:$0xf]
  %v126 = vld [vmem:[%s1 + $0xfc] sm:$0xf]
  %v127 = vld [vmem:[%s1 + $0x100] sm:$0xf]
  %v128 = vld [vmem:[%s1 + $0x104] sm:$0xf]
  %v129 = vld [vmem:[%s1 + $0x108] sm:$0xf]
  %v130 = vld [vmem:[%s1 + $0x10c] sm:$0xf]
  %v131 = vld [vmem:[%s1 + $0x110] sm:$0xf]
  %v132 = vld [vmem:[%s1 + $0x114] sm:$0xf]
  %v133 = vld [vmem:[%s1 + $0x118] sm:$0xf]
  %v134 = vld [vmem:[%s1 + $0x11c] sm:$0xf]
  %v135 = vld [vmem:[%s2] sm:$0x1]
  %v137 = vlaneseq
  %v138 = vshrl.u32 %v137, 7
  %v139 = vsub.s32 0, %v138
  %v140 = vrot.slane %v135, %v139
  %v190 = vunpack.c.l.b16 %v15
  %v191 = vunpack.c.h.b16 %v15
  %v192 = vunpack.c.l.b16 %v16
  %v193 = vunpack.c.h.b16 %v16
  %v194 = vunpack.c.l.b16 %v17
  %v195 = vunpack.c.l.b16 %v18
  %v196 = vunpack.c.h.b16 %v18
  %v197 = vunpack.c.l.b16 %v19
  %v198 = vunpack.c.h.b16 %v19
  %v199 = vunpack.c.l.b16 %v20
  %v200 = vunpack.c.l.b16 %v21
  %v201 = vunpack.c.h.b16 %v21
  %v202 = vunpack.c.l.b16 %v22
  %v203 = vunpack.c.h.b16 %v22
  %v204 = vunpack.c.l.b16 %v23
  %v205 = vunpack.c.l.b16 %v24
  %v206 = vunpack.c.h.b16 %v24
  %v207 = vunpack.c.l.b16 %v25
  %v208 = vunpack.c.h.b16 %v25
  %v209 = vunpack.c.l.b16 %v26
  %v210 = vunpack.c.l.b16 %v27
  %v211 = vunpack.c.h.b16 %v27
  %v212 = vunpack.c.l.b16 %v28
  %v213 = vunpack.c.h.b16 %v28
  %v214 = vunpack.c.l.b16 %v29
  %v215 = vunpack.c.l.b16 %v30
  %v216 = vunpack.c.h.b16 %v30
  %v217 = vunpack.c.l.b16 %v31
  %v218 = vunpack.c.h.b16 %v31
  %v219 = vunpack.c.l.b16 %v32
  %v220 = vunpack.c.l.b16 %v33
  %v221 = vunpack.c.h.b16 %v33
  %v222 = vunpack.c.l.b16 %v34
  %v223 = vunpack.c.h.b16 %v34
  %v224 = vunpack.c.l.b16 %v35
  %v225 = vunpack.c.l.b16 %v36
  %v226 = vunpack.c.h.b16 %v36
  %v227 = vunpack.c.l.b16 %v37
  %v228 = vunpack.c.h.b16 %v37
  %v229 = vunpack.c.l.b16 %v38
  %v230 = vunpack.c.l.b16 %v39
  %v231 = vunpack.c.h.b16 %v39
  %v232 = vunpack.c.l.b16 %v40
  %v233 = vunpack.c.h.b16 %v40
  %v234 = vunpack.c.l.b16 %v41
  %v235 = vunpack.c.l.b16 %v42
  %v236 = vunpack.c.h.b16 %v42
  %v237 = vunpack.c.l.b16 %v43
  %v238 = vunpack.c.h.b16 %v43
  %v239 = vunpack.c.l.b16 %v44
  %v240 = vunpack.c.l.b16 %v45
  %v241 = vunpack.c.h.b16 %v45
  %v242 = vunpack.c.l.b16 %v46
  %v243 = vunpack.c.h.b16 %v46
  %v244 = vunpack.c.l.b16 %v47
  %v245 = vunpack.c.l.b16 %v48
  %v246 = vunpack.c.h.b16 %v48
  %v247 = vunpack.c.l.b16 %v49
  %v248 = vunpack.c.h.b16 %v49
  %v249 = vunpack.c.l.b16 %v50
  %v250 = vunpack.c.l.b16 %v51
  %v251 = vunpack.c.h.b16 %v51
  %v252 = vunpack.c.l.b16 %v52
  %v253 = vunpack.c.h.b16 %v52
  %v254 = vunpack.c.l.b16 %v53
  %v255 = vunpack.c.l.b16 %v54
  %v256 = vunpack.c.h.b16 %v54
  %v257 = vunpack.c.l.b16 %v55
  %v258 = vunpack.c.h.b16 %v55
  %v259 = vunpack.c.l.b16 %v56
  %v260 = vunpack.c.l.b16 %v57
  %v261 = vunpack.c.h.b16 %v57
  %v262 = vunpack.c.l.b16 %v58
  %v263 = vunpack.c.h.b16 %v58
  %v264 = vunpack.c.l.b16 %v59
  %v265 = vunpack.c.l.b16 %v60
  %v266 = vunpack.c.h.b16 %v60
  %v267 = vunpack.c.l.b16 %v61
  %v268 = vunpack.c.h.b16 %v61
  %v269 = vunpack.c.l.b16 %v62
  %v270 = vpack.c.b16 %v195, %v190
  %v271 = vpack.c.b16 %v196, %v191
  %v272 = vpack.c.b16 %v197, %v192
  %v273 = vpack.c.b16 %v198, %v193
  %v274 = vpack.c.b16 %v199, %v194
  %v275 = vpack.c.b16 %v205, %v200
  %v276 = vpack.c.b16 %v206, %v201
  %v277 = vpack.c.b16 %v207, %v202
  %v278 = vpack.c.b16 %v208, %v203
  %v279 = vpack.c.b16 %v209, %v204
  %v280 = vpack.c.b16 %v215, %v210
  %v281 = vpack.c.b16 %v216, %v211
  %v282 = vpack.c.b16 %v217, %v212
  %v283 = vpack.c.b16 %v218, %v213
  %v284 = vpack.c.b16 %v219, %v214
  %v285 = vpack.c.b16 %v225, %v220
  %v286 = vpack.c.b16 %v226, %v221
  %v287 = vpack.c.b16 %v227, %v222
  %v288 = vpack.c.b16 %v228, %v223
  %v289 = vpack.c.b16 %v229, %v224
  %v290 = vpack.c.b16 %v235, %v230
  %v291 = vpack.c.b16 %v236, %v231
  %v292 = vpack.c.b16 %v237, %v232
  %v293 = vpack.c.b16 %v238, %v233
  %v294 = vpack.c.b16 %v239, %v234
  %v295 = vpack.c.b16 %v245, %v240
  %v296 = vpack.c.b16 %v246, %v241
  %v297 = vpack.c.b16 %v247, %v242
  %v298 = vpack.c.b16 %v248, %v243
  %v299 = vpack.c.b16 %v249, %v244
  %v300 = vpack.c.b16 %v255, %v250
  %v301 = vpack.c.b16 %v256, %v251
  %v302 = vpack.c.b16 %v257, %v252
  %v303 = vpack.c.b16 %v258, %v253
  %v304 = vpack.c.b16 %v259, %v254
  %v305 = vpack.c.b16 %v265, %v260
  %v306 = vpack.c.b16 %v266, %v261
  %v307 = vpack.c.b16 %v267, %v262
  %v308 = vpack.c.b16 %v268, %v263
  %v309 = vpack.c.b16 %v269, %v264
  %v414 = vunpack.c.l.b16 %v63
  %v415 = vunpack.c.l.b16 %v64
  %v416 = vunpack.c.l.b16 %v65
  %v417 = vunpack.c.l.b16 %v66
  %v418 = vunpack.c.l.b16 %v67
  %v419 = vunpack.c.l.b16 %v68
  %v420 = vunpack.c.l.b16 %v69
  %v421 = vunpack.c.l.b16 %v70
  %v422 = vunpack.c.l.b16 %v71
  %v423 = vunpack.c.l.b16 %v72
  %v424 = vunpack.c.l.b16 %v73
  %v425 = vunpack.c.l.b16 %v74
  %v426 = vunpack.c.l.b16 %v75
  %v427 = vunpack.c.l.b16 %v76
  %v428 = vunpack.c.l.b16 %v77
  %v429 = vunpack.c.l.b16 %v78
  %v430 = vunpack.c.l.b16 %v79
  %v431 = vunpack.c.l.b16 %v80
  %v432 = vunpack.c.l.b16 %v81
  %v433 = vunpack.c.l.b16 %v82
  %v434 = vunpack.c.l.b16 %v83
  %v435 = vunpack.c.l.b16 %v84
  %v436 = vunpack.c.l.b16 %v85
  %v437 = vunpack.c.l.b16 %v86
  %v438 = vunpack.c.l.b16 %v87
  %v439 = vunpack.c.l.b16 %v88
  %v440 = vunpack.c.l.b16 %v89
  %v441 = vunpack.c.l.b16 %v90
  %v442 = vunpack.c.l.b16 %v91
  %v443 = vunpack.c.l.b16 %v92
  %v444 = vunpack.c.l.b16 %v93
  %v445 = vunpack.c.l.b16 %v94
  %v446 = vunpack.c.l.b16 %v95
  %v447 = vunpack.c.l.b16 %v96
  %v448 = vunpack.c.l.b16 %v97
  %v449 = vunpack.c.l.b16 %v98
  %v450 = vunpack.c.l.b16 %v99
  %v451 = vunpack.c.l.b16 %v100
  %v452 = vunpack.c.l.b16 %v101
  %v453 = vunpack.c.l.b16 %v102
  %v454 = vunpack.c.l.b16 %v103
  %v455 = vunpack.c.l.b16 %v104
  %v456 = vunpack.c.l.b16 %v105
  %v457 = vunpack.c.l.b16 %v106
  %v458 = vunpack.c.l.b16 %v107
  %v459 = vunpack.c.l.b16 %v108
  %v460 = vunpack.c.l.b16 %v109
  %v461 = vunpack.c.l.b16 %v110
  %v462 = vunpack.c.l.b16 %v111
  %v463 = vunpack.c.l.b16 %v112
  %v464 = vunpack.c.l.b16 %v113
  %v465 = vunpack.c.l.b16 %v114
  %v466 = vunpack.c.l.b16 %v115
  %v467 = vunpack.c.l.b16 %v116
  %v468 = vunpack.c.l.b16 %v117
  %v469 = vunpack.c.l.b16 %v118
  %v470 = vunpack.c.l.b16 %v119
  %v471 = vunpack.c.l.b16 %v120
  %v472 = vunpack.c.l.b16 %v121
  %v473 = vunpack.c.l.b16 %v122
  %v474 = vunpack.c.l.b16 %v123
  %v475 = vunpack.c.l.b16 %v124
  %v476 = vunpack.c.l.b16 %v125
  %v477 = vunpack.c.l.b16 %v126
  %v478 = vunpack.c.l.b16 %v127
  %v479 = vunpack.c.l.b16 %v128
  %v480 = vunpack.c.l.b16 %v129
  %v481 = vunpack.c.l.b16 %v130
  %v482 = vunpack.c.l.b16 %v131
  %v483 = vunpack.c.l.b16 %v132
  %v484 = vunpack.c.l.b16 %v133
  %v485 = vunpack.c.l.b16 %v134
  %v486 = vpack.c.b16 %v415, %v414
  %v487 = vpack.c.b16 %v417, %v416
  %v488 = vpack.c.b16 %v419, %v418
  %v489 = vpack.c.b16 %v421, %v420
  %v490 = vpack.c.b16 %v423, %v422
  %v491 = vpack.c.b16 %v425, %v424
  %v492 = vpack.c.b16 %v427, %v426
  %v493 = vpack.c.b16 %v429, %v428
  %v494 = vpack.c.b16 %v431, %v430
  %v495 = vpack.c.b16 %v433, %v432
  %v496 = vpack.c.b16 %v435, %v434
  %v497 = vpack.c.b16 %v437, %v436
  %v498 = vpack.c.b16 %v439, %v438
  %v499 = vpack.c.b16 %v441, %v440
  %v500 = vpack.c.b16 %v443, %v442
  %v501 = vpack.c.b16 %v445, %v444
  %v502 = vpack.c.b16 %v447, %v446
  %v503 = vpack.c.b16 %v449, %v448
  %v504 = vpack.c.b16 %v451, %v450
  %v505 = vpack.c.b16 %v453, %v452
  %v506 = vpack.c.b16 %v455, %v454
  %v507 = vpack.c.b16 %v457, %v456
  %v508 = vpack.c.b16 %v459, %v458
  %v509 = vpack.c.b16 %v461, %v460
  %v510 = vpack.c.b16 %v463, %v462
  %v511 = vpack.c.b16 %v465, %v464
  %v512 = vpack.c.b16 %v467, %v466
  %v513 = vpack.c.b16 %v469, %v468
  %v514 = vpack.c.b16 %v471, %v470
  %v515 = vpack.c.b16 %v473, %v472
  %v516 = vpack.c.b16 %v475, %v474
  %v517 = vpack.c.b16 %v477, %v476
  %v518 = vpack.c.b16 %v479, %v478
  %v519 = vpack.c.b16 %v481, %v480
  %v520 = vpack.c.b16 %v483, %v482
  %v521 = vpack.c.b16 %v485, %v484
  %vm558 = vcmask 523264
  %v560 = vsel %vm558, %v274, 0
  %v563 = vsel %vm558, %v279, 0
  %v566 = vsel %vm558, %v284, 0
  %v569 = vsel %vm558, %v289, 0
  %v572 = vsel %vm558, %v294, 0
  %v575 = vsel %vm558, %v299, 0
  %v578 = vsel %vm558, %v304, 0
  %v581 = vsel %vm558, %v309, 0
  %583 = vmatprep.subr.bf16.mxu0 0
  %584 = vmatpush1.bf16.msra.mxu0 %v493
  %585 = vmatprep.subr.bf16.mxu0 0
  %586 = vmatpush1.bf16.msra.mxu0 %v492
  %587 = vmatprep.subr.bf16.mxu0 0
  %588 = vmatpush1.bf16.msra.mxu0 %v491
  %589 = vmatprep.subr.bf16.mxu0 0
  %590 = vmatpush1.bf16.msra.mxu0 %v490
  %591 = vmatprep.subr.bf16.mxu0 0
  %592 = vmatpush1.bf16.msra.mxu0 %v489
  %593 = vmatprep.subr.bf16.mxu0 0
  %594 = vmatpush1.bf16.msra.mxu0 %v488
  %595 = vmatprep.subr.bf16.mxu0 0
  %596 = vmatpush1.bf16.msra.mxu0 %v487
  %597 = vmatprep.subr.bf16.mxu0 0
  %598 = vmatpush1.bf16.msra.mxu0 %v486
  %599 = vmatprep.subr.bf16.mxu0 0
  %600 = vmatpush2.bf16.msra.mxu0 %v501
  %601 = vmatprep.subr.bf16.mxu0 0
  %602 = vmatpush2.bf16.msra.mxu0 %v500
  %603 = vmatprep.subr.bf16.mxu0 0
  %604 = vmatpush2.bf16.msra.mxu0 %v499
  %605 = vmatprep.subr.bf16.mxu0 0
  %606 = vmatpush2.bf16.msra.mxu0 %v498
  %607 = vmatprep.subr.bf16.mxu0 0
  %608 = vmatpush2.bf16.msra.mxu0 %v497
  %609 = vmatprep.subr.bf16.mxu0 0
  %610 = vmatpush2.bf16.msra.mxu0 %v496
  %611 = vmatprep.subr.bf16.mxu0 0
  %612 = vmatpush2.bf16.msra.mxu0 %v495
  %613 = vmatprep.subr.bf16.mxu0 0
  %614 = vmatpush2.bf16.msra.mxu0 %v494
  %615 = vmatprep.mubr.bf16.mxu0 %v271
  %616 = vmatmul.mubr.bf16.gmra.mxu0 %v270
  %v617 = vpop.f32.mrf.mxu0
  %v618 = vadd.f32 %v140, %v617
  %v619 = vpop.f32.mrf.mxu0
  %v620 = vpop.f32.mrf.mxu0
  %v621 = vadd.f32 %v140, %v620
  %v622 = vpop.f32.mrf.mxu0
  %623 = vmatprep.mubr.bf16.mxu0 %v276
  %624 = vmatmul.mubr.bf16.gmra.mxu0 %v275
  %v625 = vpop.f32.mrf.mxu0
  %v626 = vadd.f32 %v140, %v625
  %v627 = vpop.f32.mrf.mxu0
  %v628 = vpop.f32.mrf.mxu0
  %v629 = vadd.f32 %v140, %v628
  %v630 = vpop.f32.mrf.mxu0
  %631 = vmatprep.mubr.bf16.mxu0 %v281
  %632 = vmatmul.mubr.bf16.gmra.mxu0 %v280
  %v633 = vpop.f32.mrf.mxu0
  %v634 = vadd.f32 %v140, %v633
  %v635 = vpop.f32.mrf.mxu0
  %v636 = vpop.f32.mrf.mxu0
  %v637 = vadd.f32 %v140, %v636
  %v638 = vpop.f32.mrf.mxu0
  %639 = vmatprep.mubr.bf16.mxu0 %v286
  %640 = vmatmul.mubr.bf16.gmra.mxu0 %v285
  %v641 = vpop.f32.mrf.mxu0
  %v642 = vadd.f32 %v140, %v641
  %v643 = vpop.f32.mrf.mxu0
  %v644 = vpop.f32.mrf.mxu0
  %v645 = vadd.f32 %v140, %v644
  %v646 = vpop.f32.mrf.mxu0
  %647 = vmatprep.mubr.bf16.mxu0 %v291
  %648 = vmatmul.mubr.bf16.gmra.mxu0 %v290
  %v649 = vpop.f32.mrf.mxu0
  %v650 = vadd.f32 %v140, %v649
  %v651 = vpop.f32.mrf.mxu0
  %v652 = vpop.f32.mrf.mxu0
  %v653 = vadd.f32 %v140, %v652
  %v654 = vpop.f32.mrf.mxu0
  %655 = vmatprep.mubr.bf16.mxu0 %v296
  %656 = vmatmul.mubr.bf16.gmra.mxu0 %v295
  %v657 = vpop.f32.mrf.mxu0
  %v658 = vadd.f32 %v140, %v657
  %v659 = vpop.f32.mrf.mxu0
  %v660 = vpop.f32.mrf.mxu0
  %v661 = vadd.f32 %v140, %v660
  %v662 = vpop.f32.mrf.mxu0
  %663 = vmatprep.mubr.bf16.mxu0 %v301
  %664 = vmatmul.mubr.bf16.gmra.mxu0 %v300
  %v665 = vpop.f32.mrf.mxu0
  %v666 = vadd.f32 %v140, %v665
  %v667 = vpop.f32.mrf.mxu0
  %v668 = vpop.f32.mrf.mxu0
  %v669 = vadd.f32 %v140, %v668
  %v670 = vpop.f32.mrf.mxu0
  %671 = vmatprep.mubr.bf16.mxu0 %v306
  %672 = vmatmul.mubr.bf16.gmra.mxu0 %v305
  %v673 = vpop.f32.mrf.mxu0
  %v674 = vadd.f32 %v140, %v673
  %v675 = vpop.f32.mrf.mxu0
  %v676 = vpop.f32.mrf.mxu0
  %v677 = vadd.f32 %v140, %v676
  %v678 = vpop.f32.mrf.mxu0
  %679 = vdwg.mxu0
  %680 = vmatprep.subr.bf16.mxu0 0
  %681 = vmatpush1.bf16.msra.mxu0 %v509
  %682 = vmatprep.subr.bf16.mxu0 0
  %683 = vmatpush1.bf16.msra.mxu0 %v508
  %684 = vmatprep.subr.bf16.mxu0 0
  %685 = vmatpush1.bf16.msra.mxu0 %v507
  %686 = vmatprep.subr.bf16.mxu0 0
  %687 = vmatpush1.bf16.msra.mxu0 %v506
  %688 = vmatprep.subr.bf16.mxu0 0
  %689 = vmatpush1.bf16.msra.mxu0 %v505
  %690 = vmatprep.subr.bf16.mxu0 0
  %691 = vmatpush1.bf16.msra.mxu0 %v504
  %692 = vmatprep.subr.bf16.mxu0 0
  %693 = vmatpush1.bf16.msra.mxu0 %v503
  %694 = vmatprep.subr.bf16.mxu0 0
  %695 = vmatpush1.bf16.msra.mxu0 %v502
  %696 = vmatprep.subr.bf16.mxu0 0
  %697 = vmatpush2.bf16.msra.mxu0 %v517
  %698 = vmatprep.subr.bf16.mxu0 0
  %699 = vmatpush2.bf16.msra.mxu0 %v516
  %700 = vmatprep.subr.bf16.mxu0 0
  %701 = vmatpush2.bf16.msra.mxu0 %v515
  %702 = vmatprep.subr.bf16.mxu0 0
  %703 = vmatpush2.bf16.msra.mxu0 %v514
  %704 = vmatprep.subr.bf16.mxu0 0
  %705 = vmatpush2.bf16.msra.mxu0 %v513
  %706 = vmatprep.subr.bf16.mxu0 0
  %707 = vmatpush2.bf16.msra.mxu0 %v512
  %708 = vmatprep.subr.bf16.mxu0 0
  %709 = vmatpush2.bf16.msra.mxu0 %v511
  %710 = vmatprep.subr.bf16.mxu0 0
  %711 = vmatpush2.bf16.msra.mxu0 %v510
  %712 = vmatprep.mubr.bf16.mxu0 %v273
  %713 = vmatmul.mubr.bf16.gmra.mxu0 %v272
  %v714 = vpop.f32.mrf.mxu0
  %v715 = vadd.f32 %v618, %v714
  %v716 = vpop.f32.mrf.mxu0
  %v717 = vpop.f32.mrf.mxu0
  %v718 = vadd.f32 %v621, %v717
  %v719 = vpop.f32.mrf.mxu0
  %720 = vmatprep.mubr.bf16.mxu0 %v278
  %721 = vmatmul.mubr.bf16.gmra.mxu0 %v277
  %v722 = vpop.f32.mrf.mxu0
  %v723 = vadd.f32 %v626, %v722
  %v724 = vpop.f32.mrf.mxu0
  %v725 = vpop.f32.mrf.mxu0
  %v726 = vadd.f32 %v629, %v725
  %v727 = vpop.f32.mrf.mxu0
  %728 = vmatprep.mubr.bf16.mxu0 %v283
  %729 = vmatmul.mubr.bf16.gmra.mxu0 %v282
  %v730 = vpop.f32.mrf.mxu0
  %v731 = vadd.f32 %v634, %v730
  %v732 = vpop.f32.mrf.mxu0
  %v733 = vpop.f32.mrf.mxu0
  %v734 = vadd.f32 %v637, %v733
  %v735 = vpop.f32.mrf.mxu0
  %736 = vmatprep.mubr.bf16.mxu0 %v288
  %737 = vmatmul.mubr.bf16.gmra.mxu0 %v287
  %v738 = vpop.f32.mrf.mxu0
  %v739 = vadd.f32 %v642, %v738
  %v740 = vpop.f32.mrf.mxu0
  %v741 = vpop.f32.mrf.mxu0
  %v742 = vadd.f32 %v645, %v741
  %v743 = vpop.f32.mrf.mxu0
  %744 = vmatprep.mubr.bf16.mxu0 %v293
  %745 = vmatmul.mubr.bf16.gmra.mxu0 %v292
  %v746 = vpop.f32.mrf.mxu0
  %v747 = vadd.f32 %v650, %v746
  %v748 = vpop.f32.mrf.mxu0
  %v749 = vpop.f32.mrf.mxu0
  %v750 = vadd.f32 %v653, %v749
  %v751 = vpop.f32.mrf.mxu0
  %752 = vmatprep.mubr.bf16.mxu0 %v298
  %753 = vmatmul.mubr.bf16.gmra.mxu0 %v297
  %v754 = vpop.f32.mrf.mxu0
  %v755 = vadd.f32 %v658, %v754
  %v756 = vpop.f32.mrf.mxu0
  %v757 = vpop.f32.mrf.mxu0
  %v758 = vadd.f32 %v661, %v757
  %v759 = vpop.f32.mrf.mxu0
  %760 = vmatprep.mubr.bf16.mxu0 %v303
  %761 = vmatmul.mubr.bf16.gmra.mxu0 %v302
  %v762 = vpop.f32.mrf.mxu0
  %v763 = vadd.f32 %v666, %v762
  %v764 = vpop.f32.mrf.mxu0
  %v765 = vpop.f32.mrf.mxu0
  %v766 = vadd.f32 %v669, %v765
  %v767 = vpop.f32.mrf.mxu0
  %768 = vmatprep.mubr.bf16.mxu0 %v308
  %769 = vmatmul.mubr.bf16.gmra.mxu0 %v307
  %v770 = vpop.f32.mrf.mxu0
  %v771 = vadd.f32 %v674, %v770
  %v772 = vpop.f32.mrf.mxu0
  %v773 = vpop.f32.mrf.mxu0
  %v774 = vadd.f32 %v677, %v773
  %v775 = vpop.f32.mrf.mxu0
  %776 = vdwg.mxu0
  %777 = vmatprep.subr.bf16.mxu0 0
  %778 = vmatpush1.bf16.msra.mxu0 0
  %779 = vmatprep.subr.bf16.mxu0 0
  %780 = vmatpush1.bf16.msra.mxu0 0
  %781 = vmatprep.subr.bf16.mxu0 0
  %782 = vmatpush1.bf16.msra.mxu0 0
  %783 = vmatprep.subr.bf16.mxu0 0
  %784 = vmatpush1.bf16.msra.mxu0 0
  %785 = vmatprep.subr.bf16.mxu0 0
  %786 = vmatpush1.bf16.msra.mxu0 %v521
  %787 = vmatprep.subr.bf16.mxu0 0
  %788 = vmatpush1.bf16.msra.mxu0 %v520
  %789 = vmatprep.subr.bf16.mxu0 0
  %790 = vmatpush1.bf16.msra.mxu0 %v519
  %791 = vmatprep.subr.bf16.mxu0 0
  %792 = vmatpush1.bf16.msra.mxu0 %v518
  %793 = vmatprep.subr.bf16.mxu0 0
  %794 = vmatpush2.bf16.msra.mxu0 0
  %795 = vmatprep.subr.bf16.mxu0 0
  %796 = vmatpush2.bf16.msra.mxu0 0
  %797 = vmatprep.subr.bf16.mxu0 0
  %798 = vmatpush2.bf16.msra.mxu0 0
  %799 = vmatprep.subr.bf16.mxu0 0
  %800 = vmatpush2.bf16.msra.mxu0 0
  %801 = vmatprep.subr.bf16.mxu0 0
  %802 = vmatpush2.bf16.msra.mxu0 0
  %803 = vmatprep.subr.bf16.mxu0 0
  %804 = vmatpush2.bf16.msra.mxu0 0
  %805 = vmatprep.subr.bf16.mxu0 0
  %806 = vmatpush2.bf16.msra.mxu0 0
  %807 = vmatprep.subr.bf16.mxu0 0
  %808 = vmatpush2.bf16.msra.mxu0 0
  %809 = vmatprep.mubr.bf16.mxu0 0
  %810 = vmatmul.mubr.bf16.gmra.mxu0 %v560
  %v811 = vpop.f32.mrf.mxu0
  %v812 = vadd.f32 %v715, %v811
  %v813 = vpop.f32.mrf.mxu0
  %v814 = vpop.f32.mrf.mxu0
  %v815 = vadd.f32 %v718, %v814
  %v816 = vpop.f32.mrf.mxu0
  %817 = vmatprep.mubr.bf16.mxu0 0
  %818 = vmatmul.mubr.bf16.gmra.mxu0 %v563
  %v819 = vpop.f32.mrf.mxu0
  %v820 = vadd.f32 %v723, %v819
  %v821 = vpop.f32.mrf.mxu0
  %v822 = vpop.f32.mrf.mxu0
  %v823 = vadd.f32 %v726, %v822
  %v824 = vpop.f32.mrf.mxu0
  %825 = vmatprep.mubr.bf16.mxu0 0
  %826 = vmatmul.mubr.bf16.gmra.mxu0 %v566
  %v827 = vpop.f32.mrf.mxu0
  %v828 = vadd.f32 %v731, %v827
  %v829 = vpop.f32.mrf.mxu0
  %v830 = vpop.f32.mrf.mxu0
  %v831 = vadd.f32 %v734, %v830
  %v832 = vpop.f32.mrf.mxu0
  %833 = vmatprep.mubr.bf16.mxu0 0
  %834 = vmatmul.mubr.bf16.gmra.mxu0 %v569
  %v835 = vpop.f32.mrf.mxu0
  %v836 = vadd.f32 %v739, %v835
  %v837 = vpop.f32.mrf.mxu0
  %v838 = vpop.f32.mrf.mxu0
  %v839 = vadd.f32 %v742, %v838
  %v840 = vpop.f32.mrf.mxu0
  %841 = vmatprep.mubr.bf16.mxu0 0
  %842 = vmatmul.mubr.bf16.gmra.mxu0 %v572
  %v843 = vpop.f32.mrf.mxu0
  %v844 = vadd.f32 %v747, %v843
  %v845 = vpop.f32.mrf.mxu0
  %v846 = vpop.f32.mrf.mxu0
  %v847 = vadd.f32 %v750, %v846
  %v848 = vpop.f32.mrf.mxu0
  %849 = vmatprep.mubr.bf16.mxu0 0
  %850 = vmatmul.mubr.bf16.gmra.mxu0 %v575
  %v851 = vpop.f32.mrf.mxu0
  %v852 = vadd.f32 %v755, %v851
  %v853 = vpop.f32.mrf.mxu0
  %v854 = vpop.f32.mrf.mxu0
  %v855 = vadd.f32 %v758, %v854
  %v856 = vpop.f32.mrf.mxu0
  %857 = vmatprep.mubr.bf16.mxu0 0
  %858 = vmatmul.mubr.bf16.gmra.mxu0 %v578
  %v859 = vpop.f32.mrf.mxu0
  %v860 = vadd.f32 %v763, %v859
  %v861 = vpop.f32.mrf.mxu0
  %v862 = vpop.f32.mrf.mxu0
  %v863 = vadd.f32 %v766, %v862
  %v864 = vpop.f32.mrf.mxu0
  %865 = vmatprep.mubr.bf16.mxu0 0
  %866 = vmatmul.mubr.bf16.gmra.mxu0 %v581
  %v867 = vpop.f32.mrf.mxu0
  %v868 = vadd.f32 %v771, %v867
  %v869 = vpop.f32.mrf.mxu0
  %v870 = vpop.f32.mrf.mxu0
  %v871 = vadd.f32 %v774, %v870
  %v872 = vpop.f32.mrf.mxu0
  %873 = vdwg.mxu0
  %v874 = vtanh.pop %v812
  %v875 = vtanh.pop %v815
  %v876 = vtanh.pop %v820
  %v877 = vtanh.pop %v823
  %v878 = vtanh.pop %v828
  %v879 = vtanh.pop %v831
  %v880 = vtanh.pop %v836
  %v881 = vtanh.pop %v839
  %v882 = vtanh.pop %v844
  %v883 = vtanh.pop %v847
  %v884 = vtanh.pop %v852
  %v885 = vtanh.pop %v855
  %v886 = vtanh.pop %v860
  %v887 = vtanh.pop %v863
  %v888 = vtanh.pop %v868
  %v889 = vtanh.pop %v871
  %vm890 = vcmask 31744
  %891 = vst.msk [vmem:[%s3] sm:$0xff] %vm890, %v874
  %892 = vst.msk [vmem:[%s3 + $0x8] sm:$0xff] %vm890, %v875
  %893 = vst.msk [vmem:[%s3 + $0x10] sm:$0xff] %vm890, %v876
  %894 = vst.msk [vmem:[%s3 + $0x18] sm:$0xff] %vm890, %v877
  %895 = vst.msk [vmem:[%s3 + $0x20] sm:$0xff] %vm890, %v878
  %896 = vst.msk [vmem:[%s3 + $0x28] sm:$0xff] %vm890, %v879
  %897 = vst.msk [vmem:[%s3 + $0x30] sm:$0xff] %vm890, %v880
  %898 = vst.msk [vmem:[%s3 + $0x38] sm:$0xff] %vm890, %v881
  %899 = vst.msk [vmem:[%s3 + $0x40] sm:$0xff] %vm890, %v882
  %900 = vst.msk [vmem:[%s3 + $0x48] sm:$0xff] %vm890, %v883
  %901 = vst.msk [vmem:[%s3 + $0x50] sm:$0xff] %vm890, %v884
  %902 = vst.msk [vmem:[%s3 + $0x58] sm:$0xff] %vm890, %v885
  %903 = vst.msk [vmem:[%s3 + $0x60] sm:$0xff] %vm890, %v886
  %904 = vst.msk [vmem:[%s3 + $0x68] sm:$0xff] %vm890, %v887
  %905 = vst.msk [vmem:[%s3 + $0x70] sm:$0xff] %vm890, %v888
  %906 = vst.msk [vmem:[%s3 + $0x78] sm:$0xff] %vm890, %v889
  // Predicated region
  $region14: #{vae_forward.13} parent=0 // pred_check
    _
  $region15: #{vae_forward.13} parent=0 // pred_check_branch
    %908 = sbr.rel (0) target = $region17
  $region16: #{vae_forward.13} parent=0 // pred_region
    _
  $region17: #{vae_forward.13} parent=0 // pred_fallthru
    _
  // Predicated region
  $region18: #{vae_forward.13} parent=0 // pred_check
    _
  $region19: #{vae_forward.13} parent=0 // pred_check_branch
    %910 = sbr.rel (0) target = $region21
  $region20: #{vae_forward.13} parent=0 // pred_region
    _
  $region21: #{vae_forward.13} parent=0 // pred_fallthru
    _

</llo_original>
